<compile_context>
chip_gen: v6e
topology: v6e:2x2x1
jax: 0.10.0
libtpu: 0.0.40
codegen_flags: <defaults>
</compile_context>

<pallas_src>
import functools
import math

import jax
import jax.numpy as jnp
from jax.experimental import pallas as pl
from jax.experimental.pallas import tpu as pltpu


def _silu(x):
    return x * jax.nn.sigmoid(x)


def _layernorm(x, eps):
    # one-pass LayerNorm: var = E[x^2] - mu^2
    mu = jnp.mean(x, axis=-1, keepdims=True)
    ms = jnp.mean(x * x, axis=-1, keepdims=True)
    var = ms - mu * mu
    return (x - mu) * jax.lax.rsqrt(var + eps)


def _simple_mlp_adaln_kernel(
    # row-streamed input: [t | x | c] slab, tiled over N
    slab_ref,
    # precomputed sinusoidal freqs (1, half)
    freqs_ref,
    # time-embed MLP
    wt1_ref, bt1_ref, wt2_ref, bt2_ref,
    # cond embed / input projection (zero-padded to slab rows)
    wc_ref, bc_ref, wi_ref, bi_ref,
    # per-res-block adaLN (pre-split shift/scale/gate columns)
    was_ref, wasc_ref, wag_ref, bas_ref, basc_ref, bag_ref,
    # per-res-block LayerNorm affine + MLP
    lng_ref, lnb_ref, wm1_ref, bm1_ref, wm2_ref, bm2_ref,
    # final layer adaLN (pre-split shift/scale) + final linear (pre-transposed)
    wfs_ref, wfsc_ref, bfs_ref, bfsc_ref, wfin_t_ref, bfin_ref,
    # output (transposed: (out_ch, bn) for lane-dense stores)
    out_ref,
    *, depth, half, eps, fuse_time_mm,
):
    f32 = jnp.float32
    bf16 = jnp.bfloat16

    slab = slab_ref[...]                                 # (bn, 1+in_ch+z_ch) f32
    slab_b = slab.astype(bf16)

    # ---- sinusoidal timestep embedding ----
    t = slab[:, 0:1]                                     # (bn, 1) f32
    args = t * freqs_ref[...]                            # (bn, half) f32
    cos_a = jnp.cos(args)
    sin_a = jnp.sin(args)

    if fuse_time_mm:
        # v6e/v7x: one K=2*half dot fills the 256-deep MXU
        emb = jnp.concatenate([cos_a, sin_a], axis=-1).astype(bf16)
        h = jnp.dot(emb, wt1_ref[...], preferred_element_type=f32) + bt1_ref[...]
    else:
        # v5e (128-deep MXU): split into two K=half dots, no concat needed
        h = (jnp.dot(cos_a.astype(bf16), wt1_ref[:half], preferred_element_type=f32)
             + jnp.dot(sin_a.astype(bf16), wt1_ref[half:], preferred_element_type=f32)
             + bt1_ref[...])
    h = _silu(h)
    t_emb = jnp.dot(h.astype(bf16), wt2_ref[...], preferred_element_type=f32) + bt2_ref[...]

    # ---- condition embedding (from slab; t/x rows of wc are zero) ----
    c_emb = jnp.dot(slab_b, wc_ref[...], preferred_element_type=f32) + bc_ref[...]
    y = _silu(t_emb + c_emb)                             # (bn, W) f32
    y_b = y.astype(bf16)

    # ---- input projection (from slab; t/c rows of wi are zero) ----
    x = jnp.dot(slab_b, wi_ref[...], preferred_element_type=f32) + bi_ref[...]

    # ---- residual blocks (depth is small & static -> unrolled) ----
    for d in range(depth):
        shift = jnp.dot(y_b, was_ref[d], preferred_element_type=f32) + bas_ref[d]
        scale = jnp.dot(y_b, wasc_ref[d], preferred_element_type=f32) + basc_ref[d]
        gate = jnp.dot(y_b, wag_ref[d], preferred_element_type=f32) + bag_ref[d]
        xn = _layernorm(x, eps) * lng_ref[d] + lnb_ref[d]
        hh = xn * (1.0 + scale) + shift
        hh = jnp.dot(hh.astype(bf16), wm1_ref[d], preferred_element_type=f32) + bm1_ref[d]
        hh = _silu(hh)
        hh = jnp.dot(hh.astype(bf16), wm2_ref[d], preferred_element_type=f32) + bm2_ref[d]
        x = x + gate * hh

    # ---- final layer: adaLN-modulated LayerNorm (no affine) + linear ----
    shift = jnp.dot(y_b, wfs_ref[...], preferred_element_type=f32) + bfs_ref[...]
    scale = jnp.dot(y_b, wfsc_ref[...], preferred_element_type=f32) + bfsc_ref[...]
    xn = _layernorm(x, eps) * (1.0 + scale) + shift

    # transposed final matmul: (out_ch, W) x (bn, W)^T -> (out_ch, bn), lane-dense store
    out_t = jax.lax.dot_general(
        wfin_t_ref[...], xn.astype(bf16),
        dimension_numbers=(((1,), (1,)), ((), ())),
        preferred_element_type=f32)
    out_ref[...] = (out_t + bfin_ref[...]).astype(out_ref.dtype)


def _round_up(v, m):
    return (v + m - 1) // m * m


def _has_deep_mxu():
    """True on generations with a 256-deep MXU (v6e / v7x)."""
    try:
        kind = jax.devices()[0].device_kind.lower()
    except Exception:
        return False
    return any(tag in kind for tag in ("v6", "v7", "7x"))


def simple_mlp_adaln_forward(x, t, c, params, *, freq_dim=256, max_period=10000.0,
                             block_n=256, eps=1e-6):
    """Pallas forward of SimpleMLPAdaLN (cond_method='adaln').

    x: (N, in_channels), t: (N,), c: (N, z_channels).
    params: dict of weights in (in, out) layout (PyTorch Linear weights transposed);
            per-block weights are stacked along a leading depth axis.
    Returns (N, out_channels) float32.
    """
    f32, bf16 = jnp.float32, jnp.bfloat16
    n, in_ch = x.shape
    z_ch = c.shape[1]
    width = params["wi"].shape[1]
    depth = params["w_ada"].shape[0]
    out_ch = params["w_fin"].shape[1]
    half = freq_dim // 2
    # TODO(synk): odd freq_dim would need the zero-pad column; default 256 is even.

    def r2(b):  # (H,) -> (1, H)
        return b.reshape(1, -1).astype(f32)

    def r3(b):  # (D, H) -> (D, 1, H)
        return b.reshape(b.shape[0], 1, b.shape[1]).astype(f32)

    # ---- merged row slab [t | x | c]; pad N to a multiple of the row tile ----
    slab = jnp.concatenate(
        [t.astype(f32).reshape(n, 1), x.astype(f32), c.astype(f32)], axis=1)
    slab_dim = 1 + in_ch + z_ch

    bn = min(block_n, _round_up(n, 8))
    n_pad = _round_up(n, bn)
    pad = n_pad - n
    if pad:
        slab = jnp.pad(slab, ((0, pad), (0, 0)))

    # zero-pad wi / wc rows so x and c feed their matmuls straight from the slab
    wi_slab = jnp.zeros((slab_dim, width), f32).at[1:1 + in_ch].set(
        params["wi"].astype(f32)).astype(bf16)
    wc_slab = jnp.zeros((slab_dim, width), f32).at[1 + in_ch:].set(
        params["wc"].astype(f32)).astype(bf16)

    # precomputed sinusoidal frequencies (1, half)
    freqs = jnp.exp(
        -math.log(max_period) * jnp.arange(half, dtype=f32) / half).reshape(1, half)

    w_ada, b_ada = params["w_ada"], params["b_ada"]          # (D, W, 3W), (D, 3W)
    w_fada, b_fada = params["w_fada"], params["b_fada"]      # (W, 2W), (2W,)

    weight_inputs = [
        freqs,                                               # f32
        params["wt1"].astype(bf16),                          # (2*half, W)
        r2(params["bt1"]),
        params["wt2"].astype(bf16),
        r2(params["bt2"]),
        wc_slab,
        r2(params["bc"]),
        wi_slab,
        r2(params["bi"]),
        w_ada[:, :, :width].astype(bf16),                    # shift cols
        w_ada[:, :, width:2 * width].astype(bf16),           # scale cols
        w_ada[:, :, 2 * width:].astype(bf16),                # gate cols
        r3(b_ada[:, :width]),
        r3(b_ada[:, width:2 * width]),
        r3(b_ada[:, 2 * width:]),
        r3(params["ln_g"]),
        r3(params["ln_b"]),
        params["w_m1"].astype(bf16),
        r3(params["b_m1"]),
        params["w_m2"].astype(bf16),
        r3(params["b_m2"]),
        w_fada[:, :width].astype(bf16),
        w_fada[:, width:].astype(bf16),
        r2(b_fada[:width]),
        r2(b_fada[width:]),
        params["w_fin"].T.astype(bf16),                      # (out_ch, W) pre-transposed
        params["b_fin"].reshape(-1, 1).astype(f32),          # (out_ch, 1)
    ]

    def const_spec(a):
        # constant index map across the row grid -> single-buffer (halves VMEM)
        nd = a.ndim
        return pl.BlockSpec(a.shape, lambda i, _nd=nd: (0,) * _nd,
                            pipeline_mode=pl.Buffered(buffer_count=1))

    in_specs = ([pl.BlockSpec((bn, slab_dim), lambda i: (i, 0))]
                + [const_spec(a) for a in weight_inputs])

    kernel = functools.partial(
        _simple_mlp_adaln_kernel,
        depth=depth,
        half=half,
        eps=eps,
        fuse_time_mm=_has_deep_mxu(),
    )

    out_t = pl.pallas_call(
        kernel,
        out_shape=jax.ShapeDtypeStruct((out_ch, n_pad), f32),
        grid=(n_pad // bn,),
        in_specs=in_specs,
        out_specs=pl.BlockSpec((out_ch, bn), lambda i: (0, i)),
        compiler_params=pltpu.CompilerParams(
            dimension_semantics=("parallel",),
            vmem_limit_bytes=64 * 1024 * 1024,
        ),
    )(slab, *weight_inputs)

    # kernel emits lane-dense (out_ch, N_pad); transpose back outside (tiny XLA op)
    return out_t[:, :n].T


def _reference(x, t, c, params, freq_dim=256, max_period=10000.0, eps=1e-6):
    """Pure-JAX f32 mirror of the PyTorch SimpleMLPAdaLN forward (adaln path)."""
    half = freq_dim // 2
    freqs = jnp.exp(-math.log(max_period) * jnp.arange(half, dtype=jnp.float32) / half)
    args = t.astype(jnp.float32)[:, None] * freqs[None]
    emb = jnp.concatenate([jnp.cos(args), jnp.sin(args)], axis=-1)
    h = emb @ params["wt1"] + params["bt1"]
    h = h * jax.nn.sigmoid(h)
    t_emb = h @ params["wt2"] + params["bt2"]
    c_emb = c @ params["wc"] + params["bc"]
    y_act = jax.nn.silu(t_emb + c_emb)
    xh = x @ params["wi"] + params["bi"]

    def layernorm(v):
        mu = v.mean(-1, keepdims=True)
        var = ((v - mu) ** 2).mean(-1, keepdims=True)
        return (v - mu) / jnp.sqrt(var + eps)

    for d in range(params["w_ada"].shape[0]):
        mod = y_act @ params["w_ada"][d] + params["b_ada"][d]
        shift, scale, gate = jnp.split(mod, 3, axis=-1)
        hh = layernorm(xh) * params["ln_g"][d] + params["ln_b"][d]
        hh = hh * (1.0 + scale) + shift
        hh = hh @ params["w_m1"][d] + params["b_m1"][d]
        hh = hh * jax.nn.sigmoid(hh)
        hh = hh @ params["w_m2"][d] + params["b_m2"][d]
        xh = xh + gate * hh

    mod = y_act @ params["w_fada"] + params["b_fada"]
    shift, scale = jnp.split(mod, 2, axis=-1)
    hh = layernorm(xh) * (1.0 + scale) + shift
    return hh @ params["w_fin"] + params["b_fin"]


if __name__ == "__main__":
    key = jax.random.PRNGKey(0)
    keys = iter(jax.random.split(key, 40))

    N = 256            # batch of tokens (rows)      -> grid of 2 row tiles
    IN_CH = 4          # target_channels
    Z_CH = 8           # z_channels
    WIDTH = 32         # model_channels (small for the test)
    DEPTH = 2          # num_res_blocks
    OUT_CH = 2 * IN_CH # eps + learned variance
    FREQ = 256         # frequency_embedding_size (module default)

    def lin(k, fan_in, fan_out):
        return jax.random.normal(k, (fan_in, fan_out), jnp.float32) / math.sqrt(fan_in)

    def bias(k, dim):
        return jax.random.normal(k, (dim,), jnp.float32) * 0.02

    params = {
        "wt1": jax.random.normal(next(keys), (FREQ, WIDTH), jnp.float32) * 0.02,
        "bt1": bias(next(keys), WIDTH),
        "wt2": jax.random.normal(next(keys), (WIDTH, WIDTH), jnp.float32) * 0.02,
        "bt2": bias(next(keys), WIDTH),
        "wc": lin(next(keys), Z_CH, WIDTH),
        "bc": bias(next(keys), WIDTH),
        "wi": lin(next(keys), IN_CH, WIDTH),
        "bi": bias(next(keys), WIDTH),
        "w_ada": jnp.stack([lin(next(keys), WIDTH, 3 * WIDTH) for _ in range(DEPTH)]),
        "b_ada": jnp.stack([bias(next(keys), 3 * WIDTH) for _ in range(DEPTH)]),
        "ln_g": jnp.stack([1.0 + 0.1 * jax.random.normal(next(keys), (WIDTH,), jnp.float32)
                           for _ in range(DEPTH)]),
        "ln_b": jnp.stack([bias(next(keys), WIDTH) for _ in range(DEPTH)]),
        "w_m1": jnp.stack([lin(next(keys), WIDTH, WIDTH) for _ in range(DEPTH)]),
        "b_m1": jnp.stack([bias(next(keys), WIDTH) for _ in range(DEPTH)]),
        "w_m2": jnp.stack([lin(next(keys), WIDTH, WIDTH) for _ in range(DEPTH)]),
        "b_m2": jnp.stack([bias(next(keys), WIDTH) for _ in range(DEPTH)]),
        "w_fada": lin(next(keys), WIDTH, 2 * WIDTH),
        "b_fada": bias(next(keys), 2 * WIDTH),
        "w_fin": lin(next(keys), WIDTH, OUT_CH),
        "b_fin": bias(next(keys), OUT_CH),
    }

    x = jax.random.normal(next(keys), (N, IN_CH), jnp.float32)
    t = jax.random.uniform(next(keys), (N,), jnp.float32) * 1000.0
    c = jax.random.normal(next(keys), (N, Z_CH), jnp.float32)

    out = simple_mlp_adaln_forward(x, t, c, params, freq_dim=FREQ, block_n=128)
    out = jax.block_until_ready(out)

    ref = _reference(x, t, c, params, freq_dim=FREQ)
    assert out.shape == (N, OUT_CH)
    assert bool(jnp.all(jnp.isfinite(out))), "non-finite output"
    # bf16 matmul operands (f32 accumulation) -> looser tolerance vs f32 reference
    assert jnp.allclose(out, ref, atol=1e-1, rtol=1e-1), "mismatch vs reference"

    print("KERNEL_OK")
</pallas_src>

<mosaic_0001>
module attributes {stable_mosaic.version = 11 : i64} {
  func.func @_simple_mlp_adaln_kernel(%arg0: i32, %arg1: memref<128x13xf32, #tpu.memory_space<vmem>>, %arg2: memref<1x128xf32, #tpu.memory_space<vmem>>, %arg3: memref<256x32xbf16, #tpu.memory_space<vmem>>, %arg4: memref<1x32xf32, #tpu.memory_space<vmem>>, %arg5: memref<32x32xbf16, #tpu.memory_space<vmem>>, %arg6: memref<1x32xf32, #tpu.memory_space<vmem>>, %arg7: memref<13x32xbf16, #tpu.memory_space<vmem>>, %arg8: memref<1x32xf32, #tpu.memory_space<vmem>>, %arg9: memref<13x32xbf16, #tpu.memory_space<vmem>>, %arg10: memref<1x32xf32, #tpu.memory_space<vmem>>, %arg11: memref<2x32x32xbf16, #tpu.memory_space<vmem>>, %arg12: memref<2x32x32xbf16, #tpu.memory_space<vmem>>, %arg13: memref<2x32x32xbf16, #tpu.memory_space<vmem>>, %arg14: memref<2x1x32xf32, #tpu.memory_space<vmem>>, %arg15: memref<2x1x32xf32, #tpu.memory_space<vmem>>, %arg16: memref<2x1x32xf32, #tpu.memory_space<vmem>>, %arg17: memref<2x1x32xf32, #tpu.memory_space<vmem>>, %arg18: memref<2x1x32xf32, #tpu.memory_space<vmem>>, %arg19: memref<2x32x32xbf16, #tpu.memory_space<vmem>>, %arg20: memref<2x1x32xf32, #tpu.memory_space<vmem>>, %arg21: memref<2x32x32xbf16, #tpu.memory_space<vmem>>, %arg22: memref<2x1x32xf32, #tpu.memory_space<vmem>>, %arg23: memref<32x32xbf16, #tpu.memory_space<vmem>>, %arg24: memref<32x32xbf16, #tpu.memory_space<vmem>>, %arg25: memref<1x32xf32, #tpu.memory_space<vmem>>, %arg26: memref<1x32xf32, #tpu.memory_space<vmem>>, %arg27: memref<8x32xbf16, #tpu.memory_space<vmem>>, %arg28: memref<8x1xf32, #tpu.memory_space<vmem>>, %arg29: memref<8x128xf32, #tpu.memory_space<vmem>>) attributes {dimension_semantics = [#tpu.dimension_semantics<parallel>], iteration_bounds = array<i64: 2>, scalar_prefetch = 0 : i64, scratch_operands = 0 : i64, tpu.core_type = #tpu.core_type<tc>, window_params = [{transform_indices = @transform_0, window_bounds = array<i64: 128, 13>}, {pipeline_mode = #tpu.pipeline_mode<synchronous>, transform_indices = @transform_1, window_bounds = array<i64: 1, 128>}, {pipeline_mode = #tpu.pipeline_mode<synchronous>, transform_indices = @transform_2, window_bounds = array<i64: 256, 32>}, {pipeline_mode = #tpu.pipeline_mode<synchronous>, transform_indices = @transform_3, window_bounds = array<i64: 1, 32>}, {pipeline_mode = #tpu.pipeline_mode<synchronous>, transform_indices = @transform_4, window_bounds = array<i64: 32, 32>}, {pipeline_mode = #tpu.pipeline_mode<synchronous>, transform_indices = @transform_5, window_bounds = array<i64: 1, 32>}, {pipeline_mode = #tpu.pipeline_mode<synchronous>, transform_indices = @transform_6, window_bounds = array<i64: 13, 32>}, {pipeline_mode = #tpu.pipeline_mode<synchronous>, transform_indices = @transform_7, window_bounds = array<i64: 1, 32>}, {pipeline_mode = #tpu.pipeline_mode<synchronous>, transform_indices = @transform_8, window_bounds = array<i64: 13, 32>}, {pipeline_mode = #tpu.pipeline_mode<synchronous>, transform_indices = @transform_9, window_bounds = array<i64: 1, 32>}, {pipeline_mode = #tpu.pipeline_mode<synchronous>, transform_indices = @transform_10, window_bounds = array<i64: 2, 32, 32>}, {pipeline_mode = #tpu.pipeline_mode<synchronous>, transform_indices = @transform_11, window_bounds = array<i64: 2, 32, 32>}, {pipeline_mode = #tpu.pipeline_mode<synchronous>, transform_indices = @transform_12, window_bounds = array<i64: 2, 32, 32>}, {pipeline_mode = #tpu.pipeline_mode<synchronous>, transform_indices = @transform_13, window_bounds = array<i64: 2, 1, 32>}, {pipeline_mode = #tpu.pipeline_mode<synchronous>, transform_indices = @transform_14, window_bounds = array<i64: 2, 1, 32>}, {pipeline_mode = #tpu.pipeline_mode<synchronous>, transform_indices = @transform_15, window_bounds = array<i64: 2, 1, 32>}, {pipeline_mode = #tpu.pipeline_mode<synchronous>, transform_indices = @transform_16, window_bounds = array<i64: 2, 1, 32>}, {pipeline_mode = #tpu.pipeline_mode<synchronous>, transform_indices = @transform_17, window_bounds = array<i64: 2, 1, 32>}, {pipeline_mode = #tpu.pipeline_mode<synchronous>, transform_indices = @transform_18, window_bounds = array<i64: 2, 32, 32>}, {pipeline_mode = #tpu.pipeline_mode<synchronous>, transform_indices = @transform_19, window_bounds = array<i64: 2, 1, 32>}, {pipeline_mode = #tpu.pipeline_mode<synchronous>, transform_indices = @transform_20, window_bounds = array<i64: 2, 32, 32>}, {pipeline_mode = #tpu.pipeline_mode<synchronous>, transform_indices = @transform_21, window_bounds = array<i64: 2, 1, 32>}, {pipeline_mode = #tpu.pipeline_mode<synchronous>, transform_indices = @transform_22, window_bounds = array<i64: 32, 32>}, {pipeline_mode = #tpu.pipeline_mode<synchronous>, transform_indices = @transform_23, window_bounds = array<i64: 32, 32>}, {pipeline_mode = #tpu.pipeline_mode<synchronous>, transform_indices = @transform_24, window_bounds = array<i64: 1, 32>}, {pipeline_mode = #tpu.pipeline_mode<synchronous>, transform_indices = @transform_25, window_bounds = array<i64: 1, 32>}, {pipeline_mode = #tpu.pipeline_mode<synchronous>, transform_indices = @transform_26, window_bounds = array<i64: 8, 32>}, {pipeline_mode = #tpu.pipeline_mode<synchronous>, transform_indices = @transform_27, window_bounds = array<i64: 8, 1>}, {transform_indices = @transform_28, window_bounds = array<i64: 8, 128>}]} {
    %c0 = arith.constant 0 : index
    %c0_0 = arith.constant 0 : index
    %0 = vector.load %arg1[%c0, %c0_0] : memref<128x13xf32, #tpu.memory_space<vmem>>, vector<128x13xf32>
    %1 = arith.truncf %0 : vector<128x13xf32> to vector<128x13xbf16>
    %2 = vector.extract_strided_slice %0 {offsets = [0, 0], sizes = [128, 1], strides = [1, 1]} : vector<128x13xf32> to vector<128x1xf32>
    %c0_1 = arith.constant 0 : index
    %c0_2 = arith.constant 0 : index
    %3 = vector.load %arg2[%c0_1, %c0_2] : memref<1x128xf32, #tpu.memory_space<vmem>>, vector<1x128xf32>
    %4 = vector.broadcast %2 : vector<128x1xf32> to vector<128x128xf32>
    %5 = vector.broadcast %3 : vector<1x128xf32> to vector<128x128xf32>
    %6 = arith.mulf %4, %5 : vector<128x128xf32>
    %7 = math.cos %6 : vector<128x128xf32>
    %8 = math.sin %6 : vector<128x128xf32>
    %9 = arith.truncf %7 : vector<128x128xf32> to vector<128x128xbf16>
    %c0_3 = arith.constant 0 : index
    %c0_4 = arith.constant 0 : index
    %10 = vector.load %arg3[%c0_3, %c0_4] : memref<256x32xbf16, #tpu.memory_space<vmem>>, vector<128x32xbf16>
    %cst = arith.constant dense<0.000000e+00> : vector<128x32xf32>
    %11 = tpu.matmul %9, %10, %cst {dimension_numbers = #tpu.dot_dimension_numbers<[1], [0], [0], [1], [0, 0, 1, 1], [], []>} : vector<128x128xbf16>, vector<128x32xbf16>, vector<128x32xf32> -> vector<128x32xf32>
    %12 = arith.truncf %8 : vector<128x128xf32> to vector<128x128xbf16>
    %c128 = arith.constant 128 : index
    %c0_5 = arith.constant 0 : index
    %13 = vector.load %arg3[%c128, %c0_5] : memref<256x32xbf16, #tpu.memory_space<vmem>>, vector<128x32xbf16>
    %cst_6 = arith.constant dense<0.000000e+00> : vector<128x32xf32>
    %14 = tpu.matmul %12, %13, %cst_6 {dimension_numbers = #tpu.dot_dimension_numbers<[1], [0], [0], [1], [0, 0, 1, 1], [], []>} : vector<128x128xbf16>, vector<128x32xbf16>, vector<128x32xf32> -> vector<128x32xf32>
    %15 = arith.addf %11, %14 : vector<128x32xf32>
    %c0_7 = arith.constant 0 : index
    %c0_8 = arith.constant 0 : index
    %16 = vector.load %arg4[%c0_7, %c0_8] : memref<1x32xf32, #tpu.memory_space<vmem>>, vector<1x32xf32>
    %17 = vector.broadcast %16 : vector<1x32xf32> to vector<128x32xf32>
    %18 = arith.addf %15, %17 : vector<128x32xf32>
    %19 = arith.negf %18 : vector<128x32xf32>
    %20 = math.exp %19 : vector<128x32xf32>
    %cst_9 = arith.constant 1.000000e+00 : f32
    %21 = vector.broadcast %cst_9 : f32 to vector<128x32xf32>
    %22 = arith.addf %21, %20 : vector<128x32xf32>
    %23 = arith.divf %21, %22 : vector<128x32xf32>
    %24 = arith.mulf %18, %23 : vector<128x32xf32>
    %25 = arith.truncf %24 : vector<128x32xf32> to vector<128x32xbf16>
    %c0_10 = arith.constant 0 : index
    %c0_11 = arith.constant 0 : index
    %26 = vector.load %arg5[%c0_10, %c0_11] : memref<32x32xbf16, #tpu.memory_space<vmem>>, vector<32x32xbf16>
    %cst_12 = arith.constant dense<0.000000e+00> : vector<128x32xf32>
    %27 = tpu.matmul %25, %26, %cst_12 {dimension_numbers = #tpu.dot_dimension_numbers<[1], [0], [0], [1], [0, 0, 1, 1], [], []>} : vector<128x32xbf16>, vector<32x32xbf16>, vector<128x32xf32> -> vector<128x32xf32>
    %c0_13 = arith.constant 0 : index
    %c0_14 = arith.constant 0 : index
    %28 = vector.load %arg6[%c0_13, %c0_14] : memref<1x32xf32, #tpu.memory_space<vmem>>, vector<1x32xf32>
    %29 = vector.broadcast %28 : vector<1x32xf32> to vector<128x32xf32>
    %30 = arith.addf %27, %29 : vector<128x32xf32>
    %c0_15 = arith.constant 0 : index
    %c0_16 = arith.constant 0 : index
    %31 = vector.load %arg7[%c0_15, %c0_16] : memref<13x32xbf16, #tpu.memory_space<vmem>>, vector<13x32xbf16>
    %cst_17 = arith.constant dense<0.000000e+00> : vector<128x32xf32>
    %32 = tpu.matmul %1, %31, %cst_17 {dimension_numbers = #tpu.dot_dimension_numbers<[1], [0], [0], [1], [0, 0, 1, 1], [], []>} : vector<128x13xbf16>, vector<13x32xbf16>, vector<128x32xf32> -> vector<128x32xf32>
    %c0_18 = arith.constant 0 : index
    %c0_19 = arith.constant 0 : index
    %33 = vector.load %arg8[%c0_18, %c0_19] : memref<1x32xf32, #tpu.memory_space<vmem>>, vector<1x32xf32>
    %34 = vector.broadcast %33 : vector<1x32xf32> to vector<128x32xf32>
    %35 = arith.addf %32, %34 : vector<128x32xf32>
    %36 = arith.addf %30, %35 : vector<128x32xf32>
    %37 = arith.negf %36 : vector<128x32xf32>
    %38 = math.exp %37 : vector<128x32xf32>
    %cst_20 = arith.constant 1.000000e+00 : f32
    %39 = vector.broadcast %cst_20 : f32 to vector<128x32xf32>
    %40 = arith.addf %39, %38 : vector<128x32xf32>
    %41 = arith.divf %39, %40 : vector<128x32xf32>
    %42 = arith.mulf %36, %41 : vector<128x32xf32>
    %43 = arith.truncf %42 : vector<128x32xf32> to vector<128x32xbf16>
    %c0_21 = arith.constant 0 : index
    %c0_22 = arith.constant 0 : index
    %44 = vector.load %arg9[%c0_21, %c0_22] : memref<13x32xbf16, #tpu.memory_space<vmem>>, vector<13x32xbf16>
    %cst_23 = arith.constant dense<0.000000e+00> : vector<128x32xf32>
    %45 = tpu.matmul %1, %44, %cst_23 {dimension_numbers = #tpu.dot_dimension_numbers<[1], [0], [0], [1], [0, 0, 1, 1], [], []>} : vector<128x13xbf16>, vector<13x32xbf16>, vector<128x32xf32> -> vector<128x32xf32>
    %c0_24 = arith.constant 0 : index
    %c0_25 = arith.constant 0 : index
    %46 = vector.load %arg10[%c0_24, %c0_25] : memref<1x32xf32, #tpu.memory_space<vmem>>, vector<1x32xf32>
    %47 = vector.broadcast %46 : vector<1x32xf32> to vector<128x32xf32>
    %48 = arith.addf %45, %47 : vector<128x32xf32>
    %c0_26 = arith.constant 0 : index
    %c0_27 = arith.constant 0 : index
    %c0_28 = arith.constant 0 : index
    %49 = vector.load %arg11[%c0_26, %c0_27, %c0_28] : memref<2x32x32xbf16, #tpu.memory_space<vmem>>, vector<1x32x32xbf16>
    %50 = vector.shape_cast %49 : vector<1x32x32xbf16> to vector<32x32xbf16>
    %cst_29 = arith.constant dense<0.000000e+00> : vector<128x32xf32>
    %51 = tpu.matmul %43, %50, %cst_29 {dimension_numbers = #tpu.dot_dimension_numbers<[1], [0], [0], [1], [0, 0, 1, 1], [], []>} : vector<128x32xbf16>, vector<32x32xbf16>, vector<128x32xf32> -> vector<128x32xf32>
    %c0_30 = arith.constant 0 : index
    %c0_31 = arith.constant 0 : index
    %c0_32 = arith.constant 0 : index
    %52 = vector.load %arg14[%c0_30, %c0_31, %c0_32] : memref<2x1x32xf32, #tpu.memory_space<vmem>>, vector<1x1x32xf32>
    %53 = vector.shape_cast %52 : vector<1x1x32xf32> to vector<1x32xf32>
    %54 = vector.broadcast %53 : vector<1x32xf32> to vector<128x32xf32>
    %55 = arith.addf %51, %54 : vector<128x32xf32>
    %c0_33 = arith.constant 0 : index
    %c0_34 = arith.constant 0 : index
    %c0_35 = arith.constant 0 : index
    %56 = vector.load %arg12[%c0_33, %c0_34, %c0_35] : memref<2x32x32xbf16, #tpu.memory_space<vmem>>, vector<1x32x32xbf16>
    %57 = vector.shape_cast %56 : vector<1x32x32xbf16> to vector<32x32xbf16>
    %cst_36 = arith.constant dense<0.000000e+00> : vector<128x32xf32>
    %58 = tpu.matmul %43, %57, %cst_36 {dimension_numbers = #tpu.dot_dimension_numbers<[1], [0], [0], [1], [0, 0, 1, 1], [], []>} : vector<128x32xbf16>, vector<32x32xbf16>, vector<128x32xf32> -> vector<128x32xf32>
    %c0_37 = arith.constant 0 : index
    %c0_38 = arith.constant 0 : index
    %c0_39 = arith.constant 0 : index
    %59 = vector.load %arg15[%c0_37, %c0_38, %c0_39] : memref<2x1x32xf32, #tpu.memory_space<vmem>>, vector<1x1x32xf32>
    %60 = vector.shape_cast %59 : vector<1x1x32xf32> to vector<1x32xf32>
    %61 = vector.broadcast %60 : vector<1x32xf32> to vector<128x32xf32>
    %62 = arith.addf %58, %61 : vector<128x32xf32>
    %c0_40 = arith.constant 0 : index
    %c0_41 = arith.constant 0 : index
    %c0_42 = arith.constant 0 : index
    %63 = vector.load %arg13[%c0_40, %c0_41, %c0_42] : memref<2x32x32xbf16, #tpu.memory_space<vmem>>, vector<1x32x32xbf16>
    %64 = vector.shape_cast %63 : vector<1x32x32xbf16> to vector<32x32xbf16>
    %cst_43 = arith.constant dense<0.000000e+00> : vector<128x32xf32>
    %65 = tpu.matmul %43, %64, %cst_43 {dimension_numbers = #tpu.dot_dimension_numbers<[1], [0], [0], [1], [0, 0, 1, 1], [], []>} : vector<128x32xbf16>, vector<32x32xbf16>, vector<128x32xf32> -> vector<128x32xf32>
    %c0_44 = arith.constant 0 : index
    %c0_45 = arith.constant 0 : index
    %c0_46 = arith.constant 0 : index
    %66 = vector.load %arg16[%c0_44, %c0_45, %c0_46] : memref<2x1x32xf32, #tpu.memory_space<vmem>>, vector<1x1x32xf32>
    %67 = vector.shape_cast %66 : vector<1x1x32xf32> to vector<1x32xf32>
    %68 = vector.broadcast %67 : vector<1x32xf32> to vector<128x32xf32>
    %69 = arith.addf %65, %68 : vector<128x32xf32>
    %cst_47 = arith.constant dense<0.000000e+00> : vector<128xf32>
    %70 = vector.multi_reduction <add>, %48, %cst_47 [1] : vector<128x32xf32> to vector<128xf32>
    %71 = vector.shape_cast %70 : vector<128xf32> to vector<128x1xf32>
    %cst_48 = arith.constant 3.200000e+01 : f32
    %72 = vector.broadcast %cst_48 : f32 to vector<128x1xf32>
    %73 = arith.divf %71, %72 : vector<128x1xf32>
    %74 = arith.mulf %48, %48 : vector<128x32xf32>
    %cst_49 = arith.constant dense<0.000000e+00> : vector<128xf32>
    %75 = vector.multi_reduction <add>, %74, %cst_49 [1] : vector<128x32xf32> to vector<128xf32>
    %76 = vector.shape_cast %75 : vector<128xf32> to vector<128x1xf32>
    %cst_50 = arith.constant 3.200000e+01 : f32
    %77 = vector.broadcast %cst_50 : f32 to vector<128x1xf32>
    %78 = arith.divf %76, %77 : vector<128x1xf32>
    %79 = arith.mulf %73, %73 : vector<128x1xf32>
    %80 = arith.subf %78, %79 : vector<128x1xf32>
    %81 = vector.broadcast %73 : vector<128x1xf32> to vector<128x32xf32>
    %82 = arith.subf %48, %81 : vector<128x32xf32>
    %cst_51 = arith.constant 9.99999997E-7 : f32
    %83 = vector.broadcast %cst_51 : f32 to vector<128x1xf32>
    %84 = arith.addf %80, %83 : vector<128x1xf32>
    %85 = math.rsqrt %84 : vector<128x1xf32>
    %86 = vector.broadcast %85 : vector<128x1xf32> to vector<128x32xf32>
    %87 = arith.mulf %82, %86 : vector<128x32xf32>
    %c0_52 = arith.constant 0 : index
    %c0_53 = arith.constant 0 : index
    %c0_54 = arith.constant 0 : index
    %88 = vector.load %arg17[%c0_52, %c0_53, %c0_54] : memref<2x1x32xf32, #tpu.memory_space<vmem>>, vector<1x1x32xf32>
    %89 = vector.shape_cast %88 : vector<1x1x32xf32> to vector<1x32xf32>
    %90 = vector.broadcast %89 : vector<1x32xf32> to vector<128x32xf32>
    %91 = arith.mulf %87, %90 : vector<128x32xf32>
    %c0_55 = arith.constant 0 : index
    %c0_56 = arith.constant 0 : index
    %c0_57 = arith.constant 0 : index
    %92 = vector.load %arg18[%c0_55, %c0_56, %c0_57] : memref<2x1x32xf32, #tpu.memory_space<vmem>>, vector<1x1x32xf32>
    %93 = vector.shape_cast %92 : vector<1x1x32xf32> to vector<1x32xf32>
    %94 = vector.broadcast %93 : vector<1x32xf32> to vector<128x32xf32>
    %95 = arith.addf %91, %94 : vector<128x32xf32>
    %cst_58 = arith.constant 1.000000e+00 : f32
    %96 = vector.broadcast %cst_58 : f32 to vector<128x32xf32>
    %97 = arith.addf %96, %62 : vector<128x32xf32>
    %98 = arith.mulf %95, %97 : vector<128x32xf32>
    %99 = arith.addf %98, %55 : vector<128x32xf32>
    %100 = arith.truncf %99 : vector<128x32xf32> to vector<128x32xbf16>
    %c0_59 = arith.constant 0 : index
    %c0_60 = arith.constant 0 : index
    %c0_61 = arith.constant 0 : index
    %101 = vector.load %arg19[%c0_59, %c0_60, %c0_61] : memref<2x32x32xbf16, #tpu.memory_space<vmem>>, vector<1x32x32xbf16>
    %102 = vector.shape_cast %101 : vector<1x32x32xbf16> to vector<32x32xbf16>
    %cst_62 = arith.constant dense<0.000000e+00> : vector<128x32xf32>
    %103 = tpu.matmul %100, %102, %cst_62 {dimension_numbers = #tpu.dot_dimension_numbers<[1], [0], [0], [1], [0, 0, 1, 1], [], []>} : vector<128x32xbf16>, vector<32x32xbf16>, vector<128x32xf32> -> vector<128x32xf32>
    %c0_63 = arith.constant 0 : index
    %c0_64 = arith.constant 0 : index
    %c0_65 = arith.constant 0 : index
    %104 = vector.load %arg20[%c0_63, %c0_64, %c0_65] : memref<2x1x32xf32, #tpu.memory_space<vmem>>, vector<1x1x32xf32>
    %105 = vector.shape_cast %104 : vector<1x1x32xf32> to vector<1x32xf32>
    %106 = vector.broadcast %105 : vector<1x32xf32> to vector<128x32xf32>
    %107 = arith.addf %103, %106 : vector<128x32xf32>
    %108 = arith.negf %107 : vector<128x32xf32>
    %109 = math.exp %108 : vector<128x32xf32>
    %cst_66 = arith.constant 1.000000e+00 : f32
    %110 = vector.broadcast %cst_66 : f32 to vector<128x32xf32>
    %111 = arith.addf %110, %109 : vector<128x32xf32>
    %112 = arith.divf %110, %111 : vector<128x32xf32>
    %113 = arith.mulf %107, %112 : vector<128x32xf32>
    %114 = arith.truncf %113 : vector<128x32xf32> to vector<128x32xbf16>
    %c0_67 = arith.constant 0 : index
    %c0_68 = arith.constant 0 : index
    %c0_69 = arith.constant 0 : index
    %115 = vector.load %arg21[%c0_67, %c0_68, %c0_69] : memref<2x32x32xbf16, #tpu.memory_space<vmem>>, vector<1x32x32xbf16>
    %116 = vector.shape_cast %115 : vector<1x32x32xbf16> to vector<32x32xbf16>
    %cst_70 = arith.constant dense<0.000000e+00> : vector<128x32xf32>
    %117 = tpu.matmul %114, %116, %cst_70 {dimension_numbers = #tpu.dot_dimension_numbers<[1], [0], [0], [1], [0, 0, 1, 1], [], []>} : vector<128x32xbf16>, vector<32x32xbf16>, vector<128x32xf32> -> vector<128x32xf32>
    %c0_71 = arith.constant 0 : index
    %c0_72 = arith.constant 0 : index
    %c0_73 = arith.constant 0 : index
    %118 = vector.load %arg22[%c0_71, %c0_72, %c0_73] : memref<2x1x32xf32, #tpu.memory_space<vmem>>, vector<1x1x32xf32>
    %119 = vector.shape_cast %118 : vector<1x1x32xf32> to vector<1x32xf32>
    %120 = vector.broadcast %119 : vector<1x32xf32> to vector<128x32xf32>
    %121 = arith.addf %117, %120 : vector<128x32xf32>
    %122 = arith.mulf %69, %121 : vector<128x32xf32>
    %123 = arith.addf %48, %122 : vector<128x32xf32>
    %c1 = arith.constant 1 : index
    %c0_74 = arith.constant 0 : index
    %c0_75 = arith.constant 0 : index
    %124 = vector.load %arg11[%c1, %c0_74, %c0_75] : memref<2x32x32xbf16, #tpu.memory_space<vmem>>, vector<1x32x32xbf16>
    %125 = vector.shape_cast %124 : vector<1x32x32xbf16> to vector<32x32xbf16>
    %cst_76 = arith.constant dense<0.000000e+00> : vector<128x32xf32>
    %126 = tpu.matmul %43, %125, %cst_76 {dimension_numbers = #tpu.dot_dimension_numbers<[1], [0], [0], [1], [0, 0, 1, 1], [], []>} : vector<128x32xbf16>, vector<32x32xbf16>, vector<128x32xf32> -> vector<128x32xf32>
    %c1_77 = arith.constant 1 : index
    %c0_78 = arith.constant 0 : index
    %c0_79 = arith.constant 0 : index
    %127 = vector.load %arg14[%c1_77, %c0_78, %c0_79] : memref<2x1x32xf32, #tpu.memory_space<vmem>>, vector<1x1x32xf32>
    %128 = vector.shape_cast %127 : vector<1x1x32xf32> to vector<1x32xf32>
    %129 = vector.broadcast %128 : vector<1x32xf32> to vector<128x32xf32>
    %130 = arith.addf %126, %129 : vector<128x32xf32>
    %c1_80 = arith.constant 1 : index
    %c0_81 = arith.constant 0 : index
    %c0_82 = arith.constant 0 : index
    %131 = vector.load %arg12[%c1_80, %c0_81, %c0_82] : memref<2x32x32xbf16, #tpu.memory_space<vmem>>, vector<1x32x32xbf16>
    %132 = vector.shape_cast %131 : vector<1x32x32xbf16> to vector<32x32xbf16>
    %cst_83 = arith.constant dense<0.000000e+00> : vector<128x32xf32>
    %133 = tpu.matmul %43, %132, %cst_83 {dimension_numbers = #tpu.dot_dimension_numbers<[1], [0], [0], [1], [0, 0, 1, 1], [], []>} : vector<128x32xbf16>, vector<32x32xbf16>, vector<128x32xf32> -> vector<128x32xf32>
    %c1_84 = arith.constant 1 : index
    %c0_85 = arith.constant 0 : index
    %c0_86 = arith.constant 0 : index
    %134 = vector.load %arg15[%c1_84, %c0_85, %c0_86] : memref<2x1x32xf32, #tpu.memory_space<vmem>>, vector<1x1x32xf32>
    %135 = vector.shape_cast %134 : vector<1x1x32xf32> to vector<1x32xf32>
    %136 = vector.broadcast %135 : vector<1x32xf32> to vector<128x32xf32>
    %137 = arith.addf %133, %136 : vector<128x32xf32>
    %c1_87 = arith.constant 1 : index
    %c0_88 = arith.constant 0 : index
    %c0_89 = arith.constant 0 : index
    %138 = vector.load %arg13[%c1_87, %c0_88, %c0_89] : memref<2x32x32xbf16, #tpu.memory_space<vmem>>, vector<1x32x32xbf16>
    %139 = vector.shape_cast %138 : vector<1x32x32xbf16> to vector<32x32xbf16>
    %cst_90 = arith.constant dense<0.000000e+00> : vector<128x32xf32>
    %140 = tpu.matmul %43, %139, %cst_90 {dimension_numbers = #tpu.dot_dimension_numbers<[1], [0], [0], [1], [0, 0, 1, 1], [], []>} : vector<128x32xbf16>, vector<32x32xbf16>, vector<128x32xf32> -> vector<128x32xf32>
    %c1_91 = arith.constant 1 : index
    %c0_92 = arith.constant 0 : index
    %c0_93 = arith.constant 0 : index
    %141 = vector.load %arg16[%c1_91, %c0_92, %c0_93] : memref<2x1x32xf32, #tpu.memory_space<vmem>>, vector<1x1x32xf32>
    %142 = vector.shape_cast %141 : vector<1x1x32xf32> to vector<1x32xf32>
    %143 = vector.broadcast %142 : vector<1x32xf32> to vector<128x32xf32>
    %144 = arith.addf %140, %143 : vector<128x32xf32>
    %cst_94 = arith.constant dense<0.000000e+00> : vector<128xf32>
    %145 = vector.multi_reduction <add>, %123, %cst_94 [1] : vector<128x32xf32> to vector<128xf32>
    %146 = vector.shape_cast %145 : vector<128xf32> to vector<128x1xf32>
    %cst_95 = arith.constant 3.200000e+01 : f32
    %147 = vector.broadcast %cst_95 : f32 to vector<128x1xf32>
    %148 = arith.divf %146, %147 : vector<128x1xf32>
    %149 = arith.mulf %123, %123 : vector<128x32xf32>
    %cst_96 = arith.constant dense<0.000000e+00> : vector<128xf32>
    %150 = vector.multi_reduction <add>, %149, %cst_96 [1] : vector<128x32xf32> to vector<128xf32>
    %151 = vector.shape_cast %150 : vector<128xf32> to vector<128x1xf32>
    %cst_97 = arith.constant 3.200000e+01 : f32
    %152 = vector.broadcast %cst_97 : f32 to vector<128x1xf32>
    %153 = arith.divf %151, %152 : vector<128x1xf32>
    %154 = arith.mulf %148, %148 : vector<128x1xf32>
    %155 = arith.subf %153, %154 : vector<128x1xf32>
    %156 = vector.broadcast %148 : vector<128x1xf32> to vector<128x32xf32>
    %157 = arith.subf %123, %156 : vector<128x32xf32>
    %cst_98 = arith.constant 9.99999997E-7 : f32
    %158 = vector.broadcast %cst_98 : f32 to vector<128x1xf32>
    %159 = arith.addf %155, %158 : vector<128x1xf32>
    %160 = math.rsqrt %159 : vector<128x1xf32>
    %161 = vector.broadcast %160 : vector<128x1xf32> to vector<128x32xf32>
    %162 = arith.mulf %157, %161 : vector<128x32xf32>
    %c1_99 = arith.constant 1 : index
    %c0_100 = arith.constant 0 : index
    %c0_101 = arith.constant 0 : index
    %163 = vector.load %arg17[%c1_99, %c0_100, %c0_101] : memref<2x1x32xf32, #tpu.memory_space<vmem>>, vector<1x1x32xf32>
    %164 = vector.shape_cast %163 : vector<1x1x32xf32> to vector<1x32xf32>
    %165 = vector.broadcast %164 : vector<1x32xf32> to vector<128x32xf32>
    %166 = arith.mulf %162, %165 : vector<128x32xf32>
    %c1_102 = arith.constant 1 : index
    %c0_103 = arith.constant 0 : index
    %c0_104 = arith.constant 0 : index
    %167 = vector.load %arg18[%c1_102, %c0_103, %c0_104] : memref<2x1x32xf32, #tpu.memory_space<vmem>>, vector<1x1x32xf32>
    %168 = vector.shape_cast %167 : vector<1x1x32xf32> to vector<1x32xf32>
    %169 = vector.broadcast %168 : vector<1x32xf32> to vector<128x32xf32>
    %170 = arith.addf %166, %169 : vector<128x32xf32>
    %cst_105 = arith.constant 1.000000e+00 : f32
    %171 = vector.broadcast %cst_105 : f32 to vector<128x32xf32>
    %172 = arith.addf %171, %137 : vector<128x32xf32>
    %173 = arith.mulf %170, %172 : vector<128x32xf32>
    %174 = arith.addf %173, %130 : vector<128x32xf32>
    %175 = arith.truncf %174 : vector<128x32xf32> to vector<128x32xbf16>
    %c1_106 = arith.constant 1 : index
    %c0_107 = arith.constant 0 : index
    %c0_108 = arith.constant 0 : index
    %176 = vector.load %arg19[%c1_106, %c0_107, %c0_108] : memref<2x32x32xbf16, #tpu.memory_space<vmem>>, vector<1x32x32xbf16>
    %177 = vector.shape_cast %176 : vector<1x32x32xbf16> to vector<32x32xbf16>
    %cst_109 = arith.constant dense<0.000000e+00> : vector<128x32xf32>
    %178 = tpu.matmul %175, %177, %cst_109 {dimension_numbers = #tpu.dot_dimension_numbers<[1], [0], [0], [1], [0, 0, 1, 1], [], []>} : vector<128x32xbf16>, vector<32x32xbf16>, vector<128x32xf32> -> vector<128x32xf32>
    %c1_110 = arith.constant 1 : index
    %c0_111 = arith.constant 0 : index
    %c0_112 = arith.constant 0 : index
    %179 = vector.load %arg20[%c1_110, %c0_111, %c0_112] : memref<2x1x32xf32, #tpu.memory_space<vmem>>, vector<1x1x32xf32>
    %180 = vector.shape_cast %179 : vector<1x1x32xf32> to vector<1x32xf32>
    %181 = vector.broadcast %180 : vector<1x32xf32> to vector<128x32xf32>
    %182 = arith.addf %178, %181 : vector<128x32xf32>
    %183 = arith.negf %182 : vector<128x32xf32>
    %184 = math.exp %183 : vector<128x32xf32>
    %cst_113 = arith.constant 1.000000e+00 : f32
    %185 = vector.broadcast %cst_113 : f32 to vector<128x32xf32>
    %186 = arith.addf %185, %184 : vector<128x32xf32>
    %187 = arith.divf %185, %186 : vector<128x32xf32>
    %188 = arith.mulf %182, %187 : vector<128x32xf32>
    %189 = arith.truncf %188 : vector<128x32xf32> to vector<128x32xbf16>
    %c1_114 = arith.constant 1 : index
    %c0_115 = arith.constant 0 : index
    %c0_116 = arith.constant 0 : index
    %190 = vector.load %arg21[%c1_114, %c0_115, %c0_116] : memref<2x32x32xbf16, #tpu.memory_space<vmem>>, vector<1x32x32xbf16>
    %191 = vector.shape_cast %190 : vector<1x32x32xbf16> to vector<32x32xbf16>
    %cst_117 = arith.constant dense<0.000000e+00> : vector<128x32xf32>
    %192 = tpu.matmul %189, %191, %cst_117 {dimension_numbers = #tpu.dot_dimension_numbers<[1], [0], [0], [1], [0, 0, 1, 1], [], []>} : vector<128x32xbf16>, vector<32x32xbf16>, vector<128x32xf32> -> vector<128x32xf32>
    %c1_118 = arith.constant 1 : index
    %c0_119 = arith.constant 0 : index
    %c0_120 = arith.constant 0 : index
    %193 = vector.load %arg22[%c1_118, %c0_119, %c0_120] : memref<2x1x32xf32, #tpu.memory_space<vmem>>, vector<1x1x32xf32>
    %194 = vector.shape_cast %193 : vector<1x1x32xf32> to vector<1x32xf32>
    %195 = vector.broadcast %194 : vector<1x32xf32> to vector<128x32xf32>
    %196 = arith.addf %192, %195 : vector<128x32xf32>
    %197 = arith.mulf %144, %196 : vector<128x32xf32>
    %198 = arith.addf %123, %197 : vector<128x32xf32>
    %c0_121 = arith.constant 0 : index
    %c0_122 = arith.constant 0 : index
    %199 = vector.load %arg23[%c0_121, %c0_122] : memref<32x32xbf16, #tpu.memory_space<vmem>>, vector<32x32xbf16>
    %cst_123 = arith.constant dense<0.000000e+00> : vector<128x32xf32>
    %200 = tpu.matmul %43, %199, %cst_123 {dimension_numbers = #tpu.dot_dimension_numbers<[1], [0], [0], [1], [0, 0, 1, 1], [], []>} : vector<128x32xbf16>, vector<32x32xbf16>, vector<128x32xf32> -> vector<128x32xf32>
    %c0_124 = arith.constant 0 : index
    %c0_125 = arith.constant 0 : index
    %201 = vector.load %arg25[%c0_124, %c0_125] : memref<1x32xf32, #tpu.memory_space<vmem>>, vector<1x32xf32>
    %202 = vector.broadcast %201 : vector<1x32xf32> to vector<128x32xf32>
    %203 = arith.addf %200, %202 : vector<128x32xf32>
    %c0_126 = arith.constant 0 : index
    %c0_127 = arith.constant 0 : index
    %204 = vector.load %arg24[%c0_126, %c0_127] : memref<32x32xbf16, #tpu.memory_space<vmem>>, vector<32x32xbf16>
    %cst_128 = arith.constant dense<0.000000e+00> : vector<128x32xf32>
    %205 = tpu.matmul %43, %204, %cst_128 {dimension_numbers = #tpu.dot_dimension_numbers<[1], [0], [0], [1], [0, 0, 1, 1], [], []>} : vector<128x32xbf16>, vector<32x32xbf16>, vector<128x32xf32> -> vector<128x32xf32>
    %c0_129 = arith.constant 0 : index
    %c0_130 = arith.constant 0 : index
    %206 = vector.load %arg26[%c0_129, %c0_130] : memref<1x32xf32, #tpu.memory_space<vmem>>, vector<1x32xf32>
    %207 = vector.broadcast %206 : vector<1x32xf32> to vector<128x32xf32>
    %208 = arith.addf %205, %207 : vector<128x32xf32>
    %cst_131 = arith.constant dense<0.000000e+00> : vector<128xf32>
    %209 = vector.multi_reduction <add>, %198, %cst_131 [1] : vector<128x32xf32> to vector<128xf32>
    %210 = vector.shape_cast %209 : vector<128xf32> to vector<128x1xf32>
    %cst_132 = arith.constant 3.200000e+01 : f32
    %211 = vector.broadcast %cst_132 : f32 to vector<128x1xf32>
    %212 = arith.divf %210, %211 : vector<128x1xf32>
    %213 = arith.mulf %198, %198 : vector<128x32xf32>
    %cst_133 = arith.constant dense<0.000000e+00> : vector<128xf32>
    %214 = vector.multi_reduction <add>, %213, %cst_133 [1] : vector<128x32xf32> to vector<128xf32>
    %215 = vector.shape_cast %214 : vector<128xf32> to vector<128x1xf32>
    %cst_134 = arith.constant 3.200000e+01 : f32
    %216 = vector.broadcast %cst_134 : f32 to vector<128x1xf32>
    %217 = arith.divf %215, %216 : vector<128x1xf32>
    %218 = arith.mulf %212, %212 : vector<128x1xf32>
    %219 = arith.subf %217, %218 : vector<128x1xf32>
    %220 = vector.broadcast %212 : vector<128x1xf32> to vector<128x32xf32>
    %221 = arith.subf %198, %220 : vector<128x32xf32>
    %cst_135 = arith.constant 9.99999997E-7 : f32
    %222 = vector.broadcast %cst_135 : f32 to vector<128x1xf32>
    %223 = arith.addf %219, %222 : vector<128x1xf32>
    %224 = math.rsqrt %223 : vector<128x1xf32>
    %225 = vector.broadcast %224 : vector<128x1xf32> to vector<128x32xf32>
    %226 = arith.mulf %221, %225 : vector<128x32xf32>
    %cst_136 = arith.constant 1.000000e+00 : f32
    %227 = vector.broadcast %cst_136 : f32 to vector<128x32xf32>
    %228 = arith.addf %227, %208 : vector<128x32xf32>
    %229 = arith.mulf %226, %228 : vector<128x32xf32>
    %230 = arith.addf %229, %203 : vector<128x32xf32>
    %c0_137 = arith.constant 0 : index
    %c0_138 = arith.constant 0 : index
    %231 = vector.load %arg27[%c0_137, %c0_138] : memref<8x32xbf16, #tpu.memory_space<vmem>>, vector<8x32xbf16>
    %232 = arith.truncf %230 : vector<128x32xf32> to vector<128x32xbf16>
    %cst_139 = arith.constant dense<0.000000e+00> : vector<8x128xf32>
    %233 = tpu.matmul %231, %232, %cst_139 {dimension_numbers = #tpu.dot_dimension_numbers<[1], [1], [0], [0], [0, 0, 1, 0], [], []>} : vector<8x32xbf16>, vector<128x32xbf16>, vector<8x128xf32> -> vector<8x128xf32>
    %c0_140 = arith.constant 0 : index
    %c0_141 = arith.constant 0 : index
    %234 = vector.load %arg28[%c0_140, %c0_141] : memref<8x1xf32, #tpu.memory_space<vmem>>, vector<8x1xf32>
    %235 = vector.broadcast %234 : vector<8x1xf32> to vector<8x128xf32>
    %236 = arith.addf %233, %235 : vector<8x128xf32>
    %c0_142 = arith.constant 0 : index
    %c0_143 = arith.constant 0 : index
    %237 = vector.load %arg29[%c0_142, %c0_143] : memref<8x128xf32, #tpu.memory_space<vmem>>, vector<8x128xf32>
    tpu.vector_store %arg29[%c0_142, %c0_143], %236 {strides = array<i32>} : memref<8x128xf32, #tpu.memory_space<vmem>>, vector<8x128xf32>,
    return
  }
  func.func @transform_0(%arg0: i32) -> (i32, i32) {
    %c0_i32 = arith.constant 0 : i32
    %c0_i32_0 = arith.constant 0 : i32
    return %arg0, %c0_i32 : i32, i32
  }
  func.func @transform_1(%arg0: i32) -> (i32, i32) {
    %c0_i32 = arith.constant 0 : i32
    %c0_i32_0 = arith.constant 0 : i32
    %c0_i32_1 = arith.constant 0 : i32
    return %c0_i32, %c0_i32_0 : i32, i32
  }
  func.func @transform_2(%arg0: i32) -> (i32, i32) {
    %c0_i32 = arith.constant 0 : i32
    %c0_i32_0 = arith.constant 0 : i32
    %c0_i32_1 = arith.constant 0 : i32
    return %c0_i32, %c0_i32_0 : i32, i32
  }
  func.func @transform_3(%arg0: i32) -> (i32, i32) {
    %c0_i32 = arith.constant 0 : i32
    %c0_i32_0 = arith.constant 0 : i32
    %c0_i32_1 = arith.constant 0 : i32
    return %c0_i32, %c0_i32_0 : i32, i32
  }
  func.func @transform_4(%arg0: i32) -> (i32, i32) {
    %c0_i32 = arith.constant 0 : i32
    %c0_i32_0 = arith.constant 0 : i32
    %c0_i32_1 = arith.constant 0 : i32
    return %c0_i32, %c0_i32_0 : i32, i32
  }
  func.func @transform_5(%arg0: i32) -> (i32, i32) {
    %c0_i32 = arith.constant 0 : i32
    %c0_i32_0 = arith.constant 0 : i32
    %c0_i32_1 = arith.constant 0 : i32
    return %c0_i32, %c0_i32_0 : i32, i32
  }
  func.func @transform_6(%arg0: i32) -> (i32, i32) {
    %c0_i32 = arith.constant 0 : i32
    %c0_i32_0 = arith.constant 0 : i32
    %c0_i32_1 = arith.constant 0 : i32
    return %c0_i32, %c0_i32_0 : i32, i32
  }
  func.func @transform_7(%arg0: i32) -> (i32, i32) {
    %c0_i32 = arith.constant 0 : i32
    %c0_i32_0 = arith.constant 0 : i32
    %c0_i32_1 = arith.constant 0 : i32
    return %c0_i32, %c0_i32_0 : i32, i32
  }
  func.func @transform_8(%arg0: i32) -> (i32, i32) {
    %c0_i32 = arith.constant 0 : i32
    %c0_i32_0 = arith.constant 0 : i32
    %c0_i32_1 = arith.constant 0 : i32
    return %c0_i32, %c0_i32_0 : i32, i32
  }
  func.func @transform_9(%arg0: i32) -> (i32, i32) {
    %c0_i32 = arith.constant 0 : i32
    %c0_i32_0 = arith.constant 0 : i32
    %c0_i32_1 = arith.constant 0 : i32
    return %c0_i32, %c0_i32_0 : i32, i32
  }
  func.func @transform_10(%arg0: i32) -> (i32, i32, i32) {
    %c0_i32 = arith.constant 0 : i32
    %c0_i32_0 = arith.constant 0 : i32
    %c0_i32_1 = arith.constant 0 : i32
    %c0_i32_2 = arith.constant 0 : i32
    return %c0_i32, %c0_i32_0, %c0_i32_1 : i32, i32, i32
  }
  func.func @transform_11(%arg0: i32) -> (i32, i32, i32) {
    %c0_i32 = arith.constant 0 : i32
    %c0_i32_0 = arith.constant 0 : i32
    %c0_i32_1 = arith.constant 0 : i32
    %c0_i32_2 = arith.constant 0 : i32
    return %c0_i32, %c0_i32_0, %c0_i32_1 : i32, i32, i32
  }
  func.func @transform_12(%arg0: i32) -> (i32, i32, i32) {
    %c0_i32 = arith.constant 0 : i32
    %c0_i32_0 = arith.constant 0 : i32
    %c0_i32_1 = arith.constant 0 : i32
    %c0_i32_2 = arith.constant 0 : i32
    return %c0_i32, %c0_i32_0, %c0_i32_1 : i32, i32, i32
  }
  func.func @transform_13(%arg0: i32) -> (i32, i32, i32) {
    %c0_i32 = arith.constant 0 : i32
    %c0_i32_0 = arith.constant 0 : i32
    %c0_i32_1 = arith.constant 0 : i32
    %c0_i32_2 = arith.constant 0 : i32
    return %c0_i32, %c0_i32_0, %c0_i32_1 : i32, i32, i32
  }
  func.func @transform_14(%arg0: i32) -> (i32, i32, i32) {
    %c0_i32 = arith.constant 0 : i32
    %c0_i32_0 = arith.constant 0 : i32
    %c0_i32_1 = arith.constant 0 : i32
    %c0_i32_2 = arith.constant 0 : i32
    return %c0_i32, %c0_i32_0, %c0_i32_1 : i32, i32, i32
  }
  func.func @transform_15(%arg0: i32) -> (i32, i32, i32) {
    %c0_i32 = arith.constant 0 : i32
    %c0_i32_0 = arith.constant 0 : i32
    %c0_i32_1 = arith.constant 0 : i32
    %c0_i32_2 = arith.constant 0 : i32
    return %c0_i32, %c0_i32_0, %c0_i32_1 : i32, i32, i32
  }
  func.func @transform_16(%arg0: i32) -> (i32, i32, i32) {
    %c0_i32 = arith.constant 0 : i32
    %c0_i32_0 = arith.constant 0 : i32
    %c0_i32_1 = arith.constant 0 : i32
    %c0_i32_2 = arith.constant 0 : i32
    return %c0_i32, %c0_i32_0, %c0_i32_1 : i32, i32, i32
  }
  func.func @transform_17(%arg0: i32) -> (i32, i32, i32) {
    %c0_i32 = arith.constant 0 : i32
    %c0_i32_0 = arith.constant 0 : i32
    %c0_i32_1 = arith.constant 0 : i32
    %c0_i32_2 = arith.constant 0 : i32
    return %c0_i32, %c0_i32_0, %c0_i32_1 : i32, i32, i32
  }
  func.func @transform_18(%arg0: i32) -> (i32, i32, i32) {
    %c0_i32 = arith.constant 0 : i32
    %c0_i32_0 = arith.constant 0 : i32
    %c0_i32_1 = arith.constant 0 : i32
    %c0_i32_2 = arith.constant 0 : i32
    return %c0_i32, %c0_i32_0, %c0_i32_1 : i32, i32, i32
  }
  func.func @transform_19(%arg0: i32) -> (i32, i32, i32) {
    %c0_i32 = arith.constant 0 : i32
    %c0_i32_0 = arith.constant 0 : i32
    %c0_i32_1 = arith.constant 0 : i32
    %c0_i32_2 = arith.constant 0 : i32
    return %c0_i32, %c0_i32_0, %c0_i32_1 : i32, i32, i32
  }
  func.func @transform_20(%arg0: i32) -> (i32, i32, i32) {
    %c0_i32 = arith.constant 0 : i32
    %c0_i32_0 = arith.constant 0 : i32
    %c0_i32_1 = arith.constant 0 : i32
    %c0_i32_2 = arith.constant 0 : i32
    return %c0_i32, %c0_i32_0, %c0_i32_1 : i32, i32, i32
  }
  func.func @transform_21(%arg0: i32) -> (i32, i32, i32) {
    %c0_i32 = arith.constant 0 : i32
    %c0_i32_0 = arith.constant 0 : i32
    %c0_i32_1 = arith.constant 0 : i32
    %c0_i32_2 = arith.constant 0 : i32
    return %c0_i32, %c0_i32_0, %c0_i32_1 : i32, i32, i32
  }
  func.func @transform_22(%arg0: i32) -> (i32, i32) {
    %c0_i32 = arith.constant 0 : i32
    %c0_i32_0 = arith.constant 0 : i32
    %c0_i32_1 = arith.constant 0 : i32
    return %c0_i32, %c0_i32_0 : i32, i32
  }
  func.func @transform_23(%arg0: i32) -> (i32, i32) {
    %c0_i32 = arith.constant 0 : i32
    %c0_i32_0 = arith.constant 0 : i32
    %c0_i32_1 = arith.constant 0 : i32
    return %c0_i32, %c0_i32_0 : i32, i32
  }
  func.func @transform_24(%arg0: i32) -> (i32, i32) {
    %c0_i32 = arith.constant 0 : i32
    %c0_i32_0 = arith.constant 0 : i32
    %c0_i32_1 = arith.constant 0 : i32
    return %c0_i32, %c0_i32_0 : i32, i32
  }
  func.func @transform_25(%arg0: i32) -> (i32, i32) {
    %c0_i32 = arith.constant 0 : i32
    %c0_i32_0 = arith.constant 0 : i32
    %c0_i32_1 = arith.constant 0 : i32
    return %c0_i32, %c0_i32_0 : i32, i32
  }
  func.func @transform_26(%arg0: i32) -> (i32, i32) {
    %c0_i32 = arith.constant 0 : i32
    %c0_i32_0 = arith.constant 0 : i32
    %c0_i32_1 = arith.constant 0 : i32
    return %c0_i32, %c0_i32_0 : i32, i32
  }
  func.func @transform_27(%arg0: i32) -> (i32, i32) {
    %c0_i32 = arith.constant 0 : i32
    %c0_i32_0 = arith.constant 0 : i32
    %c0_i32_1 = arith.constant 0 : i32
    return %c0_i32, %c0_i32_0 : i32, i32
  }
  func.func @transform_28(%arg0: i32) -> (i32, i32) {
    %c0_i32 = arith.constant 0 : i32
    %c0_i32_0 = arith.constant 0 : i32
    return %c0_i32, %arg0 : i32, i32
  }
}

</mosaic_0001>

<llo_original>
// kernel: tpu_custom_call.1
$region0: #{tpu_custom_call.1}
  #allocation0 [shape = 'u32[]', space=smem, size = 0x4, offset = 0x4, fixed_abs, tag = 'smem constant byte address 0x4 - core index']
  #allocation1 [shape = 'u32[144,128]{1,0:T(1,128)}', space=vmem, size = 0x12000, scoped, tag = 'internal scratch']
  %s0 = inlined_call_operand.vmem [shape: f32[256,13], index: 0, kind: input, shape index: {}]
  %s1 = inlined_call_operand.vmem [shape: f32[1,128], index: 1, kind: input, shape index: {}]
  %s2 = inlined_call_operand.vmem [shape: bf16[256,32], index: 2, kind: input, shape index: {}]
  %s3 = inlined_call_operand.vmem [shape: f32[1,32], index: 3, kind: input, shape index: {}]
  %s4 = inlined_call_operand.vmem [shape: bf16[32,32], index: 4, kind: input, shape index: {}]
  %s5 = inlined_call_operand.vmem [shape: f32[1,32], index: 5, kind: input, shape index: {}]
  %s6 = inlined_call_operand.vmem [shape: bf16[13,32], index: 6, kind: input, shape index: {}]
  %s7 = inlined_call_operand.vmem [shape: f32[1,32], index: 7, kind: input, shape index: {}]
  %s8 = inlined_call_operand.vmem [shape: bf16[13,32], index: 8, kind: input, shape index: {}]
  %s9 = inlined_call_operand.vmem [shape: f32[1,32], index: 9, kind: input, shape index: {}]
  %s10 = inlined_call_operand.vmem [shape: bf16[2,32,32], index: 10, kind: input, shape index: {}]
  %s11 = inlined_call_operand.vmem [shape: bf16[2,32,32], index: 11, kind: input, shape index: {}]
  %s12 = inlined_call_operand.vmem [shape: bf16[2,32,32], index: 12, kind: input, shape index: {}]
  %s13 = inlined_call_operand.vmem [shape: f32[2,1,32], index: 13, kind: input, shape index: {}]
  %s14 = inlined_call_operand.vmem [shape: f32[2,1,32], index: 14, kind: input, shape index: {}]
  %s15 = inlined_call_operand.vmem [shape: f32[2,1,32], index: 15, kind: input, shape index: {}]
  %s16 = inlined_call_operand.vmem [shape: f32[2,1,32], index: 16, kind: input, shape index: {}]
  %s17 = inlined_call_operand.vmem [shape: f32[2,1,32], index: 17, kind: input, shape index: {}]
  %s18 = inlined_call_operand.vmem [shape: bf16[2,32,32], index: 18, kind: input, shape index: {}]
  %s19 = inlined_call_operand.vmem [shape: f32[2,1,32], index: 19, kind: input, shape index: {}]
  %s20 = inlined_call_operand.vmem [shape: bf16[2,32,32], index: 20, kind: input, shape index: {}]
  %s21 = inlined_call_operand.vmem [shape: f32[2,1,32], index: 21, kind: input, shape index: {}]
  %s22 = inlined_call_operand.vmem [shape: bf16[32,32], index: 22, kind: input, shape index: {}]
  %s23 = inlined_call_operand.vmem [shape: bf16[32,32], index: 23, kind: input, shape index: {}]
  %s24 = inlined_call_operand.vmem [shape: f32[1,32], index: 24, kind: input, shape index: {}]
  %s25 = inlined_call_operand.vmem [shape: f32[1,32], index: 25, kind: input, shape index: {}]
  %s26 = inlined_call_operand.vmem [shape: bf16[8,32], index: 26, kind: input, shape index: {}]
  %s27 = inlined_call_operand.vmem [shape: f32[8,1], index: 27, kind: input, shape index: {}]
  %s28 = inlined_call_operand.hbm [shape: f32[8,256], index: 28, kind: output, shape index: {}]
  %s29 = sld [smem:[#allocation0]]
  $region145: #{tpu_custom_call.1} parent=0
    _
  %s31 = ssub.s32 1, %s29
  %s32 = scalar_select 0, %s31, %s29
  $region1: #{tpu_custom_call.1} parent=0
    #allocation2 [shape = 'u8[8192]{0}', space=vmem, size = 0x2000, scoped, tag = 'output window, operand 0']
    #allocation3 [shape = 's32[2]{0}', space=sflag, size = 0x8, scoped, tag = 'scoped memory for tpu_custom_call.1']
    %33 = vsyncpa [#allocation3], 0
    %s34 = scalar_lea.sflag [#allocation3], 1
    %35 = vsyncpa %s34, 0
    loop: start=0, step=1, limit=4
    $region2: #{tpu_custom_call.1} parent=1 // loop_pre_header
      _
    $region3: #{tpu_custom_call.1} parent=1 // loop_header
      %s37 = sphi 0, %s41
      %p38 = scmp.ge.s32.totalorder %s37, 4
      %s47 = sphi 0, %s49
      %s50 = sphi 0, %s47
      %s51 = sphi 0, %s50
      %s67 = sphi 0, %s51
      %s71 = sphi 0, %s71
      %s73 = sphi 0, %s71
      %s74 = sphi 0, %s73
      %s88 = sphi 0, %s74
      %s92 = sphi 0, %s92
      %s94 = sphi 0, %s92
      %s95 = sphi 0, %s94
      %s109 = sphi 0, %s95
      %s113 = sphi 0, %s113
      %s115 = sphi 0, %s113
      %s116 = sphi 0, %s115
      %s130 = sphi 0, %s116
      %s134 = sphi 0, %s134
      %s136 = sphi 0, %s134
      %s137 = sphi 0, %s136
      %s151 = sphi 0, %s137
      %s155 = sphi 0, %s155
      %s157 = sphi 0, %s155
      %s158 = sphi 0, %s157
      %s172 = sphi 0, %s158
      %s176 = sphi 0, %s176
      %s178 = sphi 0, %s176
      %s179 = sphi 0, %s178
      %s193 = sphi 0, %s179
      %s197 = sphi 0, %s197
      %s199 = sphi 0, %s197
      %s200 = sphi 0, %s199
      %s214 = sphi 0, %s200
      %s218 = sphi 0, %s218
      %s220 = sphi 0, %s218
      %s221 = sphi 0, %s220
      %s235 = sphi 0, %s221
      %s239 = sphi 0, %s239
      %s241 = sphi 0, %s239
      %s242 = sphi 0, %s241
      %s256 = sphi 0, %s242
      %s260 = sphi 0, %s260
      %s262 = sphi 0, %s260
      %s263 = sphi 0, %s262
      %s277 = sphi 0, %s263
      %s281 = sphi 0, %s281
      %s283 = sphi 0, %s281
      %s284 = sphi 0, %s283
      %s298 = sphi 0, %s284
      %s302 = sphi 0, %s302
      %s304 = sphi 0, %s302
      %s305 = sphi 0, %s304
      %s319 = sphi 0, %s305
      %s323 = sphi 0, %s323
      %s325 = sphi 0, %s323
      %s326 = sphi 0, %s325
      %s340 = sphi 0, %s326
      %s344 = sphi 0, %s344
      %s346 = sphi 0, %s344
      %s347 = sphi 0, %s346
      %s361 = sphi 0, %s347
      %s365 = sphi 0, %s365
      %s367 = sphi 0, %s365
      %s368 = sphi 0, %s367
      %s382 = sphi 0, %s368
      %s386 = sphi 0, %s386
      %s388 = sphi 0, %s386
      %s389 = sphi 0, %s388
      %s403 = sphi 0, %s389
      %s407 = sphi 0, %s407
      %s409 = sphi 0, %s407
      %s410 = sphi 0, %s409
      %s424 = sphi 0, %s410
      %s428 = sphi 0, %s428
      %s430 = sphi 0, %s428
      %s431 = sphi 0, %s430
      %s445 = sphi 0, %s431
      %s449 = sphi 0, %s449
      %s451 = sphi 0, %s449
      %s452 = sphi 0, %s451
      %s466 = sphi 0, %s452
      %s470 = sphi 0, %s470
      %s472 = sphi 0, %s470
      %s473 = sphi 0, %s472
      %s487 = sphi 0, %s473
      %s491 = sphi 0, %s491
      %s493 = sphi 0, %s491
      %s494 = sphi 0, %s493
      %s508 = sphi 0, %s494
      %s512 = sphi 0, %s512
      %s514 = sphi 0, %s512
      %s515 = sphi 0, %s514
      %s529 = sphi 0, %s515
      %s533 = sphi 0, %s533
      %s535 = sphi 0, %s533
      %s536 = sphi 0, %s535
      %s550 = sphi 0, %s536
      %s554 = sphi 0, %s554
      %s556 = sphi 0, %s554
      %s557 = sphi 0, %s556
      %s571 = sphi 0, %s557
      %s575 = sphi 0, %s575
      %s577 = sphi 0, %s575
      %s578 = sphi 0, %s577
      %s592 = sphi 0, %s578
      %s596 = sphi 0, %s596
      %s598 = sphi 0, %s596
      %s599 = sphi 0, %s598
      %s613 = sphi 0, %s599
      %s617 = sphi 0, %s617
      %s619 = sphi 0, %s617
      %s620 = sphi 0, %s619
      %s634 = sphi 0, %s620
      %s640 = sphi 0, %s642
      %s643 = sphi 0, %s640
      %s644 = sphi 0, %s643
      %s660 = sphi 0, %s644
    $region4: #{tpu_custom_call.1} parent=1 // loop_header_branch
      %40 = sbr.rel (%p38) target = $region8
    $region5: #{tpu_custom_call.1} parent=1 // loop_body
      %s42 = ssub.s32 %s37, 1
      %s43 = ssub.s32 %s37, 2
      %s44 = sadd.s32 %s37, 1
      %s45 = ssub.s32 %s37, %s44
      %p46 = scmp.eq.s32.totalorder %s45, 0
      %s48 = sadd.s32 %s47, 1
      %s49 = scalar_select %p46, %s47, %s48
      %p52 = pneg %p46
      %p53 = scmp.eq.s32.totalorder %s37, 1
      %p54 = por %p52, %p53
      %p55 = scmp.ne.s32.totalorder %s47, %s50
      %p56 = scmp.eq.s32.totalorder %s37, 0
      %p57 = por %p55, %p56
      %p58 = scmp.ne.s32.totalorder %s47, %s50
      %p59 = scmp.eq.s32.totalorder %s42, 1
      %p60 = por %p58, %p59
      %p61 = scmp.ne.s32.totalorder %s50, %s51
      %p62 = scmp.eq.s32.totalorder %s42, 0
      %p63 = por %p61, %p62
      %p64 = scmp.ne.s32.totalorder %s50, %s51
      %p65 = scmp.eq.s32.totalorder %s43, 1
      %p66 = por %p64, %p65
      %p68 = scmp.ne.s32.totalorder %s51, %s67
      %p69 = scmp.eq.s32.totalorder %s43, 0
      %p70 = por %p68, %p69
      %s72 = sadd.s32 %s71, 1
      %p75 = scmp.eq.s32.totalorder %s37, 1
      %p76 = scmp.ne.s32.totalorder %s71, %s73
      %p77 = scmp.eq.s32.totalorder %s37, 0
      %p78 = por %p76, %p77
      %p79 = scmp.ne.s32.totalorder %s71, %s73
      %p80 = scmp.eq.s32.totalorder %s42, 1
      %p81 = por %p79, %p80
      %p82 = scmp.ne.s32.totalorder %s73, %s74
      %p83 = scmp.eq.s32.totalorder %s42, 0
      %p84 = por %p82, %p83
      %p85 = scmp.ne.s32.totalorder %s73, %s74
      %p86 = scmp.eq.s32.totalorder %s43, 1
      %p87 = por %p85, %p86
      %p89 = scmp.ne.s32.totalorder %s74, %s88
      %p90 = scmp.eq.s32.totalorder %s43, 0
      %p91 = por %p89, %p90
      %s93 = sadd.s32 %s92, 1
      %p96 = scmp.eq.s32.totalorder %s37, 1
      %p97 = scmp.ne.s32.totalorder %s92, %s94
      %p98 = scmp.eq.s32.totalorder %s37, 0
      %p99 = por %p97, %p98
      %p100 = scmp.ne.s32.totalorder %s92, %s94
      %p101 = scmp.eq.s32.totalorder %s42, 1
      %p102 = por %p100, %p101
      %p103 = scmp.ne.s32.totalorder %s94, %s95
      %p104 = scmp.eq.s32.totalorder %s42, 0
      %p105 = por %p103, %p104
      %p106 = scmp.ne.s32.totalorder %s94, %s95
      %p107 = scmp.eq.s32.totalorder %s43, 1
      %p108 = por %p106, %p107
      %p110 = scmp.ne.s32.totalorder %s95, %s109
      %p111 = scmp.eq.s32.totalorder %s43, 0
      %p112 = por %p110, %p111
      %s114 = sadd.s32 %s113, 1
      %p117 = scmp.eq.s32.totalorder %s37, 1
      %p118 = scmp.ne.s32.totalorder %s113, %s115
      %p119 = scmp.eq.s32.totalorder %s37, 0
      %p120 = por %p118, %p119
      %p121 = scmp.ne.s32.totalorder %s113, %s115
      %p122 = scmp.eq.s32.totalorder %s42, 1
      %p123 = por %p121, %p122
      %p124 = scmp.ne.s32.totalorder %s115, %s116
      %p125 = scmp.eq.s32.totalorder %s42, 0
      %p126 = por %p124, %p125
      %p127 = scmp.ne.s32.totalorder %s115, %s116
      %p128 = scmp.eq.s32.totalorder %s43, 1
      %p129 = por %p127, %p128
      %p131 = scmp.ne.s32.totalorder %s116, %s130
      %p132 = scmp.eq.s32.totalorder %s43, 0
      %p133 = por %p131, %p132
      %s135 = sadd.s32 %s134, 1
      %p138 = scmp.eq.s32.totalorder %s37, 1
      %p139 = scmp.ne.s32.totalorder %s134, %s136
      %p140 = scmp.eq.s32.totalorder %s37, 0
      %p141 = por %p139, %p140
      %p142 = scmp.ne.s32.totalorder %s134, %s136
      %p143 = scmp.eq.s32.totalorder %s42, 1
      %p144 = por %p142, %p143
      %p145 = scmp.ne.s32.totalorder %s136, %s137
      %p146 = scmp.eq.s32.totalorder %s42, 0
      %p147 = por %p145, %p146
      %p148 = scmp.ne.s32.totalorder %s136, %s137
      %p149 = scmp.eq.s32.totalorder %s43, 1
      %p150 = por %p148, %p149
      %p152 = scmp.ne.s32.totalorder %s137, %s151
      %p153 = scmp.eq.s32.totalorder %s43, 0
      %p154 = por %p152, %p153
      %s156 = sadd.s32 %s155, 1
      %p159 = scmp.eq.s32.totalorder %s37, 1
      %p160 = scmp.ne.s32.totalorder %s155, %s157
      %p161 = scmp.eq.s32.totalorder %s37, 0
      %p162 = por %p160, %p161
      %p163 = scmp.ne.s32.totalorder %s155, %s157
      %p164 = scmp.eq.s32.totalorder %s42, 1
      %p165 = por %p163, %p164
      %p166 = scmp.ne.s32.totalorder %s157, %s158
      %p167 = scmp.eq.s32.totalorder %s42, 0
      %p168 = por %p166, %p167
      %p169 = scmp.ne.s32.totalorder %s157, %s158
      %p170 = scmp.eq.s32.totalorder %s43, 1
      %p171 = por %p169, %p170
      %p173 = scmp.ne.s32.totalorder %s158, %s172
      %p174 = scmp.eq.s32.totalorder %s43, 0
      %p175 = por %p173, %p174
      %s177 = sadd.s32 %s176, 1
      %p180 = scmp.eq.s32.totalorder %s37, 1
      %p181 = scmp.ne.s32.totalorder %s176, %s178
      %p182 = scmp.eq.s32.totalorder %s37, 0
      %p183 = por %p181, %p182
      %p184 = scmp.ne.s32.totalorder %s176, %s178
      %p185 = scmp.eq.s32.totalorder %s42, 1
      %p186 = por %p184, %p185
      %p187 = scmp.ne.s32.totalorder %s178, %s179
      %p188 = scmp.eq.s32.totalorder %s42, 0
      %p189 = por %p187, %p188
      %p190 = scmp.ne.s32.totalorder %s178, %s179
      %p191 = scmp.eq.s32.totalorder %s43, 1
      %p192 = por %p190, %p191
      %p194 = scmp.ne.s32.totalorder %s179, %s193
      %p195 = scmp.eq.s32.totalorder %s43, 0
      %p196 = por %p194, %p195
      %s198 = sadd.s32 %s197, 1
      %p201 = scmp.eq.s32.totalorder %s37, 1
      %p202 = scmp.ne.s32.totalorder %s197, %s199
      %p203 = scmp.eq.s32.totalorder %s37, 0
      %p204 = por %p202, %p203
      %p205 = scmp.ne.s32.totalorder %s197, %s199
      %p206 = scmp.eq.s32.totalorder %s42, 1
      %p207 = por %p205, %p206
      %p208 = scmp.ne.s32.totalorder %s199, %s200
      %p209 = scmp.eq.s32.totalorder %s42, 0
      %p210 = por %p208, %p209
      %p211 = scmp.ne.s32.totalorder %s199, %s200
      %p212 = scmp.eq.s32.totalorder %s43, 1
      %p213 = por %p211, %p212
      %p215 = scmp.ne.s32.totalorder %s200, %s214
      %p216 = scmp.eq.s32.totalorder %s43, 0
      %p217 = por %p215, %p216
      %s219 = sadd.s32 %s218, 1
      %p222 = scmp.eq.s32.totalorder %s37, 1
      %p223 = scmp.ne.s32.totalorder %s218, %s220
      %p224 = scmp.eq.s32.totalorder %s37, 0
      %p225 = por %p223, %p224
      %p226 = scmp.ne.s32.totalorder %s218, %s220
      %p227 = scmp.eq.s32.totalorder %s42, 1
      %p228 = por %p226, %p227
      %p229 = scmp.ne.s32.totalorder %s220, %s221
      %p230 = scmp.eq.s32.totalorder %s42, 0
      %p231 = por %p229, %p230
      %p232 = scmp.ne.s32.totalorder %s220, %s221
      %p233 = scmp.eq.s32.totalorder %s43, 1
      %p234 = por %p232, %p233
      %p236 = scmp.ne.s32.totalorder %s221, %s235
      %p237 = scmp.eq.s32.totalorder %s43, 0
      %p238 = por %p236, %p237
      %s240 = sadd.s32 %s239, 1
      %p243 = scmp.eq.s32.totalorder %s37, 1
      %p244 = scmp.ne.s32.totalorder %s239, %s241
      %p245 = scmp.eq.s32.totalorder %s37, 0
      %p246 = por %p244, %p245
      %p247 = scmp.ne.s32.totalorder %s239, %s241
      %p248 = scmp.eq.s32.totalorder %s42, 1
      %p249 = por %p247, %p248
      %p250 = scmp.ne.s32.totalorder %s241, %s242
      %p251 = scmp.eq.s32.totalorder %s42, 0
      %p252 = por %p250, %p251
      %p253 = scmp.ne.s32.totalorder %s241, %s242
      %p254 = scmp.eq.s32.totalorder %s43, 1
      %p255 = por %p253, %p254
      %p257 = scmp.ne.s32.totalorder %s242, %s256
      %p258 = scmp.eq.s32.totalorder %s43, 0
      %p259 = por %p257, %p258
      %s261 = sadd.s32 %s260, 1
      %p264 = scmp.eq.s32.totalorder %s37, 1
      %p265 = scmp.ne.s32.totalorder %s260, %s262
      %p266 = scmp.eq.s32.totalorder %s37, 0
      %p267 = por %p265, %p266
      %p268 = scmp.ne.s32.totalorder %s260, %s262
      %p269 = scmp.eq.s32.totalorder %s42, 1
      %p270 = por %p268, %p269
      %p271 = scmp.ne.s32.totalorder %s262, %s263
      %p272 = scmp.eq.s32.totalorder %s42, 0
      %p273 = por %p271, %p272
      %p274 = scmp.ne.s32.totalorder %s262, %s263
      %p275 = scmp.eq.s32.totalorder %s43, 1
      %p276 = por %p274, %p275
      %p278 = scmp.ne.s32.totalorder %s263, %s277
      %p279 = scmp.eq.s32.totalorder %s43, 0
      %p280 = por %p278, %p279
      %s282 = sadd.s32 %s281, 1
      %p285 = scmp.eq.s32.totalorder %s37, 1
      %p286 = scmp.ne.s32.totalorder %s281, %s283
      %p287 = scmp.eq.s32.totalorder %s37, 0
      %p288 = por %p286, %p287
      %p289 = scmp.ne.s32.totalorder %s281, %s283
      %p290 = scmp.eq.s32.totalorder %s42, 1
      %p291 = por %p289, %p290
      %p292 = scmp.ne.s32.totalorder %s283, %s284
      %p293 = scmp.eq.s32.totalorder %s42, 0
      %p294 = por %p292, %p293
      %p295 = scmp.ne.s32.totalorder %s283, %s284
      %p296 = scmp.eq.s32.totalorder %s43, 1
      %p297 = por %p295, %p296
      %p299 = scmp.ne.s32.totalorder %s284, %s298
      %p300 = scmp.eq.s32.totalorder %s43, 0
      %p301 = por %p299, %p300
      %s303 = sadd.s32 %s302, 1
      %p306 = scmp.eq.s32.totalorder %s37, 1
      %p307 = scmp.ne.s32.totalorder %s302, %s304
      %p308 = scmp.eq.s32.totalorder %s37, 0
      %p309 = por %p307, %p308
      %p310 = scmp.ne.s32.totalorder %s302, %s304
      %p311 = scmp.eq.s32.totalorder %s42, 1
      %p312 = por %p310, %p311
      %p313 = scmp.ne.s32.totalorder %s304, %s305
      %p314 = scmp.eq.s32.totalorder %s42, 0
      %p315 = por %p313, %p314
      %p316 = scmp.ne.s32.totalorder %s304, %s305
      %p317 = scmp.eq.s32.totalorder %s43, 1
      %p318 = por %p316, %p317
      %p320 = scmp.ne.s32.totalorder %s305, %s319
      %p321 = scmp.eq.s32.totalorder %s43, 0
      %p322 = por %p320, %p321
      %s324 = sadd.s32 %s323, 1
      %p327 = scmp.eq.s32.totalorder %s37, 1
      %p328 = scmp.ne.s32.totalorder %s323, %s325
      %p329 = scmp.eq.s32.totalorder %s37, 0
      %p330 = por %p328, %p329
      %p331 = scmp.ne.s32.totalorder %s323, %s325
      %p332 = scmp.eq.s32.totalorder %s42, 1
      %p333 = por %p331, %p332
      %p334 = scmp.ne.s32.totalorder %s325, %s326
      %p335 = scmp.eq.s32.totalorder %s42, 0
      %p336 = por %p334, %p335
      %p337 = scmp.ne.s32.totalorder %s325, %s326
      %p338 = scmp.eq.s32.totalorder %s43, 1
      %p339 = por %p337, %p338
      %p341 = scmp.ne.s32.totalorder %s326, %s340
      %p342 = scmp.eq.s32.totalorder %s43, 0
      %p343 = por %p341, %p342
      %s345 = sadd.s32 %s344, 1
      %p348 = scmp.eq.s32.totalorder %s37, 1
      %p349 = scmp.ne.s32.totalorder %s344, %s346
      %p350 = scmp.eq.s32.totalorder %s37, 0
      %p351 = por %p349, %p350
      %p352 = scmp.ne.s32.totalorder %s344, %s346
      %p353 = scmp.eq.s32.totalorder %s42, 1
      %p354 = por %p352, %p353
      %p355 = scmp.ne.s32.totalorder %s346, %s347
      %p356 = scmp.eq.s32.totalorder %s42, 0
      %p357 = por %p355, %p356
      %p358 = scmp.ne.s32.totalorder %s346, %s347
      %p359 = scmp.eq.s32.totalorder %s43, 1
      %p360 = por %p358, %p359
      %p362 = scmp.ne.s32.totalorder %s347, %s361
      %p363 = scmp.eq.s32.totalorder %s43, 0
      %p364 = por %p362, %p363
      %s366 = sadd.s32 %s365, 1
      %p369 = scmp.eq.s32.totalorder %s37, 1
      %p370 = scmp.ne.s32.totalorder %s365, %s367
      %p371 = scmp.eq.s32.totalorder %s37, 0
      %p372 = por %p370, %p371
      %p373 = scmp.ne.s32.totalorder %s365, %s367
      %p374 = scmp.eq.s32.totalorder %s42, 1
      %p375 = por %p373, %p374
      %p376 = scmp.ne.s32.totalorder %s367, %s368
      %p377 = scmp.eq.s32.totalorder %s42, 0
      %p378 = por %p376, %p377
      %p379 = scmp.ne.s32.totalorder %s367, %s368
      %p380 = scmp.eq.s32.totalorder %s43, 1
      %p381 = por %p379, %p380
      %p383 = scmp.ne.s32.totalorder %s368, %s382
      %p384 = scmp.eq.s32.totalorder %s43, 0
      %p385 = por %p383, %p384
      %s387 = sadd.s32 %s386, 1
      %p390 = scmp.eq.s32.totalorder %s37, 1
      %p391 = scmp.ne.s32.totalorder %s386, %s388
      %p392 = scmp.eq.s32.totalorder %s37, 0
      %p393 = por %p391, %p392
      %p394 = scmp.ne.s32.totalorder %s386, %s388
      %p395 = scmp.eq.s32.totalorder %s42, 1
      %p396 = por %p394, %p395
      %p397 = scmp.ne.s32.totalorder %s388, %s389
      %p398 = scmp.eq.s32.totalorder %s42, 0
      %p399 = por %p397, %p398
      %p400 = scmp.ne.s32.totalorder %s388, %s389
      %p401 = scmp.eq.s32.totalorder %s43, 1
      %p402 = por %p400, %p401
      %p404 = scmp.ne.s32.totalorder %s389, %s403
      %p405 = scmp.eq.s32.totalorder %s43, 0
      %p406 = por %p404, %p405
      %s408 = sadd.s32 %s407, 1
      %p411 = scmp.eq.s32.totalorder %s37, 1
      %p412 = scmp.ne.s32.totalorder %s407, %s409
      %p413 = scmp.eq.s32.totalorder %s37, 0
      %p414 = por %p412, %p413
      %p415 = scmp.ne.s32.totalorder %s407, %s409
      %p416 = scmp.eq.s32.totalorder %s42, 1
      %p417 = por %p415, %p416
      %p418 = scmp.ne.s32.totalorder %s409, %s410
      %p419 = scmp.eq.s32.totalorder %s42, 0
      %p420 = por %p418, %p419
      %p421 = scmp.ne.s32.totalorder %s409, %s410
      %p422 = scmp.eq.s32.totalorder %s43, 1
      %p423 = por %p421, %p422
      %p425 = scmp.ne.s32.totalorder %s410, %s424
      %p426 = scmp.eq.s32.totalorder %s43, 0
      %p427 = por %p425, %p426
      %s429 = sadd.s32 %s428, 1
      %p432 = scmp.eq.s32.totalorder %s37, 1
      %p433 = scmp.ne.s32.totalorder %s428, %s430
      %p434 = scmp.eq.s32.totalorder %s37, 0
      %p435 = por %p433, %p434
      %p436 = scmp.ne.s32.totalorder %s428, %s430
      %p437 = scmp.eq.s32.totalorder %s42, 1
      %p438 = por %p436, %p437
      %p439 = scmp.ne.s32.totalorder %s430, %s431
      %p440 = scmp.eq.s32.totalorder %s42, 0
      %p441 = por %p439, %p440
      %p442 = scmp.ne.s32.totalorder %s430, %s431
      %p443 = scmp.eq.s32.totalorder %s43, 1
      %p444 = por %p442, %p443
      %p446 = scmp.ne.s32.totalorder %s431, %s445
      %p447 = scmp.eq.s32.totalorder %s43, 0
      %p448 = por %p446, %p447
      %s450 = sadd.s32 %s449, 1
      %p453 = scmp.eq.s32.totalorder %s37, 1
      %p454 = scmp.ne.s32.totalorder %s449, %s451
      %p455 = scmp.eq.s32.totalorder %s37, 0
      %p456 = por %p454, %p455
      %p457 = scmp.ne.s32.totalorder %s449, %s451
      %p458 = scmp.eq.s32.totalorder %s42, 1
      %p459 = por %p457, %p458
      %p460 = scmp.ne.s32.totalorder %s451, %s452
      %p461 = scmp.eq.s32.totalorder %s42, 0
      %p462 = por %p460, %p461
      %p463 = scmp.ne.s32.totalorder %s451, %s452
      %p464 = scmp.eq.s32.totalorder %s43, 1
      %p465 = por %p463, %p464
      %p467 = scmp.ne.s32.totalorder %s452, %s466
      %p468 = scmp.eq.s32.totalorder %s43, 0
      %p469 = por %p467, %p468
      %s471 = sadd.s32 %s470, 1
      %p474 = scmp.eq.s32.totalorder %s37, 1
      %p475 = scmp.ne.s32.totalorder %s470, %s472
      %p476 = scmp.eq.s32.totalorder %s37, 0
      %p477 = por %p475, %p476
      %p478 = scmp.ne.s32.totalorder %s470, %s472
      %p479 = scmp.eq.s32.totalorder %s42, 1
      %p480 = por %p478, %p479
      %p481 = scmp.ne.s32.totalorder %s472, %s473
      %p482 = scmp.eq.s32.totalorder %s42, 0
      %p483 = por %p481, %p482
      %p484 = scmp.ne.s32.totalorder %s472, %s473
      %p485 = scmp.eq.s32.totalorder %s43, 1
      %p486 = por %p484, %p485
      %p488 = scmp.ne.s32.totalorder %s473, %s487
      %p489 = scmp.eq.s32.totalorder %s43, 0
      %p490 = por %p488, %p489
      %s492 = sadd.s32 %s491, 1
      %p495 = scmp.eq.s32.totalorder %s37, 1
      %p496 = scmp.ne.s32.totalorder %s491, %s493
      %p497 = scmp.eq.s32.totalorder %s37, 0
      %p498 = por %p496, %p497
      %p499 = scmp.ne.s32.totalorder %s491, %s493
      %p500 = scmp.eq.s32.totalorder %s42, 1
      %p501 = por %p499, %p500
      %p502 = scmp.ne.s32.totalorder %s493, %s494
      %p503 = scmp.eq.s32.totalorder %s42, 0
      %p504 = por %p502, %p503
      %p505 = scmp.ne.s32.totalorder %s493, %s494
      %p506 = scmp.eq.s32.totalorder %s43, 1
      %p507 = por %p505, %p506
      %p509 = scmp.ne.s32.totalorder %s494, %s508
      %p510 = scmp.eq.s32.totalorder %s43, 0
      %p511 = por %p509, %p510
      %s513 = sadd.s32 %s512, 1
      %p516 = scmp.eq.s32.totalorder %s37, 1
      %p517 = scmp.ne.s32.totalorder %s512, %s514
      %p518 = scmp.eq.s32.totalorder %s37, 0
      %p519 = por %p517, %p518
      %p520 = scmp.ne.s32.totalorder %s512, %s514
      %p521 = scmp.eq.s32.totalorder %s42, 1
      %p522 = por %p520, %p521
      %p523 = scmp.ne.s32.totalorder %s514, %s515
      %p524 = scmp.eq.s32.totalorder %s42, 0
      %p525 = por %p523, %p524
      %p526 = scmp.ne.s32.totalorder %s514, %s515
      %p527 = scmp.eq.s32.totalorder %s43, 1
      %p528 = por %p526, %p527
      %p530 = scmp.ne.s32.totalorder %s515, %s529
      %p531 = scmp.eq.s32.totalorder %s43, 0
      %p532 = por %p530, %p531
      %s534 = sadd.s32 %s533, 1
      %p537 = scmp.eq.s32.totalorder %s37, 1
      %p538 = scmp.ne.s32.totalorder %s533, %s535
      %p539 = scmp.eq.s32.totalorder %s37, 0
      %p540 = por %p538, %p539
      %p541 = scmp.ne.s32.totalorder %s533, %s535
      %p542 = scmp.eq.s32.totalorder %s42, 1
      %p543 = por %p541, %p542
      %p544 = scmp.ne.s32.totalorder %s535, %s536
      %p545 = scmp.eq.s32.totalorder %s42, 0
      %p546 = por %p544, %p545
      %p547 = scmp.ne.s32.totalorder %s535, %s536
      %p548 = scmp.eq.s32.totalorder %s43, 1
      %p549 = por %p547, %p548
      %p551 = scmp.ne.s32.totalorder %s536, %s550
      %p552 = scmp.eq.s32.totalorder %s43, 0
      %p553 = por %p551, %p552
      %s555 = sadd.s32 %s554, 1
      %p558 = scmp.eq.s32.totalorder %s37, 1
      %p559 = scmp.ne.s32.totalorder %s554, %s556
      %p560 = scmp.eq.s32.totalorder %s37, 0
      %p561 = por %p559, %p560
      %p562 = scmp.ne.s32.totalorder %s554, %s556
      %p563 = scmp.eq.s32.totalorder %s42, 1
      %p564 = por %p562, %p563
      %p565 = scmp.ne.s32.totalorder %s556, %s557
      %p566 = scmp.eq.s32.totalorder %s42, 0
      %p567 = por %p565, %p566
      %p568 = scmp.ne.s32.totalorder %s556, %s557
      %p569 = scmp.eq.s32.totalorder %s43, 1
      %p570 = por %p568, %p569
      %p572 = scmp.ne.s32.totalorder %s557, %s571
      %p573 = scmp.eq.s32.totalorder %s43, 0
      %p574 = por %p572, %p573
      %s576 = sadd.s32 %s575, 1
      %p579 = scmp.eq.s32.totalorder %s37, 1
      %p580 = scmp.ne.s32.totalorder %s575, %s577
      %p581 = scmp.eq.s32.totalorder %s37, 0
      %p582 = por %p580, %p581
      %p583 = scmp.ne.s32.totalorder %s575, %s577
      %p584 = scmp.eq.s32.totalorder %s42, 1
      %p585 = por %p583, %p584
      %p586 = scmp.ne.s32.totalorder %s577, %s578
      %p587 = scmp.eq.s32.totalorder %s42, 0
      %p588 = por %p586, %p587
      %p589 = scmp.ne.s32.totalorder %s577, %s578
      %p590 = scmp.eq.s32.totalorder %s43, 1
      %p591 = por %p589, %p590
      %p593 = scmp.ne.s32.totalorder %s578, %s592
      %p594 = scmp.eq.s32.totalorder %s43, 0
      %p595 = por %p593, %p594
      %s597 = sadd.s32 %s596, 1
      %p600 = scmp.eq.s32.totalorder %s37, 1
      %p601 = scmp.ne.s32.totalorder %s596, %s598
      %p602 = scmp.eq.s32.totalorder %s37, 0
      %p603 = por %p601, %p602
      %p604 = scmp.ne.s32.totalorder %s596, %s598
      %p605 = scmp.eq.s32.totalorder %s42, 1
      %p606 = por %p604, %p605
      %p607 = scmp.ne.s32.totalorder %s598, %s599
      %p608 = scmp.eq.s32.totalorder %s42, 0
      %p609 = por %p607, %p608
      %p610 = scmp.ne.s32.totalorder %s598, %s599
      %p611 = scmp.eq.s32.totalorder %s43, 1
      %p612 = por %p610, %p611
      %p614 = scmp.ne.s32.totalorder %s599, %s613
      %p615 = scmp.eq.s32.totalorder %s43, 0
      %p616 = por %p614, %p615
      %s618 = sadd.s32 %s617, 1
      %p621 = scmp.eq.s32.totalorder %s37, 1
      %p622 = scmp.ne.s32.totalorder %s617, %s619
      %p623 = scmp.eq.s32.totalorder %s37, 0
      %p624 = por %p622, %p623
      %p625 = scmp.ne.s32.totalorder %s617, %s619
      %p626 = scmp.eq.s32.totalorder %s42, 1
      %p627 = por %p625, %p626
      %p628 = scmp.ne.s32.totalorder %s619, %s620
      %p629 = scmp.eq.s32.totalorder %s42, 0
      %p630 = por %p628, %p629
      %p631 = scmp.ne.s32.totalorder %s619, %s620
      %p632 = scmp.eq.s32.totalorder %s43, 1
      %p633 = por %p631, %p632
      %p635 = scmp.ne.s32.totalorder %s620, %s634
      %p636 = scmp.eq.s32.totalorder %s43, 0
      %p637 = por %p635, %p636
      %s638 = ssub.s32 %s37, %s44
      %p639 = scmp.eq.s32.totalorder %s638, 0
      %s641 = sadd.s32 %s640, 1
      %s642 = scalar_select %p639, %s640, %s641
      %p645 = pneg %p639
      %p646 = scmp.eq.s32.totalorder %s37, 1
      %p647 = por %p645, %p646
      %p648 = scmp.ne.s32.totalorder %s640, %s643
      %p649 = scmp.eq.s32.totalorder %s37, 0
      %p650 = por %p648, %p649
      %p651 = scmp.ne.s32.totalorder %s640, %s643
      %p652 = scmp.eq.s32.totalorder %s42, 1
      %p653 = por %p651, %p652
      %p654 = scmp.ne.s32.totalorder %s643, %s644
      %p655 = scmp.eq.s32.totalorder %s42, 0
      %p656 = por %p654, %p655
      %p657 = scmp.ne.s32.totalorder %s643, %s644
      %p658 = scmp.eq.s32.totalorder %s43, 1
      %p659 = por %p657, %p658
      %p661 = scmp.ne.s32.totalorder %s644, %s660
      %p662 = scmp.eq.s32.totalorder %s43, 0
      %p663 = por %p661, %p662
      %p664 = scmp.le.s32.totalorder 1, %s37
      %p665 = scmp.lt.s32.totalorder %s37, 3
      %p666 = pnand %p664, %p665
      %p667 = pneg %p666
      // Predicated region
      $region9: #{tpu_custom_call.1} parent=5 // pred_check
        _
      $region10: #{tpu_custom_call.1} parent=5 // pred_check_branch
        %669 = sbr.rel (%p666) target = $region12
      $region11: #{tpu_custom_call.1} parent=5 // pred_region
        %s670 = ssub.s32 %s37, 1
        // Predicated region
        $region13: #{tpu_custom_call.1} parent=11 // pred_check
          %p671 = pneg %p84
        $region14: #{tpu_custom_call.1} parent=11 // pred_check_branch
          %673 = sbr.rel (%p671) target = $region16
        $region15: #{tpu_custom_call.1} parent=11 // pred_region
          _
        $region16: #{tpu_custom_call.1} parent=11 // pred_fallthru
          _
        // Predicated region
        $region17: #{tpu_custom_call.1} parent=11 // pred_check
          %p674 = pneg %p105
        $region18: #{tpu_custom_call.1} parent=11 // pred_check_branch
          %676 = sbr.rel (%p674) target = $region20
        $region19: #{tpu_custom_call.1} parent=11 // pred_region
          _
        $region20: #{tpu_custom_call.1} parent=11 // pred_fallthru
          _
        // Predicated region
        $region21: #{tpu_custom_call.1} parent=11 // pred_check
          %p677 = pneg %p126
        $region22: #{tpu_custom_call.1} parent=11 // pred_check_branch
          %679 = sbr.rel (%p677) target = $region24
        $region23: #{tpu_custom_call.1} parent=11 // pred_region
          _
        $region24: #{tpu_custom_call.1} parent=11 // pred_fallthru
          _
        // Predicated region
        $region25: #{tpu_custom_call.1} parent=11 // pred_check
          %p680 = pneg %p147
        $region26: #{tpu_custom_call.1} parent=11 // pred_check_branch
          %682 = sbr.rel (%p680) target = $region28
        $region27: #{tpu_custom_call.1} parent=11 // pred_region
          _
        $region28: #{tpu_custom_call.1} parent=11 // pred_fallthru
          _
        // Predicated region
        $region29: #{tpu_custom_call.1} parent=11 // pred_check
          %p683 = pneg %p168
        $region30: #{tpu_custom_call.1} parent=11 // pred_check_branch
          %685 = sbr.rel (%p683) target = $region32
        $region31: #{tpu_custom_call.1} parent=11 // pred_region
          _
        $region32: #{tpu_custom_call.1} parent=11 // pred_fallthru
          _
        // Predicated region
        $region33: #{tpu_custom_call.1} parent=11 // pred_check
          %p686 = pneg %p189
        $region34: #{tpu_custom_call.1} parent=11 // pred_check_branch
          %688 = sbr.rel (%p686) target = $region36
        $region35: #{tpu_custom_call.1} parent=11 // pred_region
          _
        $region36: #{tpu_custom_call.1} parent=11 // pred_fallthru
          _
        // Predicated region
        $region37: #{tpu_custom_call.1} parent=11 // pred_check
          %p689 = pneg %p210
        $region38: #{tpu_custom_call.1} parent=11 // pred_check_branch
          %691 = sbr.rel (%p689) target = $region40
        $region39: #{tpu_custom_call.1} parent=11 // pred_region
          _
        $region40: #{tpu_custom_call.1} parent=11 // pred_fallthru
          _
        // Predicated region
        $region41: #{tpu_custom_call.1} parent=11 // pred_check
          %p692 = pneg %p231
        $region42: #{tpu_custom_call.1} parent=11 // pred_check_branch
          %694 = sbr.rel (%p692) target = $region44
        $region43: #{tpu_custom_call.1} parent=11 // pred_region
          _
        $region44: #{tpu_custom_call.1} parent=11 // pred_fallthru
          _
        // Predicated region
        $region45: #{tpu_custom_call.1} parent=11 // pred_check
          %p695 = pneg %p252
        $region46: #{tpu_custom_call.1} parent=11 // pred_check_branch
          %697 = sbr.rel (%p695) target = $region48
        $region47: #{tpu_custom_call.1} parent=11 // pred_region
          _
        $region48: #{tpu_custom_call.1} parent=11 // pred_fallthru
          _
        // Predicated region
        $region49: #{tpu_custom_call.1} parent=11 // pred_check
          %p698 = pneg %p273
        $region50: #{tpu_custom_call.1} parent=11 // pred_check_branch
          %700 = sbr.rel (%p698) target = $region52
        $region51: #{tpu_custom_call.1} parent=11 // pred_region
          _
        $region52: #{tpu_custom_call.1} parent=11 // pred_fallthru
          _
        // Predicated region
        $region53: #{tpu_custom_call.1} parent=11 // pred_check
          %p701 = pneg %p294
        $region54: #{tpu_custom_call.1} parent=11 // pred_check_branch
          %703 = sbr.rel (%p701) target = $region56
        $region55: #{tpu_custom_call.1} parent=11 // pred_region
          _
        $region56: #{tpu_custom_call.1} parent=11 // pred_fallthru
          _
        // Predicated region
        $region57: #{tpu_custom_call.1} parent=11 // pred_check
          %p704 = pneg %p315
        $region58: #{tpu_custom_call.1} parent=11 // pred_check_branch
          %706 = sbr.rel (%p704) target = $region60
        $region59: #{tpu_custom_call.1} parent=11 // pred_region
          _
        $region60: #{tpu_custom_call.1} parent=11 // pred_fallthru
          _
        // Predicated region
        $region61: #{tpu_custom_call.1} parent=11 // pred_check
          %p707 = pneg %p336
        $region62: #{tpu_custom_call.1} parent=11 // pred_check_branch
          %709 = sbr.rel (%p707) target = $region64
        $region63: #{tpu_custom_call.1} parent=11 // pred_region
          _
        $region64: #{tpu_custom_call.1} parent=11 // pred_fallthru
          _
        // Predicated region
        $region65: #{tpu_custom_call.1} parent=11 // pred_check
          %p710 = pneg %p357
        $region66: #{tpu_custom_call.1} parent=11 // pred_check_branch
          %712 = sbr.rel (%p710) target = $region68
        $region67: #{tpu_custom_call.1} parent=11 // pred_region
          _
        $region68: #{tpu_custom_call.1} parent=11 // pred_fallthru
          _
        // Predicated region
        $region69: #{tpu_custom_call.1} parent=11 // pred_check
          %p713 = pneg %p378
        $region70: #{tpu_custom_call.1} parent=11 // pred_check_branch
          %715 = sbr.rel (%p713) target = $region72
        $region71: #{tpu_custom_call.1} parent=11 // pred_region
          _
        $region72: #{tpu_custom_call.1} parent=11 // pred_fallthru
          _
        // Predicated region
        $region73: #{tpu_custom_call.1} parent=11 // pred_check
          %p716 = pneg %p399
        $region74: #{tpu_custom_call.1} parent=11 // pred_check_branch
          %718 = sbr.rel (%p716) target = $region76
        $region75: #{tpu_custom_call.1} parent=11 // pred_region
          _
        $region76: #{tpu_custom_call.1} parent=11 // pred_fallthru
          _
        // Predicated region
        $region77: #{tpu_custom_call.1} parent=11 // pred_check
          %p719 = pneg %p420
        $region78: #{tpu_custom_call.1} parent=11 // pred_check_branch
          %721 = sbr.rel (%p719) target = $region80
        $region79: #{tpu_custom_call.1} parent=11 // pred_region
          _
        $region80: #{tpu_custom_call.1} parent=11 // pred_fallthru
          _
        // Predicated region
        $region81: #{tpu_custom_call.1} parent=11 // pred_check
          %p722 = pneg %p441
        $region82: #{tpu_custom_call.1} parent=11 // pred_check_branch
          %724 = sbr.rel (%p722) target = $region84
        $region83: #{tpu_custom_call.1} parent=11 // pred_region
          _
        $region84: #{tpu_custom_call.1} parent=11 // pred_fallthru
          _
        // Predicated region
        $region85: #{tpu_custom_call.1} parent=11 // pred_check
          %p725 = pneg %p462
        $region86: #{tpu_custom_call.1} parent=11 // pred_check_branch
          %727 = sbr.rel (%p725) target = $region88
        $region87: #{tpu_custom_call.1} parent=11 // pred_region
          _
        $region88: #{tpu_custom_call.1} parent=11 // pred_fallthru
          _
        // Predicated region
        $region89: #{tpu_custom_call.1} parent=11 // pred_check
          %p728 = pneg %p483
        $region90: #{tpu_custom_call.1} parent=11 // pred_check_branch
          %730 = sbr.rel (%p728) target = $region92
        $region91: #{tpu_custom_call.1} parent=11 // pred_region
          _
        $region92: #{tpu_custom_call.1} parent=11 // pred_fallthru
          _
        // Predicated region
        $region93: #{tpu_custom_call.1} parent=11 // pred_check
          %p731 = pneg %p504
        $region94: #{tpu_custom_call.1} parent=11 // pred_check_branch
          %733 = sbr.rel (%p731) target = $region96
        $region95: #{tpu_custom_call.1} parent=11 // pred_region
          _
        $region96: #{tpu_custom_call.1} parent=11 // pred_fallthru
          _
        // Predicated region
        $region97: #{tpu_custom_call.1} parent=11 // pred_check
          %p734 = pneg %p525
        $region98: #{tpu_custom_call.1} parent=11 // pred_check_branch
          %736 = sbr.rel (%p734) target = $region100
        $region99: #{tpu_custom_call.1} parent=11 // pred_region
          _
        $region100: #{tpu_custom_call.1} parent=11 // pred_fallthru
          _
        // Predicated region
        $region101: #{tpu_custom_call.1} parent=11 // pred_check
          %p737 = pneg %p546
        $region102: #{tpu_custom_call.1} parent=11 // pred_check_branch
          %739 = sbr.rel (%p737) target = $region104
        $region103: #{tpu_custom_call.1} parent=11 // pred_region
          _
        $region104: #{tpu_custom_call.1} parent=11 // pred_fallthru
          _
        // Predicated region
        $region105: #{tpu_custom_call.1} parent=11 // pred_check
          %p740 = pneg %p567
        $region106: #{tpu_custom_call.1} parent=11 // pred_check_branch
          %742 = sbr.rel (%p740) target = $region108
        $region107: #{tpu_custom_call.1} parent=11 // pred_region
          _
        $region108: #{tpu_custom_call.1} parent=11 // pred_fallthru
          _
        // Predicated region
        $region109: #{tpu_custom_call.1} parent=11 // pred_check
          %p743 = pneg %p588
        $region110: #{tpu_custom_call.1} parent=11 // pred_check_branch
          %745 = sbr.rel (%p743) target = $region112
        $region111: #{tpu_custom_call.1} parent=11 // pred_region
          _
        $region112: #{tpu_custom_call.1} parent=11 // pred_fallthru
          _
        // Predicated region
        $region113: #{tpu_custom_call.1} parent=11 // pred_check
          %p746 = pneg %p609
        $region114: #{tpu_custom_call.1} parent=11 // pred_check_branch
          %748 = sbr.rel (%p746) target = $region116
        $region115: #{tpu_custom_call.1} parent=11 // pred_region
          _
        $region116: #{tpu_custom_call.1} parent=11 // pred_fallthru
          _
        // Predicated region
        $region117: #{tpu_custom_call.1} parent=11 // pred_check
          %p749 = pneg %p630
        $region118: #{tpu_custom_call.1} parent=11 // pred_check_branch
          %751 = sbr.rel (%p749) target = $region120
        $region119: #{tpu_custom_call.1} parent=11 // pred_region
          _
        $region120: #{tpu_custom_call.1} parent=11 // pred_fallthru
          _
      $region12: #{tpu_custom_call.1} parent=5 // pred_fallthru
        _
      %p752 = scmp.lt.s32.totalorder %s37, 2
      // Predicated region
      $region121: #{tpu_custom_call.1} parent=5 // pred_check
        %p753 = pneg %p752
      $region122: #{tpu_custom_call.1} parent=5 // pred_check_branch
        %755 = sbr.rel (%p753) target = $region124
      $region123: #{tpu_custom_call.1} parent=5 // pred_region
        // Predicated region
        $region125: #{tpu_custom_call.1} parent=123 // pred_check
          %p756 = pneg %p57
        $region126: #{tpu_custom_call.1} parent=123 // pred_check_branch
          %758 = sbr.rel (%p756) target = $region128
        $region127: #{tpu_custom_call.1} parent=123 // pred_region
          %s759 = smul.u32 16, %s37
          %p760 = scmp.lt.s32.totalorder %s759, 31
          %s761 = scalar_select %p760, %s759, 31
          %s762 = smul.addr %s761, 8
          %s763 = scalar_lea.vmem %s0, %s762
          %s764 = smul.u32 16, %s37
        $region128: #{tpu_custom_call.1} parent=123 // pred_fallthru
          _
      $region124: #{tpu_custom_call.1} parent=5 // pred_fallthru
        _
      %p765 = scmp.le.s32.totalorder 1, %s37
      %p766 = scmp.lt.s32.totalorder %s37, 3
      %p767 = pnand %p765, %p766
      %p768 = pneg %p767
      // Predicated region
      $region129: #{tpu_custom_call.1} parent=5 // pred_check
        _
      $region130: #{tpu_custom_call.1} parent=5 // pred_check_branch
        %770 = sbr.rel (%p767) target = $region132
      $region131: #{tpu_custom_call.1} parent=5 // pred_region
        %s771 = ssub.s32 %s37, 1
        %s772 = smul.u32 16, %s42
        %p773 = scmp.lt.s32.totalorder %s772, 31
        %s774 = scalar_select %p773, %s772, 31
        %s775 = smul.addr %s774, 8
        %s776 = scalar_lea.vmem %s0, %s775
        %p777 = pneg %p63
        %p778 = pneg %p60
        %p779 = pneg %p84
        %p780 = pneg %p81
        %p781 = pneg %p105
        %p782 = pneg %p102
        %p783 = pneg %p126
        %p784 = pneg %p123
        %p785 = pneg %p147
        %p786 = pneg %p144
        %p787 = pneg %p168
        %p788 = pneg %p165
        %p789 = pneg %p189
        %p790 = pneg %p186
        %p791 = pneg %p210
        %p792 = pneg %p207
        %p793 = pneg %p231
        %p794 = pneg %p228
        %p795 = pneg %p252
        %p796 = pneg %p249
        %p797 = pneg %p273
        %p798 = pneg %p270
        %p799 = pneg %p294
        %p800 = pneg %p291
        %p801 = pneg %p315
        %p802 = pneg %p312
        %p803 = pneg %p336
        %p804 = pneg %p333
        %p805 = pneg %p357
        %p806 = pneg %p354
        %p807 = pneg %p378
        %p808 = pneg %p375
        %p809 = pneg %p399
        %p810 = pneg %p396
        %p811 = pneg %p420
        %p812 = pneg %p417
        %p813 = pneg %p441
        %p814 = pneg %p438
        %p815 = pneg %p462
        %p816 = pneg %p459
        %p817 = pneg %p483
        %p818 = pneg %p480
        %p819 = pneg %p504
        %p820 = pneg %p501
        %p821 = pneg %p525
        %p822 = pneg %p522
        %p823 = pneg %p546
        %p824 = pneg %p543
        %p825 = pneg %p567
        %p826 = pneg %p564
        %p827 = pneg %p588
        %p828 = pneg %p585
        %p829 = pneg %p609
        %p830 = pneg %p606
        %p831 = pneg %p630
        %p832 = pneg %p627
        %p833 = pneg %p656
        %p834 = pneg %p653
        %s835 = sand.u32 %s643, 1
        %s836 = scalar_lea.sflag [#allocation3], %s835
        %s837 = sand.u32 %s643, 1
        %s838 = smul.addr %s837, 8
        %s839 = scalar_lea.vmem [#allocation2], %s838
        %s840 = smul.u32 16, %s42
        %p841 = scmp.lt.s32.totalorder %s840, 31
        %s842 = scalar_select %p841, %s840, 31
        %s843 = smul.addr %s842, 8
        %s844 = scalar_lea.vmem %s0, %s843
        %s845 = smul.u32 16, %s42
        %v847 = vld [vmem:[%s844] sm:$0xff]
        %v848 = vld [vmem:[%s844 + $0x8] sm:$0xff]
        %v849 = vld [vmem:[%s844 + $0x10] sm:$0xff]
        %v850 = vld [vmem:[%s844 + $0x18] sm:$0xff]
        %v851 = vld [vmem:[%s844 + $0x20] sm:$0xff]
        %v852 = vld [vmem:[%s844 + $0x28] sm:$0xff]
        %v853 = vld [vmem:[%s844 + $0x30] sm:$0xff]
        %v854 = vld [vmem:[%s844 + $0x38] sm:$0xff]
        %v855 = vld [vmem:[%s844 + $0x40] sm:$0xff]
        %v856 = vld [vmem:[%s844 + $0x48] sm:$0xff]
        %v857 = vld [vmem:[%s844 + $0x50] sm:$0xff]
        %v858 = vld [vmem:[%s844 + $0x58] sm:$0xff]
        %v859 = vld [vmem:[%s844 + $0x60] sm:$0xff]
        %v860 = vld [vmem:[%s844 + $0x68] sm:$0xff]
        %v861 = vld [vmem:[%s844 + $0x70] sm:$0xff]
        %v862 = vld [vmem:[%s844 + $0x78] sm:$0xff]
        %v863 = vpack.c.bf16 %v848, %v847
        %v864 = vpack.c.bf16 %v850, %v849
        %v865 = vpack.c.bf16 %v852, %v851
        %v866 = vpack.c.bf16 %v854, %v853
        %v867 = vpack.c.bf16 %v856, %v855
        %v868 = vpack.c.bf16 %v858, %v857
        %v869 = vpack.c.bf16 %v860, %v859
        %v870 = vpack.c.bf16 %v862, %v861
        %v871 = vld [vmem:[%s1] sm:$0x1]
        %873 = vset.pattern.permute.xlu0 0
        %874 = vperm.xlu0 %873, %v847
        %v875 = vpop.permute.xlu0 %874
        %878 = vset.pattern.permute.xlu0 0
        %879 = vperm.xlu0 %878, %v848
        %v880 = vpop.permute.xlu0 %879
        %883 = vset.pattern.permute.xlu0 0
        %884 = vperm.xlu0 %883, %v849
        %v885 = vpop.permute.xlu0 %884
        %888 = vset.pattern.permute.xlu0 0
        %889 = vperm.xlu0 %888, %v850
        %v890 = vpop.permute.xlu0 %889
        %893 = vset.pattern.permute.xlu0 0
        %894 = vperm.xlu0 %893, %v851
        %v895 = vpop.permute.xlu0 %894
        %898 = vset.pattern.permute.xlu0 0
        %899 = vperm.xlu0 %898, %v852
        %v900 = vpop.permute.xlu0 %899
        %903 = vset.pattern.permute.xlu0 0
        %904 = vperm.xlu0 %903, %v853
        %v905 = vpop.permute.xlu0 %904
        %908 = vset.pattern.permute.xlu0 0
        %909 = vperm.xlu0 %908, %v854
        %v910 = vpop.permute.xlu0 %909
        %913 = vset.pattern.permute.xlu0 0
        %914 = vperm.xlu0 %913, %v855
        %v915 = vpop.permute.xlu0 %914
        %918 = vset.pattern.permute.xlu0 0
        %919 = vperm.xlu0 %918, %v856
        %v920 = vpop.permute.xlu0 %919
        %923 = vset.pattern.permute.xlu0 0
        %924 = vperm.xlu0 %923, %v857
        %v925 = vpop.permute.xlu0 %924
        %928 = vset.pattern.permute.xlu0 0
        %929 = vperm.xlu0 %928, %v858
        %v930 = vpop.permute.xlu0 %929
        %933 = vset.pattern.permute.xlu0 0
        %934 = vperm.xlu0 %933, %v859
        %v935 = vpop.permute.xlu0 %934
        %938 = vset.pattern.permute.xlu0 0
        %939 = vperm.xlu0 %938, %v860
        %v940 = vpop.permute.xlu0 %939
        %943 = vset.pattern.permute.xlu0 0
        %944 = vperm.xlu0 %943, %v861
        %v945 = vpop.permute.xlu0 %944
        %948 = vset.pattern.permute.xlu0 0
        %949 = vperm.xlu0 %948, %v862
        %v950 = vpop.permute.xlu0 %949
        %v953 = vlaneseq
        %v954 = vshrl.u32 %v953, 7
        %v955 = vsub.s32 0, %v954
        %v956 = vrot.slane %v871, %v955
        %v958 = vmul.f32 %v875, %v956
        %v959 = vmul.f32 %v880, %v956
        %v960 = vmul.f32 %v885, %v956
        %v961 = vmul.f32 %v890, %v956
        %v962 = vmul.f32 %v895, %v956
        %v963 = vmul.f32 %v900, %v956
        %v964 = vmul.f32 %v905, %v956
        %v965 = vmul.f32 %v910, %v956
        %v966 = vmul.f32 %v915, %v956
        %v967 = vmul.f32 %v920, %v956
        %v968 = vmul.f32 %v925, %v956
        %v969 = vmul.f32 %v930, %v956
        %v970 = vmul.f32 %v935, %v956
        %v971 = vmul.f32 %v940, %v956
        %v972 = vmul.f32 %v945, %v956
        %v973 = vmul.f32 %v950, %v956
        %v974 = vand.u32 2147483647, %v958
        %vm975 = vcmp.le.f32.partialorder %v974, 0.7853982
        %vm976 = vcmp.lt.s32.totalorder %v958, 0
        %v977 = vand.u32 %v958, 2139095040
        %v978 = vshrl.u32 %v977, 23
        %v979 = vsub.s32 %v978, 127
        %v980 = vand.u32 2147483647, %v958
        %v981 = vand.u32 %v980, 8388607
        %v982 = vor.u32 %v981, 8388608
        %v983 = vsub.s32 0, %v982
        %v984 = vadd.s32 %v979, 1
        %vm985 = vcmp.gt.s32.totalorder %v984, 0
        %v986 = vsel %vm985, %v984, 0
        %v987 = vshrl.u32 %v986, 5
        %v988 = vand.u32 %v986, 31
        %v989 = vsub.s32 32, %v988
        %v990 = vshrl.u32 683565275, %v989
        %v991 = vshll.u32 683565275, %v988
        %v992 = vshrl.u32 2475754826, %v989
        %v993 = vor.u32 %v991, %v992
        %v994 = vshll.u32 2475754826, %v988
        %v995 = vshrl.u32 2131351028, %v989
        %v996 = vor.u32 %v994, %v995
        %v997 = vshll.u32 2131351028, %v988
        %v998 = vshrl.u32 2102212464, %v989
        %v999 = vor.u32 %v997, %v998
        %v1000 = vshll.u32 2102212464, %v988
        %v1001 = vshrl.u32 920167782, %v989
        %v1002 = vor.u32 %v1000, %v1001
        %v1003 = vshll.u32 920167782, %v988
        %v1004 = vshrl.u32 1326507024, %v989
        %v1005 = vor.u32 %v1003, %v1004
        %vm1006 = vcmp.lt.s32.totalorder %v987, 1
        %vm1007 = vcmp.lt.s32.totalorder %v987, 2
        %vm1008 = vcmp.lt.s32.totalorder %v987, 3
        %vm1009 = vcmp.lt.s32.totalorder %v987, 4
        %v1010 = vsel %vm1006, %v990, %v993
        %v1011 = vsel %vm1009, %v999, 2102212464
        %v1012 = vsel %vm1008, %v996, %v1011
        %v1013 = vsel %vm1007, %v1010, %v1012
        %v1014 = vsel %vm1006, %v993, %v996
        %v1015 = vsel %vm1009, %v1002, 920167782
        %v1016 = vsel %vm1008, %v999, %v1015
        %v1017 = vsel %vm1007, %v1014, %v1016
        %v1018 = vsel %vm1006, %v996, %v999
        %v1019 = vsel %vm1009, %v1005, 1326507024
        %v1020 = vsel %vm1008, %v1002, %v1019
        %v1021 = vsel %vm1007, %v1018, %v1020
        %v1022 = vshll.u32 %v982, 8
        %v1023 = vmul.u32.u64.compose %v1022, %v1021
        %v1024 = vextract.low.u32 %v1023
        %v1025 = vextract.high.u32 %v1023
        %v1026 = vmul.u32.u64.compose %v1022, %v1017
        %v1027 = vextract.low.u32 %v1026
        %v1028 = vextract.high.u32 %v1026
        %v1029 = vmul.u32 %v1022, %v1013
        %v1030 = vadd.s32 %v1025, %v1027
        %vm1031 = vc.u32 %v1025, %v1027
        %v1032 = vadd.s32 %v1028, 1
        %v1033 = vsel %vm1031, %v1032, %v1028
        %v1034 = vadd.s32 %v1029, %v1033
        %v1035 = vadd.s32 %v1034, 536870912
        %v1036 = vshrl.u32 %v1035, 30
        %v1037 = vshll.u32 %v1036, 30
        %v1038 = vsub.s32 %v1034, %v1037
        %vm1039 = vcmp.lt.s32.totalorder %v1038, 0
        %v1040 = vsub.s32 0, %v1038
        %v1041 = vsel %vm1039, %v1040, %v1038
        %v1042 = vclz %v1041
        %v1043 = vsub.s32 %v1042, 2
        %vm1044 = vcmp.gt.s32.totalorder 0, %v1043
        %v1045 = vsel %vm1044, 0, %v1043
        %v1046 = vsub.s32 32, %v1045
        %v1047 = vshll.u32 %v1038, %v1045
        %v1048 = vshrl.u32 %v1030, %v1046
        %v1049 = vor.u32 %v1047, %v1048
        %v1050 = vsub.s32 4294967266, %v1045
        %v1051 = vadd.s32 %v1050, 127
        %v1052 = vshll.u32 %v1051, 23
        %v1053 = vor.u32 4788187, %v1052
        %v1054 = vand.u32 2147483647, %v1053
        %v1056 = vcvt.s32.f32 %v1049
        %v1057 = vmul.f32 %v1056, %v1054
        %v1058 = vxor.u32 %v1057, 2147483648
        %v1059 = vsel %vm976, %v1058, %v1057
        %v1060 = vsub.s32 4, %v1036
        %v1061 = vsel %vm976, %v1060, %v1036
        %v1062 = vsel %vm975, %v958, %v1059
        %v1063 = vsel %vm975, 0, %v1061
        %v1064 = vcosq.f32.pop %v1062
        %v1065 = vsinq.f32.pop %v1062
        %vm1066 = vweird.f32 %v958
        %v1067 = vand.u32 %v1063, 3
        %vm1068 = vcmp.lt.s32.totalorder %v1067, 2
        %vm1069 = vcmp.eq.s32.totalorder %v1067, 0
        %v1070 = vxor.u32 %v1065, 2147483648
        %v1071 = vsel %vm1069, %v1064, %v1070
        %vm1072 = vcmp.eq.s32.totalorder %v1067, 2
        %v1073 = vxor.u32 %v1064, 2147483648
        %v1074 = vsel %vm1072, %v1073, %v1065
        %v1075 = vsel %vm1068, %v1071, %v1074
        %v1076 = vsel %vm1066, nan, %v1075
        %v1077 = vand.u32 2147483647, %v959
        %vm1078 = vcmp.le.f32.partialorder %v1077, 0.7853982
        %vm1079 = vcmp.lt.s32.totalorder %v959, 0
        %v1080 = vand.u32 %v959, 2139095040
        %v1081 = vshrl.u32 %v1080, 23
        %v1082 = vsub.s32 %v1081, 127
        %v1083 = vand.u32 2147483647, %v959
        %v1084 = vand.u32 %v1083, 8388607
        %v1085 = vor.u32 %v1084, 8388608
        %v1086 = vsub.s32 0, %v1085
        %v1087 = vadd.s32 %v1082, 1
        %vm1088 = vcmp.gt.s32.totalorder %v1087, 0
        %v1089 = vsel %vm1088, %v1087, 0
        %v1090 = vshrl.u32 %v1089, 5
        %v1091 = vand.u32 %v1089, 31
        %v1092 = vsub.s32 32, %v1091
        %v1093 = vshrl.u32 683565275, %v1092
        %v1094 = vshll.u32 683565275, %v1091
        %v1095 = vshrl.u32 2475754826, %v1092
        %v1096 = vor.u32 %v1094, %v1095
        %v1097 = vshll.u32 2475754826, %v1091
        %v1098 = vshrl.u32 2131351028, %v1092
        %v1099 = vor.u32 %v1097, %v1098
        %v1100 = vshll.u32 2131351028, %v1091
        %v1101 = vshrl.u32 2102212464, %v1092
        %v1102 = vor.u32 %v1100, %v1101
        %v1103 = vshll.u32 2102212464, %v1091
        %v1104 = vshrl.u32 920167782, %v1092
        %v1105 = vor.u32 %v1103, %v1104
        %v1106 = vshll.u32 920167782, %v1091
        %v1107 = vshrl.u32 1326507024, %v1092
        %v1108 = vor.u32 %v1106, %v1107
        %vm1109 = vcmp.lt.s32.totalorder %v1090, 1
        %vm1110 = vcmp.lt.s32.totalorder %v1090, 2
        %vm1111 = vcmp.lt.s32.totalorder %v1090, 3
        %vm1112 = vcmp.lt.s32.totalorder %v1090, 4
        %v1113 = vsel %vm1109, %v1093, %v1096
        %v1114 = vsel %vm1112, %v1102, 2102212464
        %v1115 = vsel %vm1111, %v1099, %v1114
        %v1116 = vsel %vm1110, %v1113, %v1115
        %v1117 = vsel %vm1109, %v1096, %v1099
        %v1118 = vsel %vm1112, %v1105, 920167782
        %v1119 = vsel %vm1111, %v1102, %v1118
        %v1120 = vsel %vm1110, %v1117, %v1119
        %v1121 = vsel %vm1109, %v1099, %v1102
        %v1122 = vsel %vm1112, %v1108, 1326507024
        %v1123 = vsel %vm1111, %v1105, %v1122
        %v1124 = vsel %vm1110, %v1121, %v1123
        %v1125 = vshll.u32 %v1085, 8
        %v1126 = vmul.u32.u64.compose %v1125, %v1124
        %v1127 = vextract.low.u32 %v1126
        %v1128 = vextract.high.u32 %v1126
        %v1129 = vmul.u32.u64.compose %v1125, %v1120
        %v1130 = vextract.low.u32 %v1129
        %v1131 = vextract.high.u32 %v1129
        %v1132 = vmul.u32 %v1125, %v1116
        %v1133 = vadd.s32 %v1128, %v1130
        %vm1134 = vc.u32 %v1128, %v1130
        %v1135 = vadd.s32 %v1131, 1
        %v1136 = vsel %vm1134, %v1135, %v1131
        %v1137 = vadd.s32 %v1132, %v1136
        %v1138 = vadd.s32 %v1137, 536870912
        %v1139 = vshrl.u32 %v1138, 30
        %v1140 = vshll.u32 %v1139, 30
        %v1141 = vsub.s32 %v1137, %v1140
        %vm1142 = vcmp.lt.s32.totalorder %v1141, 0
        %v1143 = vsub.s32 0, %v1141
        %v1144 = vsel %vm1142, %v1143, %v1141
        %v1145 = vclz %v1144
        %v1146 = vsub.s32 %v1145, 2
        %vm1147 = vcmp.gt.s32.totalorder 0, %v1146
        %v1148 = vsel %vm1147, 0, %v1146
        %v1149 = vsub.s32 32, %v1148
        %v1150 = vshll.u32 %v1141, %v1148
        %v1151 = vshrl.u32 %v1133, %v1149
        %v1152 = vor.u32 %v1150, %v1151
        %v1153 = vsub.s32 4294967266, %v1148
        %v1154 = vadd.s32 %v1153, 127
        %v1155 = vshll.u32 %v1154, 23
        %v1156 = vor.u32 4788187, %v1155
        %v1157 = vand.u32 2147483647, %v1156
        %v1159 = vcvt.s32.f32 %v1152
        %v1160 = vmul.f32 %v1159, %v1157
        %v1161 = vxor.u32 %v1160, 2147483648
        %v1162 = vsel %vm1079, %v1161, %v1160
        %v1163 = vsub.s32 4, %v1139
        %v1164 = vsel %vm1079, %v1163, %v1139
        %v1165 = vsel %vm1078, %v959, %v1162
        %v1166 = vsel %vm1078, 0, %v1164
        %v1167 = vcosq.f32.pop %v1165
        %v1168 = vsinq.f32.pop %v1165
        %vm1169 = vweird.f32 %v959
        %v1170 = vand.u32 %v1166, 3
        %vm1171 = vcmp.lt.s32.totalorder %v1170, 2
        %vm1172 = vcmp.eq.s32.totalorder %v1170, 0
        %v1173 = vxor.u32 %v1168, 2147483648
        %v1174 = vsel %vm1172, %v1167, %v1173
        %vm1175 = vcmp.eq.s32.totalorder %v1170, 2
        %v1176 = vxor.u32 %v1167, 2147483648
        %v1177 = vsel %vm1175, %v1176, %v1168
        %v1178 = vsel %vm1171, %v1174, %v1177
        %v1179 = vsel %vm1169, nan, %v1178
        %v1180 = vand.u32 2147483647, %v960
        %vm1181 = vcmp.le.f32.partialorder %v1180, 0.7853982
        %vm1182 = vcmp.lt.s32.totalorder %v960, 0
        %v1183 = vand.u32 %v960, 2139095040
        %v1184 = vshrl.u32 %v1183, 23
        %v1185 = vsub.s32 %v1184, 127
        %v1186 = vand.u32 2147483647, %v960
        %v1187 = vand.u32 %v1186, 8388607
        %v1188 = vor.u32 %v1187, 8388608
        %v1189 = vsub.s32 0, %v1188
        %v1190 = vadd.s32 %v1185, 1
        %vm1191 = vcmp.gt.s32.totalorder %v1190, 0
        %v1192 = vsel %vm1191, %v1190, 0
        %v1193 = vshrl.u32 %v1192, 5
        %v1194 = vand.u32 %v1192, 31
        %v1195 = vsub.s32 32, %v1194
        %v1196 = vshrl.u32 683565275, %v1195
        %v1197 = vshll.u32 683565275, %v1194
        %v1198 = vshrl.u32 2475754826, %v1195
        %v1199 = vor.u32 %v1197, %v1198
        %v1200 = vshll.u32 2475754826, %v1194
        %v1201 = vshrl.u32 2131351028, %v1195
        %v1202 = vor.u32 %v1200, %v1201
        %v1203 = vshll.u32 2131351028, %v1194
        %v1204 = vshrl.u32 2102212464, %v1195
        %v1205 = vor.u32 %v1203, %v1204
        %v1206 = vshll.u32 2102212464, %v1194
        %v1207 = vshrl.u32 920167782, %v1195
        %v1208 = vor.u32 %v1206, %v1207
        %v1209 = vshll.u32 920167782, %v1194
        %v1210 = vshrl.u32 1326507024, %v1195
        %v1211 = vor.u32 %v1209, %v1210
        %vm1212 = vcmp.lt.s32.totalorder %v1193, 1
        %vm1213 = vcmp.lt.s32.totalorder %v1193, 2
        %vm1214 = vcmp.lt.s32.totalorder %v1193, 3
        %vm1215 = vcmp.lt.s32.totalorder %v1193, 4
        %v1216 = vsel %vm1212, %v1196, %v1199
        %v1217 = vsel %vm1215, %v1205, 2102212464
        %v1218 = vsel %vm1214, %v1202, %v1217
        %v1219 = vsel %vm1213, %v1216, %v1218
        %v1220 = vsel %vm1212, %v1199, %v1202
        %v1221 = vsel %vm1215, %v1208, 920167782
        %v1222 = vsel %vm1214, %v1205, %v1221
        %v1223 = vsel %vm1213, %v1220, %v1222
        %v1224 = vsel %vm1212, %v1202, %v1205
        %v1225 = vsel %vm1215, %v1211, 1326507024
        %v1226 = vsel %vm1214, %v1208, %v1225
        %v1227 = vsel %vm1213, %v1224, %v1226
        %v1228 = vshll.u32 %v1188, 8
        %v1229 = vmul.u32.u64.compose %v1228, %v1227
        %v1230 = vextract.low.u32 %v1229
        %v1231 = vextract.high.u32 %v1229
        %v1232 = vmul.u32.u64.compose %v1228, %v1223
        %v1233 = vextract.low.u32 %v1232
        %v1234 = vextract.high.u32 %v1232
        %v1235 = vmul.u32 %v1228, %v1219
        %v1236 = vadd.s32 %v1231, %v1233
        %vm1237 = vc.u32 %v1231, %v1233
        %v1238 = vadd.s32 %v1234, 1
        %v1239 = vsel %vm1237, %v1238, %v1234
        %v1240 = vadd.s32 %v1235, %v1239
        %v1241 = vadd.s32 %v1240, 536870912
        %v1242 = vshrl.u32 %v1241, 30
        %v1243 = vshll.u32 %v1242, 30
        %v1244 = vsub.s32 %v1240, %v1243
        %vm1245 = vcmp.lt.s32.totalorder %v1244, 0
        %v1246 = vsub.s32 0, %v1244
        %v1247 = vsel %vm1245, %v1246, %v1244
        %v1248 = vclz %v1247
        %v1249 = vsub.s32 %v1248, 2
        %vm1250 = vcmp.gt.s32.totalorder 0, %v1249
        %v1251 = vsel %vm1250, 0, %v1249
        %v1252 = vsub.s32 32, %v1251
        %v1253 = vshll.u32 %v1244, %v1251
        %v1254 = vshrl.u32 %v1236, %v1252
        %v1255 = vor.u32 %v1253, %v1254
        %v1256 = vsub.s32 4294967266, %v1251
        %v1257 = vadd.s32 %v1256, 127
        %v1258 = vshll.u32 %v1257, 23
        %v1259 = vor.u32 4788187, %v1258
        %v1260 = vand.u32 2147483647, %v1259
        %v1262 = vcvt.s32.f32 %v1255
        %v1263 = vmul.f32 %v1262, %v1260
        %v1264 = vxor.u32 %v1263, 2147483648
        %v1265 = vsel %vm1182, %v1264, %v1263
        %v1266 = vsub.s32 4, %v1242
        %v1267 = vsel %vm1182, %v1266, %v1242
        %v1268 = vsel %vm1181, %v960, %v1265
        %v1269 = vsel %vm1181, 0, %v1267
        %v1270 = vcosq.f32.pop %v1268
        %v1271 = vsinq.f32.pop %v1268
        %vm1272 = vweird.f32 %v960
        %v1273 = vand.u32 %v1269, 3
        %vm1274 = vcmp.lt.s32.totalorder %v1273, 2
        %vm1275 = vcmp.eq.s32.totalorder %v1273, 0
        %v1276 = vxor.u32 %v1271, 2147483648
        %v1277 = vsel %vm1275, %v1270, %v1276
        %vm1278 = vcmp.eq.s32.totalorder %v1273, 2
        %v1279 = vxor.u32 %v1270, 2147483648
        %v1280 = vsel %vm1278, %v1279, %v1271
        %v1281 = vsel %vm1274, %v1277, %v1280
        %v1282 = vsel %vm1272, nan, %v1281
        %v1283 = vand.u32 2147483647, %v961
        %vm1284 = vcmp.le.f32.partialorder %v1283, 0.7853982
        %vm1285 = vcmp.lt.s32.totalorder %v961, 0
        %v1286 = vand.u32 %v961, 2139095040
        %v1287 = vshrl.u32 %v1286, 23
        %v1288 = vsub.s32 %v1287, 127
        %v1289 = vand.u32 2147483647, %v961
        %v1290 = vand.u32 %v1289, 8388607
        %v1291 = vor.u32 %v1290, 8388608
        %v1292 = vsub.s32 0, %v1291
        %v1293 = vadd.s32 %v1288, 1
        %vm1294 = vcmp.gt.s32.totalorder %v1293, 0
        %v1295 = vsel %vm1294, %v1293, 0
        %v1296 = vshrl.u32 %v1295, 5
        %v1297 = vand.u32 %v1295, 31
        %v1298 = vsub.s32 32, %v1297
        %v1299 = vshrl.u32 683565275, %v1298
        %v1300 = vshll.u32 683565275, %v1297
        %v1301 = vshrl.u32 2475754826, %v1298
        %v1302 = vor.u32 %v1300, %v1301
        %v1303 = vshll.u32 2475754826, %v1297
        %v1304 = vshrl.u32 2131351028, %v1298
        %v1305 = vor.u32 %v1303, %v1304
        %v1306 = vshll.u32 2131351028, %v1297
        %v1307 = vshrl.u32 2102212464, %v1298
        %v1308 = vor.u32 %v1306, %v1307
        %v1309 = vshll.u32 2102212464, %v1297
        %v1310 = vshrl.u32 920167782, %v1298
        %v1311 = vor.u32 %v1309, %v1310
        %v1312 = vshll.u32 920167782, %v1297
        %v1313 = vshrl.u32 1326507024, %v1298
        %v1314 = vor.u32 %v1312, %v1313
        %vm1315 = vcmp.lt.s32.totalorder %v1296, 1
        %vm1316 = vcmp.lt.s32.totalorder %v1296, 2
        %vm1317 = vcmp.lt.s32.totalorder %v1296, 3
        %vm1318 = vcmp.lt.s32.totalorder %v1296, 4
        %v1319 = vsel %vm1315, %v1299, %v1302
        %v1320 = vsel %vm1318, %v1308, 2102212464
        %v1321 = vsel %vm1317, %v1305, %v1320
        %v1322 = vsel %vm1316, %v1319, %v1321
        %v1323 = vsel %vm1315, %v1302, %v1305
        %v1324 = vsel %vm1318, %v1311, 920167782
        %v1325 = vsel %vm1317, %v1308, %v1324
        %v1326 = vsel %vm1316, %v1323, %v1325
        %v1327 = vsel %vm1315, %v1305, %v1308
        %v1328 = vsel %vm1318, %v1314, 1326507024
        %v1329 = vsel %vm1317, %v1311, %v1328
        %v1330 = vsel %vm1316, %v1327, %v1329
        %v1331 = vshll.u32 %v1291, 8
        %v1332 = vmul.u32.u64.compose %v1331, %v1330
        %v1333 = vextract.low.u32 %v1332
        %v1334 = vextract.high.u32 %v1332
        %v1335 = vmul.u32.u64.compose %v1331, %v1326
        %v1336 = vextract.low.u32 %v1335
        %v1337 = vextract.high.u32 %v1335
        %v1338 = vmul.u32 %v1331, %v1322
        %v1339 = vadd.s32 %v1334, %v1336
        %vm1340 = vc.u32 %v1334, %v1336
        %v1341 = vadd.s32 %v1337, 1
        %v1342 = vsel %vm1340, %v1341, %v1337
        %v1343 = vadd.s32 %v1338, %v1342
        %v1344 = vadd.s32 %v1343, 536870912
        %v1345 = vshrl.u32 %v1344, 30
        %v1346 = vshll.u32 %v1345, 30
        %v1347 = vsub.s32 %v1343, %v1346
        %vm1348 = vcmp.lt.s32.totalorder %v1347, 0
        %v1349 = vsub.s32 0, %v1347
        %v1350 = vsel %vm1348, %v1349, %v1347
        %v1351 = vclz %v1350
        %v1352 = vsub.s32 %v1351, 2
        %vm1353 = vcmp.gt.s32.totalorder 0, %v1352
        %v1354 = vsel %vm1353, 0, %v1352
        %v1355 = vsub.s32 32, %v1354
        %v1356 = vshll.u32 %v1347, %v1354
        %v1357 = vshrl.u32 %v1339, %v1355
        %v1358 = vor.u32 %v1356, %v1357
        %v1359 = vsub.s32 4294967266, %v1354
        %v1360 = vadd.s32 %v1359, 127
        %v1361 = vshll.u32 %v1360, 23
        %v1362 = vor.u32 4788187, %v1361
        %v1363 = vand.u32 2147483647, %v1362
        %v1365 = vcvt.s32.f32 %v1358
        %v1366 = vmul.f32 %v1365, %v1363
        %v1367 = vxor.u32 %v1366, 2147483648
        %v1368 = vsel %vm1285, %v1367, %v1366
        %v1369 = vsub.s32 4, %v1345
        %v1370 = vsel %vm1285, %v1369, %v1345
        %v1371 = vsel %vm1284, %v961, %v1368
        %v1372 = vsel %vm1284, 0, %v1370
        %v1373 = vcosq.f32.pop %v1371
        %v1374 = vsinq.f32.pop %v1371
        %vm1375 = vweird.f32 %v961
        %v1376 = vand.u32 %v1372, 3
        %vm1377 = vcmp.lt.s32.totalorder %v1376, 2
        %vm1378 = vcmp.eq.s32.totalorder %v1376, 0
        %v1379 = vxor.u32 %v1374, 2147483648
        %v1380 = vsel %vm1378, %v1373, %v1379
        %vm1381 = vcmp.eq.s32.totalorder %v1376, 2
        %v1382 = vxor.u32 %v1373, 2147483648
        %v1383 = vsel %vm1381, %v1382, %v1374
        %v1384 = vsel %vm1377, %v1380, %v1383
        %v1385 = vsel %vm1375, nan, %v1384
        %v1386 = vand.u32 2147483647, %v962
        %vm1387 = vcmp.le.f32.partialorder %v1386, 0.7853982
        %vm1388 = vcmp.lt.s32.totalorder %v962, 0
        %v1389 = vand.u32 %v962, 2139095040
        %v1390 = vshrl.u32 %v1389, 23
        %v1391 = vsub.s32 %v1390, 127
        %v1392 = vand.u32 2147483647, %v962
        %v1393 = vand.u32 %v1392, 8388607
        %v1394 = vor.u32 %v1393, 8388608
        %v1395 = vsub.s32 0, %v1394
        %v1396 = vadd.s32 %v1391, 1
        %vm1397 = vcmp.gt.s32.totalorder %v1396, 0
        %v1398 = vsel %vm1397, %v1396, 0
        %v1399 = vshrl.u32 %v1398, 5
        %v1400 = vand.u32 %v1398, 31
        %v1401 = vsub.s32 32, %v1400
        %v1402 = vshrl.u32 683565275, %v1401
        %v1403 = vshll.u32 683565275, %v1400
        %v1404 = vshrl.u32 2475754826, %v1401
        %v1405 = vor.u32 %v1403, %v1404
        %v1406 = vshll.u32 2475754826, %v1400
        %v1407 = vshrl.u32 2131351028, %v1401
        %v1408 = vor.u32 %v1406, %v1407
        %v1409 = vshll.u32 2131351028, %v1400
        %v1410 = vshrl.u32 2102212464, %v1401
        %v1411 = vor.u32 %v1409, %v1410
        %v1412 = vshll.u32 2102212464, %v1400
        %v1413 = vshrl.u32 920167782, %v1401
        %v1414 = vor.u32 %v1412, %v1413
        %v1415 = vshll.u32 920167782, %v1400
        %v1416 = vshrl.u32 1326507024, %v1401
        %v1417 = vor.u32 %v1415, %v1416
        %vm1418 = vcmp.lt.s32.totalorder %v1399, 1
        %vm1419 = vcmp.lt.s32.totalorder %v1399, 2
        %vm1420 = vcmp.lt.s32.totalorder %v1399, 3
        %vm1421 = vcmp.lt.s32.totalorder %v1399, 4
        %v1422 = vsel %vm1418, %v1402, %v1405
        %v1423 = vsel %vm1421, %v1411, 2102212464
        %v1424 = vsel %vm1420, %v1408, %v1423
        %v1425 = vsel %vm1419, %v1422, %v1424
        %v1426 = vsel %vm1418, %v1405, %v1408
        %v1427 = vsel %vm1421, %v1414, 920167782
        %v1428 = vsel %vm1420, %v1411, %v1427
        %v1429 = vsel %vm1419, %v1426, %v1428
        %v1430 = vsel %vm1418, %v1408, %v1411
        %v1431 = vsel %vm1421, %v1417, 1326507024
        %v1432 = vsel %vm1420, %v1414, %v1431
        %v1433 = vsel %vm1419, %v1430, %v1432
        %v1434 = vshll.u32 %v1394, 8
        %v1435 = vmul.u32.u64.compose %v1434, %v1433
        %v1436 = vextract.low.u32 %v1435
        %v1437 = vextract.high.u32 %v1435
        %v1438 = vmul.u32.u64.compose %v1434, %v1429
        %v1439 = vextract.low.u32 %v1438
        %v1440 = vextract.high.u32 %v1438
        %v1441 = vmul.u32 %v1434, %v1425
        %v1442 = vadd.s32 %v1437, %v1439
        %vm1443 = vc.u32 %v1437, %v1439
        %v1444 = vadd.s32 %v1440, 1
        %v1445 = vsel %vm1443, %v1444, %v1440
        %v1446 = vadd.s32 %v1441, %v1445
        %v1447 = vadd.s32 %v1446, 536870912
        %v1448 = vshrl.u32 %v1447, 30
        %v1449 = vshll.u32 %v1448, 30
        %v1450 = vsub.s32 %v1446, %v1449
        %vm1451 = vcmp.lt.s32.totalorder %v1450, 0
        %v1452 = vsub.s32 0, %v1450
        %v1453 = vsel %vm1451, %v1452, %v1450
        %v1454 = vclz %v1453
        %v1455 = vsub.s32 %v1454, 2
        %vm1456 = vcmp.gt.s32.totalorder 0, %v1455
        %v1457 = vsel %vm1456, 0, %v1455
        %v1458 = vsub.s32 32, %v1457
        %v1459 = vshll.u32 %v1450, %v1457
        %v1460 = vshrl.u32 %v1442, %v1458
        %v1461 = vor.u32 %v1459, %v1460
        %v1462 = vsub.s32 4294967266, %v1457
        %v1463 = vadd.s32 %v1462, 127
        %v1464 = vshll.u32 %v1463, 23
        %v1465 = vor.u32 4788187, %v1464
        %v1466 = vand.u32 2147483647, %v1465
        %v1468 = vcvt.s32.f32 %v1461
        %v1469 = vmul.f32 %v1468, %v1466
        %v1470 = vxor.u32 %v1469, 2147483648
        %v1471 = vsel %vm1388, %v1470, %v1469
        %v1472 = vsub.s32 4, %v1448
        %v1473 = vsel %vm1388, %v1472, %v1448
        %v1474 = vsel %vm1387, %v962, %v1471
        %v1475 = vsel %vm1387, 0, %v1473
        %v1476 = vcosq.f32.pop %v1474
        %v1477 = vsinq.f32.pop %v1474
        %vm1478 = vweird.f32 %v962
        %v1479 = vand.u32 %v1475, 3
        %vm1480 = vcmp.lt.s32.totalorder %v1479, 2
        %vm1481 = vcmp.eq.s32.totalorder %v1479, 0
        %v1482 = vxor.u32 %v1477, 2147483648
        %v1483 = vsel %vm1481, %v1476, %v1482
        %vm1484 = vcmp.eq.s32.totalorder %v1479, 2
        %v1485 = vxor.u32 %v1476, 2147483648
        %v1486 = vsel %vm1484, %v1485, %v1477
        %v1487 = vsel %vm1480, %v1483, %v1486
        %v1488 = vsel %vm1478, nan, %v1487
        %v1489 = vand.u32 2147483647, %v963
        %vm1490 = vcmp.le.f32.partialorder %v1489, 0.7853982
        %vm1491 = vcmp.lt.s32.totalorder %v963, 0
        %v1492 = vand.u32 %v963, 2139095040
        %v1493 = vshrl.u32 %v1492, 23
        %v1494 = vsub.s32 %v1493, 127
        %v1495 = vand.u32 2147483647, %v963
        %v1496 = vand.u32 %v1495, 8388607
        %v1497 = vor.u32 %v1496, 8388608
        %v1498 = vsub.s32 0, %v1497
        %v1499 = vadd.s32 %v1494, 1
        %vm1500 = vcmp.gt.s32.totalorder %v1499, 0
        %v1501 = vsel %vm1500, %v1499, 0
        %v1502 = vshrl.u32 %v1501, 5
        %v1503 = vand.u32 %v1501, 31
        %v1504 = vsub.s32 32, %v1503
        %v1505 = vshrl.u32 683565275, %v1504
        %v1506 = vshll.u32 683565275, %v1503
        %v1507 = vshrl.u32 2475754826, %v1504
        %v1508 = vor.u32 %v1506, %v1507
        %v1509 = vshll.u32 2475754826, %v1503
        %v1510 = vshrl.u32 2131351028, %v1504
        %v1511 = vor.u32 %v1509, %v1510
        %v1512 = vshll.u32 2131351028, %v1503
        %v1513 = vshrl.u32 2102212464, %v1504
        %v1514 = vor.u32 %v1512, %v1513
        %v1515 = vshll.u32 2102212464, %v1503
        %v1516 = vshrl.u32 920167782, %v1504
        %v1517 = vor.u32 %v1515, %v1516
        %v1518 = vshll.u32 920167782, %v1503
        %v1519 = vshrl.u32 1326507024, %v1504
        %v1520 = vor.u32 %v1518, %v1519
        %vm1521 = vcmp.lt.s32.totalorder %v1502, 1
        %vm1522 = vcmp.lt.s32.totalorder %v1502, 2
        %vm1523 = vcmp.lt.s32.totalorder %v1502, 3
        %vm1524 = vcmp.lt.s32.totalorder %v1502, 4
        %v1525 = vsel %vm1521, %v1505, %v1508
        %v1526 = vsel %vm1524, %v1514, 2102212464
        %v1527 = vsel %vm1523, %v1511, %v1526
        %v1528 = vsel %vm1522, %v1525, %v1527
        %v1529 = vsel %vm1521, %v1508, %v1511
        %v1530 = vsel %vm1524, %v1517, 920167782
        %v1531 = vsel %vm1523, %v1514, %v1530
        %v1532 = vsel %vm1522, %v1529, %v1531
        %v1533 = vsel %vm1521, %v1511, %v1514
        %v1534 = vsel %vm1524, %v1520, 1326507024
        %v1535 = vsel %vm1523, %v1517, %v1534
        %v1536 = vsel %vm1522, %v1533, %v1535
        %v1537 = vshll.u32 %v1497, 8
        %v1538 = vmul.u32.u64.compose %v1537, %v1536
        %v1539 = vextract.low.u32 %v1538
        %v1540 = vextract.high.u32 %v1538
        %v1541 = vmul.u32.u64.compose %v1537, %v1532
        %v1542 = vextract.low.u32 %v1541
        %v1543 = vextract.high.u32 %v1541
        %v1544 = vmul.u32 %v1537, %v1528
        %v1545 = vadd.s32 %v1540, %v1542
        %vm1546 = vc.u32 %v1540, %v1542
        %v1547 = vadd.s32 %v1543, 1
        %v1548 = vsel %vm1546, %v1547, %v1543
        %v1549 = vadd.s32 %v1544, %v1548
        %v1550 = vadd.s32 %v1549, 536870912
        %v1551 = vshrl.u32 %v1550, 30
        %v1552 = vshll.u32 %v1551, 30
        %v1553 = vsub.s32 %v1549, %v1552
        %vm1554 = vcmp.lt.s32.totalorder %v1553, 0
        %v1555 = vsub.s32 0, %v1553
        %v1556 = vsel %vm1554, %v1555, %v1553
        %v1557 = vclz %v1556
        %v1558 = vsub.s32 %v1557, 2
        %vm1559 = vcmp.gt.s32.totalorder 0, %v1558
        %v1560 = vsel %vm1559, 0, %v1558
        %v1561 = vsub.s32 32, %v1560
        %v1562 = vshll.u32 %v1553, %v1560
        %v1563 = vshrl.u32 %v1545, %v1561
        %v1564 = vor.u32 %v1562, %v1563
        %v1565 = vsub.s32 4294967266, %v1560
        %v1566 = vadd.s32 %v1565, 127
        %v1567 = vshll.u32 %v1566, 23
        %v1568 = vor.u32 4788187, %v1567
        %v1569 = vand.u32 2147483647, %v1568
        %v1571 = vcvt.s32.f32 %v1564
        %v1572 = vmul.f32 %v1571, %v1569
        %v1573 = vxor.u32 %v1572, 2147483648
        %v1574 = vsel %vm1491, %v1573, %v1572
        %v1575 = vsub.s32 4, %v1551
        %v1576 = vsel %vm1491, %v1575, %v1551
        %v1577 = vsel %vm1490, %v963, %v1574
        %v1578 = vsel %vm1490, 0, %v1576
        %v1579 = vcosq.f32.pop %v1577
        %v1580 = vsinq.f32.pop %v1577
        %vm1581 = vweird.f32 %v963
        %v1582 = vand.u32 %v1578, 3
        %vm1583 = vcmp.lt.s32.totalorder %v1582, 2
        %vm1584 = vcmp.eq.s32.totalorder %v1582, 0
        %v1585 = vxor.u32 %v1580, 2147483648
        %v1586 = vsel %vm1584, %v1579, %v1585
        %vm1587 = vcmp.eq.s32.totalorder %v1582, 2
        %v1588 = vxor.u32 %v1579, 2147483648
        %v1589 = vsel %vm1587, %v1588, %v1580
        %v1590 = vsel %vm1583, %v1586, %v1589
        %v1591 = vsel %vm1581, nan, %v1590
        %v1592 = vand.u32 2147483647, %v964
        %vm1593 = vcmp.le.f32.partialorder %v1592, 0.7853982
        %vm1594 = vcmp.lt.s32.totalorder %v964, 0
        %v1595 = vand.u32 %v964, 2139095040
        %v1596 = vshrl.u32 %v1595, 23
        %v1597 = vsub.s32 %v1596, 127
        %v1598 = vand.u32 2147483647, %v964
        %v1599 = vand.u32 %v1598, 8388607
        %v1600 = vor.u32 %v1599, 8388608
        %v1601 = vsub.s32 0, %v1600
        %v1602 = vadd.s32 %v1597, 1
        %vm1603 = vcmp.gt.s32.totalorder %v1602, 0
        %v1604 = vsel %vm1603, %v1602, 0
        %v1605 = vshrl.u32 %v1604, 5
        %v1606 = vand.u32 %v1604, 31
        %v1607 = vsub.s32 32, %v1606
        %v1608 = vshrl.u32 683565275, %v1607
        %v1609 = vshll.u32 683565275, %v1606
        %v1610 = vshrl.u32 2475754826, %v1607
        %v1611 = vor.u32 %v1609, %v1610
        %v1612 = vshll.u32 2475754826, %v1606
        %v1613 = vshrl.u32 2131351028, %v1607
        %v1614 = vor.u32 %v1612, %v1613
        %v1615 = vshll.u32 2131351028, %v1606
        %v1616 = vshrl.u32 2102212464, %v1607
        %v1617 = vor.u32 %v1615, %v1616
        %v1618 = vshll.u32 2102212464, %v1606
        %v1619 = vshrl.u32 920167782, %v1607
        %v1620 = vor.u32 %v1618, %v1619
        %v1621 = vshll.u32 920167782, %v1606
        %v1622 = vshrl.u32 1326507024, %v1607
        %v1623 = vor.u32 %v1621, %v1622
        %vm1624 = vcmp.lt.s32.totalorder %v1605, 1
        %vm1625 = vcmp.lt.s32.totalorder %v1605, 2
        %vm1626 = vcmp.lt.s32.totalorder %v1605, 3
        %vm1627 = vcmp.lt.s32.totalorder %v1605, 4
        %v1628 = vsel %vm1624, %v1608, %v1611
        %v1629 = vsel %vm1627, %v1617, 2102212464
        %v1630 = vsel %vm1626, %v1614, %v1629
        %v1631 = vsel %vm1625, %v1628, %v1630
        %v1632 = vsel %vm1624, %v1611, %v1614
        %v1633 = vsel %vm1627, %v1620, 920167782
        %v1634 = vsel %vm1626, %v1617, %v1633
        %v1635 = vsel %vm1625, %v1632, %v1634
        %v1636 = vsel %vm1624, %v1614, %v1617
        %v1637 = vsel %vm1627, %v1623, 1326507024
        %v1638 = vsel %vm1626, %v1620, %v1637
        %v1639 = vsel %vm1625, %v1636, %v1638
        %v1640 = vshll.u32 %v1600, 8
        %v1641 = vmul.u32.u64.compose %v1640, %v1639
        %v1642 = vextract.low.u32 %v1641
        %v1643 = vextract.high.u32 %v1641
        %v1644 = vmul.u32.u64.compose %v1640, %v1635
        %v1645 = vextract.low.u32 %v1644
        %v1646 = vextract.high.u32 %v1644
        %v1647 = vmul.u32 %v1640, %v1631
        %v1648 = vadd.s32 %v1643, %v1645
        %vm1649 = vc.u32 %v1643, %v1645
        %v1650 = vadd.s32 %v1646, 1
        %v1651 = vsel %vm1649, %v1650, %v1646
        %v1652 = vadd.s32 %v1647, %v1651
        %v1653 = vadd.s32 %v1652, 536870912
        %v1654 = vshrl.u32 %v1653, 30
        %v1655 = vshll.u32 %v1654, 30
        %v1656 = vsub.s32 %v1652, %v1655
        %vm1657 = vcmp.lt.s32.totalorder %v1656, 0
        %v1658 = vsub.s32 0, %v1656
        %v1659 = vsel %vm1657, %v1658, %v1656
        %v1660 = vclz %v1659
        %v1661 = vsub.s32 %v1660, 2
        %vm1662 = vcmp.gt.s32.totalorder 0, %v1661
        %v1663 = vsel %vm1662, 0, %v1661
        %v1664 = vsub.s32 32, %v1663
        %v1665 = vshll.u32 %v1656, %v1663
        %v1666 = vshrl.u32 %v1648, %v1664
        %v1667 = vor.u32 %v1665, %v1666
        %v1668 = vsub.s32 4294967266, %v1663
        %v1669 = vadd.s32 %v1668, 127
        %v1670 = vshll.u32 %v1669, 23
        %v1671 = vor.u32 4788187, %v1670
        %v1672 = vand.u32 2147483647, %v1671
        %v1674 = vcvt.s32.f32 %v1667
        %v1675 = vmul.f32 %v1674, %v1672
        %v1676 = vxor.u32 %v1675, 2147483648
        %v1677 = vsel %vm1594, %v1676, %v1675
        %v1678 = vsub.s32 4, %v1654
        %v1679 = vsel %vm1594, %v1678, %v1654
        %v1680 = vsel %vm1593, %v964, %v1677
        %v1681 = vsel %vm1593, 0, %v1679
        %v1682 = vcosq.f32.pop %v1680
        %v1683 = vsinq.f32.pop %v1680
        %vm1684 = vweird.f32 %v964
        %v1685 = vand.u32 %v1681, 3
        %vm1686 = vcmp.lt.s32.totalorder %v1685, 2
        %vm1687 = vcmp.eq.s32.totalorder %v1685, 0
        %v1688 = vxor.u32 %v1683, 2147483648
        %v1689 = vsel %vm1687, %v1682, %v1688
        %vm1690 = vcmp.eq.s32.totalorder %v1685, 2
        %v1691 = vxor.u32 %v1682, 2147483648
        %v1692 = vsel %vm1690, %v1691, %v1683
        %v1693 = vsel %vm1686, %v1689, %v1692
        %v1694 = vsel %vm1684, nan, %v1693
        %v1695 = vand.u32 2147483647, %v965
        %vm1696 = vcmp.le.f32.partialorder %v1695, 0.7853982
        %vm1697 = vcmp.lt.s32.totalorder %v965, 0
        %v1698 = vand.u32 %v965, 2139095040
        %v1699 = vshrl.u32 %v1698, 23
        %v1700 = vsub.s32 %v1699, 127
        %v1701 = vand.u32 2147483647, %v965
        %v1702 = vand.u32 %v1701, 8388607
        %v1703 = vor.u32 %v1702, 8388608
        %v1704 = vsub.s32 0, %v1703
        %v1705 = vadd.s32 %v1700, 1
        %vm1706 = vcmp.gt.s32.totalorder %v1705, 0
        %v1707 = vsel %vm1706, %v1705, 0
        %v1708 = vshrl.u32 %v1707, 5
        %v1709 = vand.u32 %v1707, 31
        %v1710 = vsub.s32 32, %v1709
        %v1711 = vshrl.u32 683565275, %v1710
        %v1712 = vshll.u32 683565275, %v1709
        %v1713 = vshrl.u32 2475754826, %v1710
        %v1714 = vor.u32 %v1712, %v1713
        %v1715 = vshll.u32 2475754826, %v1709
        %v1716 = vshrl.u32 2131351028, %v1710
        %v1717 = vor.u32 %v1715, %v1716
        %v1718 = vshll.u32 2131351028, %v1709
        %v1719 = vshrl.u32 2102212464, %v1710
        %v1720 = vor.u32 %v1718, %v1719
        %v1721 = vshll.u32 2102212464, %v1709
        %v1722 = vshrl.u32 920167782, %v1710
        %v1723 = vor.u32 %v1721, %v1722
        %v1724 = vshll.u32 920167782, %v1709
        %v1725 = vshrl.u32 1326507024, %v1710
        %v1726 = vor.u32 %v1724, %v1725
        %vm1727 = vcmp.lt.s32.totalorder %v1708, 1
        %vm1728 = vcmp.lt.s32.totalorder %v1708, 2
        %vm1729 = vcmp.lt.s32.totalorder %v1708, 3
        %vm1730 = vcmp.lt.s32.totalorder %v1708, 4
        %v1731 = vsel %vm1727, %v1711, %v1714
        %v1732 = vsel %vm1730, %v1720, 2102212464
        %v1733 = vsel %vm1729, %v1717, %v1732
        %v1734 = vsel %vm1728, %v1731, %v1733
        %v1735 = vsel %vm1727, %v1714, %v1717
        %v1736 = vsel %vm1730, %v1723, 920167782
        %v1737 = vsel %vm1729, %v1720, %v1736
        %v1738 = vsel %vm1728, %v1735, %v1737
        %v1739 = vsel %vm1727, %v1717, %v1720
        %v1740 = vsel %vm1730, %v1726, 1326507024
        %v1741 = vsel %vm1729, %v1723, %v1740
        %v1742 = vsel %vm1728, %v1739, %v1741
        %v1743 = vshll.u32 %v1703, 8
        %v1744 = vmul.u32.u64.compose %v1743, %v1742
        %v1745 = vextract.low.u32 %v1744
        %v1746 = vextract.high.u32 %v1744
        %v1747 = vmul.u32.u64.compose %v1743, %v1738
        %v1748 = vextract.low.u32 %v1747
        %v1749 = vextract.high.u32 %v1747
        %v1750 = vmul.u32 %v1743, %v1734
        %v1751 = vadd.s32 %v1746, %v1748
        %vm1752 = vc.u32 %v1746, %v1748
        %v1753 = vadd.s32 %v1749, 1
        %v1754 = vsel %vm1752, %v1753, %v1749
        %v1755 = vadd.s32 %v1750, %v1754
        %v1756 = vadd.s32 %v1755, 536870912
        %v1757 = vshrl.u32 %v1756, 30
        %v1758 = vshll.u32 %v1757, 30
        %v1759 = vsub.s32 %v1755, %v1758
        %vm1760 = vcmp.lt.s32.totalorder %v1759, 0
        %v1761 = vsub.s32 0, %v1759
        %v1762 = vsel %vm1760, %v1761, %v1759
        %v1763 = vclz %v1762
        %v1764 = vsub.s32 %v1763, 2
        %vm1765 = vcmp.gt.s32.totalorder 0, %v1764
        %v1766 = vsel %vm1765, 0, %v1764
        %v1767 = vsub.s32 32, %v1766
        %v1768 = vshll.u32 %v1759, %v1766
        %v1769 = vshrl.u32 %v1751, %v1767
        %v1770 = vor.u32 %v1768, %v1769
        %v1771 = vsub.s32 4294967266, %v1766
        %v1772 = vadd.s32 %v1771, 127
        %v1773 = vshll.u32 %v1772, 23
        %v1774 = vor.u32 4788187, %v1773
        %v1775 = vand.u32 2147483647, %v1774
        %v1777 = vcvt.s32.f32 %v1770
        %v1778 = vmul.f32 %v1777, %v1775
        %v1779 = vxor.u32 %v1778, 2147483648
        %v1780 = vsel %vm1697, %v1779, %v1778
        %v1781 = vsub.s32 4, %v1757
        %v1782 = vsel %vm1697, %v1781, %v1757
        %v1783 = vsel %vm1696, %v965, %v1780
        %v1784 = vsel %vm1696, 0, %v1782
        %v1785 = vcosq.f32.pop %v1783
        %v1786 = vsinq.f32.pop %v1783
        %vm1787 = vweird.f32 %v965
        %v1788 = vand.u32 %v1784, 3
        %vm1789 = vcmp.lt.s32.totalorder %v1788, 2
        %vm1790 = vcmp.eq.s32.totalorder %v1788, 0
        %v1791 = vxor.u32 %v1786, 2147483648
        %v1792 = vsel %vm1790, %v1785, %v1791
        %vm1793 = vcmp.eq.s32.totalorder %v1788, 2
        %v1794 = vxor.u32 %v1785, 2147483648
        %v1795 = vsel %vm1793, %v1794, %v1786
        %v1796 = vsel %vm1789, %v1792, %v1795
        %v1797 = vsel %vm1787, nan, %v1796
        %v1798 = vand.u32 2147483647, %v966
        %vm1799 = vcmp.le.f32.partialorder %v1798, 0.7853982
        %vm1800 = vcmp.lt.s32.totalorder %v966, 0
        %v1801 = vand.u32 %v966, 2139095040
        %v1802 = vshrl.u32 %v1801, 23
        %v1803 = vsub.s32 %v1802, 127
        %v1804 = vand.u32 2147483647, %v966
        %v1805 = vand.u32 %v1804, 8388607
        %v1806 = vor.u32 %v1805, 8388608
        %v1807 = vsub.s32 0, %v1806
        %v1808 = vadd.s32 %v1803, 1
        %vm1809 = vcmp.gt.s32.totalorder %v1808, 0
        %v1810 = vsel %vm1809, %v1808, 0
        %v1811 = vshrl.u32 %v1810, 5
        %v1812 = vand.u32 %v1810, 31
        %v1813 = vsub.s32 32, %v1812
        %v1814 = vshrl.u32 683565275, %v1813
        %v1815 = vshll.u32 683565275, %v1812
        %v1816 = vshrl.u32 2475754826, %v1813
        %v1817 = vor.u32 %v1815, %v1816
        %v1818 = vshll.u32 2475754826, %v1812
        %v1819 = vshrl.u32 2131351028, %v1813
        %v1820 = vor.u32 %v1818, %v1819
        %v1821 = vshll.u32 2131351028, %v1812
        %v1822 = vshrl.u32 2102212464, %v1813
        %v1823 = vor.u32 %v1821, %v1822
        %v1824 = vshll.u32 2102212464, %v1812
        %v1825 = vshrl.u32 920167782, %v1813
        %v1826 = vor.u32 %v1824, %v1825
        %v1827 = vshll.u32 920167782, %v1812
        %v1828 = vshrl.u32 1326507024, %v1813
        %v1829 = vor.u32 %v1827, %v1828
        %vm1830 = vcmp.lt.s32.totalorder %v1811, 1
        %vm1831 = vcmp.lt.s32.totalorder %v1811, 2
        %vm1832 = vcmp.lt.s32.totalorder %v1811, 3
        %vm1833 = vcmp.lt.s32.totalorder %v1811, 4
        %v1834 = vsel %vm1830, %v1814, %v1817
        %v1835 = vsel %vm1833, %v1823, 2102212464
        %v1836 = vsel %vm1832, %v1820, %v1835
        %v1837 = vsel %vm1831, %v1834, %v1836
        %v1838 = vsel %vm1830, %v1817, %v1820
        %v1839 = vsel %vm1833, %v1826, 920167782
        %v1840 = vsel %vm1832, %v1823, %v1839
        %v1841 = vsel %vm1831, %v1838, %v1840
        %v1842 = vsel %vm1830, %v1820, %v1823
        %v1843 = vsel %vm1833, %v1829, 1326507024
        %v1844 = vsel %vm1832, %v1826, %v1843
        %v1845 = vsel %vm1831, %v1842, %v1844
        %v1846 = vshll.u32 %v1806, 8
        %v1847 = vmul.u32.u64.compose %v1846, %v1845
        %v1848 = vextract.low.u32 %v1847
        %v1849 = vextract.high.u32 %v1847
        %v1850 = vmul.u32.u64.compose %v1846, %v1841
        %v1851 = vextract.low.u32 %v1850
        %v1852 = vextract.high.u32 %v1850
        %v1853 = vmul.u32 %v1846, %v1837
        %v1854 = vadd.s32 %v1849, %v1851
        %vm1855 = vc.u32 %v1849, %v1851
        %v1856 = vadd.s32 %v1852, 1
        %v1857 = vsel %vm1855, %v1856, %v1852
        %v1858 = vadd.s32 %v1853, %v1857
        %v1859 = vadd.s32 %v1858, 536870912
        %v1860 = vshrl.u32 %v1859, 30
        %v1861 = vshll.u32 %v1860, 30
        %v1862 = vsub.s32 %v1858, %v1861
        %vm1863 = vcmp.lt.s32.totalorder %v1862, 0
        %v1864 = vsub.s32 0, %v1862
        %v1865 = vsel %vm1863, %v1864, %v1862
        %v1866 = vclz %v1865
        %v1867 = vsub.s32 %v1866, 2
        %vm1868 = vcmp.gt.s32.totalorder 0, %v1867
        %v1869 = vsel %vm1868, 0, %v1867
        %v1870 = vsub.s32 32, %v1869
        %v1871 = vshll.u32 %v1862, %v1869
        %v1872 = vshrl.u32 %v1854, %v1870
        %v1873 = vor.u32 %v1871, %v1872
        %v1874 = vsub.s32 4294967266, %v1869
        %v1875 = vadd.s32 %v1874, 127
        %v1876 = vshll.u32 %v1875, 23
        %v1877 = vor.u32 4788187, %v1876
        %v1878 = vand.u32 2147483647, %v1877
        %v1880 = vcvt.s32.f32 %v1873
        %v1881 = vmul.f32 %v1880, %v1878
        %v1882 = vxor.u32 %v1881, 2147483648
        %v1883 = vsel %vm1800, %v1882, %v1881
        %v1884 = vsub.s32 4, %v1860
        %v1885 = vsel %vm1800, %v1884, %v1860
        %v1886 = vsel %vm1799, %v966, %v1883
        %v1887 = vsel %vm1799, 0, %v1885
        %v1888 = vcosq.f32.pop %v1886
        %v1889 = vsinq.f32.pop %v1886
        %vm1890 = vweird.f32 %v966
        %v1891 = vand.u32 %v1887, 3
        %vm1892 = vcmp.lt.s32.totalorder %v1891, 2
        %vm1893 = vcmp.eq.s32.totalorder %v1891, 0
        %v1894 = vxor.u32 %v1889, 2147483648
        %v1895 = vsel %vm1893, %v1888, %v1894
        %vm1896 = vcmp.eq.s32.totalorder %v1891, 2
        %v1897 = vxor.u32 %v1888, 2147483648
        %v1898 = vsel %vm1896, %v1897, %v1889
        %v1899 = vsel %vm1892, %v1895, %v1898
        %v1900 = vsel %vm1890, nan, %v1899
        %v1901 = vand.u32 2147483647, %v967
        %vm1902 = vcmp.le.f32.partialorder %v1901, 0.7853982
        %vm1903 = vcmp.lt.s32.totalorder %v967, 0
        %v1904 = vand.u32 %v967, 2139095040
        %v1905 = vshrl.u32 %v1904, 23
        %v1906 = vsub.s32 %v1905, 127
        %v1907 = vand.u32 2147483647, %v967
        %v1908 = vand.u32 %v1907, 8388607
        %v1909 = vor.u32 %v1908, 8388608
        %v1910 = vsub.s32 0, %v1909
        %v1911 = vadd.s32 %v1906, 1
        %vm1912 = vcmp.gt.s32.totalorder %v1911, 0
        %v1913 = vsel %vm1912, %v1911, 0
        %v1914 = vshrl.u32 %v1913, 5
        %v1915 = vand.u32 %v1913, 31
        %v1916 = vsub.s32 32, %v1915
        %v1917 = vshrl.u32 683565275, %v1916
        %v1918 = vshll.u32 683565275, %v1915
        %v1919 = vshrl.u32 2475754826, %v1916
        %v1920 = vor.u32 %v1918, %v1919
        %v1921 = vshll.u32 2475754826, %v1915
        %v1922 = vshrl.u32 2131351028, %v1916
        %v1923 = vor.u32 %v1921, %v1922
        %v1924 = vshll.u32 2131351028, %v1915
        %v1925 = vshrl.u32 2102212464, %v1916
        %v1926 = vor.u32 %v1924, %v1925
        %v1927 = vshll.u32 2102212464, %v1915
        %v1928 = vshrl.u32 920167782, %v1916
        %v1929 = vor.u32 %v1927, %v1928
        %v1930 = vshll.u32 920167782, %v1915
        %v1931 = vshrl.u32 1326507024, %v1916
        %v1932 = vor.u32 %v1930, %v1931
        %vm1933 = vcmp.lt.s32.totalorder %v1914, 1
        %vm1934 = vcmp.lt.s32.totalorder %v1914, 2
        %vm1935 = vcmp.lt.s32.totalorder %v1914, 3
        %vm1936 = vcmp.lt.s32.totalorder %v1914, 4
        %v1937 = vsel %vm1933, %v1917, %v1920
        %v1938 = vsel %vm1936, %v1926, 2102212464
        %v1939 = vsel %vm1935, %v1923, %v1938
        %v1940 = vsel %vm1934, %v1937, %v1939
        %v1941 = vsel %vm1933, %v1920, %v1923
        %v1942 = vsel %vm1936, %v1929, 920167782
        %v1943 = vsel %vm1935, %v1926, %v1942
        %v1944 = vsel %vm1934, %v1941, %v1943
        %v1945 = vsel %vm1933, %v1923, %v1926
        %v1946 = vsel %vm1936, %v1932, 1326507024
        %v1947 = vsel %vm1935, %v1929, %v1946
        %v1948 = vsel %vm1934, %v1945, %v1947
        %v1949 = vshll.u32 %v1909, 8
        %v1950 = vmul.u32.u64.compose %v1949, %v1948
        %v1951 = vextract.low.u32 %v1950
        %v1952 = vextract.high.u32 %v1950
        %v1953 = vmul.u32.u64.compose %v1949, %v1944
        %v1954 = vextract.low.u32 %v1953
        %v1955 = vextract.high.u32 %v1953
        %v1956 = vmul.u32 %v1949, %v1940
        %v1957 = vadd.s32 %v1952, %v1954
        %vm1958 = vc.u32 %v1952, %v1954
        %v1959 = vadd.s32 %v1955, 1
        %v1960 = vsel %vm1958, %v1959, %v1955
        %v1961 = vadd.s32 %v1956, %v1960
        %v1962 = vadd.s32 %v1961, 536870912
        %v1963 = vshrl.u32 %v1962, 30
        %v1964 = vshll.u32 %v1963, 30
        %v1965 = vsub.s32 %v1961, %v1964
        %vm1966 = vcmp.lt.s32.totalorder %v1965, 0
        %v1967 = vsub.s32 0, %v1965
        %v1968 = vsel %vm1966, %v1967, %v1965
        %v1969 = vclz %v1968
        %v1970 = vsub.s32 %v1969, 2
        %vm1971 = vcmp.gt.s32.totalorder 0, %v1970
        %v1972 = vsel %vm1971, 0, %v1970
        %v1973 = vsub.s32 32, %v1972
        %v1974 = vshll.u32 %v1965, %v1972
        %v1975 = vshrl.u32 %v1957, %v1973
        %v1976 = vor.u32 %v1974, %v1975
        %v1977 = vsub.s32 4294967266, %v1972
        %v1978 = vadd.s32 %v1977, 127
        %v1979 = vshll.u32 %v1978, 23
        %v1980 = vor.u32 4788187, %v1979
        %v1981 = vand.u32 2147483647, %v1980
        %v1983 = vcvt.s32.f32 %v1976
        %v1984 = vmul.f32 %v1983, %v1981
        %v1985 = vxor.u32 %v1984, 2147483648
        %v1986 = vsel %vm1903, %v1985, %v1984
        %v1987 = vsub.s32 4, %v1963
        %v1988 = vsel %vm1903, %v1987, %v1963
        %v1989 = vsel %vm1902, %v967, %v1986
        %v1990 = vsel %vm1902, 0, %v1988
        %v1991 = vcosq.f32.pop %v1989
        %v1992 = vsinq.f32.pop %v1989
        %vm1993 = vweird.f32 %v967
        %v1994 = vand.u32 %v1990, 3
        %vm1995 = vcmp.lt.s32.totalorder %v1994, 2
        %vm1996 = vcmp.eq.s32.totalorder %v1994, 0
        %v1997 = vxor.u32 %v1992, 2147483648
        %v1998 = vsel %vm1996, %v1991, %v1997
        %vm1999 = vcmp.eq.s32.totalorder %v1994, 2
        %v2000 = vxor.u32 %v1991, 2147483648
        %v2001 = vsel %vm1999, %v2000, %v1992
        %v2002 = vsel %vm1995, %v1998, %v2001
        %v2003 = vsel %vm1993, nan, %v2002
        %v2004 = vand.u32 2147483647, %v968
        %vm2005 = vcmp.le.f32.partialorder %v2004, 0.7853982
        %vm2006 = vcmp.lt.s32.totalorder %v968, 0
        %v2007 = vand.u32 %v968, 2139095040
        %v2008 = vshrl.u32 %v2007, 23
        %v2009 = vsub.s32 %v2008, 127
        %v2010 = vand.u32 2147483647, %v968
        %v2011 = vand.u32 %v2010, 8388607
        %v2012 = vor.u32 %v2011, 8388608
        %v2013 = vsub.s32 0, %v2012
        %v2014 = vadd.s32 %v2009, 1
        %vm2015 = vcmp.gt.s32.totalorder %v2014, 0
        %v2016 = vsel %vm2015, %v2014, 0
        %v2017 = vshrl.u32 %v2016, 5
        %v2018 = vand.u32 %v2016, 31
        %v2019 = vsub.s32 32, %v2018
        %v2020 = vshrl.u32 683565275, %v2019
        %v2021 = vshll.u32 683565275, %v2018
        %v2022 = vshrl.u32 2475754826, %v2019
        %v2023 = vor.u32 %v2021, %v2022
        %v2024 = vshll.u32 2475754826, %v2018
        %v2025 = vshrl.u32 2131351028, %v2019
        %v2026 = vor.u32 %v2024, %v2025
        %v2027 = vshll.u32 2131351028, %v2018
        %v2028 = vshrl.u32 2102212464, %v2019
        %v2029 = vor.u32 %v2027, %v2028
        %v2030 = vshll.u32 2102212464, %v2018
        %v2031 = vshrl.u32 920167782, %v2019
        %v2032 = vor.u32 %v2030, %v2031
        %v2033 = vshll.u32 920167782, %v2018
        %v2034 = vshrl.u32 1326507024, %v2019
        %v2035 = vor.u32 %v2033, %v2034
        %vm2036 = vcmp.lt.s32.totalorder %v2017, 1
        %vm2037 = vcmp.lt.s32.totalorder %v2017, 2
        %vm2038 = vcmp.lt.s32.totalorder %v2017, 3
        %vm2039 = vcmp.lt.s32.totalorder %v2017, 4
        %v2040 = vsel %vm2036, %v2020, %v2023
        %v2041 = vsel %vm2039, %v2029, 2102212464
        %v2042 = vsel %vm2038, %v2026, %v2041
        %v2043 = vsel %vm2037, %v2040, %v2042
        %v2044 = vsel %vm2036, %v2023, %v2026
        %v2045 = vsel %vm2039, %v2032, 920167782
        %v2046 = vsel %vm2038, %v2029, %v2045
        %v2047 = vsel %vm2037, %v2044, %v2046
        %v2048 = vsel %vm2036, %v2026, %v2029
        %v2049 = vsel %vm2039, %v2035, 1326507024
        %v2050 = vsel %vm2038, %v2032, %v2049
        %v2051 = vsel %vm2037, %v2048, %v2050
        %v2052 = vshll.u32 %v2012, 8
        %v2053 = vmul.u32.u64.compose %v2052, %v2051
        %v2054 = vextract.low.u32 %v2053
        %v2055 = vextract.high.u32 %v2053
        %v2056 = vmul.u32.u64.compose %v2052, %v2047
        %v2057 = vextract.low.u32 %v2056
        %v2058 = vextract.high.u32 %v2056
        %v2059 = vmul.u32 %v2052, %v2043
        %v2060 = vadd.s32 %v2055, %v2057
        %vm2061 = vc.u32 %v2055, %v2057
        %v2062 = vadd.s32 %v2058, 1
        %v2063 = vsel %vm2061, %v2062, %v2058
        %v2064 = vadd.s32 %v2059, %v2063
        %v2065 = vadd.s32 %v2064, 536870912
        %v2066 = vshrl.u32 %v2065, 30
        %v2067 = vshll.u32 %v2066, 30
        %v2068 = vsub.s32 %v2064, %v2067
        %vm2069 = vcmp.lt.s32.totalorder %v2068, 0
        %v2070 = vsub.s32 0, %v2068
        %v2071 = vsel %vm2069, %v2070, %v2068
        %v2072 = vclz %v2071
        %v2073 = vsub.s32 %v2072, 2
        %vm2074 = vcmp.gt.s32.totalorder 0, %v2073
        %v2075 = vsel %vm2074, 0, %v2073
        %v2076 = vsub.s32 32, %v2075
        %v2077 = vshll.u32 %v2068, %v2075
        %v2078 = vshrl.u32 %v2060, %v2076
        %v2079 = vor.u32 %v2077, %v2078
        %v2080 = vsub.s32 4294967266, %v2075
        %v2081 = vadd.s32 %v2080, 127
        %v2082 = vshll.u32 %v2081, 23
        %v2083 = vor.u32 4788187, %v2082
        %v2084 = vand.u32 2147483647, %v2083
        %v2086 = vcvt.s32.f32 %v2079
        %v2087 = vmul.f32 %v2086, %v2084
        %v2088 = vxor.u32 %v2087, 2147483648
        %v2089 = vsel %vm2006, %v2088, %v2087
        %v2090 = vsub.s32 4, %v2066
        %v2091 = vsel %vm2006, %v2090, %v2066
        %v2092 = vsel %vm2005, %v968, %v2089
        %v2093 = vsel %vm2005, 0, %v2091
        %v2094 = vcosq.f32.pop %v2092
        %v2095 = vsinq.f32.pop %v2092
        %vm2096 = vweird.f32 %v968
        %v2097 = vand.u32 %v2093, 3
        %vm2098 = vcmp.lt.s32.totalorder %v2097, 2
        %vm2099 = vcmp.eq.s32.totalorder %v2097, 0
        %v2100 = vxor.u32 %v2095, 2147483648
        %v2101 = vsel %vm2099, %v2094, %v2100
        %vm2102 = vcmp.eq.s32.totalorder %v2097, 2
        %v2103 = vxor.u32 %v2094, 2147483648
        %v2104 = vsel %vm2102, %v2103, %v2095
        %v2105 = vsel %vm2098, %v2101, %v2104
        %v2106 = vsel %vm2096, nan, %v2105
        %v2107 = vand.u32 2147483647, %v969
        %vm2108 = vcmp.le.f32.partialorder %v2107, 0.7853982
        %vm2109 = vcmp.lt.s32.totalorder %v969, 0
        %v2110 = vand.u32 %v969, 2139095040
        %v2111 = vshrl.u32 %v2110, 23
        %v2112 = vsub.s32 %v2111, 127
        %v2113 = vand.u32 2147483647, %v969
        %v2114 = vand.u32 %v2113, 8388607
        %v2115 = vor.u32 %v2114, 8388608
        %v2116 = vsub.s32 0, %v2115
        %v2117 = vadd.s32 %v2112, 1
        %vm2118 = vcmp.gt.s32.totalorder %v2117, 0
        %v2119 = vsel %vm2118, %v2117, 0
        %v2120 = vshrl.u32 %v2119, 5
        %v2121 = vand.u32 %v2119, 31
        %v2122 = vsub.s32 32, %v2121
        %v2123 = vshrl.u32 683565275, %v2122
        %v2124 = vshll.u32 683565275, %v2121
        %v2125 = vshrl.u32 2475754826, %v2122
        %v2126 = vor.u32 %v2124, %v2125
        %v2127 = vshll.u32 2475754826, %v2121
        %v2128 = vshrl.u32 2131351028, %v2122
        %v2129 = vor.u32 %v2127, %v2128
        %v2130 = vshll.u32 2131351028, %v2121
        %v2131 = vshrl.u32 2102212464, %v2122
        %v2132 = vor.u32 %v2130, %v2131
        %v2133 = vshll.u32 2102212464, %v2121
        %v2134 = vshrl.u32 920167782, %v2122
        %v2135 = vor.u32 %v2133, %v2134
        %v2136 = vshll.u32 920167782, %v2121
        %v2137 = vshrl.u32 1326507024, %v2122
        %v2138 = vor.u32 %v2136, %v2137
        %vm2139 = vcmp.lt.s32.totalorder %v2120, 1
        %vm2140 = vcmp.lt.s32.totalorder %v2120, 2
        %vm2141 = vcmp.lt.s32.totalorder %v2120, 3
        %vm2142 = vcmp.lt.s32.totalorder %v2120, 4
        %v2143 = vsel %vm2139, %v2123, %v2126
        %v2144 = vsel %vm2142, %v2132, 2102212464
        %v2145 = vsel %vm2141, %v2129, %v2144
        %v2146 = vsel %vm2140, %v2143, %v2145
        %v2147 = vsel %vm2139, %v2126, %v2129
        %v2148 = vsel %vm2142, %v2135, 920167782
        %v2149 = vsel %vm2141, %v2132, %v2148
        %v2150 = vsel %vm2140, %v2147, %v2149
        %v2151 = vsel %vm2139, %v2129, %v2132
        %v2152 = vsel %vm2142, %v2138, 1326507024
        %v2153 = vsel %vm2141, %v2135, %v2152
        %v2154 = vsel %vm2140, %v2151, %v2153
        %v2155 = vshll.u32 %v2115, 8
        %v2156 = vmul.u32.u64.compose %v2155, %v2154
        %v2157 = vextract.low.u32 %v2156
        %v2158 = vextract.high.u32 %v2156
        %v2159 = vmul.u32.u64.compose %v2155, %v2150
        %v2160 = vextract.low.u32 %v2159
        %v2161 = vextract.high.u32 %v2159
        %v2162 = vmul.u32 %v2155, %v2146
        %v2163 = vadd.s32 %v2158, %v2160
        %vm2164 = vc.u32 %v2158, %v2160
        %v2165 = vadd.s32 %v2161, 1
        %v2166 = vsel %vm2164, %v2165, %v2161
        %v2167 = vadd.s32 %v2162, %v2166
        %v2168 = vadd.s32 %v2167, 536870912
        %v2169 = vshrl.u32 %v2168, 30
        %v2170 = vshll.u32 %v2169, 30
        %v2171 = vsub.s32 %v2167, %v2170
        %vm2172 = vcmp.lt.s32.totalorder %v2171, 0
        %v2173 = vsub.s32 0, %v2171
        %v2174 = vsel %vm2172, %v2173, %v2171
        %v2175 = vclz %v2174
        %v2176 = vsub.s32 %v2175, 2
        %vm2177 = vcmp.gt.s32.totalorder 0, %v2176
        %v2178 = vsel %vm2177, 0, %v2176
        %v2179 = vsub.s32 32, %v2178
        %v2180 = vshll.u32 %v2171, %v2178
        %v2181 = vshrl.u32 %v2163, %v2179
        %v2182 = vor.u32 %v2180, %v2181
        %v2183 = vsub.s32 4294967266, %v2178
        %v2184 = vadd.s32 %v2183, 127
        %v2185 = vshll.u32 %v2184, 23
        %v2186 = vor.u32 4788187, %v2185
        %v2187 = vand.u32 2147483647, %v2186
        %v2189 = vcvt.s32.f32 %v2182
        %v2190 = vmul.f32 %v2189, %v2187
        %v2191 = vxor.u32 %v2190, 2147483648
        %v2192 = vsel %vm2109, %v2191, %v2190
        %v2193 = vsub.s32 4, %v2169
        %v2194 = vsel %vm2109, %v2193, %v2169
        %v2195 = vsel %vm2108, %v969, %v2192
        %v2196 = vsel %vm2108, 0, %v2194
        %v2197 = vcosq.f32.pop %v2195
        %v2198 = vsinq.f32.pop %v2195
        %vm2199 = vweird.f32 %v969
        %v2200 = vand.u32 %v2196, 3
        %vm2201 = vcmp.lt.s32.totalorder %v2200, 2
        %vm2202 = vcmp.eq.s32.totalorder %v2200, 0
        %v2203 = vxor.u32 %v2198, 2147483648
        %v2204 = vsel %vm2202, %v2197, %v2203
        %vm2205 = vcmp.eq.s32.totalorder %v2200, 2
        %v2206 = vxor.u32 %v2197, 2147483648
        %v2207 = vsel %vm2205, %v2206, %v2198
        %v2208 = vsel %vm2201, %v2204, %v2207
        %v2209 = vsel %vm2199, nan, %v2208
        %v2210 = vand.u32 2147483647, %v970
        %vm2211 = vcmp.le.f32.partialorder %v2210, 0.7853982
        %vm2212 = vcmp.lt.s32.totalorder %v970, 0
        %v2213 = vand.u32 %v970, 2139095040
        %v2214 = vshrl.u32 %v2213, 23
        %v2215 = vsub.s32 %v2214, 127
        %v2216 = vand.u32 2147483647, %v970
        %v2217 = vand.u32 %v2216, 8388607
        %v2218 = vor.u32 %v2217, 8388608
        %v2219 = vsub.s32 0, %v2218
        %v2220 = vadd.s32 %v2215, 1
        %vm2221 = vcmp.gt.s32.totalorder %v2220, 0
        %v2222 = vsel %vm2221, %v2220, 0
        %v2223 = vshrl.u32 %v2222, 5
        %v2224 = vand.u32 %v2222, 31
        %v2225 = vsub.s32 32, %v2224
        %v2226 = vshrl.u32 683565275, %v2225
        %v2227 = vshll.u32 683565275, %v2224
        %v2228 = vshrl.u32 2475754826, %v2225
        %v2229 = vor.u32 %v2227, %v2228
        %v2230 = vshll.u32 2475754826, %v2224
        %v2231 = vshrl.u32 2131351028, %v2225
        %v2232 = vor.u32 %v2230, %v2231
        %v2233 = vshll.u32 2131351028, %v2224
        %v2234 = vshrl.u32 2102212464, %v2225
        %v2235 = vor.u32 %v2233, %v2234
        %v2236 = vshll.u32 2102212464, %v2224
        %v2237 = vshrl.u32 920167782, %v2225
        %v2238 = vor.u32 %v2236, %v2237
        %v2239 = vshll.u32 920167782, %v2224
        %v2240 = vshrl.u32 1326507024, %v2225
        %v2241 = vor.u32 %v2239, %v2240
        %vm2242 = vcmp.lt.s32.totalorder %v2223, 1
        %vm2243 = vcmp.lt.s32.totalorder %v2223, 2
        %vm2244 = vcmp.lt.s32.totalorder %v2223, 3
        %vm2245 = vcmp.lt.s32.totalorder %v2223, 4
        %v2246 = vsel %vm2242, %v2226, %v2229
        %v2247 = vsel %vm2245, %v2235, 2102212464
        %v2248 = vsel %vm2244, %v2232, %v2247
        %v2249 = vsel %vm2243, %v2246, %v2248
        %v2250 = vsel %vm2242, %v2229, %v2232
        %v2251 = vsel %vm2245, %v2238, 920167782
        %v2252 = vsel %vm2244, %v2235, %v2251
        %v2253 = vsel %vm2243, %v2250, %v2252
        %v2254 = vsel %vm2242, %v2232, %v2235
        %v2255 = vsel %vm2245, %v2241, 1326507024
        %v2256 = vsel %vm2244, %v2238, %v2255
        %v2257 = vsel %vm2243, %v2254, %v2256
        %v2258 = vshll.u32 %v2218, 8
        %v2259 = vmul.u32.u64.compose %v2258, %v2257
        %v2260 = vextract.low.u32 %v2259
        %v2261 = vextract.high.u32 %v2259
        %v2262 = vmul.u32.u64.compose %v2258, %v2253
        %v2263 = vextract.low.u32 %v2262
        %v2264 = vextract.high.u32 %v2262
        %v2265 = vmul.u32 %v2258, %v2249
        %v2266 = vadd.s32 %v2261, %v2263
        %vm2267 = vc.u32 %v2261, %v2263
        %v2268 = vadd.s32 %v2264, 1
        %v2269 = vsel %vm2267, %v2268, %v2264
        %v2270 = vadd.s32 %v2265, %v2269
        %v2271 = vadd.s32 %v2270, 536870912
        %v2272 = vshrl.u32 %v2271, 30
        %v2273 = vshll.u32 %v2272, 30
        %v2274 = vsub.s32 %v2270, %v2273
        %vm2275 = vcmp.lt.s32.totalorder %v2274, 0
        %v2276 = vsub.s32 0, %v2274
        %v2277 = vsel %vm2275, %v2276, %v2274
        %v2278 = vclz %v2277
        %v2279 = vsub.s32 %v2278, 2
        %vm2280 = vcmp.gt.s32.totalorder 0, %v2279
        %v2281 = vsel %vm2280, 0, %v2279
        %v2282 = vsub.s32 32, %v2281
        %v2283 = vshll.u32 %v2274, %v2281
        %v2284 = vshrl.u32 %v2266, %v2282
        %v2285 = vor.u32 %v2283, %v2284
        %v2286 = vsub.s32 4294967266, %v2281
        %v2287 = vadd.s32 %v2286, 127
        %v2288 = vshll.u32 %v2287, 23
        %v2289 = vor.u32 4788187, %v2288
        %v2290 = vand.u32 2147483647, %v2289
        %v2292 = vcvt.s32.f32 %v2285
        %v2293 = vmul.f32 %v2292, %v2290
        %v2294 = vxor.u32 %v2293, 2147483648
        %v2295 = vsel %vm2212, %v2294, %v2293
        %v2296 = vsub.s32 4, %v2272
        %v2297 = vsel %vm2212, %v2296, %v2272
        %v2298 = vsel %vm2211, %v970, %v2295
        %v2299 = vsel %vm2211, 0, %v2297
        %v2300 = vcosq.f32.pop %v2298
        %v2301 = vsinq.f32.pop %v2298
        %vm2302 = vweird.f32 %v970
        %v2303 = vand.u32 %v2299, 3
        %vm2304 = vcmp.lt.s32.totalorder %v2303, 2
        %vm2305 = vcmp.eq.s32.totalorder %v2303, 0
        %v2306 = vxor.u32 %v2301, 2147483648
        %v2307 = vsel %vm2305, %v2300, %v2306
        %vm2308 = vcmp.eq.s32.totalorder %v2303, 2
        %v2309 = vxor.u32 %v2300, 2147483648
        %v2310 = vsel %vm2308, %v2309, %v2301
        %v2311 = vsel %vm2304, %v2307, %v2310
        %v2312 = vsel %vm2302, nan, %v2311
        %v2313 = vand.u32 2147483647, %v971
        %vm2314 = vcmp.le.f32.partialorder %v2313, 0.7853982
        %vm2315 = vcmp.lt.s32.totalorder %v971, 0
        %v2316 = vand.u32 %v971, 2139095040
        %v2317 = vshrl.u32 %v2316, 23
        %v2318 = vsub.s32 %v2317, 127
        %v2319 = vand.u32 2147483647, %v971
        %v2320 = vand.u32 %v2319, 8388607
        %v2321 = vor.u32 %v2320, 8388608
        %v2322 = vsub.s32 0, %v2321
        %v2323 = vadd.s32 %v2318, 1
        %vm2324 = vcmp.gt.s32.totalorder %v2323, 0
        %v2325 = vsel %vm2324, %v2323, 0
        %v2326 = vshrl.u32 %v2325, 5
        %v2327 = vand.u32 %v2325, 31
        %v2328 = vsub.s32 32, %v2327
        %v2329 = vshrl.u32 683565275, %v2328
        %v2330 = vshll.u32 683565275, %v2327
        %v2331 = vshrl.u32 2475754826, %v2328
        %v2332 = vor.u32 %v2330, %v2331
        %v2333 = vshll.u32 2475754826, %v2327
        %v2334 = vshrl.u32 2131351028, %v2328
        %v2335 = vor.u32 %v2333, %v2334
        %v2336 = vshll.u32 2131351028, %v2327
        %v2337 = vshrl.u32 2102212464, %v2328
        %v2338 = vor.u32 %v2336, %v2337
        %v2339 = vshll.u32 2102212464, %v2327
        %v2340 = vshrl.u32 920167782, %v2328
        %v2341 = vor.u32 %v2339, %v2340
        %v2342 = vshll.u32 920167782, %v2327
        %v2343 = vshrl.u32 1326507024, %v2328
        %v2344 = vor.u32 %v2342, %v2343
        %vm2345 = vcmp.lt.s32.totalorder %v2326, 1
        %vm2346 = vcmp.lt.s32.totalorder %v2326, 2
        %vm2347 = vcmp.lt.s32.totalorder %v2326, 3
        %vm2348 = vcmp.lt.s32.totalorder %v2326, 4
        %v2349 = vsel %vm2345, %v2329, %v2332
        %v2350 = vsel %vm2348, %v2338, 2102212464
        %v2351 = vsel %vm2347, %v2335, %v2350
        %v2352 = vsel %vm2346, %v2349, %v2351
        %v2353 = vsel %vm2345, %v2332, %v2335
        %v2354 = vsel %vm2348, %v2341, 920167782
        %v2355 = vsel %vm2347, %v2338, %v2354
        %v2356 = vsel %vm2346, %v2353, %v2355
        %v2357 = vsel %vm2345, %v2335, %v2338
        %v2358 = vsel %vm2348, %v2344, 1326507024
        %v2359 = vsel %vm2347, %v2341, %v2358
        %v2360 = vsel %vm2346, %v2357, %v2359
        %v2361 = vshll.u32 %v2321, 8
        %v2362 = vmul.u32.u64.compose %v2361, %v2360
        %v2363 = vextract.low.u32 %v2362
        %v2364 = vextract.high.u32 %v2362
        %v2365 = vmul.u32.u64.compose %v2361, %v2356
        %v2366 = vextract.low.u32 %v2365
        %v2367 = vextract.high.u32 %v2365
        %v2368 = vmul.u32 %v2361, %v2352
        %v2369 = vadd.s32 %v2364, %v2366
        %vm2370 = vc.u32 %v2364, %v2366
        %v2371 = vadd.s32 %v2367, 1
        %v2372 = vsel %vm2370, %v2371, %v2367
        %v2373 = vadd.s32 %v2368, %v2372
        %v2374 = vadd.s32 %v2373, 536870912
        %v2375 = vshrl.u32 %v2374, 30
        %v2376 = vshll.u32 %v2375, 30
        %v2377 = vsub.s32 %v2373, %v2376
        %vm2378 = vcmp.lt.s32.totalorder %v2377, 0
        %v2379 = vsub.s32 0, %v2377
        %v2380 = vsel %vm2378, %v2379, %v2377
        %v2381 = vclz %v2380
        %v2382 = vsub.s32 %v2381, 2
        %vm2383 = vcmp.gt.s32.totalorder 0, %v2382
        %v2384 = vsel %vm2383, 0, %v2382
        %v2385 = vsub.s32 32, %v2384
        %v2386 = vshll.u32 %v2377, %v2384
        %v2387 = vshrl.u32 %v2369, %v2385
        %v2388 = vor.u32 %v2386, %v2387
        %v2389 = vsub.s32 4294967266, %v2384
        %v2390 = vadd.s32 %v2389, 127
        %v2391 = vshll.u32 %v2390, 23
        %v2392 = vor.u32 4788187, %v2391
        %v2393 = vand.u32 2147483647, %v2392
        %v2395 = vcvt.s32.f32 %v2388
        %v2396 = vmul.f32 %v2395, %v2393
        %v2397 = vxor.u32 %v2396, 2147483648
        %v2398 = vsel %vm2315, %v2397, %v2396
        %v2399 = vsub.s32 4, %v2375
        %v2400 = vsel %vm2315, %v2399, %v2375
        %v2401 = vsel %vm2314, %v971, %v2398
        %v2402 = vsel %vm2314, 0, %v2400
        %v2403 = vcosq.f32.pop %v2401
        %v2404 = vsinq.f32.pop %v2401
        %vm2405 = vweird.f32 %v971
        %v2406 = vand.u32 %v2402, 3
        %vm2407 = vcmp.lt.s32.totalorder %v2406, 2
        %vm2408 = vcmp.eq.s32.totalorder %v2406, 0
        %v2409 = vxor.u32 %v2404, 2147483648
        %v2410 = vsel %vm2408, %v2403, %v2409
        %vm2411 = vcmp.eq.s32.totalorder %v2406, 2
        %v2412 = vxor.u32 %v2403, 2147483648
        %v2413 = vsel %vm2411, %v2412, %v2404
        %v2414 = vsel %vm2407, %v2410, %v2413
        %v2415 = vsel %vm2405, nan, %v2414
        %v2416 = vand.u32 2147483647, %v972
        %vm2417 = vcmp.le.f32.partialorder %v2416, 0.7853982
        %vm2418 = vcmp.lt.s32.totalorder %v972, 0
        %v2419 = vand.u32 %v972, 2139095040
        %v2420 = vshrl.u32 %v2419, 23
        %v2421 = vsub.s32 %v2420, 127
        %v2422 = vand.u32 2147483647, %v972
        %v2423 = vand.u32 %v2422, 8388607
        %v2424 = vor.u32 %v2423, 8388608
        %v2425 = vsub.s32 0, %v2424
        %v2426 = vadd.s32 %v2421, 1
        %vm2427 = vcmp.gt.s32.totalorder %v2426, 0
        %v2428 = vsel %vm2427, %v2426, 0
        %v2429 = vshrl.u32 %v2428, 5
        %v2430 = vand.u32 %v2428, 31
        %v2431 = vsub.s32 32, %v2430
        %v2432 = vshrl.u32 683565275, %v2431
        %v2433 = vshll.u32 683565275, %v2430
        %v2434 = vshrl.u32 2475754826, %v2431
        %v2435 = vor.u32 %v2433, %v2434
        %v2436 = vshll.u32 2475754826, %v2430
        %v2437 = vshrl.u32 2131351028, %v2431
        %v2438 = vor.u32 %v2436, %v2437
        %v2439 = vshll.u32 2131351028, %v2430
        %v2440 = vshrl.u32 2102212464, %v2431
        %v2441 = vor.u32 %v2439, %v2440
        %v2442 = vshll.u32 2102212464, %v2430
        %v2443 = vshrl.u32 920167782, %v2431
        %v2444 = vor.u32 %v2442, %v2443
        %v2445 = vshll.u32 920167782, %v2430
        %v2446 = vshrl.u32 1326507024, %v2431
        %v2447 = vor.u32 %v2445, %v2446
        %vm2448 = vcmp.lt.s32.totalorder %v2429, 1
        %vm2449 = vcmp.lt.s32.totalorder %v2429, 2
        %vm2450 = vcmp.lt.s32.totalorder %v2429, 3
        %vm2451 = vcmp.lt.s32.totalorder %v2429, 4
        %v2452 = vsel %vm2448, %v2432, %v2435
        %v2453 = vsel %vm2451, %v2441, 2102212464
        %v2454 = vsel %vm2450, %v2438, %v2453
        %v2455 = vsel %vm2449, %v2452, %v2454
        %v2456 = vsel %vm2448, %v2435, %v2438
        %v2457 = vsel %vm2451, %v2444, 920167782
        %v2458 = vsel %vm2450, %v2441, %v2457
        %v2459 = vsel %vm2449, %v2456, %v2458
        %v2460 = vsel %vm2448, %v2438, %v2441
        %v2461 = vsel %vm2451, %v2447, 1326507024
        %v2462 = vsel %vm2450, %v2444, %v2461
        %v2463 = vsel %vm2449, %v2460, %v2462
        %v2464 = vshll.u32 %v2424, 8
        %v2465 = vmul.u32.u64.compose %v2464, %v2463
        %v2466 = vextract.low.u32 %v2465
        %v2467 = vextract.high.u32 %v2465
        %v2468 = vmul.u32.u64.compose %v2464, %v2459
        %v2469 = vextract.low.u32 %v2468
        %v2470 = vextract.high.u32 %v2468
        %v2471 = vmul.u32 %v2464, %v2455
        %v2472 = vadd.s32 %v2467, %v2469
        %vm2473 = vc.u32 %v2467, %v2469
        %v2474 = vadd.s32 %v2470, 1
        %v2475 = vsel %vm2473, %v2474, %v2470
        %v2476 = vadd.s32 %v2471, %v2475
        %v2477 = vadd.s32 %v2476, 536870912
        %v2478 = vshrl.u32 %v2477, 30
        %v2479 = vshll.u32 %v2478, 30
        %v2480 = vsub.s32 %v2476, %v2479
        %vm2481 = vcmp.lt.s32.totalorder %v2480, 0
        %v2482 = vsub.s32 0, %v2480
        %v2483 = vsel %vm2481, %v2482, %v2480
        %v2484 = vclz %v2483
        %v2485 = vsub.s32 %v2484, 2
        %vm2486 = vcmp.gt.s32.totalorder 0, %v2485
        %v2487 = vsel %vm2486, 0, %v2485
        %v2488 = vsub.s32 32, %v2487
        %v2489 = vshll.u32 %v2480, %v2487
        %v2490 = vshrl.u32 %v2472, %v2488
        %v2491 = vor.u32 %v2489, %v2490
        %v2492 = vsub.s32 4294967266, %v2487
        %v2493 = vadd.s32 %v2492, 127
        %v2494 = vshll.u32 %v2493, 23
        %v2495 = vor.u32 4788187, %v2494
        %v2496 = vand.u32 2147483647, %v2495
        %v2498 = vcvt.s32.f32 %v2491
        %v2499 = vmul.f32 %v2498, %v2496
        %v2500 = vxor.u32 %v2499, 2147483648
        %v2501 = vsel %vm2418, %v2500, %v2499
        %v2502 = vsub.s32 4, %v2478
        %v2503 = vsel %vm2418, %v2502, %v2478
        %v2504 = vsel %vm2417, %v972, %v2501
        %v2505 = vsel %vm2417, 0, %v2503
        %v2506 = vcosq.f32.pop %v2504
        %v2507 = vsinq.f32.pop %v2504
        %vm2508 = vweird.f32 %v972
        %v2509 = vand.u32 %v2505, 3
        %vm2510 = vcmp.lt.s32.totalorder %v2509, 2
        %vm2511 = vcmp.eq.s32.totalorder %v2509, 0
        %v2512 = vxor.u32 %v2507, 2147483648
        %v2513 = vsel %vm2511, %v2506, %v2512
        %vm2514 = vcmp.eq.s32.totalorder %v2509, 2
        %v2515 = vxor.u32 %v2506, 2147483648
        %v2516 = vsel %vm2514, %v2515, %v2507
        %v2517 = vsel %vm2510, %v2513, %v2516
        %v2518 = vsel %vm2508, nan, %v2517
        %v2519 = vand.u32 2147483647, %v973
        %vm2520 = vcmp.le.f32.partialorder %v2519, 0.7853982
        %vm2521 = vcmp.lt.s32.totalorder %v973, 0
        %v2522 = vand.u32 %v973, 2139095040
        %v2523 = vshrl.u32 %v2522, 23
        %v2524 = vsub.s32 %v2523, 127
        %v2525 = vand.u32 2147483647, %v973
        %v2526 = vand.u32 %v2525, 8388607
        %v2527 = vor.u32 %v2526, 8388608
        %v2528 = vsub.s32 0, %v2527
        %v2529 = vadd.s32 %v2524, 1
        %vm2530 = vcmp.gt.s32.totalorder %v2529, 0
        %v2531 = vsel %vm2530, %v2529, 0
        %v2532 = vshrl.u32 %v2531, 5
        %v2533 = vand.u32 %v2531, 31
        %v2534 = vsub.s32 32, %v2533
        %v2535 = vshrl.u32 683565275, %v2534
        %v2536 = vshll.u32 683565275, %v2533
        %v2537 = vshrl.u32 2475754826, %v2534
        %v2538 = vor.u32 %v2536, %v2537
        %v2539 = vshll.u32 2475754826, %v2533
        %v2540 = vshrl.u32 2131351028, %v2534
        %v2541 = vor.u32 %v2539, %v2540
        %v2542 = vshll.u32 2131351028, %v2533
        %v2543 = vshrl.u32 2102212464, %v2534
        %v2544 = vor.u32 %v2542, %v2543
        %v2545 = vshll.u32 2102212464, %v2533
        %v2546 = vshrl.u32 920167782, %v2534
        %v2547 = vor.u32 %v2545, %v2546
        %v2548 = vshll.u32 920167782, %v2533
        %v2549 = vshrl.u32 1326507024, %v2534
        %v2550 = vor.u32 %v2548, %v2549
        %vm2551 = vcmp.lt.s32.totalorder %v2532, 1
        %vm2552 = vcmp.lt.s32.totalorder %v2532, 2
        %vm2553 = vcmp.lt.s32.totalorder %v2532, 3
        %vm2554 = vcmp.lt.s32.totalorder %v2532, 4
        %v2555 = vsel %vm2551, %v2535, %v2538
        %v2556 = vsel %vm2554, %v2544, 2102212464
        %v2557 = vsel %vm2553, %v2541, %v2556
        %v2558 = vsel %vm2552, %v2555, %v2557
        %v2559 = vsel %vm2551, %v2538, %v2541
        %v2560 = vsel %vm2554, %v2547, 920167782
        %v2561 = vsel %vm2553, %v2544, %v2560
        %v2562 = vsel %vm2552, %v2559, %v2561
        %v2563 = vsel %vm2551, %v2541, %v2544
        %v2564 = vsel %vm2554, %v2550, 1326507024
        %v2565 = vsel %vm2553, %v2547, %v2564
        %v2566 = vsel %vm2552, %v2563, %v2565
        %v2567 = vshll.u32 %v2527, 8
        %v2568 = vmul.u32.u64.compose %v2567, %v2566
        %v2569 = vextract.low.u32 %v2568
        %v2570 = vextract.high.u32 %v2568
        %v2571 = vmul.u32.u64.compose %v2567, %v2562
        %v2572 = vextract.low.u32 %v2571
        %v2573 = vextract.high.u32 %v2571
        %v2574 = vmul.u32 %v2567, %v2558
        %v2575 = vadd.s32 %v2570, %v2572
        %vm2576 = vc.u32 %v2570, %v2572
        %v2577 = vadd.s32 %v2573, 1
        %v2578 = vsel %vm2576, %v2577, %v2573
        %v2579 = vadd.s32 %v2574, %v2578
        %v2580 = vadd.s32 %v2579, 536870912
        %v2581 = vshrl.u32 %v2580, 30
        %v2582 = vshll.u32 %v2581, 30
        %v2583 = vsub.s32 %v2579, %v2582
        %vm2584 = vcmp.lt.s32.totalorder %v2583, 0
        %v2585 = vsub.s32 0, %v2583
        %v2586 = vsel %vm2584, %v2585, %v2583
        %v2587 = vclz %v2586
        %v2588 = vsub.s32 %v2587, 2
        %vm2589 = vcmp.gt.s32.totalorder 0, %v2588
        %v2590 = vsel %vm2589, 0, %v2588
        %v2591 = vsub.s32 32, %v2590
        %v2592 = vshll.u32 %v2583, %v2590
        %v2593 = vshrl.u32 %v2575, %v2591
        %v2594 = vor.u32 %v2592, %v2593
        %v2595 = vsub.s32 4294967266, %v2590
        %v2596 = vadd.s32 %v2595, 127
        %v2597 = vshll.u32 %v2596, 23
        %v2598 = vor.u32 4788187, %v2597
        %v2599 = vand.u32 2147483647, %v2598
        %v2601 = vcvt.s32.f32 %v2594
        %v2602 = vmul.f32 %v2601, %v2599
        %v2603 = vxor.u32 %v2602, 2147483648
        %v2604 = vsel %vm2521, %v2603, %v2602
        %v2605 = vsub.s32 4, %v2581
        %v2606 = vsel %vm2521, %v2605, %v2581
        %v2607 = vsel %vm2520, %v973, %v2604
        %v2608 = vsel %vm2520, 0, %v2606
        %v2609 = vcosq.f32.pop %v2607
        %v2610 = vsinq.f32.pop %v2607
        %vm2611 = vweird.f32 %v973
        %v2612 = vand.u32 %v2608, 3
        %vm2613 = vcmp.lt.s32.totalorder %v2612, 2
        %vm2614 = vcmp.eq.s32.totalorder %v2612, 0
        %v2615 = vxor.u32 %v2610, 2147483648
        %v2616 = vsel %vm2614, %v2609, %v2615
        %vm2617 = vcmp.eq.s32.totalorder %v2612, 2
        %v2618 = vxor.u32 %v2609, 2147483648
        %v2619 = vsel %vm2617, %v2618, %v2610
        %v2620 = vsel %vm2613, %v2616, %v2619
        %v2621 = vsel %vm2611, nan, %v2620
        %v2622 = vand.u32 2147483647, %v958
        %vm2623 = vcmp.le.f32.partialorder %v2622, 0.7853982
        %vm2624 = vcmp.lt.s32.totalorder %v958, 0
        %v2625 = vand.u32 %v958, 2139095040
        %v2626 = vshrl.u32 %v2625, 23
        %v2627 = vsub.s32 %v2626, 127
        %v2628 = vand.u32 2147483647, %v958
        %v2629 = vand.u32 %v2628, 8388607
        %v2630 = vor.u32 %v2629, 8388608
        %v2631 = vsub.s32 0, %v2630
        %v2632 = vadd.s32 %v2627, 1
        %vm2633 = vcmp.gt.s32.totalorder %v2632, 0
        %v2634 = vsel %vm2633, %v2632, 0
        %v2635 = vshrl.u32 %v2634, 5
        %v2636 = vand.u32 %v2634, 31
        %v2637 = vsub.s32 32, %v2636
        %v2638 = vshrl.u32 683565275, %v2637
        %v2639 = vshll.u32 683565275, %v2636
        %v2640 = vshrl.u32 2475754826, %v2637
        %v2641 = vor.u32 %v2639, %v2640
        %v2642 = vshll.u32 2475754826, %v2636
        %v2643 = vshrl.u32 2131351028, %v2637
        %v2644 = vor.u32 %v2642, %v2643
        %v2645 = vshll.u32 2131351028, %v2636
        %v2646 = vshrl.u32 2102212464, %v2637
        %v2647 = vor.u32 %v2645, %v2646
        %v2648 = vshll.u32 2102212464, %v2636
        %v2649 = vshrl.u32 920167782, %v2637
        %v2650 = vor.u32 %v2648, %v2649
        %v2651 = vshll.u32 920167782, %v2636
        %v2652 = vshrl.u32 1326507024, %v2637
        %v2653 = vor.u32 %v2651, %v2652
        %vm2654 = vcmp.lt.s32.totalorder %v2635, 1
        %vm2655 = vcmp.lt.s32.totalorder %v2635, 2
        %vm2656 = vcmp.lt.s32.totalorder %v2635, 3
        %vm2657 = vcmp.lt.s32.totalorder %v2635, 4
        %v2658 = vsel %vm2654, %v2638, %v2641
        %v2659 = vsel %vm2657, %v2647, 2102212464
        %v2660 = vsel %vm2656, %v2644, %v2659
        %v2661 = vsel %vm2655, %v2658, %v2660
        %v2662 = vsel %vm2654, %v2641, %v2644
        %v2663 = vsel %vm2657, %v2650, 920167782
        %v2664 = vsel %vm2656, %v2647, %v2663
        %v2665 = vsel %vm2655, %v2662, %v2664
        %v2666 = vsel %vm2654, %v2644, %v2647
        %v2667 = vsel %vm2657, %v2653, 1326507024
        %v2668 = vsel %vm2656, %v2650, %v2667
        %v2669 = vsel %vm2655, %v2666, %v2668
        %v2670 = vshll.u32 %v2630, 8
        %v2671 = vmul.u32.u64.compose %v2670, %v2669
        %v2672 = vextract.low.u32 %v2671
        %v2673 = vextract.high.u32 %v2671
        %v2674 = vmul.u32.u64.compose %v2670, %v2665
        %v2675 = vextract.low.u32 %v2674
        %v2676 = vextract.high.u32 %v2674
        %v2677 = vmul.u32 %v2670, %v2661
        %v2678 = vadd.s32 %v2673, %v2675
        %vm2679 = vc.u32 %v2673, %v2675
        %v2680 = vadd.s32 %v2676, 1
        %v2681 = vsel %vm2679, %v2680, %v2676
        %v2682 = vadd.s32 %v2677, %v2681
        %v2683 = vadd.s32 %v2682, 536870912
        %v2684 = vshrl.u32 %v2683, 30
        %v2685 = vshll.u32 %v2684, 30
        %v2686 = vsub.s32 %v2682, %v2685
        %vm2687 = vcmp.lt.s32.totalorder %v2686, 0
        %v2688 = vsub.s32 0, %v2686
        %v2689 = vsel %vm2687, %v2688, %v2686
        %v2690 = vclz %v2689
        %v2691 = vsub.s32 %v2690, 2
        %vm2692 = vcmp.gt.s32.totalorder 0, %v2691
        %v2693 = vsel %vm2692, 0, %v2691
        %v2694 = vsub.s32 32, %v2693
        %v2695 = vshll.u32 %v2686, %v2693
        %v2696 = vshrl.u32 %v2678, %v2694
        %v2697 = vor.u32 %v2695, %v2696
        %v2698 = vsub.s32 4294967266, %v2693
        %v2699 = vadd.s32 %v2698, 127
        %v2700 = vshll.u32 %v2699, 23
        %v2701 = vor.u32 4788187, %v2700
        %v2702 = vand.u32 2147483647, %v2701
        %v2704 = vcvt.s32.f32 %v2697
        %v2705 = vmul.f32 %v2704, %v2702
        %v2706 = vxor.u32 %v2705, 2147483648
        %v2707 = vsel %vm2624, %v2706, %v2705
        %v2708 = vsub.s32 4, %v2684
        %v2709 = vsel %vm2624, %v2708, %v2684
        %v2710 = vsel %vm2623, %v958, %v2707
        %v2711 = vsel %vm2623, 0, %v2709
        %v2712 = vcosq.f32.pop %v2710
        %v2713 = vsinq.f32.pop %v2710
        %vm2714 = vweird.f32 %v958
        %v2715 = vadd.s32 %v2711, 3
        %v2716 = vand.u32 %v2715, 3
        %vm2717 = vcmp.lt.s32.totalorder %v2716, 2
        %vm2718 = vcmp.eq.s32.totalorder %v2716, 0
        %v2719 = vxor.u32 %v2713, 2147483648
        %v2720 = vsel %vm2718, %v2712, %v2719
        %vm2721 = vcmp.eq.s32.totalorder %v2716, 2
        %v2722 = vxor.u32 %v2712, 2147483648
        %v2723 = vsel %vm2721, %v2722, %v2713
        %v2724 = vsel %vm2717, %v2720, %v2723
        %v2725 = vsel %vm2714, nan, %v2724
        %v2726 = vand.u32 2147483647, %v959
        %vm2727 = vcmp.le.f32.partialorder %v2726, 0.7853982
        %vm2728 = vcmp.lt.s32.totalorder %v959, 0
        %v2729 = vand.u32 %v959, 2139095040
        %v2730 = vshrl.u32 %v2729, 23
        %v2731 = vsub.s32 %v2730, 127
        %v2732 = vand.u32 2147483647, %v959
        %v2733 = vand.u32 %v2732, 8388607
        %v2734 = vor.u32 %v2733, 8388608
        %v2735 = vsub.s32 0, %v2734
        %v2736 = vadd.s32 %v2731, 1
        %vm2737 = vcmp.gt.s32.totalorder %v2736, 0
        %v2738 = vsel %vm2737, %v2736, 0
        %v2739 = vshrl.u32 %v2738, 5
        %v2740 = vand.u32 %v2738, 31
        %v2741 = vsub.s32 32, %v2740
        %v2742 = vshrl.u32 683565275, %v2741
        %v2743 = vshll.u32 683565275, %v2740
        %v2744 = vshrl.u32 2475754826, %v2741
        %v2745 = vor.u32 %v2743, %v2744
        %v2746 = vshll.u32 2475754826, %v2740
        %v2747 = vshrl.u32 2131351028, %v2741
        %v2748 = vor.u32 %v2746, %v2747
        %v2749 = vshll.u32 2131351028, %v2740
        %v2750 = vshrl.u32 2102212464, %v2741
        %v2751 = vor.u32 %v2749, %v2750
        %v2752 = vshll.u32 2102212464, %v2740
        %v2753 = vshrl.u32 920167782, %v2741
        %v2754 = vor.u32 %v2752, %v2753
        %v2755 = vshll.u32 920167782, %v2740
        %v2756 = vshrl.u32 1326507024, %v2741
        %v2757 = vor.u32 %v2755, %v2756
        %vm2758 = vcmp.lt.s32.totalorder %v2739, 1
        %vm2759 = vcmp.lt.s32.totalorder %v2739, 2
        %vm2760 = vcmp.lt.s32.totalorder %v2739, 3
        %vm2761 = vcmp.lt.s32.totalorder %v2739, 4
        %v2762 = vsel %vm2758, %v2742, %v2745
        %v2763 = vsel %vm2761, %v2751, 2102212464
        %v2764 = vsel %vm2760, %v2748, %v2763
        %v2765 = vsel %vm2759, %v2762, %v2764
        %v2766 = vsel %vm2758, %v2745, %v2748
        %v2767 = vsel %vm2761, %v2754, 920167782
        %v2768 = vsel %vm2760, %v2751, %v2767
        %v2769 = vsel %vm2759, %v2766, %v2768
        %v2770 = vsel %vm2758, %v2748, %v2751
        %v2771 = vsel %vm2761, %v2757, 1326507024
        %v2772 = vsel %vm2760, %v2754, %v2771
        %v2773 = vsel %vm2759, %v2770, %v2772
        %v2774 = vshll.u32 %v2734, 8
        %v2775 = vmul.u32.u64.compose %v2774, %v2773
        %v2776 = vextract.low.u32 %v2775
        %v2777 = vextract.high.u32 %v2775
        %v2778 = vmul.u32.u64.compose %v2774, %v2769
        %v2779 = vextract.low.u32 %v2778
        %v2780 = vextract.high.u32 %v2778
        %v2781 = vmul.u32 %v2774, %v2765
        %v2782 = vadd.s32 %v2777, %v2779
        %vm2783 = vc.u32 %v2777, %v2779
        %v2784 = vadd.s32 %v2780, 1
        %v2785 = vsel %vm2783, %v2784, %v2780
        %v2786 = vadd.s32 %v2781, %v2785
        %v2787 = vadd.s32 %v2786, 536870912
        %v2788 = vshrl.u32 %v2787, 30
        %v2789 = vshll.u32 %v2788, 30
        %v2790 = vsub.s32 %v2786, %v2789
        %vm2791 = vcmp.lt.s32.totalorder %v2790, 0
        %v2792 = vsub.s32 0, %v2790
        %v2793 = vsel %vm2791, %v2792, %v2790
        %v2794 = vclz %v2793
        %v2795 = vsub.s32 %v2794, 2
        %vm2796 = vcmp.gt.s32.totalorder 0, %v2795
        %v2797 = vsel %vm2796, 0, %v2795
        %v2798 = vsub.s32 32, %v2797
        %v2799 = vshll.u32 %v2790, %v2797
        %v2800 = vshrl.u32 %v2782, %v2798
        %v2801 = vor.u32 %v2799, %v2800
        %v2802 = vsub.s32 4294967266, %v2797
        %v2803 = vadd.s32 %v2802, 127
        %v2804 = vshll.u32 %v2803, 23
        %v2805 = vor.u32 4788187, %v2804
        %v2806 = vand.u32 2147483647, %v2805
        %v2808 = vcvt.s32.f32 %v2801
        %v2809 = vmul.f32 %v2808, %v2806
        %v2810 = vxor.u32 %v2809, 2147483648
        %v2811 = vsel %vm2728, %v2810, %v2809
        %v2812 = vsub.s32 4, %v2788
        %v2813 = vsel %vm2728, %v2812, %v2788
        %v2814 = vsel %vm2727, %v959, %v2811
        %v2815 = vsel %vm2727, 0, %v2813
        %v2816 = vcosq.f32.pop %v2814
        %v2817 = vsinq.f32.pop %v2814
        %vm2818 = vweird.f32 %v959
        %v2819 = vadd.s32 %v2815, 3
        %v2820 = vand.u32 %v2819, 3
        %vm2821 = vcmp.lt.s32.totalorder %v2820, 2
        %vm2822 = vcmp.eq.s32.totalorder %v2820, 0
        %v2823 = vxor.u32 %v2817, 2147483648
        %v2824 = vsel %vm2822, %v2816, %v2823
        %vm2825 = vcmp.eq.s32.totalorder %v2820, 2
        %v2826 = vxor.u32 %v2816, 2147483648
        %v2827 = vsel %vm2825, %v2826, %v2817
        %v2828 = vsel %vm2821, %v2824, %v2827
        %v2829 = vsel %vm2818, nan, %v2828
        %v2830 = vand.u32 2147483647, %v960
        %vm2831 = vcmp.le.f32.partialorder %v2830, 0.7853982
        %vm2832 = vcmp.lt.s32.totalorder %v960, 0
        %v2833 = vand.u32 %v960, 2139095040
        %v2834 = vshrl.u32 %v2833, 23
        %v2835 = vsub.s32 %v2834, 127
        %v2836 = vand.u32 2147483647, %v960
        %v2837 = vand.u32 %v2836, 8388607
        %v2838 = vor.u32 %v2837, 8388608
        %v2839 = vsub.s32 0, %v2838
        %v2840 = vadd.s32 %v2835, 1
        %vm2841 = vcmp.gt.s32.totalorder %v2840, 0
        %v2842 = vsel %vm2841, %v2840, 0
        %v2843 = vshrl.u32 %v2842, 5
        %v2844 = vand.u32 %v2842, 31
        %v2845 = vsub.s32 32, %v2844
        %v2846 = vshrl.u32 683565275, %v2845
        %v2847 = vshll.u32 683565275, %v2844
        %v2848 = vshrl.u32 2475754826, %v2845
        %v2849 = vor.u32 %v2847, %v2848
        %v2850 = vshll.u32 2475754826, %v2844
        %v2851 = vshrl.u32 2131351028, %v2845
        %v2852 = vor.u32 %v2850, %v2851
        %v2853 = vshll.u32 2131351028, %v2844
        %v2854 = vshrl.u32 2102212464, %v2845
        %v2855 = vor.u32 %v2853, %v2854
        %v2856 = vshll.u32 2102212464, %v2844
        %v2857 = vshrl.u32 920167782, %v2845
        %v2858 = vor.u32 %v2856, %v2857
        %v2859 = vshll.u32 920167782, %v2844
        %v2860 = vshrl.u32 1326507024, %v2845
        %v2861 = vor.u32 %v2859, %v2860
        %vm2862 = vcmp.lt.s32.totalorder %v2843, 1
        %vm2863 = vcmp.lt.s32.totalorder %v2843, 2
        %vm2864 = vcmp.lt.s32.totalorder %v2843, 3
        %vm2865 = vcmp.lt.s32.totalorder %v2843, 4
        %v2866 = vsel %vm2862, %v2846, %v2849
        %v2867 = vsel %vm2865, %v2855, 2102212464
        %v2868 = vsel %vm2864, %v2852, %v2867
        %v2869 = vsel %vm2863, %v2866, %v2868
        %v2870 = vsel %vm2862, %v2849, %v2852
        %v2871 = vsel %vm2865, %v2858, 920167782
        %v2872 = vsel %vm2864, %v2855, %v2871
        %v2873 = vsel %vm2863, %v2870, %v2872
        %v2874 = vsel %vm2862, %v2852, %v2855
        %v2875 = vsel %vm2865, %v2861, 1326507024
        %v2876 = vsel %vm2864, %v2858, %v2875
        %v2877 = vsel %vm2863, %v2874, %v2876
        %v2878 = vshll.u32 %v2838, 8
        %v2879 = vmul.u32.u64.compose %v2878, %v2877
        %v2880 = vextract.low.u32 %v2879
        %v2881 = vextract.high.u32 %v2879
        %v2882 = vmul.u32.u64.compose %v2878, %v2873
        %v2883 = vextract.low.u32 %v2882
        %v2884 = vextract.high.u32 %v2882
        %v2885 = vmul.u32 %v2878, %v2869
        %v2886 = vadd.s32 %v2881, %v2883
        %vm2887 = vc.u32 %v2881, %v2883
        %v2888 = vadd.s32 %v2884, 1
        %v2889 = vsel %vm2887, %v2888, %v2884
        %v2890 = vadd.s32 %v2885, %v2889
        %v2891 = vadd.s32 %v2890, 536870912
        %v2892 = vshrl.u32 %v2891, 30
        %v2893 = vshll.u32 %v2892, 30
        %v2894 = vsub.s32 %v2890, %v2893
        %vm2895 = vcmp.lt.s32.totalorder %v2894, 0
        %v2896 = vsub.s32 0, %v2894
        %v2897 = vsel %vm2895, %v2896, %v2894
        %v2898 = vclz %v2897
        %v2899 = vsub.s32 %v2898, 2
        %vm2900 = vcmp.gt.s32.totalorder 0, %v2899
        %v2901 = vsel %vm2900, 0, %v2899
        %v2902 = vsub.s32 32, %v2901
        %v2903 = vshll.u32 %v2894, %v2901
        %v2904 = vshrl.u32 %v2886, %v2902
        %v2905 = vor.u32 %v2903, %v2904
        %v2906 = vsub.s32 4294967266, %v2901
        %v2907 = vadd.s32 %v2906, 127
        %v2908 = vshll.u32 %v2907, 23
        %v2909 = vor.u32 4788187, %v2908
        %v2910 = vand.u32 2147483647, %v2909
        %v2912 = vcvt.s32.f32 %v2905
        %v2913 = vmul.f32 %v2912, %v2910
        %v2914 = vxor.u32 %v2913, 2147483648
        %v2915 = vsel %vm2832, %v2914, %v2913
        %v2916 = vsub.s32 4, %v2892
        %v2917 = vsel %vm2832, %v2916, %v2892
        %v2918 = vsel %vm2831, %v960, %v2915
        %v2919 = vsel %vm2831, 0, %v2917
        %v2920 = vcosq.f32.pop %v2918
        %v2921 = vsinq.f32.pop %v2918
        %vm2922 = vweird.f32 %v960
        %v2923 = vadd.s32 %v2919, 3
        %v2924 = vand.u32 %v2923, 3
        %vm2925 = vcmp.lt.s32.totalorder %v2924, 2
        %vm2926 = vcmp.eq.s32.totalorder %v2924, 0
        %v2927 = vxor.u32 %v2921, 2147483648
        %v2928 = vsel %vm2926, %v2920, %v2927
        %vm2929 = vcmp.eq.s32.totalorder %v2924, 2
        %v2930 = vxor.u32 %v2920, 2147483648
        %v2931 = vsel %vm2929, %v2930, %v2921
        %v2932 = vsel %vm2925, %v2928, %v2931
        %v2933 = vsel %vm2922, nan, %v2932
        %v2934 = vand.u32 2147483647, %v961
        %vm2935 = vcmp.le.f32.partialorder %v2934, 0.7853982
        %vm2936 = vcmp.lt.s32.totalorder %v961, 0
        %v2937 = vand.u32 %v961, 2139095040
        %v2938 = vshrl.u32 %v2937, 23
        %v2939 = vsub.s32 %v2938, 127
        %v2940 = vand.u32 2147483647, %v961
        %v2941 = vand.u32 %v2940, 8388607
        %v2942 = vor.u32 %v2941, 8388608
        %v2943 = vsub.s32 0, %v2942
        %v2944 = vadd.s32 %v2939, 1
        %vm2945 = vcmp.gt.s32.totalorder %v2944, 0
        %v2946 = vsel %vm2945, %v2944, 0
        %v2947 = vshrl.u32 %v2946, 5
        %v2948 = vand.u32 %v2946, 31
        %v2949 = vsub.s32 32, %v2948
        %v2950 = vshrl.u32 683565275, %v2949
        %v2951 = vshll.u32 683565275, %v2948
        %v2952 = vshrl.u32 2475754826, %v2949
        %v2953 = vor.u32 %v2951, %v2952
        %v2954 = vshll.u32 2475754826, %v2948
        %v2955 = vshrl.u32 2131351028, %v2949
        %v2956 = vor.u32 %v2954, %v2955
        %v2957 = vshll.u32 2131351028, %v2948
        %v2958 = vshrl.u32 2102212464, %v2949
        %v2959 = vor.u32 %v2957, %v2958
        %v2960 = vshll.u32 2102212464, %v2948
        %v2961 = vshrl.u32 920167782, %v2949
        %v2962 = vor.u32 %v2960, %v2961
        %v2963 = vshll.u32 920167782, %v2948
        %v2964 = vshrl.u32 1326507024, %v2949
        %v2965 = vor.u32 %v2963, %v2964
        %vm2966 = vcmp.lt.s32.totalorder %v2947, 1
        %vm2967 = vcmp.lt.s32.totalorder %v2947, 2
        %vm2968 = vcmp.lt.s32.totalorder %v2947, 3
        %vm2969 = vcmp.lt.s32.totalorder %v2947, 4
        %v2970 = vsel %vm2966, %v2950, %v2953
        %v2971 = vsel %vm2969, %v2959, 2102212464
        %v2972 = vsel %vm2968, %v2956, %v2971
        %v2973 = vsel %vm2967, %v2970, %v2972
        %v2974 = vsel %vm2966, %v2953, %v2956
        %v2975 = vsel %vm2969, %v2962, 920167782
        %v2976 = vsel %vm2968, %v2959, %v2975
        %v2977 = vsel %vm2967, %v2974, %v2976
        %v2978 = vsel %vm2966, %v2956, %v2959
        %v2979 = vsel %vm2969, %v2965, 1326507024
        %v2980 = vsel %vm2968, %v2962, %v2979
        %v2981 = vsel %vm2967, %v2978, %v2980
        %v2982 = vshll.u32 %v2942, 8
        %v2983 = vmul.u32.u64.compose %v2982, %v2981
        %v2984 = vextract.low.u32 %v2983
        %v2985 = vextract.high.u32 %v2983
        %v2986 = vmul.u32.u64.compose %v2982, %v2977
        %v2987 = vextract.low.u32 %v2986
        %v2988 = vextract.high.u32 %v2986
        %v2989 = vmul.u32 %v2982, %v2973
        %v2990 = vadd.s32 %v2985, %v2987
        %vm2991 = vc.u32 %v2985, %v2987
        %v2992 = vadd.s32 %v2988, 1
        %v2993 = vsel %vm2991, %v2992, %v2988
        %v2994 = vadd.s32 %v2989, %v2993
        %v2995 = vadd.s32 %v2994, 536870912
        %v2996 = vshrl.u32 %v2995, 30
        %v2997 = vshll.u32 %v2996, 30
        %v2998 = vsub.s32 %v2994, %v2997
        %vm2999 = vcmp.lt.s32.totalorder %v2998, 0
        %v3000 = vsub.s32 0, %v2998
        %v3001 = vsel %vm2999, %v3000, %v2998
        %v3002 = vclz %v3001
        %v3003 = vsub.s32 %v3002, 2
        %vm3004 = vcmp.gt.s32.totalorder 0, %v3003
        %v3005 = vsel %vm3004, 0, %v3003
        %v3006 = vsub.s32 32, %v3005
        %v3007 = vshll.u32 %v2998, %v3005
        %v3008 = vshrl.u32 %v2990, %v3006
        %v3009 = vor.u32 %v3007, %v3008
        %v3010 = vsub.s32 4294967266, %v3005
        %v3011 = vadd.s32 %v3010, 127
        %v3012 = vshll.u32 %v3011, 23
        %v3013 = vor.u32 4788187, %v3012
        %v3014 = vand.u32 2147483647, %v3013
        %v3016 = vcvt.s32.f32 %v3009
        %v3017 = vmul.f32 %v3016, %v3014
        %v3018 = vxor.u32 %v3017, 2147483648
        %v3019 = vsel %vm2936, %v3018, %v3017
        %v3020 = vsub.s32 4, %v2996
        %v3021 = vsel %vm2936, %v3020, %v2996
        %v3022 = vsel %vm2935, %v961, %v3019
        %v3023 = vsel %vm2935, 0, %v3021
        %v3024 = vcosq.f32.pop %v3022
        %v3025 = vsinq.f32.pop %v3022
        %vm3026 = vweird.f32 %v961
        %v3027 = vadd.s32 %v3023, 3
        %v3028 = vand.u32 %v3027, 3
        %vm3029 = vcmp.lt.s32.totalorder %v3028, 2
        %vm3030 = vcmp.eq.s32.totalorder %v3028, 0
        %v3031 = vxor.u32 %v3025, 2147483648
        %v3032 = vsel %vm3030, %v3024, %v3031
        %vm3033 = vcmp.eq.s32.totalorder %v3028, 2
        %v3034 = vxor.u32 %v3024, 2147483648
        %v3035 = vsel %vm3033, %v3034, %v3025
        %v3036 = vsel %vm3029, %v3032, %v3035
        %v3037 = vsel %vm3026, nan, %v3036
        %v3038 = vand.u32 2147483647, %v962
        %vm3039 = vcmp.le.f32.partialorder %v3038, 0.7853982
        %vm3040 = vcmp.lt.s32.totalorder %v962, 0
        %v3041 = vand.u32 %v962, 2139095040
        %v3042 = vshrl.u32 %v3041, 23
        %v3043 = vsub.s32 %v3042, 127
        %v3044 = vand.u32 2147483647, %v962
        %v3045 = vand.u32 %v3044, 8388607
        %v3046 = vor.u32 %v3045, 8388608
        %v3047 = vsub.s32 0, %v3046
        %v3048 = vadd.s32 %v3043, 1
        %vm3049 = vcmp.gt.s32.totalorder %v3048, 0
        %v3050 = vsel %vm3049, %v3048, 0
        %v3051 = vshrl.u32 %v3050, 5
        %v3052 = vand.u32 %v3050, 31
        %v3053 = vsub.s32 32, %v3052
        %v3054 = vshrl.u32 683565275, %v3053
        %v3055 = vshll.u32 683565275, %v3052
        %v3056 = vshrl.u32 2475754826, %v3053
        %v3057 = vor.u32 %v3055, %v3056
        %v3058 = vshll.u32 2475754826, %v3052
        %v3059 = vshrl.u32 2131351028, %v3053
        %v3060 = vor.u32 %v3058, %v3059
        %v3061 = vshll.u32 2131351028, %v3052
        %v3062 = vshrl.u32 2102212464, %v3053
        %v3063 = vor.u32 %v3061, %v3062
        %v3064 = vshll.u32 2102212464, %v3052
        %v3065 = vshrl.u32 920167782, %v3053
        %v3066 = vor.u32 %v3064, %v3065
        %v3067 = vshll.u32 920167782, %v3052
        %v3068 = vshrl.u32 1326507024, %v3053
        %v3069 = vor.u32 %v3067, %v3068
        %vm3070 = vcmp.lt.s32.totalorder %v3051, 1
        %vm3071 = vcmp.lt.s32.totalorder %v3051, 2
        %vm3072 = vcmp.lt.s32.totalorder %v3051, 3
        %vm3073 = vcmp.lt.s32.totalorder %v3051, 4
        %v3074 = vsel %vm3070, %v3054, %v3057
        %v3075 = vsel %vm3073, %v3063, 2102212464
        %v3076 = vsel %vm3072, %v3060, %v3075
        %v3077 = vsel %vm3071, %v3074, %v3076
        %v3078 = vsel %vm3070, %v3057, %v3060
        %v3079 = vsel %vm3073, %v3066, 920167782
        %v3080 = vsel %vm3072, %v3063, %v3079
        %v3081 = vsel %vm3071, %v3078, %v3080
        %v3082 = vsel %vm3070, %v3060, %v3063
        %v3083 = vsel %vm3073, %v3069, 1326507024
        %v3084 = vsel %vm3072, %v3066, %v3083
        %v3085 = vsel %vm3071, %v3082, %v3084
        %v3086 = vshll.u32 %v3046, 8
        %v3087 = vmul.u32.u64.compose %v3086, %v3085
        %v3088 = vextract.low.u32 %v3087
        %v3089 = vextract.high.u32 %v3087
        %v3090 = vmul.u32.u64.compose %v3086, %v3081
        %v3091 = vextract.low.u32 %v3090
        %v3092 = vextract.high.u32 %v3090
        %v3093 = vmul.u32 %v3086, %v3077
        %v3094 = vadd.s32 %v3089, %v3091
        %vm3095 = vc.u32 %v3089, %v3091
        %v3096 = vadd.s32 %v3092, 1
        %v3097 = vsel %vm3095, %v3096, %v3092
        %v3098 = vadd.s32 %v3093, %v3097
        %v3099 = vadd.s32 %v3098, 536870912
        %v3100 = vshrl.u32 %v3099, 30
        %v3101 = vshll.u32 %v3100, 30
        %v3102 = vsub.s32 %v3098, %v3101
        %vm3103 = vcmp.lt.s32.totalorder %v3102, 0
        %v3104 = vsub.s32 0, %v3102
        %v3105 = vsel %vm3103, %v3104, %v3102
        %v3106 = vclz %v3105
        %v3107 = vsub.s32 %v3106, 2
        %vm3108 = vcmp.gt.s32.totalorder 0, %v3107
        %v3109 = vsel %vm3108, 0, %v3107
        %v3110 = vsub.s32 32, %v3109
        %v3111 = vshll.u32 %v3102, %v3109
        %v3112 = vshrl.u32 %v3094, %v3110
        %v3113 = vor.u32 %v3111, %v3112
        %v3114 = vsub.s32 4294967266, %v3109
        %v3115 = vadd.s32 %v3114, 127
        %v3116 = vshll.u32 %v3115, 23
        %v3117 = vor.u32 4788187, %v3116
        %v3118 = vand.u32 2147483647, %v3117
        %v3120 = vcvt.s32.f32 %v3113
        %v3121 = vmul.f32 %v3120, %v3118
        %v3122 = vxor.u32 %v3121, 2147483648
        %v3123 = vsel %vm3040, %v3122, %v3121
        %v3124 = vsub.s32 4, %v3100
        %v3125 = vsel %vm3040, %v3124, %v3100
        %v3126 = vsel %vm3039, %v962, %v3123
        %v3127 = vsel %vm3039, 0, %v3125
        %v3128 = vcosq.f32.pop %v3126
        %v3129 = vsinq.f32.pop %v3126
        %vm3130 = vweird.f32 %v962
        %v3131 = vadd.s32 %v3127, 3
        %v3132 = vand.u32 %v3131, 3
        %vm3133 = vcmp.lt.s32.totalorder %v3132, 2
        %vm3134 = vcmp.eq.s32.totalorder %v3132, 0
        %v3135 = vxor.u32 %v3129, 2147483648
        %v3136 = vsel %vm3134, %v3128, %v3135
        %vm3137 = vcmp.eq.s32.totalorder %v3132, 2
        %v3138 = vxor.u32 %v3128, 2147483648
        %v3139 = vsel %vm3137, %v3138, %v3129
        %v3140 = vsel %vm3133, %v3136, %v3139
        %v3141 = vsel %vm3130, nan, %v3140
        %v3142 = vand.u32 2147483647, %v963
        %vm3143 = vcmp.le.f32.partialorder %v3142, 0.7853982
        %vm3144 = vcmp.lt.s32.totalorder %v963, 0
        %v3145 = vand.u32 %v963, 2139095040
        %v3146 = vshrl.u32 %v3145, 23
        %v3147 = vsub.s32 %v3146, 127
        %v3148 = vand.u32 2147483647, %v963
        %v3149 = vand.u32 %v3148, 8388607
        %v3150 = vor.u32 %v3149, 8388608
        %v3151 = vsub.s32 0, %v3150
        %v3152 = vadd.s32 %v3147, 1
        %vm3153 = vcmp.gt.s32.totalorder %v3152, 0
        %v3154 = vsel %vm3153, %v3152, 0
        %v3155 = vshrl.u32 %v3154, 5
        %v3156 = vand.u32 %v3154, 31
        %v3157 = vsub.s32 32, %v3156
        %v3158 = vshrl.u32 683565275, %v3157
        %v3159 = vshll.u32 683565275, %v3156
        %v3160 = vshrl.u32 2475754826, %v3157
        %v3161 = vor.u32 %v3159, %v3160
        %v3162 = vshll.u32 2475754826, %v3156
        %v3163 = vshrl.u32 2131351028, %v3157
        %v3164 = vor.u32 %v3162, %v3163
        %v3165 = vshll.u32 2131351028, %v3156
        %v3166 = vshrl.u32 2102212464, %v3157
        %v3167 = vor.u32 %v3165, %v3166
        %v3168 = vshll.u32 2102212464, %v3156
        %v3169 = vshrl.u32 920167782, %v3157
        %v3170 = vor.u32 %v3168, %v3169
        %v3171 = vshll.u32 920167782, %v3156
        %v3172 = vshrl.u32 1326507024, %v3157
        %v3173 = vor.u32 %v3171, %v3172
        %vm3174 = vcmp.lt.s32.totalorder %v3155, 1
        %vm3175 = vcmp.lt.s32.totalorder %v3155, 2
        %vm3176 = vcmp.lt.s32.totalorder %v3155, 3
        %vm3177 = vcmp.lt.s32.totalorder %v3155, 4
        %v3178 = vsel %vm3174, %v3158, %v3161
        %v3179 = vsel %vm3177, %v3167, 2102212464
        %v3180 = vsel %vm3176, %v3164, %v3179
        %v3181 = vsel %vm3175, %v3178, %v3180
        %v3182 = vsel %vm3174, %v3161, %v3164
        %v3183 = vsel %vm3177, %v3170, 920167782
        %v3184 = vsel %vm3176, %v3167, %v3183
        %v3185 = vsel %vm3175, %v3182, %v3184
        %v3186 = vsel %vm3174, %v3164, %v3167
        %v3187 = vsel %vm3177, %v3173, 1326507024
        %v3188 = vsel %vm3176, %v3170, %v3187
        %v3189 = vsel %vm3175, %v3186, %v3188
        %v3190 = vshll.u32 %v3150, 8
        %v3191 = vmul.u32.u64.compose %v3190, %v3189
        %v3192 = vextract.low.u32 %v3191
        %v3193 = vextract.high.u32 %v3191
        %v3194 = vmul.u32.u64.compose %v3190, %v3185
        %v3195 = vextract.low.u32 %v3194
        %v3196 = vextract.high.u32 %v3194
        %v3197 = vmul.u32 %v3190, %v3181
        %v3198 = vadd.s32 %v3193, %v3195
        %vm3199 = vc.u32 %v3193, %v3195
        %v3200 = vadd.s32 %v3196, 1
        %v3201 = vsel %vm3199, %v3200, %v3196
        %v3202 = vadd.s32 %v3197, %v3201
        %v3203 = vadd.s32 %v3202, 536870912
        %v3204 = vshrl.u32 %v3203, 30
        %v3205 = vshll.u32 %v3204, 30
        %v3206 = vsub.s32 %v3202, %v3205
        %vm3207 = vcmp.lt.s32.totalorder %v3206, 0
        %v3208 = vsub.s32 0, %v3206
        %v3209 = vsel %vm3207, %v3208, %v3206
        %v3210 = vclz %v3209
        %v3211 = vsub.s32 %v3210, 2
        %vm3212 = vcmp.gt.s32.totalorder 0, %v3211
        %v3213 = vsel %vm3212, 0, %v3211
        %v3214 = vsub.s32 32, %v3213
        %v3215 = vshll.u32 %v3206, %v3213
        %v3216 = vshrl.u32 %v3198, %v3214
        %v3217 = vor.u32 %v3215, %v3216
        %v3218 = vsub.s32 4294967266, %v3213
        %v3219 = vadd.s32 %v3218, 127
        %v3220 = vshll.u32 %v3219, 23
        %v3221 = vor.u32 4788187, %v3220
        %v3222 = vand.u32 2147483647, %v3221
        %v3224 = vcvt.s32.f32 %v3217
        %v3225 = vmul.f32 %v3224, %v3222
        %v3226 = vxor.u32 %v3225, 2147483648
        %v3227 = vsel %vm3144, %v3226, %v3225
        %v3228 = vsub.s32 4, %v3204
        %v3229 = vsel %vm3144, %v3228, %v3204
        %v3230 = vsel %vm3143, %v963, %v3227
        %v3231 = vsel %vm3143, 0, %v3229
        %v3232 = vcosq.f32.pop %v3230
        %v3233 = vsinq.f32.pop %v3230
        %vm3234 = vweird.f32 %v963
        %v3235 = vadd.s32 %v3231, 3
        %v3236 = vand.u32 %v3235, 3
        %vm3237 = vcmp.lt.s32.totalorder %v3236, 2
        %vm3238 = vcmp.eq.s32.totalorder %v3236, 0
        %v3239 = vxor.u32 %v3233, 2147483648
        %v3240 = vsel %vm3238, %v3232, %v3239
        %vm3241 = vcmp.eq.s32.totalorder %v3236, 2
        %v3242 = vxor.u32 %v3232, 2147483648
        %v3243 = vsel %vm3241, %v3242, %v3233
        %v3244 = vsel %vm3237, %v3240, %v3243
        %v3245 = vsel %vm3234, nan, %v3244
        %v3246 = vand.u32 2147483647, %v964
        %vm3247 = vcmp.le.f32.partialorder %v3246, 0.7853982
        %vm3248 = vcmp.lt.s32.totalorder %v964, 0
        %v3249 = vand.u32 %v964, 2139095040
        %v3250 = vshrl.u32 %v3249, 23
        %v3251 = vsub.s32 %v3250, 127
        %v3252 = vand.u32 2147483647, %v964
        %v3253 = vand.u32 %v3252, 8388607
        %v3254 = vor.u32 %v3253, 8388608
        %v3255 = vsub.s32 0, %v3254
        %v3256 = vadd.s32 %v3251, 1
        %vm3257 = vcmp.gt.s32.totalorder %v3256, 0
        %v3258 = vsel %vm3257, %v3256, 0
        %v3259 = vshrl.u32 %v3258, 5
        %v3260 = vand.u32 %v3258, 31
        %v3261 = vsub.s32 32, %v3260
        %v3262 = vshrl.u32 683565275, %v3261
        %v3263 = vshll.u32 683565275, %v3260
        %v3264 = vshrl.u32 2475754826, %v3261
        %v3265 = vor.u32 %v3263, %v3264
        %v3266 = vshll.u32 2475754826, %v3260
        %v3267 = vshrl.u32 2131351028, %v3261
        %v3268 = vor.u32 %v3266, %v3267
        %v3269 = vshll.u32 2131351028, %v3260
        %v3270 = vshrl.u32 2102212464, %v3261
        %v3271 = vor.u32 %v3269, %v3270
        %v3272 = vshll.u32 2102212464, %v3260
        %v3273 = vshrl.u32 920167782, %v3261
        %v3274 = vor.u32 %v3272, %v3273
        %v3275 = vshll.u32 920167782, %v3260
        %v3276 = vshrl.u32 1326507024, %v3261
        %v3277 = vor.u32 %v3275, %v3276
        %vm3278 = vcmp.lt.s32.totalorder %v3259, 1
        %vm3279 = vcmp.lt.s32.totalorder %v3259, 2
        %vm3280 = vcmp.lt.s32.totalorder %v3259, 3
        %vm3281 = vcmp.lt.s32.totalorder %v3259, 4
        %v3282 = vsel %vm3278, %v3262, %v3265
        %v3283 = vsel %vm3281, %v3271, 2102212464
        %v3284 = vsel %vm3280, %v3268, %v3283
        %v3285 = vsel %vm3279, %v3282, %v3284
        %v3286 = vsel %vm3278, %v3265, %v3268
        %v3287 = vsel %vm3281, %v3274, 920167782
        %v3288 = vsel %vm3280, %v3271, %v3287
        %v3289 = vsel %vm3279, %v3286, %v3288
        %v3290 = vsel %vm3278, %v3268, %v3271
        %v3291 = vsel %vm3281, %v3277, 1326507024
        %v3292 = vsel %vm3280, %v3274, %v3291
        %v3293 = vsel %vm3279, %v3290, %v3292
        %v3294 = vshll.u32 %v3254, 8
        %v3295 = vmul.u32.u64.compose %v3294, %v3293
        %v3296 = vextract.low.u32 %v3295
        %v3297 = vextract.high.u32 %v3295
        %v3298 = vmul.u32.u64.compose %v3294, %v3289
        %v3299 = vextract.low.u32 %v3298
        %v3300 = vextract.high.u32 %v3298
        %v3301 = vmul.u32 %v3294, %v3285
        %v3302 = vadd.s32 %v3297, %v3299
        %vm3303 = vc.u32 %v3297, %v3299
        %v3304 = vadd.s32 %v3300, 1
        %v3305 = vsel %vm3303, %v3304, %v3300
        %v3306 = vadd.s32 %v3301, %v3305
        %v3307 = vadd.s32 %v3306, 536870912
        %v3308 = vshrl.u32 %v3307, 30
        %v3309 = vshll.u32 %v3308, 30
        %v3310 = vsub.s32 %v3306, %v3309
        %vm3311 = vcmp.lt.s32.totalorder %v3310, 0
        %v3312 = vsub.s32 0, %v3310
        %v3313 = vsel %vm3311, %v3312, %v3310
        %v3314 = vclz %v3313
        %v3315 = vsub.s32 %v3314, 2
        %vm3316 = vcmp.gt.s32.totalorder 0, %v3315
        %v3317 = vsel %vm3316, 0, %v3315
        %v3318 = vsub.s32 32, %v3317
        %v3319 = vshll.u32 %v3310, %v3317
        %v3320 = vshrl.u32 %v3302, %v3318
        %v3321 = vor.u32 %v3319, %v3320
        %v3322 = vsub.s32 4294967266, %v3317
        %v3323 = vadd.s32 %v3322, 127
        %v3324 = vshll.u32 %v3323, 23
        %v3325 = vor.u32 4788187, %v3324
        %v3326 = vand.u32 2147483647, %v3325
        %v3328 = vcvt.s32.f32 %v3321
        %v3329 = vmul.f32 %v3328, %v3326
        %v3330 = vxor.u32 %v3329, 2147483648
        %v3331 = vsel %vm3248, %v3330, %v3329
        %v3332 = vsub.s32 4, %v3308
        %v3333 = vsel %vm3248, %v3332, %v3308
        %v3334 = vsel %vm3247, %v964, %v3331
        %v3335 = vsel %vm3247, 0, %v3333
        %v3336 = vcosq.f32.pop %v3334
        %v3337 = vsinq.f32.pop %v3334
        %vm3338 = vweird.f32 %v964
        %v3339 = vadd.s32 %v3335, 3
        %v3340 = vand.u32 %v3339, 3
        %vm3341 = vcmp.lt.s32.totalorder %v3340, 2
        %vm3342 = vcmp.eq.s32.totalorder %v3340, 0
        %v3343 = vxor.u32 %v3337, 2147483648
        %v3344 = vsel %vm3342, %v3336, %v3343
        %vm3345 = vcmp.eq.s32.totalorder %v3340, 2
        %v3346 = vxor.u32 %v3336, 2147483648
        %v3347 = vsel %vm3345, %v3346, %v3337
        %v3348 = vsel %vm3341, %v3344, %v3347
        %v3349 = vsel %vm3338, nan, %v3348
        %v3350 = vand.u32 2147483647, %v965
        %vm3351 = vcmp.le.f32.partialorder %v3350, 0.7853982
        %vm3352 = vcmp.lt.s32.totalorder %v965, 0
        %v3353 = vand.u32 %v965, 2139095040
        %v3354 = vshrl.u32 %v3353, 23
        %v3355 = vsub.s32 %v3354, 127
        %v3356 = vand.u32 2147483647, %v965
        %v3357 = vand.u32 %v3356, 8388607
        %v3358 = vor.u32 %v3357, 8388608
        %v3359 = vsub.s32 0, %v3358
        %v3360 = vadd.s32 %v3355, 1
        %vm3361 = vcmp.gt.s32.totalorder %v3360, 0
        %v3362 = vsel %vm3361, %v3360, 0
        %v3363 = vshrl.u32 %v3362, 5
        %v3364 = vand.u32 %v3362, 31
        %v3365 = vsub.s32 32, %v3364
        %v3366 = vshrl.u32 683565275, %v3365
        %v3367 = vshll.u32 683565275, %v3364
        %v3368 = vshrl.u32 2475754826, %v3365
        %v3369 = vor.u32 %v3367, %v3368
        %v3370 = vshll.u32 2475754826, %v3364
        %v3371 = vshrl.u32 2131351028, %v3365
        %v3372 = vor.u32 %v3370, %v3371
        %v3373 = vshll.u32 2131351028, %v3364
        %v3374 = vshrl.u32 2102212464, %v3365
        %v3375 = vor.u32 %v3373, %v3374
        %v3376 = vshll.u32 2102212464, %v3364
        %v3377 = vshrl.u32 920167782, %v3365
        %v3378 = vor.u32 %v3376, %v3377
        %v3379 = vshll.u32 920167782, %v3364
        %v3380 = vshrl.u32 1326507024, %v3365
        %v3381 = vor.u32 %v3379, %v3380
        %vm3382 = vcmp.lt.s32.totalorder %v3363, 1
        %vm3383 = vcmp.lt.s32.totalorder %v3363, 2
        %vm3384 = vcmp.lt.s32.totalorder %v3363, 3
        %vm3385 = vcmp.lt.s32.totalorder %v3363, 4
        %v3386 = vsel %vm3382, %v3366, %v3369
        %v3387 = vsel %vm3385, %v3375, 2102212464
        %v3388 = vsel %vm3384, %v3372, %v3387
        %v3389 = vsel %vm3383, %v3386, %v3388
        %v3390 = vsel %vm3382, %v3369, %v3372
        %v3391 = vsel %vm3385, %v3378, 920167782
        %v3392 = vsel %vm3384, %v3375, %v3391
        %v3393 = vsel %vm3383, %v3390, %v3392
        %v3394 = vsel %vm3382, %v3372, %v3375
        %v3395 = vsel %vm3385, %v3381, 1326507024
        %v3396 = vsel %vm3384, %v3378, %v3395
        %v3397 = vsel %vm3383, %v3394, %v3396
        %v3398 = vshll.u32 %v3358, 8
        %v3399 = vmul.u32.u64.compose %v3398, %v3397
        %v3400 = vextract.low.u32 %v3399
        %v3401 = vextract.high.u32 %v3399
        %v3402 = vmul.u32.u64.compose %v3398, %v3393
        %v3403 = vextract.low.u32 %v3402
        %v3404 = vextract.high.u32 %v3402
        %v3405 = vmul.u32 %v3398, %v3389
        %v3406 = vadd.s32 %v3401, %v3403
        %vm3407 = vc.u32 %v3401, %v3403
        %v3408 = vadd.s32 %v3404, 1
        %v3409 = vsel %vm3407, %v3408, %v3404
        %v3410 = vadd.s32 %v3405, %v3409
        %v3411 = vadd.s32 %v3410, 536870912
        %v3412 = vshrl.u32 %v3411, 30
        %v3413 = vshll.u32 %v3412, 30
        %v3414 = vsub.s32 %v3410, %v3413
        %vm3415 = vcmp.lt.s32.totalorder %v3414, 0
        %v3416 = vsub.s32 0, %v3414
        %v3417 = vsel %vm3415, %v3416, %v3414
        %v3418 = vclz %v3417
        %v3419 = vsub.s32 %v3418, 2
        %vm3420 = vcmp.gt.s32.totalorder 0, %v3419
        %v3421 = vsel %vm3420, 0, %v3419
        %v3422 = vsub.s32 32, %v3421
        %v3423 = vshll.u32 %v3414, %v3421
        %v3424 = vshrl.u32 %v3406, %v3422
        %v3425 = vor.u32 %v3423, %v3424
        %v3426 = vsub.s32 4294967266, %v3421
        %v3427 = vadd.s32 %v3426, 127
        %v3428 = vshll.u32 %v3427, 23
        %v3429 = vor.u32 4788187, %v3428
        %v3430 = vand.u32 2147483647, %v3429
        %v3432 = vcvt.s32.f32 %v3425
        %v3433 = vmul.f32 %v3432, %v3430
        %v3434 = vxor.u32 %v3433, 2147483648
        %v3435 = vsel %vm3352, %v3434, %v3433
        %v3436 = vsub.s32 4, %v3412
        %v3437 = vsel %vm3352, %v3436, %v3412
        %v3438 = vsel %vm3351, %v965, %v3435
        %v3439 = vsel %vm3351, 0, %v3437
        %v3440 = vcosq.f32.pop %v3438
        %v3441 = vsinq.f32.pop %v3438
        %vm3442 = vweird.f32 %v965
        %v3443 = vadd.s32 %v3439, 3
        %v3444 = vand.u32 %v3443, 3
        %vm3445 = vcmp.lt.s32.totalorder %v3444, 2
        %vm3446 = vcmp.eq.s32.totalorder %v3444, 0
        %v3447 = vxor.u32 %v3441, 2147483648
        %v3448 = vsel %vm3446, %v3440, %v3447
        %vm3449 = vcmp.eq.s32.totalorder %v3444, 2
        %v3450 = vxor.u32 %v3440, 2147483648
        %v3451 = vsel %vm3449, %v3450, %v3441
        %v3452 = vsel %vm3445, %v3448, %v3451
        %v3453 = vsel %vm3442, nan, %v3452
        %v3454 = vand.u32 2147483647, %v966
        %vm3455 = vcmp.le.f32.partialorder %v3454, 0.7853982
        %vm3456 = vcmp.lt.s32.totalorder %v966, 0
        %v3457 = vand.u32 %v966, 2139095040
        %v3458 = vshrl.u32 %v3457, 23
        %v3459 = vsub.s32 %v3458, 127
        %v3460 = vand.u32 2147483647, %v966
        %v3461 = vand.u32 %v3460, 8388607
        %v3462 = vor.u32 %v3461, 8388608
        %v3463 = vsub.s32 0, %v3462
        %v3464 = vadd.s32 %v3459, 1
        %vm3465 = vcmp.gt.s32.totalorder %v3464, 0
        %v3466 = vsel %vm3465, %v3464, 0
        %v3467 = vshrl.u32 %v3466, 5
        %v3468 = vand.u32 %v3466, 31
        %v3469 = vsub.s32 32, %v3468
        %v3470 = vshrl.u32 683565275, %v3469
        %v3471 = vshll.u32 683565275, %v3468
        %v3472 = vshrl.u32 2475754826, %v3469
        %v3473 = vor.u32 %v3471, %v3472
        %v3474 = vshll.u32 2475754826, %v3468
        %v3475 = vshrl.u32 2131351028, %v3469
        %v3476 = vor.u32 %v3474, %v3475
        %v3477 = vshll.u32 2131351028, %v3468
        %v3478 = vshrl.u32 2102212464, %v3469
        %v3479 = vor.u32 %v3477, %v3478
        %v3480 = vshll.u32 2102212464, %v3468
        %v3481 = vshrl.u32 920167782, %v3469
        %v3482 = vor.u32 %v3480, %v3481
        %v3483 = vshll.u32 920167782, %v3468
        %v3484 = vshrl.u32 1326507024, %v3469
        %v3485 = vor.u32 %v3483, %v3484
        %vm3486 = vcmp.lt.s32.totalorder %v3467, 1
        %vm3487 = vcmp.lt.s32.totalorder %v3467, 2
        %vm3488 = vcmp.lt.s32.totalorder %v3467, 3
        %vm3489 = vcmp.lt.s32.totalorder %v3467, 4
        %v3490 = vsel %vm3486, %v3470, %v3473
        %v3491 = vsel %vm3489, %v3479, 2102212464
        %v3492 = vsel %vm3488, %v3476, %v3491
        %v3493 = vsel %vm3487, %v3490, %v3492
        %v3494 = vsel %vm3486, %v3473, %v3476
        %v3495 = vsel %vm3489, %v3482, 920167782
        %v3496 = vsel %vm3488, %v3479, %v3495
        %v3497 = vsel %vm3487, %v3494, %v3496
        %v3498 = vsel %vm3486, %v3476, %v3479
        %v3499 = vsel %vm3489, %v3485, 1326507024
        %v3500 = vsel %vm3488, %v3482, %v3499
        %v3501 = vsel %vm3487, %v3498, %v3500
        %v3502 = vshll.u32 %v3462, 8
        %v3503 = vmul.u32.u64.compose %v3502, %v3501
        %v3504 = vextract.low.u32 %v3503
        %v3505 = vextract.high.u32 %v3503
        %v3506 = vmul.u32.u64.compose %v3502, %v3497
        %v3507 = vextract.low.u32 %v3506
        %v3508 = vextract.high.u32 %v3506
        %v3509 = vmul.u32 %v3502, %v3493
        %v3510 = vadd.s32 %v3505, %v3507
        %vm3511 = vc.u32 %v3505, %v3507
        %v3512 = vadd.s32 %v3508, 1
        %v3513 = vsel %vm3511, %v3512, %v3508
        %v3514 = vadd.s32 %v3509, %v3513
        %v3515 = vadd.s32 %v3514, 536870912
        %v3516 = vshrl.u32 %v3515, 30
        %v3517 = vshll.u32 %v3516, 30
        %v3518 = vsub.s32 %v3514, %v3517
        %vm3519 = vcmp.lt.s32.totalorder %v3518, 0
        %v3520 = vsub.s32 0, %v3518
        %v3521 = vsel %vm3519, %v3520, %v3518
        %v3522 = vclz %v3521
        %v3523 = vsub.s32 %v3522, 2
        %vm3524 = vcmp.gt.s32.totalorder 0, %v3523
        %v3525 = vsel %vm3524, 0, %v3523
        %v3526 = vsub.s32 32, %v3525
        %v3527 = vshll.u32 %v3518, %v3525
        %v3528 = vshrl.u32 %v3510, %v3526
        %v3529 = vor.u32 %v3527, %v3528
        %v3530 = vsub.s32 4294967266, %v3525
        %v3531 = vadd.s32 %v3530, 127
        %v3532 = vshll.u32 %v3531, 23
        %v3533 = vor.u32 4788187, %v3532
        %v3534 = vand.u32 2147483647, %v3533
        %v3536 = vcvt.s32.f32 %v3529
        %v3537 = vmul.f32 %v3536, %v3534
        %v3538 = vxor.u32 %v3537, 2147483648
        %v3539 = vsel %vm3456, %v3538, %v3537
        %v3540 = vsub.s32 4, %v3516
        %v3541 = vsel %vm3456, %v3540, %v3516
        %v3542 = vsel %vm3455, %v966, %v3539
        %v3543 = vsel %vm3455, 0, %v3541
        %v3544 = vcosq.f32.pop %v3542
        %v3545 = vsinq.f32.pop %v3542
        %vm3546 = vweird.f32 %v966
        %v3547 = vadd.s32 %v3543, 3
        %v3548 = vand.u32 %v3547, 3
        %vm3549 = vcmp.lt.s32.totalorder %v3548, 2
        %vm3550 = vcmp.eq.s32.totalorder %v3548, 0
        %v3551 = vxor.u32 %v3545, 2147483648
        %v3552 = vsel %vm3550, %v3544, %v3551
        %vm3553 = vcmp.eq.s32.totalorder %v3548, 2
        %v3554 = vxor.u32 %v3544, 2147483648
        %v3555 = vsel %vm3553, %v3554, %v3545
        %v3556 = vsel %vm3549, %v3552, %v3555
        %v3557 = vsel %vm3546, nan, %v3556
        %v3558 = vand.u32 2147483647, %v967
        %vm3559 = vcmp.le.f32.partialorder %v3558, 0.7853982
        %vm3560 = vcmp.lt.s32.totalorder %v967, 0
        %v3561 = vand.u32 %v967, 2139095040
        %v3562 = vshrl.u32 %v3561, 23
        %v3563 = vsub.s32 %v3562, 127
        %v3564 = vand.u32 2147483647, %v967
        %v3565 = vand.u32 %v3564, 8388607
        %v3566 = vor.u32 %v3565, 8388608
        %v3567 = vsub.s32 0, %v3566
        %v3568 = vadd.s32 %v3563, 1
        %vm3569 = vcmp.gt.s32.totalorder %v3568, 0
        %v3570 = vsel %vm3569, %v3568, 0
        %v3571 = vshrl.u32 %v3570, 5
        %v3572 = vand.u32 %v3570, 31
        %v3573 = vsub.s32 32, %v3572
        %v3574 = vshrl.u32 683565275, %v3573
        %v3575 = vshll.u32 683565275, %v3572
        %v3576 = vshrl.u32 2475754826, %v3573
        %v3577 = vor.u32 %v3575, %v3576
        %v3578 = vshll.u32 2475754826, %v3572
        %v3579 = vshrl.u32 2131351028, %v3573
        %v3580 = vor.u32 %v3578, %v3579
        %v3581 = vshll.u32 2131351028, %v3572
        %v3582 = vshrl.u32 2102212464, %v3573
        %v3583 = vor.u32 %v3581, %v3582
        %v3584 = vshll.u32 2102212464, %v3572
        %v3585 = vshrl.u32 920167782, %v3573
        %v3586 = vor.u32 %v3584, %v3585
        %v3587 = vshll.u32 920167782, %v3572
        %v3588 = vshrl.u32 1326507024, %v3573
        %v3589 = vor.u32 %v3587, %v3588
        %vm3590 = vcmp.lt.s32.totalorder %v3571, 1
        %vm3591 = vcmp.lt.s32.totalorder %v3571, 2
        %vm3592 = vcmp.lt.s32.totalorder %v3571, 3
        %vm3593 = vcmp.lt.s32.totalorder %v3571, 4
        %v3594 = vsel %vm3590, %v3574, %v3577
        %v3595 = vsel %vm3593, %v3583, 2102212464
        %v3596 = vsel %vm3592, %v3580, %v3595
        %v3597 = vsel %vm3591, %v3594, %v3596
        %v3598 = vsel %vm3590, %v3577, %v3580
        %v3599 = vsel %vm3593, %v3586, 920167782
        %v3600 = vsel %vm3592, %v3583, %v3599
        %v3601 = vsel %vm3591, %v3598, %v3600
        %v3602 = vsel %vm3590, %v3580, %v3583
        %v3603 = vsel %vm3593, %v3589, 1326507024
        %v3604 = vsel %vm3592, %v3586, %v3603
        %v3605 = vsel %vm3591, %v3602, %v3604
        %v3606 = vshll.u32 %v3566, 8
        %v3607 = vmul.u32.u64.compose %v3606, %v3605
        %v3608 = vextract.low.u32 %v3607
        %v3609 = vextract.high.u32 %v3607
        %v3610 = vmul.u32.u64.compose %v3606, %v3601
        %v3611 = vextract.low.u32 %v3610
        %v3612 = vextract.high.u32 %v3610
        %v3613 = vmul.u32 %v3606, %v3597
        %v3614 = vadd.s32 %v3609, %v3611
        %vm3615 = vc.u32 %v3609, %v3611
        %v3616 = vadd.s32 %v3612, 1
        %v3617 = vsel %vm3615, %v3616, %v3612
        %v3618 = vadd.s32 %v3613, %v3617
        %v3619 = vadd.s32 %v3618, 536870912
        %v3620 = vshrl.u32 %v3619, 30
        %v3621 = vshll.u32 %v3620, 30
        %v3622 = vsub.s32 %v3618, %v3621
        %vm3623 = vcmp.lt.s32.totalorder %v3622, 0
        %v3624 = vsub.s32 0, %v3622
        %v3625 = vsel %vm3623, %v3624, %v3622
        %v3626 = vclz %v3625
        %v3627 = vsub.s32 %v3626, 2
        %vm3628 = vcmp.gt.s32.totalorder 0, %v3627
        %v3629 = vsel %vm3628, 0, %v3627
        %v3630 = vsub.s32 32, %v3629
        %v3631 = vshll.u32 %v3622, %v3629
        %v3632 = vshrl.u32 %v3614, %v3630
        %v3633 = vor.u32 %v3631, %v3632
        %v3634 = vsub.s32 4294967266, %v3629
        %v3635 = vadd.s32 %v3634, 127
        %v3636 = vshll.u32 %v3635, 23
        %v3637 = vor.u32 4788187, %v3636
        %v3638 = vand.u32 2147483647, %v3637
        %v3640 = vcvt.s32.f32 %v3633
        %v3641 = vmul.f32 %v3640, %v3638
        %v3642 = vxor.u32 %v3641, 2147483648
        %v3643 = vsel %vm3560, %v3642, %v3641
        %v3644 = vsub.s32 4, %v3620
        %v3645 = vsel %vm3560, %v3644, %v3620
        %v3646 = vsel %vm3559, %v967, %v3643
        %v3647 = vsel %vm3559, 0, %v3645
        %v3648 = vcosq.f32.pop %v3646
        %v3649 = vsinq.f32.pop %v3646
        %vm3650 = vweird.f32 %v967
        %v3651 = vadd.s32 %v3647, 3
        %v3652 = vand.u32 %v3651, 3
        %vm3653 = vcmp.lt.s32.totalorder %v3652, 2
        %vm3654 = vcmp.eq.s32.totalorder %v3652, 0
        %v3655 = vxor.u32 %v3649, 2147483648
        %v3656 = vsel %vm3654, %v3648, %v3655
        %vm3657 = vcmp.eq.s32.totalorder %v3652, 2
        %v3658 = vxor.u32 %v3648, 2147483648
        %v3659 = vsel %vm3657, %v3658, %v3649
        %v3660 = vsel %vm3653, %v3656, %v3659
        %v3661 = vsel %vm3650, nan, %v3660
        %v3662 = vand.u32 2147483647, %v968
        %vm3663 = vcmp.le.f32.partialorder %v3662, 0.7853982
        %vm3664 = vcmp.lt.s32.totalorder %v968, 0
        %v3665 = vand.u32 %v968, 2139095040
        %v3666 = vshrl.u32 %v3665, 23
        %v3667 = vsub.s32 %v3666, 127
        %v3668 = vand.u32 2147483647, %v968
        %v3669 = vand.u32 %v3668, 8388607
        %v3670 = vor.u32 %v3669, 8388608
        %v3671 = vsub.s32 0, %v3670
        %v3672 = vadd.s32 %v3667, 1
        %vm3673 = vcmp.gt.s32.totalorder %v3672, 0
        %v3674 = vsel %vm3673, %v3672, 0
        %v3675 = vshrl.u32 %v3674, 5
        %v3676 = vand.u32 %v3674, 31
        %v3677 = vsub.s32 32, %v3676
        %v3678 = vshrl.u32 683565275, %v3677
        %v3679 = vshll.u32 683565275, %v3676
        %v3680 = vshrl.u32 2475754826, %v3677
        %v3681 = vor.u32 %v3679, %v3680
        %v3682 = vshll.u32 2475754826, %v3676
        %v3683 = vshrl.u32 2131351028, %v3677
        %v3684 = vor.u32 %v3682, %v3683
        %v3685 = vshll.u32 2131351028, %v3676
        %v3686 = vshrl.u32 2102212464, %v3677
        %v3687 = vor.u32 %v3685, %v3686
        %v3688 = vshll.u32 2102212464, %v3676
        %v3689 = vshrl.u32 920167782, %v3677
        %v3690 = vor.u32 %v3688, %v3689
        %v3691 = vshll.u32 920167782, %v3676
        %v3692 = vshrl.u32 1326507024, %v3677
        %v3693 = vor.u32 %v3691, %v3692
        %vm3694 = vcmp.lt.s32.totalorder %v3675, 1
        %vm3695 = vcmp.lt.s32.totalorder %v3675, 2
        %vm3696 = vcmp.lt.s32.totalorder %v3675, 3
        %vm3697 = vcmp.lt.s32.totalorder %v3675, 4
        %v3698 = vsel %vm3694, %v3678, %v3681
        %v3699 = vsel %vm3697, %v3687, 2102212464
        %v3700 = vsel %vm3696, %v3684, %v3699
        %v3701 = vsel %vm3695, %v3698, %v3700
        %v3702 = vsel %vm3694, %v3681, %v3684
        %v3703 = vsel %vm3697, %v3690, 920167782
        %v3704 = vsel %vm3696, %v3687, %v3703
        %v3705 = vsel %vm3695, %v3702, %v3704
        %v3706 = vsel %vm3694, %v3684, %v3687
        %v3707 = vsel %vm3697, %v3693, 1326507024
        %v3708 = vsel %vm3696, %v3690, %v3707
        %v3709 = vsel %vm3695, %v3706, %v3708
        %v3710 = vshll.u32 %v3670, 8
        %v3711 = vmul.u32.u64.compose %v3710, %v3709
        %v3712 = vextract.low.u32 %v3711
        %v3713 = vextract.high.u32 %v3711
        %v3714 = vmul.u32.u64.compose %v3710, %v3705
        %v3715 = vextract.low.u32 %v3714
        %v3716 = vextract.high.u32 %v3714
        %v3717 = vmul.u32 %v3710, %v3701
        %v3718 = vadd.s32 %v3713, %v3715
        %vm3719 = vc.u32 %v3713, %v3715
        %v3720 = vadd.s32 %v3716, 1
        %v3721 = vsel %vm3719, %v3720, %v3716
        %v3722 = vadd.s32 %v3717, %v3721
        %v3723 = vadd.s32 %v3722, 536870912
        %v3724 = vshrl.u32 %v3723, 30
        %v3725 = vshll.u32 %v3724, 30
        %v3726 = vsub.s32 %v3722, %v3725
        %vm3727 = vcmp.lt.s32.totalorder %v3726, 0
        %v3728 = vsub.s32 0, %v3726
        %v3729 = vsel %vm3727, %v3728, %v3726
        %v3730 = vclz %v3729
        %v3731 = vsub.s32 %v3730, 2
        %vm3732 = vcmp.gt.s32.totalorder 0, %v3731
        %v3733 = vsel %vm3732, 0, %v3731
        %v3734 = vsub.s32 32, %v3733
        %v3735 = vshll.u32 %v3726, %v3733
        %v3736 = vshrl.u32 %v3718, %v3734
        %v3737 = vor.u32 %v3735, %v3736
        %v3738 = vsub.s32 4294967266, %v3733
        %v3739 = vadd.s32 %v3738, 127
        %v3740 = vshll.u32 %v3739, 23
        %v3741 = vor.u32 4788187, %v3740
        %v3742 = vand.u32 2147483647, %v3741
        %v3744 = vcvt.s32.f32 %v3737
        %v3745 = vmul.f32 %v3744, %v3742
        %v3746 = vxor.u32 %v3745, 2147483648
        %v3747 = vsel %vm3664, %v3746, %v3745
        %v3748 = vsub.s32 4, %v3724
        %v3749 = vsel %vm3664, %v3748, %v3724
        %v3750 = vsel %vm3663, %v968, %v3747
        %v3751 = vsel %vm3663, 0, %v3749
        %v3752 = vcosq.f32.pop %v3750
        %v3753 = vsinq.f32.pop %v3750
        %vm3754 = vweird.f32 %v968
        %v3755 = vadd.s32 %v3751, 3
        %v3756 = vand.u32 %v3755, 3
        %vm3757 = vcmp.lt.s32.totalorder %v3756, 2
        %vm3758 = vcmp.eq.s32.totalorder %v3756, 0
        %v3759 = vxor.u32 %v3753, 2147483648
        %v3760 = vsel %vm3758, %v3752, %v3759
        %vm3761 = vcmp.eq.s32.totalorder %v3756, 2
        %v3762 = vxor.u32 %v3752, 2147483648
        %v3763 = vsel %vm3761, %v3762, %v3753
        %v3764 = vsel %vm3757, %v3760, %v3763
        %v3765 = vsel %vm3754, nan, %v3764
        %v3766 = vand.u32 2147483647, %v969
        %vm3767 = vcmp.le.f32.partialorder %v3766, 0.7853982
        %vm3768 = vcmp.lt.s32.totalorder %v969, 0
        %v3769 = vand.u32 %v969, 2139095040
        %v3770 = vshrl.u32 %v3769, 23
        %v3771 = vsub.s32 %v3770, 127
        %v3772 = vand.u32 2147483647, %v969
        %v3773 = vand.u32 %v3772, 8388607
        %v3774 = vor.u32 %v3773, 8388608
        %v3775 = vsub.s32 0, %v3774
        %v3776 = vadd.s32 %v3771, 1
        %vm3777 = vcmp.gt.s32.totalorder %v3776, 0
        %v3778 = vsel %vm3777, %v3776, 0
        %v3779 = vshrl.u32 %v3778, 5
        %v3780 = vand.u32 %v3778, 31
        %v3781 = vsub.s32 32, %v3780
        %v3782 = vshrl.u32 683565275, %v3781
        %v3783 = vshll.u32 683565275, %v3780
        %v3784 = vshrl.u32 2475754826, %v3781
        %v3785 = vor.u32 %v3783, %v3784
        %v3786 = vshll.u32 2475754826, %v3780
        %v3787 = vshrl.u32 2131351028, %v3781
        %v3788 = vor.u32 %v3786, %v3787
        %v3789 = vshll.u32 2131351028, %v3780
        %v3790 = vshrl.u32 2102212464, %v3781
        %v3791 = vor.u32 %v3789, %v3790
        %v3792 = vshll.u32 2102212464, %v3780
        %v3793 = vshrl.u32 920167782, %v3781
        %v3794 = vor.u32 %v3792, %v3793
        %v3795 = vshll.u32 920167782, %v3780
        %v3796 = vshrl.u32 1326507024, %v3781
        %v3797 = vor.u32 %v3795, %v3796
        %vm3798 = vcmp.lt.s32.totalorder %v3779, 1
        %vm3799 = vcmp.lt.s32.totalorder %v3779, 2
        %vm3800 = vcmp.lt.s32.totalorder %v3779, 3
        %vm3801 = vcmp.lt.s32.totalorder %v3779, 4
        %v3802 = vsel %vm3798, %v3782, %v3785
        %v3803 = vsel %vm3801, %v3791, 2102212464
        %v3804 = vsel %vm3800, %v3788, %v3803
        %v3805 = vsel %vm3799, %v3802, %v3804
        %v3806 = vsel %vm3798, %v3785, %v3788
        %v3807 = vsel %vm3801, %v3794, 920167782
        %v3808 = vsel %vm3800, %v3791, %v3807
        %v3809 = vsel %vm3799, %v3806, %v3808
        %v3810 = vsel %vm3798, %v3788, %v3791
        %v3811 = vsel %vm3801, %v3797, 1326507024
        %v3812 = vsel %vm3800, %v3794, %v3811
        %v3813 = vsel %vm3799, %v3810, %v3812
        %v3814 = vshll.u32 %v3774, 8
        %v3815 = vmul.u32.u64.compose %v3814, %v3813
        %v3816 = vextract.low.u32 %v3815
        %v3817 = vextract.high.u32 %v3815
        %v3818 = vmul.u32.u64.compose %v3814, %v3809
        %v3819 = vextract.low.u32 %v3818
        %v3820 = vextract.high.u32 %v3818
        %v3821 = vmul.u32 %v3814, %v3805
        %v3822 = vadd.s32 %v3817, %v3819
        %vm3823 = vc.u32 %v3817, %v3819
        %v3824 = vadd.s32 %v3820, 1
        %v3825 = vsel %vm3823, %v3824, %v3820
        %v3826 = vadd.s32 %v3821, %v3825
        %v3827 = vadd.s32 %v3826, 536870912
        %v3828 = vshrl.u32 %v3827, 30
        %v3829 = vshll.u32 %v3828, 30
        %v3830 = vsub.s32 %v3826, %v3829
        %vm3831 = vcmp.lt.s32.totalorder %v3830, 0
        %v3832 = vsub.s32 0, %v3830
        %v3833 = vsel %vm3831, %v3832, %v3830
        %v3834 = vclz %v3833
        %v3835 = vsub.s32 %v3834, 2
        %vm3836 = vcmp.gt.s32.totalorder 0, %v3835
        %v3837 = vsel %vm3836, 0, %v3835
        %v3838 = vsub.s32 32, %v3837
        %v3839 = vshll.u32 %v3830, %v3837
        %v3840 = vshrl.u32 %v3822, %v3838
        %v3841 = vor.u32 %v3839, %v3840
        %v3842 = vsub.s32 4294967266, %v3837
        %v3843 = vadd.s32 %v3842, 127
        %v3844 = vshll.u32 %v3843, 23
        %v3845 = vor.u32 4788187, %v3844
        %v3846 = vand.u32 2147483647, %v3845
        %v3848 = vcvt.s32.f32 %v3841
        %v3849 = vmul.f32 %v3848, %v3846
        %v3850 = vxor.u32 %v3849, 2147483648
        %v3851 = vsel %vm3768, %v3850, %v3849
        %v3852 = vsub.s32 4, %v3828
        %v3853 = vsel %vm3768, %v3852, %v3828
        %v3854 = vsel %vm3767, %v969, %v3851
        %v3855 = vsel %vm3767, 0, %v3853
        %v3856 = vcosq.f32.pop %v3854
        %v3857 = vsinq.f32.pop %v3854
        %vm3858 = vweird.f32 %v969
        %v3859 = vadd.s32 %v3855, 3
        %v3860 = vand.u32 %v3859, 3
        %vm3861 = vcmp.lt.s32.totalorder %v3860, 2
        %vm3862 = vcmp.eq.s32.totalorder %v3860, 0
        %v3863 = vxor.u32 %v3857, 2147483648
        %v3864 = vsel %vm3862, %v3856, %v3863
        %vm3865 = vcmp.eq.s32.totalorder %v3860, 2
        %v3866 = vxor.u32 %v3856, 2147483648
        %v3867 = vsel %vm3865, %v3866, %v3857
        %v3868 = vsel %vm3861, %v3864, %v3867
        %v3869 = vsel %vm3858, nan, %v3868
        %v3870 = vand.u32 2147483647, %v970
        %vm3871 = vcmp.le.f32.partialorder %v3870, 0.7853982
        %vm3872 = vcmp.lt.s32.totalorder %v970, 0
        %v3873 = vand.u32 %v970, 2139095040
        %v3874 = vshrl.u32 %v3873, 23
        %v3875 = vsub.s32 %v3874, 127
        %v3876 = vand.u32 2147483647, %v970
        %v3877 = vand.u32 %v3876, 8388607
        %v3878 = vor.u32 %v3877, 8388608
        %v3879 = vsub.s32 0, %v3878
        %v3880 = vadd.s32 %v3875, 1
        %vm3881 = vcmp.gt.s32.totalorder %v3880, 0
        %v3882 = vsel %vm3881, %v3880, 0
        %v3883 = vshrl.u32 %v3882, 5
        %v3884 = vand.u32 %v3882, 31
        %v3885 = vsub.s32 32, %v3884
        %v3886 = vshrl.u32 683565275, %v3885
        %v3887 = vshll.u32 683565275, %v3884
        %v3888 = vshrl.u32 2475754826, %v3885
        %v3889 = vor.u32 %v3887, %v3888
        %v3890 = vshll.u32 2475754826, %v3884
        %v3891 = vshrl.u32 2131351028, %v3885
        %v3892 = vor.u32 %v3890, %v3891
        %v3893 = vshll.u32 2131351028, %v3884
        %v3894 = vshrl.u32 2102212464, %v3885
        %v3895 = vor.u32 %v3893, %v3894
        %v3896 = vshll.u32 2102212464, %v3884
        %v3897 = vshrl.u32 920167782, %v3885
        %v3898 = vor.u32 %v3896, %v3897
        %v3899 = vshll.u32 920167782, %v3884
        %v3900 = vshrl.u32 1326507024, %v3885
        %v3901 = vor.u32 %v3899, %v3900
        %vm3902 = vcmp.lt.s32.totalorder %v3883, 1
        %vm3903 = vcmp.lt.s32.totalorder %v3883, 2
        %vm3904 = vcmp.lt.s32.totalorder %v3883, 3
        %vm3905 = vcmp.lt.s32.totalorder %v3883, 4
        %v3906 = vsel %vm3902, %v3886, %v3889
        %v3907 = vsel %vm3905, %v3895, 2102212464
        %v3908 = vsel %vm3904, %v3892, %v3907
        %v3909 = vsel %vm3903, %v3906, %v3908
        %v3910 = vsel %vm3902, %v3889, %v3892
        %v3911 = vsel %vm3905, %v3898, 920167782
        %v3912 = vsel %vm3904, %v3895, %v3911
        %v3913 = vsel %vm3903, %v3910, %v3912
        %v3914 = vsel %vm3902, %v3892, %v3895
        %v3915 = vsel %vm3905, %v3901, 1326507024
        %v3916 = vsel %vm3904, %v3898, %v3915
        %v3917 = vsel %vm3903, %v3914, %v3916
        %v3918 = vshll.u32 %v3878, 8
        %v3919 = vmul.u32.u64.compose %v3918, %v3917
        %v3920 = vextract.low.u32 %v3919
        %v3921 = vextract.high.u32 %v3919
        %v3922 = vmul.u32.u64.compose %v3918, %v3913
        %v3923 = vextract.low.u32 %v3922
        %v3924 = vextract.high.u32 %v3922
        %v3925 = vmul.u32 %v3918, %v3909
        %v3926 = vadd.s32 %v3921, %v3923
        %vm3927 = vc.u32 %v3921, %v3923
        %v3928 = vadd.s32 %v3924, 1
        %v3929 = vsel %vm3927, %v3928, %v3924
        %v3930 = vadd.s32 %v3925, %v3929
        %v3931 = vadd.s32 %v3930, 536870912
        %v3932 = vshrl.u32 %v3931, 30
        %v3933 = vshll.u32 %v3932, 30
        %v3934 = vsub.s32 %v3930, %v3933
        %vm3935 = vcmp.lt.s32.totalorder %v3934, 0
        %v3936 = vsub.s32 0, %v3934
        %v3937 = vsel %vm3935, %v3936, %v3934
        %v3938 = vclz %v3937
        %v3939 = vsub.s32 %v3938, 2
        %vm3940 = vcmp.gt.s32.totalorder 0, %v3939
        %v3941 = vsel %vm3940, 0, %v3939
        %v3942 = vsub.s32 32, %v3941
        %v3943 = vshll.u32 %v3934, %v3941
        %v3944 = vshrl.u32 %v3926, %v3942
        %v3945 = vor.u32 %v3943, %v3944
        %v3946 = vsub.s32 4294967266, %v3941
        %v3947 = vadd.s32 %v3946, 127
        %v3948 = vshll.u32 %v3947, 23
        %v3949 = vor.u32 4788187, %v3948
        %v3950 = vand.u32 2147483647, %v3949
        %v3952 = vcvt.s32.f32 %v3945
        %v3953 = vmul.f32 %v3952, %v3950
        %v3954 = vxor.u32 %v3953, 2147483648
        %v3955 = vsel %vm3872, %v3954, %v3953
        %v3956 = vsub.s32 4, %v3932
        %v3957 = vsel %vm3872, %v3956, %v3932
        %v3958 = vsel %vm3871, %v970, %v3955
        %v3959 = vsel %vm3871, 0, %v3957
        %v3960 = vcosq.f32.pop %v3958
        %v3961 = vsinq.f32.pop %v3958
        %vm3962 = vweird.f32 %v970
        %v3963 = vadd.s32 %v3959, 3
        %v3964 = vand.u32 %v3963, 3
        %vm3965 = vcmp.lt.s32.totalorder %v3964, 2
        %vm3966 = vcmp.eq.s32.totalorder %v3964, 0
        %v3967 = vxor.u32 %v3961, 2147483648
        %v3968 = vsel %vm3966, %v3960, %v3967
        %vm3969 = vcmp.eq.s32.totalorder %v3964, 2
        %v3970 = vxor.u32 %v3960, 2147483648
        %v3971 = vsel %vm3969, %v3970, %v3961
        %v3972 = vsel %vm3965, %v3968, %v3971
        %v3973 = vsel %vm3962, nan, %v3972
        %v3974 = vand.u32 2147483647, %v971
        %vm3975 = vcmp.le.f32.partialorder %v3974, 0.7853982
        %vm3976 = vcmp.lt.s32.totalorder %v971, 0
        %v3977 = vand.u32 %v971, 2139095040
        %v3978 = vshrl.u32 %v3977, 23
        %v3979 = vsub.s32 %v3978, 127
        %v3980 = vand.u32 2147483647, %v971
        %v3981 = vand.u32 %v3980, 8388607
        %v3982 = vor.u32 %v3981, 8388608
        %v3983 = vsub.s32 0, %v3982
        %v3984 = vadd.s32 %v3979, 1
        %vm3985 = vcmp.gt.s32.totalorder %v3984, 0
        %v3986 = vsel %vm3985, %v3984, 0
        %v3987 = vshrl.u32 %v3986, 5
        %v3988 = vand.u32 %v3986, 31
        %v3989 = vsub.s32 32, %v3988
        %v3990 = vshrl.u32 683565275, %v3989
        %v3991 = vshll.u32 683565275, %v3988
        %v3992 = vshrl.u32 2475754826, %v3989
        %v3993 = vor.u32 %v3991, %v3992
        %v3994 = vshll.u32 2475754826, %v3988
        %v3995 = vshrl.u32 2131351028, %v3989
        %v3996 = vor.u32 %v3994, %v3995
        %v3997 = vshll.u32 2131351028, %v3988
        %v3998 = vshrl.u32 2102212464, %v3989
        %v3999 = vor.u32 %v3997, %v3998
        %v4000 = vshll.u32 2102212464, %v3988
        %v4001 = vshrl.u32 920167782, %v3989
        %v4002 = vor.u32 %v4000, %v4001
        %v4003 = vshll.u32 920167782, %v3988
        %v4004 = vshrl.u32 1326507024, %v3989
        %v4005 = vor.u32 %v4003, %v4004
        %vm4006 = vcmp.lt.s32.totalorder %v3987, 1
        %vm4007 = vcmp.lt.s32.totalorder %v3987, 2
        %vm4008 = vcmp.lt.s32.totalorder %v3987, 3
        %vm4009 = vcmp.lt.s32.totalorder %v3987, 4
        %v4010 = vsel %vm4006, %v3990, %v3993
        %v4011 = vsel %vm4009, %v3999, 2102212464
        %v4012 = vsel %vm4008, %v3996, %v4011
        %v4013 = vsel %vm4007, %v4010, %v4012
        %v4014 = vsel %vm4006, %v3993, %v3996
        %v4015 = vsel %vm4009, %v4002, 920167782
        %v4016 = vsel %vm4008, %v3999, %v4015
        %v4017 = vsel %vm4007, %v4014, %v4016
        %v4018 = vsel %vm4006, %v3996, %v3999
        %v4019 = vsel %vm4009, %v4005, 1326507024
        %v4020 = vsel %vm4008, %v4002, %v4019
        %v4021 = vsel %vm4007, %v4018, %v4020
        %v4022 = vshll.u32 %v3982, 8
        %v4023 = vmul.u32.u64.compose %v4022, %v4021
        %v4024 = vextract.low.u32 %v4023
        %v4025 = vextract.high.u32 %v4023
        %v4026 = vmul.u32.u64.compose %v4022, %v4017
        %v4027 = vextract.low.u32 %v4026
        %v4028 = vextract.high.u32 %v4026
        %v4029 = vmul.u32 %v4022, %v4013
        %v4030 = vadd.s32 %v4025, %v4027
        %vm4031 = vc.u32 %v4025, %v4027
        %v4032 = vadd.s32 %v4028, 1
        %v4033 = vsel %vm4031, %v4032, %v4028
        %v4034 = vadd.s32 %v4029, %v4033
        %v4035 = vadd.s32 %v4034, 536870912
        %v4036 = vshrl.u32 %v4035, 30
        %v4037 = vshll.u32 %v4036, 30
        %v4038 = vsub.s32 %v4034, %v4037
        %vm4039 = vcmp.lt.s32.totalorder %v4038, 0
        %v4040 = vsub.s32 0, %v4038
        %v4041 = vsel %vm4039, %v4040, %v4038
        %v4042 = vclz %v4041
        %v4043 = vsub.s32 %v4042, 2
        %vm4044 = vcmp.gt.s32.totalorder 0, %v4043
        %v4045 = vsel %vm4044, 0, %v4043
        %v4046 = vsub.s32 32, %v4045
        %v4047 = vshll.u32 %v4038, %v4045
        %v4048 = vshrl.u32 %v4030, %v4046
        %v4049 = vor.u32 %v4047, %v4048
        %v4050 = vsub.s32 4294967266, %v4045
        %v4051 = vadd.s32 %v4050, 127
        %v4052 = vshll.u32 %v4051, 23
        %v4053 = vor.u32 4788187, %v4052
        %v4054 = vand.u32 2147483647, %v4053
        %v4056 = vcvt.s32.f32 %v4049
        %v4057 = vmul.f32 %v4056, %v4054
        %v4058 = vxor.u32 %v4057, 2147483648
        %v4059 = vsel %vm3976, %v4058, %v4057
        %v4060 = vsub.s32 4, %v4036
        %v4061 = vsel %vm3976, %v4060, %v4036
        %v4062 = vsel %vm3975, %v971, %v4059
        %v4063 = vsel %vm3975, 0, %v4061
        %v4064 = vcosq.f32.pop %v4062
        %v4065 = vsinq.f32.pop %v4062
        %vm4066 = vweird.f32 %v971
        %v4067 = vadd.s32 %v4063, 3
        %v4068 = vand.u32 %v4067, 3
        %vm4069 = vcmp.lt.s32.totalorder %v4068, 2
        %vm4070 = vcmp.eq.s32.totalorder %v4068, 0
        %v4071 = vxor.u32 %v4065, 2147483648
        %v4072 = vsel %vm4070, %v4064, %v4071
        %vm4073 = vcmp.eq.s32.totalorder %v4068, 2
        %v4074 = vxor.u32 %v4064, 2147483648
        %v4075 = vsel %vm4073, %v4074, %v4065
        %v4076 = vsel %vm4069, %v4072, %v4075
        %v4077 = vsel %vm4066, nan, %v4076
        %v4078 = vand.u32 2147483647, %v972
        %vm4079 = vcmp.le.f32.partialorder %v4078, 0.7853982
        %vm4080 = vcmp.lt.s32.totalorder %v972, 0
        %v4081 = vand.u32 %v972, 2139095040
        %v4082 = vshrl.u32 %v4081, 23
        %v4083 = vsub.s32 %v4082, 127
        %v4084 = vand.u32 2147483647, %v972
        %v4085 = vand.u32 %v4084, 8388607
        %v4086 = vor.u32 %v4085, 8388608
        %v4087 = vsub.s32 0, %v4086
        %v4088 = vadd.s32 %v4083, 1
        %vm4089 = vcmp.gt.s32.totalorder %v4088, 0
        %v4090 = vsel %vm4089, %v4088, 0
        %v4091 = vshrl.u32 %v4090, 5
        %v4092 = vand.u32 %v4090, 31
        %v4093 = vsub.s32 32, %v4092
        %v4094 = vshrl.u32 683565275, %v4093
        %v4095 = vshll.u32 683565275, %v4092
        %v4096 = vshrl.u32 2475754826, %v4093
        %v4097 = vor.u32 %v4095, %v4096
        %v4098 = vshll.u32 2475754826, %v4092
        %v4099 = vshrl.u32 2131351028, %v4093
        %v4100 = vor.u32 %v4098, %v4099
        %v4101 = vshll.u32 2131351028, %v4092
        %v4102 = vshrl.u32 2102212464, %v4093
        %v4103 = vor.u32 %v4101, %v4102
        %v4104 = vshll.u32 2102212464, %v4092
        %v4105 = vshrl.u32 920167782, %v4093
        %v4106 = vor.u32 %v4104, %v4105
        %v4107 = vshll.u32 920167782, %v4092
        %v4108 = vshrl.u32 1326507024, %v4093
        %v4109 = vor.u32 %v4107, %v4108
        %vm4110 = vcmp.lt.s32.totalorder %v4091, 1
        %vm4111 = vcmp.lt.s32.totalorder %v4091, 2
        %vm4112 = vcmp.lt.s32.totalorder %v4091, 3
        %vm4113 = vcmp.lt.s32.totalorder %v4091, 4
        %v4114 = vsel %vm4110, %v4094, %v4097
        %v4115 = vsel %vm4113, %v4103, 2102212464
        %v4116 = vsel %vm4112, %v4100, %v4115
        %v4117 = vsel %vm4111, %v4114, %v4116
        %v4118 = vsel %vm4110, %v4097, %v4100
        %v4119 = vsel %vm4113, %v4106, 920167782
        %v4120 = vsel %vm4112, %v4103, %v4119
        %v4121 = vsel %vm4111, %v4118, %v4120
        %v4122 = vsel %vm4110, %v4100, %v4103
        %v4123 = vsel %vm4113, %v4109, 1326507024
        %v4124 = vsel %vm4112, %v4106, %v4123
        %v4125 = vsel %vm4111, %v4122, %v4124
        %v4126 = vshll.u32 %v4086, 8
        %v4127 = vmul.u32.u64.compose %v4126, %v4125
        %v4128 = vextract.low.u32 %v4127
        %v4129 = vextract.high.u32 %v4127
        %v4130 = vmul.u32.u64.compose %v4126, %v4121
        %v4131 = vextract.low.u32 %v4130
        %v4132 = vextract.high.u32 %v4130
        %v4133 = vmul.u32 %v4126, %v4117
        %v4134 = vadd.s32 %v4129, %v4131
        %vm4135 = vc.u32 %v4129, %v4131
        %v4136 = vadd.s32 %v4132, 1
        %v4137 = vsel %vm4135, %v4136, %v4132
        %v4138 = vadd.s32 %v4133, %v4137
        %v4139 = vadd.s32 %v4138, 536870912
        %v4140 = vshrl.u32 %v4139, 30
        %v4141 = vshll.u32 %v4140, 30
        %v4142 = vsub.s32 %v4138, %v4141
        %vm4143 = vcmp.lt.s32.totalorder %v4142, 0
        %v4144 = vsub.s32 0, %v4142
        %v4145 = vsel %vm4143, %v4144, %v4142
        %v4146 = vclz %v4145
        %v4147 = vsub.s32 %v4146, 2
        %vm4148 = vcmp.gt.s32.totalorder 0, %v4147
        %v4149 = vsel %vm4148, 0, %v4147
        %v4150 = vsub.s32 32, %v4149
        %v4151 = vshll.u32 %v4142, %v4149
        %v4152 = vshrl.u32 %v4134, %v4150
        %v4153 = vor.u32 %v4151, %v4152
        %v4154 = vsub.s32 4294967266, %v4149
        %v4155 = vadd.s32 %v4154, 127
        %v4156 = vshll.u32 %v4155, 23
        %v4157 = vor.u32 4788187, %v4156
        %v4158 = vand.u32 2147483647, %v4157
        %v4160 = vcvt.s32.f32 %v4153
        %v4161 = vmul.f32 %v4160, %v4158
        %v4162 = vxor.u32 %v4161, 2147483648
        %v4163 = vsel %vm4080, %v4162, %v4161
        %v4164 = vsub.s32 4, %v4140
        %v4165 = vsel %vm4080, %v4164, %v4140
        %v4166 = vsel %vm4079, %v972, %v4163
        %v4167 = vsel %vm4079, 0, %v4165
        %v4168 = vcosq.f32.pop %v4166
        %v4169 = vsinq.f32.pop %v4166
        %vm4170 = vweird.f32 %v972
        %v4171 = vadd.s32 %v4167, 3
        %v4172 = vand.u32 %v4171, 3
        %vm4173 = vcmp.lt.s32.totalorder %v4172, 2
        %vm4174 = vcmp.eq.s32.totalorder %v4172, 0
        %v4175 = vxor.u32 %v4169, 2147483648
        %v4176 = vsel %vm4174, %v4168, %v4175
        %vm4177 = vcmp.eq.s32.totalorder %v4172, 2
        %v4178 = vxor.u32 %v4168, 2147483648
        %v4179 = vsel %vm4177, %v4178, %v4169
        %v4180 = vsel %vm4173, %v4176, %v4179
        %v4181 = vsel %vm4170, nan, %v4180
        %v4182 = vand.u32 2147483647, %v973
        %vm4183 = vcmp.le.f32.partialorder %v4182, 0.7853982
        %vm4184 = vcmp.lt.s32.totalorder %v973, 0
        %v4185 = vand.u32 %v973, 2139095040
        %v4186 = vshrl.u32 %v4185, 23
        %v4187 = vsub.s32 %v4186, 127
        %v4188 = vand.u32 2147483647, %v973
        %v4189 = vand.u32 %v4188, 8388607
        %v4190 = vor.u32 %v4189, 8388608
        %v4191 = vsub.s32 0, %v4190
        %v4192 = vadd.s32 %v4187, 1
        %vm4193 = vcmp.gt.s32.totalorder %v4192, 0
        %v4194 = vsel %vm4193, %v4192, 0
        %v4195 = vshrl.u32 %v4194, 5
        %v4196 = vand.u32 %v4194, 31
        %v4197 = vsub.s32 32, %v4196
        %v4198 = vshrl.u32 683565275, %v4197
        %v4199 = vshll.u32 683565275, %v4196
        %v4200 = vshrl.u32 2475754826, %v4197
        %v4201 = vor.u32 %v4199, %v4200
        %v4202 = vshll.u32 2475754826, %v4196
        %v4203 = vshrl.u32 2131351028, %v4197
        %v4204 = vor.u32 %v4202, %v4203
        %v4205 = vshll.u32 2131351028, %v4196
        %v4206 = vshrl.u32 2102212464, %v4197
        %v4207 = vor.u32 %v4205, %v4206
        %v4208 = vshll.u32 2102212464, %v4196
        %v4209 = vshrl.u32 920167782, %v4197
        %v4210 = vor.u32 %v4208, %v4209
        %v4211 = vshll.u32 920167782, %v4196
        %v4212 = vshrl.u32 1326507024, %v4197
        %v4213 = vor.u32 %v4211, %v4212
        %vm4214 = vcmp.lt.s32.totalorder %v4195, 1
        %vm4215 = vcmp.lt.s32.totalorder %v4195, 2
        %vm4216 = vcmp.lt.s32.totalorder %v4195, 3
        %vm4217 = vcmp.lt.s32.totalorder %v4195, 4
        %v4218 = vsel %vm4214, %v4198, %v4201
        %v4219 = vsel %vm4217, %v4207, 2102212464
        %v4220 = vsel %vm4216, %v4204, %v4219
        %v4221 = vsel %vm4215, %v4218, %v4220
        %v4222 = vsel %vm4214, %v4201, %v4204
        %v4223 = vsel %vm4217, %v4210, 920167782
        %v4224 = vsel %vm4216, %v4207, %v4223
        %v4225 = vsel %vm4215, %v4222, %v4224
        %v4226 = vsel %vm4214, %v4204, %v4207
        %v4227 = vsel %vm4217, %v4213, 1326507024
        %v4228 = vsel %vm4216, %v4210, %v4227
        %v4229 = vsel %vm4215, %v4226, %v4228
        %v4230 = vshll.u32 %v4190, 8
        %v4231 = vmul.u32.u64.compose %v4230, %v4229
        %v4232 = vextract.low.u32 %v4231
        %v4233 = vextract.high.u32 %v4231
        %v4234 = vmul.u32.u64.compose %v4230, %v4225
        %v4235 = vextract.low.u32 %v4234
        %v4236 = vextract.high.u32 %v4234
        %v4237 = vmul.u32 %v4230, %v4221
        %v4238 = vadd.s32 %v4233, %v4235
        %vm4239 = vc.u32 %v4233, %v4235
        %v4240 = vadd.s32 %v4236, 1
        %v4241 = vsel %vm4239, %v4240, %v4236
        %v4242 = vadd.s32 %v4237, %v4241
        %v4243 = vadd.s32 %v4242, 536870912
        %v4244 = vshrl.u32 %v4243, 30
        %v4245 = vshll.u32 %v4244, 30
        %v4246 = vsub.s32 %v4242, %v4245
        %vm4247 = vcmp.lt.s32.totalorder %v4246, 0
        %v4248 = vsub.s32 0, %v4246
        %v4249 = vsel %vm4247, %v4248, %v4246
        %v4250 = vclz %v4249
        %v4251 = vsub.s32 %v4250, 2
        %vm4252 = vcmp.gt.s32.totalorder 0, %v4251
        %v4253 = vsel %vm4252, 0, %v4251
        %v4254 = vsub.s32 32, %v4253
        %v4255 = vshll.u32 %v4246, %v4253
        %v4256 = vshrl.u32 %v4238, %v4254
        %v4257 = vor.u32 %v4255, %v4256
        %v4258 = vsub.s32 4294967266, %v4253
        %v4259 = vadd.s32 %v4258, 127
        %v4260 = vshll.u32 %v4259, 23
        %v4261 = vor.u32 4788187, %v4260
        %v4262 = vand.u32 2147483647, %v4261
        %v4264 = vcvt.s32.f32 %v4257
        %v4265 = vmul.f32 %v4264, %v4262
        %v4266 = vxor.u32 %v4265, 2147483648
        %v4267 = vsel %vm4184, %v4266, %v4265
        %v4268 = vsub.s32 4, %v4244
        %v4269 = vsel %vm4184, %v4268, %v4244
        %v4270 = vsel %vm4183, %v973, %v4267
        %v4271 = vsel %vm4183, 0, %v4269
        %v4272 = vcosq.f32.pop %v4270
        %v4273 = vsinq.f32.pop %v4270
        %vm4274 = vweird.f32 %v973
        %v4275 = vadd.s32 %v4271, 3
        %v4276 = vand.u32 %v4275, 3
        %vm4277 = vcmp.lt.s32.totalorder %v4276, 2
        %vm4278 = vcmp.eq.s32.totalorder %v4276, 0
        %v4279 = vxor.u32 %v4273, 2147483648
        %v4280 = vsel %vm4278, %v4272, %v4279
        %vm4281 = vcmp.eq.s32.totalorder %v4276, 2
        %v4282 = vxor.u32 %v4272, 2147483648
        %v4283 = vsel %vm4281, %v4282, %v4273
        %v4284 = vsel %vm4277, %v4280, %v4283
        %v4285 = vsel %vm4274, nan, %v4284
        %v4286 = vpack.c.bf16 %v1179, %v1076
        %v4287 = vpack.c.bf16 %v1385, %v1282
        %v4288 = vpack.c.bf16 %v1591, %v1488
        %v4289 = vpack.c.bf16 %v1797, %v1694
        %v4290 = vpack.c.bf16 %v2003, %v1900
        %v4291 = vpack.c.bf16 %v2209, %v2106
        %v4292 = vpack.c.bf16 %v2415, %v2312
        %v4293 = vpack.c.bf16 %v2621, %v2518
        %v4294 = vld [vmem:[%s2] sm:$0xf]
        %v4295 = vld [vmem:[%s2 + $0x4] sm:$0xf]
        %v4296 = vld [vmem:[%s2 + $0x8] sm:$0xf]
        %v4297 = vld [vmem:[%s2 + $0xc] sm:$0xf]
        %v4298 = vld [vmem:[%s2 + $0x10] sm:$0xf]
        %v4299 = vld [vmem:[%s2 + $0x14] sm:$0xf]
        %v4300 = vld [vmem:[%s2 + $0x18] sm:$0xf]
        %v4301 = vld [vmem:[%s2 + $0x1c] sm:$0xf]
        %v4302 = vld [vmem:[%s2 + $0x20] sm:$0xf]
        %v4303 = vld [vmem:[%s2 + $0x24] sm:$0xf]
        %v4304 = vld [vmem:[%s2 + $0x28] sm:$0xf]
        %v4305 = vld [vmem:[%s2 + $0x2c] sm:$0xf]
        %v4306 = vld [vmem:[%s2 + $0x30] sm:$0xf]
        %v4307 = vld [vmem:[%s2 + $0x34] sm:$0xf]
        %v4308 = vld [vmem:[%s2 + $0x38] sm:$0xf]
        %v4309 = vld [vmem:[%s2 + $0x3c] sm:$0xf]
        %v4310 = vpack.c.bf16 %v2829, %v2725
        %v4311 = vpack.c.bf16 %v3037, %v2933
        %v4312 = vpack.c.bf16 %v3245, %v3141
        %v4313 = vpack.c.bf16 %v3453, %v3349
        %v4314 = vpack.c.bf16 %v3661, %v3557
        %v4315 = vpack.c.bf16 %v3869, %v3765
        %v4316 = vpack.c.bf16 %v4077, %v3973
        %v4317 = vpack.c.bf16 %v4285, %v4181
        %v4318 = vld [vmem:[%s2 + $0x40] sm:$0xf]
        %v4319 = vld [vmem:[%s2 + $0x44] sm:$0xf]
        %v4320 = vld [vmem:[%s2 + $0x48] sm:$0xf]
        %v4321 = vld [vmem:[%s2 + $0x4c] sm:$0xf]
        %v4322 = vld [vmem:[%s2 + $0x50] sm:$0xf]
        %v4323 = vld [vmem:[%s2 + $0x54] sm:$0xf]
        %v4324 = vld [vmem:[%s2 + $0x58] sm:$0xf]
        %v4325 = vld [vmem:[%s2 + $0x5c] sm:$0xf]
        %v4326 = vld [vmem:[%s2 + $0x60] sm:$0xf]
        %v4327 = vld [vmem:[%s2 + $0x64] sm:$0xf]
        %v4328 = vld [vmem:[%s2 + $0x68] sm:$0xf]
        %v4329 = vld [vmem:[%s2 + $0x6c] sm:$0xf]
        %v4330 = vld [vmem:[%s2 + $0x70] sm:$0xf]
        %v4331 = vld [vmem:[%s2 + $0x74] sm:$0xf]
        %v4332 = vld [vmem:[%s2 + $0x78] sm:$0xf]
        %v4333 = vld [vmem:[%s2 + $0x7c] sm:$0xf]
        %v4350 = vunpack.c.l.b16 %v4318
        %v4351 = vunpack.c.l.b16 %v4319
        %v4352 = vunpack.c.l.b16 %v4320
        %v4353 = vunpack.c.l.b16 %v4321
        %v4354 = vunpack.c.l.b16 %v4322
        %v4355 = vunpack.c.l.b16 %v4323
        %v4356 = vunpack.c.l.b16 %v4324
        %v4357 = vunpack.c.l.b16 %v4325
        %v4358 = vunpack.c.l.b16 %v4326
        %v4359 = vunpack.c.l.b16 %v4327
        %v4360 = vunpack.c.l.b16 %v4328
        %v4361 = vunpack.c.l.b16 %v4329
        %v4362 = vunpack.c.l.b16 %v4330
        %v4363 = vunpack.c.l.b16 %v4331
        %v4364 = vunpack.c.l.b16 %v4332
        %v4365 = vunpack.c.l.b16 %v4333
        %v4366 = vpack.c.b16 %v4351, %v4350
        %v4367 = vpack.c.b16 %v4353, %v4352
        %v4368 = vpack.c.b16 %v4355, %v4354
        %v4369 = vpack.c.b16 %v4357, %v4356
        %v4370 = vpack.c.b16 %v4359, %v4358
        %v4371 = vpack.c.b16 %v4361, %v4360
        %v4372 = vpack.c.b16 %v4363, %v4362
        %v4373 = vpack.c.b16 %v4365, %v4364
        %4382 = vmatprep.subr.bf16.mxu0 0
        %4383 = vmatpush1.bf16.msra.mxu0 %v4373
        %4384 = vmatprep.subr.bf16.mxu0 0
        %4385 = vmatpush1.bf16.msra.mxu0 %v4372
        %4386 = vmatprep.subr.bf16.mxu0 0
        %4387 = vmatpush1.bf16.msra.mxu0 %v4371
        %4388 = vmatprep.subr.bf16.mxu0 0
        %4389 = vmatpush1.bf16.msra.mxu0 %v4370
        %4390 = vmatprep.subr.bf16.mxu0 0
        %4391 = vmatpush1.bf16.msra.mxu0 %v4369
        %4392 = vmatprep.subr.bf16.mxu0 0
        %4393 = vmatpush1.bf16.msra.mxu0 %v4368
        %4394 = vmatprep.subr.bf16.mxu0 0
        %4395 = vmatpush1.bf16.msra.mxu0 %v4367
        %4396 = vmatprep.subr.bf16.mxu0 0
        %4397 = vmatpush1.bf16.msra.mxu0 %v4366
        %4398 = vmatprep.subr.bf16.mxu0 0
        %4399 = vmatpush2.bf16.msra.mxu0 0
        %4400 = vmatprep.subr.bf16.mxu0 0
        %4401 = vmatpush2.bf16.msra.mxu0 0
        %4402 = vmatprep.subr.bf16.mxu0 0
        %4403 = vmatpush2.bf16.msra.mxu0 0
        %4404 = vmatprep.subr.bf16.mxu0 0
        %4405 = vmatpush2.bf16.msra.mxu0 0
        %4406 = vmatprep.subr.bf16.mxu0 0
        %4407 = vmatpush2.bf16.msra.mxu0 0
        %4408 = vmatprep.subr.bf16.mxu0 0
        %4409 = vmatpush2.bf16.msra.mxu0 0
        %4410 = vmatprep.subr.bf16.mxu0 0
        %4411 = vmatpush2.bf16.msra.mxu0 0
        %4412 = vmatprep.subr.bf16.mxu0 0
        %4413 = vmatpush2.bf16.msra.mxu0 0
        %4414 = vmatprep.mubr.bf16.mxu0 0
        %4415 = vmatmul.mubr.bf16.gmra.mxu0 %v4310
        %v4416 = vpop.f32.mrf.mxu0
        %v4417 = vadd.f32 0.0, %v4416
        %v4418 = vpop.f32.mrf.mxu0
        %v4419 = vpop.f32.mrf.mxu0
        %v4420 = vadd.f32 0.0, %v4419
        %v4421 = vpop.f32.mrf.mxu0
        %4422 = vmatprep.mubr.bf16.mxu0 0
        %4423 = vmatmul.mubr.bf16.gmra.mxu0 %v4311
        %v4424 = vpop.f32.mrf.mxu0
        %v4425 = vadd.f32 0.0, %v4424
        %v4426 = vpop.f32.mrf.mxu0
        %v4427 = vpop.f32.mrf.mxu0
        %v4428 = vadd.f32 0.0, %v4427
        %v4429 = vpop.f32.mrf.mxu0
        %4430 = vmatprep.mubr.bf16.mxu0 0
        %4431 = vmatmul.mubr.bf16.gmra.mxu0 %v4312
        %v4432 = vpop.f32.mrf.mxu0
        %v4433 = vadd.f32 0.0, %v4432
        %v4434 = vpop.f32.mrf.mxu0
        %v4435 = vpop.f32.mrf.mxu0
        %v4436 = vadd.f32 0.0, %v4435
        %v4437 = vpop.f32.mrf.mxu0
        %4438 = vmatprep.mubr.bf16.mxu0 0
        %4439 = vmatmul.mubr.bf16.gmra.mxu0 %v4313
        %v4440 = vpop.f32.mrf.mxu0
        %v4441 = vadd.f32 0.0, %v4440
        %v4442 = vpop.f32.mrf.mxu0
        %v4443 = vpop.f32.mrf.mxu0
        %v4444 = vadd.f32 0.0, %v4443
        %v4445 = vpop.f32.mrf.mxu0
        %4446 = vmatprep.mubr.bf16.mxu0 0
        %4447 = vmatmul.mubr.bf16.gmra.mxu0 %v4314
        %v4448 = vpop.f32.mrf.mxu0
        %v4449 = vadd.f32 0.0, %v4448
        %v4450 = vpop.f32.mrf.mxu0
        %v4451 = vpop.f32.mrf.mxu0
        %v4452 = vadd.f32 0.0, %v4451
        %v4453 = vpop.f32.mrf.mxu0
        %4454 = vmatprep.mubr.bf16.mxu0 0
        %4455 = vmatmul.mubr.bf16.gmra.mxu0 %v4315
        %v4456 = vpop.f32.mrf.mxu0
        %v4457 = vadd.f32 0.0, %v4456
        %v4458 = vpop.f32.mrf.mxu0
        %v4459 = vpop.f32.mrf.mxu0
        %v4460 = vadd.f32 0.0, %v4459
        %v4461 = vpop.f32.mrf.mxu0
        %4462 = vmatprep.mubr.bf16.mxu0 0
        %4463 = vmatmul.mubr.bf16.gmra.mxu0 %v4316
        %v4464 = vpop.f32.mrf.mxu0
        %v4465 = vadd.f32 0.0, %v4464
        %v4466 = vpop.f32.mrf.mxu0
        %v4467 = vpop.f32.mrf.mxu0
        %v4468 = vadd.f32 0.0, %v4467
        %v4469 = vpop.f32.mrf.mxu0
        %4470 = vmatprep.mubr.bf16.mxu0 0
        %4471 = vmatmul.mubr.bf16.gmra.mxu0 %v4317
        %v4472 = vpop.f32.mrf.mxu0
        %v4473 = vadd.f32 0.0, %v4472
        %v4474 = vpop.f32.mrf.mxu0
        %v4475 = vpop.f32.mrf.mxu0
        %v4476 = vadd.f32 0.0, %v4475
        %v4477 = vpop.f32.mrf.mxu0
        %4478 = vdwg.mxu0
        %v4495 = vunpack.c.l.b16 %v4294
        %v4496 = vunpack.c.l.b16 %v4295
        %v4497 = vunpack.c.l.b16 %v4296
        %v4498 = vunpack.c.l.b16 %v4297
        %v4499 = vunpack.c.l.b16 %v4298
        %v4500 = vunpack.c.l.b16 %v4299
        %v4501 = vunpack.c.l.b16 %v4300
        %v4502 = vunpack.c.l.b16 %v4301
        %v4503 = vunpack.c.l.b16 %v4302
        %v4504 = vunpack.c.l.b16 %v4303
        %v4505 = vunpack.c.l.b16 %v4304
        %v4506 = vunpack.c.l.b16 %v4305
        %v4507 = vunpack.c.l.b16 %v4306
        %v4508 = vunpack.c.l.b16 %v4307
        %v4509 = vunpack.c.l.b16 %v4308
        %v4510 = vunpack.c.l.b16 %v4309
        %v4511 = vpack.c.b16 %v4496, %v4495
        %v4512 = vpack.c.b16 %v4498, %v4497
        %v4513 = vpack.c.b16 %v4500, %v4499
        %v4514 = vpack.c.b16 %v4502, %v4501
        %v4515 = vpack.c.b16 %v4504, %v4503
        %v4516 = vpack.c.b16 %v4506, %v4505
        %v4517 = vpack.c.b16 %v4508, %v4507
        %v4518 = vpack.c.b16 %v4510, %v4509
        %4527 = vmatprep.subr.bf16.mxu0 0
        %4528 = vmatpush1.bf16.msra.mxu0 %v4518
        %4529 = vmatprep.subr.bf16.mxu0 0
        %4530 = vmatpush1.bf16.msra.mxu0 %v4517
        %4531 = vmatprep.subr.bf16.mxu0 0
        %4532 = vmatpush1.bf16.msra.mxu0 %v4516
        %4533 = vmatprep.subr.bf16.mxu0 0
        %4534 = vmatpush1.bf16.msra.mxu0 %v4515
        %4535 = vmatprep.subr.bf16.mxu0 0
        %4536 = vmatpush1.bf16.msra.mxu0 %v4514
        %4537 = vmatprep.subr.bf16.mxu0 0
        %4538 = vmatpush1.bf16.msra.mxu0 %v4513
        %4539 = vmatprep.subr.bf16.mxu0 0
        %4540 = vmatpush1.bf16.msra.mxu0 %v4512
        %4541 = vmatprep.subr.bf16.mxu0 0
        %4542 = vmatpush1.bf16.msra.mxu0 %v4511
        %4543 = vmatprep.subr.bf16.mxu0 0
        %4544 = vmatpush2.bf16.msra.mxu0 0
        %4545 = vmatprep.subr.bf16.mxu0 0
        %4546 = vmatpush2.bf16.msra.mxu0 0
        %4547 = vmatprep.subr.bf16.mxu0 0
        %4548 = vmatpush2.bf16.msra.mxu0 0
        %4549 = vmatprep.subr.bf16.mxu0 0
        %4550 = vmatpush2.bf16.msra.mxu0 0
        %4551 = vmatprep.subr.bf16.mxu0 0
        %4552 = vmatpush2.bf16.msra.mxu0 0
        %4553 = vmatprep.subr.bf16.mxu0 0
        %4554 = vmatpush2.bf16.msra.mxu0 0
        %4555 = vmatprep.subr.bf16.mxu0 0
        %4556 = vmatpush2.bf16.msra.mxu0 0
        %4557 = vmatprep.subr.bf16.mxu0 0
        %4558 = vmatpush2.bf16.msra.mxu0 0
        %4559 = vmatprep.mubr.bf16.mxu0 0
        %4560 = vmatmul.mubr.bf16.gmra.mxu0 %v4286
        %v4561 = vpop.f32.mrf.mxu0
        %v4562 = vadd.f32 %v4417, %v4561
        %v4563 = vpop.f32.mrf.mxu0
        %v4564 = vpop.f32.mrf.mxu0
        %v4565 = vadd.f32 %v4420, %v4564
        %v4566 = vpop.f32.mrf.mxu0
        %4567 = vmatprep.mubr.bf16.mxu0 0
        %4568 = vmatmul.mubr.bf16.gmra.mxu0 %v4287
        %v4569 = vpop.f32.mrf.mxu0
        %v4570 = vadd.f32 %v4425, %v4569
        %v4571 = vpop.f32.mrf.mxu0
        %v4572 = vpop.f32.mrf.mxu0
        %v4573 = vadd.f32 %v4428, %v4572
        %v4574 = vpop.f32.mrf.mxu0
        %4575 = vmatprep.mubr.bf16.mxu0 0
        %4576 = vmatmul.mubr.bf16.gmra.mxu0 %v4288
        %v4577 = vpop.f32.mrf.mxu0
        %v4578 = vadd.f32 %v4433, %v4577
        %v4579 = vpop.f32.mrf.mxu0
        %v4580 = vpop.f32.mrf.mxu0
        %v4581 = vadd.f32 %v4436, %v4580
        %v4582 = vpop.f32.mrf.mxu0
        %4583 = vmatprep.mubr.bf16.mxu0 0
        %4584 = vmatmul.mubr.bf16.gmra.mxu0 %v4289
        %v4585 = vpop.f32.mrf.mxu0
        %v4586 = vadd.f32 %v4441, %v4585
        %v4587 = vpop.f32.mrf.mxu0
        %v4588 = vpop.f32.mrf.mxu0
        %v4589 = vadd.f32 %v4444, %v4588
        %v4590 = vpop.f32.mrf.mxu0
        %4591 = vmatprep.mubr.bf16.mxu0 0
        %4592 = vmatmul.mubr.bf16.gmra.mxu0 %v4290
        %v4593 = vpop.f32.mrf.mxu0
        %v4594 = vadd.f32 %v4449, %v4593
        %v4595 = vpop.f32.mrf.mxu0
        %v4596 = vpop.f32.mrf.mxu0
        %v4597 = vadd.f32 %v4452, %v4596
        %v4598 = vpop.f32.mrf.mxu0
        %4599 = vmatprep.mubr.bf16.mxu0 0
        %4600 = vmatmul.mubr.bf16.gmra.mxu0 %v4291
        %v4601 = vpop.f32.mrf.mxu0
        %v4602 = vadd.f32 %v4457, %v4601
        %v4603 = vpop.f32.mrf.mxu0
        %v4604 = vpop.f32.mrf.mxu0
        %v4605 = vadd.f32 %v4460, %v4604
        %v4606 = vpop.f32.mrf.mxu0
        %4607 = vmatprep.mubr.bf16.mxu0 0
        %4608 = vmatmul.mubr.bf16.gmra.mxu0 %v4292
        %v4609 = vpop.f32.mrf.mxu0
        %v4610 = vadd.f32 %v4465, %v4609
        %v4611 = vpop.f32.mrf.mxu0
        %v4612 = vpop.f32.mrf.mxu0
        %v4613 = vadd.f32 %v4468, %v4612
        %v4614 = vpop.f32.mrf.mxu0
        %4615 = vmatprep.mubr.bf16.mxu0 0
        %4616 = vmatmul.mubr.bf16.gmra.mxu0 %v4293
        %v4617 = vpop.f32.mrf.mxu0
        %v4618 = vadd.f32 %v4473, %v4617
        %v4619 = vpop.f32.mrf.mxu0
        %v4620 = vpop.f32.mrf.mxu0
        %v4621 = vadd.f32 %v4476, %v4620
        %v4622 = vpop.f32.mrf.mxu0
        %4623 = vdwg.mxu0
        %v4624 = vld [vmem:[%s3] sm:$0x1]
        %v4626 = vlaneseq
        %v4627 = vshrl.u32 %v4626, 7
        %v4628 = vsub.s32 0, %v4627
        %v4629 = vrot.slane %v4624, %v4628
        %v4631 = vadd.f32 %v4562, %v4629
        %v4632 = vadd.f32 %v4565, %v4629
        %v4633 = vadd.f32 %v4570, %v4629
        %v4634 = vadd.f32 %v4573, %v4629
        %v4635 = vadd.f32 %v4578, %v4629
        %v4636 = vadd.f32 %v4581, %v4629
        %v4637 = vadd.f32 %v4586, %v4629
        %v4638 = vadd.f32 %v4589, %v4629
        %v4639 = vadd.f32 %v4594, %v4629
        %v4640 = vadd.f32 %v4597, %v4629
        %v4641 = vadd.f32 %v4602, %v4629
        %v4642 = vadd.f32 %v4605, %v4629
        %v4643 = vadd.f32 %v4610, %v4629
        %v4644 = vadd.f32 %v4613, %v4629
        %v4645 = vadd.f32 %v4618, %v4629
        %v4646 = vadd.f32 %v4621, %v4629
        %v4647 = vxor.u32 %v4631, 2147483648
        %v4648 = vxor.u32 %v4632, 2147483648
        %v4649 = vxor.u32 %v4633, 2147483648
        %v4650 = vxor.u32 %v4634, 2147483648
        %v4651 = vxor.u32 %v4635, 2147483648
        %v4652 = vxor.u32 %v4636, 2147483648
        %v4653 = vxor.u32 %v4637, 2147483648
        %v4654 = vxor.u32 %v4638, 2147483648
        %v4655 = vxor.u32 %v4639, 2147483648
        %v4656 = vxor.u32 %v4640, 2147483648
        %v4657 = vxor.u32 %v4641, 2147483648
        %v4658 = vxor.u32 %v4642, 2147483648
        %v4659 = vxor.u32 %v4643, 2147483648
        %v4660 = vxor.u32 %v4644, 2147483648
        %v4661 = vxor.u32 %v4645, 2147483648
        %v4662 = vxor.u32 %v4646, 2147483648
        %v4663 = vmul.f32 %v4647, 1.442695
        %v4664 = vpow.pop %v4663
        %v4665 = vmul.f32 %v4648, 1.442695
        %v4666 = vpow.pop %v4665
        %v4667 = vmul.f32 %v4649, 1.442695
        %v4668 = vpow.pop %v4667
        %v4669 = vmul.f32 %v4650, 1.442695
        %v4670 = vpow.pop %v4669
        %v4671 = vmul.f32 %v4651, 1.442695
        %v4672 = vpow.pop %v4671
        %v4673 = vmul.f32 %v4652, 1.442695
        %v4674 = vpow.pop %v4673
        %v4675 = vmul.f32 %v4653, 1.442695
        %v4676 = vpow.pop %v4675
        %v4677 = vmul.f32 %v4654, 1.442695
        %v4678 = vpow.pop %v4677
        %v4679 = vmul.f32 %v4655, 1.442695
        %v4680 = vpow.pop %v4679
        %v4681 = vmul.f32 %v4656, 1.442695
        %v4682 = vpow.pop %v4681
        %v4683 = vmul.f32 %v4657, 1.442695
        %v4684 = vpow.pop %v4683
        %v4685 = vmul.f32 %v4658, 1.442695
        %v4686 = vpow.pop %v4685
        %v4687 = vmul.f32 %v4659, 1.442695
        %v4688 = vpow.pop %v4687
        %v4689 = vmul.f32 %v4660, 1.442695
        %v4690 = vpow.pop %v4689
        %v4691 = vmul.f32 %v4661, 1.442695
        %v4692 = vpow.pop %v4691
        %v4693 = vmul.f32 %v4662, 1.442695
        %v4694 = vpow.pop %v4693
        %v4695 = vadd.f32 %v4664, 1.0
        %v4696 = vadd.f32 %v4666, 1.0
        %v4697 = vadd.f32 %v4668, 1.0
        %v4698 = vadd.f32 %v4670, 1.0
        %v4699 = vadd.f32 %v4672, 1.0
        %v4700 = vadd.f32 %v4674, 1.0
        %v4701 = vadd.f32 %v4676, 1.0
        %v4702 = vadd.f32 %v4678, 1.0
        %v4703 = vadd.f32 %v4680, 1.0
        %v4704 = vadd.f32 %v4682, 1.0
        %v4705 = vadd.f32 %v4684, 1.0
        %v4706 = vadd.f32 %v4686, 1.0
        %v4707 = vadd.f32 %v4688, 1.0
        %v4708 = vadd.f32 %v4690, 1.0
        %v4709 = vadd.f32 %v4692, 1.0
        %v4710 = vadd.f32 %v4694, 1.0
        %v4711 = vrcp.pop %v4695
        %v4712 = vmul.f32 1.0, %v4711
        %v4713 = vrcp.pop %v4696
        %v4714 = vmul.f32 1.0, %v4713
        %v4715 = vrcp.pop %v4697
        %v4716 = vmul.f32 1.0, %v4715
        %v4717 = vrcp.pop %v4698
        %v4718 = vmul.f32 1.0, %v4717
        %v4719 = vrcp.pop %v4699
        %v4720 = vmul.f32 1.0, %v4719
        %v4721 = vrcp.pop %v4700
        %v4722 = vmul.f32 1.0, %v4721
        %v4723 = vrcp.pop %v4701
        %v4724 = vmul.f32 1.0, %v4723
        %v4725 = vrcp.pop %v4702
        %v4726 = vmul.f32 1.0, %v4725
        %v4727 = vrcp.pop %v4703
        %v4728 = vmul.f32 1.0, %v4727
        %v4729 = vrcp.pop %v4704
        %v4730 = vmul.f32 1.0, %v4729
        %v4731 = vrcp.pop %v4705
        %v4732 = vmul.f32 1.0, %v4731
        %v4733 = vrcp.pop %v4706
        %v4734 = vmul.f32 1.0, %v4733
        %v4735 = vrcp.pop %v4707
        %v4736 = vmul.f32 1.0, %v4735
        %v4737 = vrcp.pop %v4708
        %v4738 = vmul.f32 1.0, %v4737
        %v4739 = vrcp.pop %v4709
        %v4740 = vmul.f32 1.0, %v4739
        %v4741 = vrcp.pop %v4710
        %v4742 = vmul.f32 1.0, %v4741
        %v4743 = vmul.f32 %v4631, %v4712
        %v4744 = vmul.f32 %v4632, %v4714
        %v4745 = vmul.f32 %v4633, %v4716
        %v4746 = vmul.f32 %v4634, %v4718
        %v4747 = vmul.f32 %v4635, %v4720
        %v4748 = vmul.f32 %v4636, %v4722
        %v4749 = vmul.f32 %v4637, %v4724
        %v4750 = vmul.f32 %v4638, %v4726
        %v4751 = vmul.f32 %v4639, %v4728
        %v4752 = vmul.f32 %v4640, %v4730
        %v4753 = vmul.f32 %v4641, %v4732
        %v4754 = vmul.f32 %v4642, %v4734
        %v4755 = vmul.f32 %v4643, %v4736
        %v4756 = vmul.f32 %v4644, %v4738
        %v4757 = vmul.f32 %v4645, %v4740
        %v4758 = vmul.f32 %v4646, %v4742
        %v4759 = vpack.c.bf16 %v4744, %v4743
        %v4760 = vpack.c.bf16 %v4746, %v4745
        %v4761 = vpack.c.bf16 %v4748, %v4747
        %v4762 = vpack.c.bf16 %v4750, %v4749
        %v4763 = vpack.c.bf16 %v4752, %v4751
        %v4764 = vpack.c.bf16 %v4754, %v4753
        %v4765 = vpack.c.bf16 %v4756, %v4755
        %v4766 = vpack.c.bf16 %v4758, %v4757
        %v4767 = vld [vmem:[%s4] sm:$0xf]
        %v4768 = vld [vmem:[%s4 + $0x4] sm:$0xf]
        %v4769 = vld [vmem:[%s4 + $0x8] sm:$0xf]
        %v4770 = vld [vmem:[%s4 + $0xc] sm:$0xf]
        %v4771 = vld [vmem:[%s5] sm:$0x1]
        %v4773 = vlaneseq
        %v4774 = vshrl.u32 %v4773, 7
        %v4775 = vsub.s32 0, %v4774
        %v4776 = vrot.slane %v4771, %v4775
        %v4782 = vunpack.c.l.b16 %v4767
        %v4783 = vunpack.c.l.b16 %v4768
        %v4784 = vunpack.c.l.b16 %v4769
        %v4785 = vunpack.c.l.b16 %v4770
        %v4786 = vpack.c.b16 %v4783, %v4782
        %v4787 = vpack.c.b16 %v4785, %v4784
        %vm4790 = vcmask 261120
        %v4792 = vsel %vm4790, %v4759, 0
        %v4795 = vsel %vm4790, %v4760, 0
        %v4798 = vsel %vm4790, %v4761, 0
        %v4801 = vsel %vm4790, %v4762, 0
        %v4804 = vsel %vm4790, %v4763, 0
        %v4807 = vsel %vm4790, %v4764, 0
        %v4810 = vsel %vm4790, %v4765, 0
        %v4813 = vsel %vm4790, %v4766, 0
        %4815 = vmatprep.subr.bf16.mxu0 0
        %4816 = vmatpush1.bf16.msra.mxu0 0
        %4817 = vmatprep.subr.bf16.mxu0 0
        %4818 = vmatpush1.bf16.msra.mxu0 0
        %4819 = vmatprep.subr.bf16.mxu0 0
        %4820 = vmatpush1.bf16.msra.mxu0 0
        %4821 = vmatprep.subr.bf16.mxu0 0
        %4822 = vmatpush1.bf16.msra.mxu0 0
        %4823 = vmatprep.subr.bf16.mxu0 0
        %4824 = vmatpush1.bf16.msra.mxu0 0
        %4825 = vmatprep.subr.bf16.mxu0 0
        %4826 = vmatpush1.bf16.msra.mxu0 0
        %4827 = vmatprep.subr.bf16.mxu0 0
        %4828 = vmatpush1.bf16.msra.mxu0 %v4787
        %4829 = vmatprep.subr.bf16.mxu0 0
        %4830 = vmatpush1.bf16.msra.mxu0 %v4786
        %4831 = vmatprep.subr.bf16.mxu0 0
        %4832 = vmatpush2.bf16.msra.mxu0 0
        %4833 = vmatprep.subr.bf16.mxu0 0
        %4834 = vmatpush2.bf16.msra.mxu0 0
        %4835 = vmatprep.subr.bf16.mxu0 0
        %4836 = vmatpush2.bf16.msra.mxu0 0
        %4837 = vmatprep.subr.bf16.mxu0 0
        %4838 = vmatpush2.bf16.msra.mxu0 0
        %4839 = vmatprep.subr.bf16.mxu0 0
        %4840 = vmatpush2.bf16.msra.mxu0 0
        %4841 = vmatprep.subr.bf16.mxu0 0
        %4842 = vmatpush2.bf16.msra.mxu0 0
        %4843 = vmatprep.subr.bf16.mxu0 0
        %4844 = vmatpush2.bf16.msra.mxu0 0
        %4845 = vmatprep.subr.bf16.mxu0 0
        %4846 = vmatpush2.bf16.msra.mxu0 0
        %4847 = vmatprep.mubr.bf16.mxu0 0
        %4848 = vmatmul.mubr.bf16.gmra.mxu0 %v4792
        %v4849 = vpop.f32.mrf.mxu0
        %v4850 = vadd.f32 %v4776, %v4849
        %v4851 = vpop.f32.mrf.mxu0
        %v4852 = vpop.f32.mrf.mxu0
        %v4853 = vadd.f32 %v4776, %v4852
        %v4854 = vpop.f32.mrf.mxu0
        %4855 = vmatprep.mubr.bf16.mxu0 0
        %4856 = vmatmul.mubr.bf16.gmra.mxu0 %v4795
        %v4857 = vpop.f32.mrf.mxu0
        %v4858 = vadd.f32 %v4776, %v4857
        %v4859 = vpop.f32.mrf.mxu0
        %v4860 = vpop.f32.mrf.mxu0
        %v4861 = vadd.f32 %v4776, %v4860
        %v4862 = vpop.f32.mrf.mxu0
        %4863 = vmatprep.mubr.bf16.mxu0 0
        %4864 = vmatmul.mubr.bf16.gmra.mxu0 %v4798
        %v4865 = vpop.f32.mrf.mxu0
        %v4866 = vadd.f32 %v4776, %v4865
        %v4867 = vpop.f32.mrf.mxu0
        %v4868 = vpop.f32.mrf.mxu0
        %v4869 = vadd.f32 %v4776, %v4868
        %v4870 = vpop.f32.mrf.mxu0
        %4871 = vmatprep.mubr.bf16.mxu0 0
        %4872 = vmatmul.mubr.bf16.gmra.mxu0 %v4801
        %v4873 = vpop.f32.mrf.mxu0
        %v4874 = vadd.f32 %v4776, %v4873
        %v4875 = vpop.f32.mrf.mxu0
        %v4876 = vpop.f32.mrf.mxu0
        %v4877 = vadd.f32 %v4776, %v4876
        %v4878 = vpop.f32.mrf.mxu0
        %4879 = vmatprep.mubr.bf16.mxu0 0
        %4880 = vmatmul.mubr.bf16.gmra.mxu0 %v4804
        %v4881 = vpop.f32.mrf.mxu0
        %v4882 = vadd.f32 %v4776, %v4881
        %v4883 = vpop.f32.mrf.mxu0
        %v4884 = vpop.f32.mrf.mxu0
        %v4885 = vadd.f32 %v4776, %v4884
        %v4886 = vpop.f32.mrf.mxu0
        %4887 = vmatprep.mubr.bf16.mxu0 0
        %4888 = vmatmul.mubr.bf16.gmra.mxu0 %v4807
        %v4889 = vpop.f32.mrf.mxu0
        %v4890 = vadd.f32 %v4776, %v4889
        %v4891 = vpop.f32.mrf.mxu0
        %v4892 = vpop.f32.mrf.mxu0
        %v4893 = vadd.f32 %v4776, %v4892
        %v4894 = vpop.f32.mrf.mxu0
        %4895 = vmatprep.mubr.bf16.mxu0 0
        %4896 = vmatmul.mubr.bf16.gmra.mxu0 %v4810
        %v4897 = vpop.f32.mrf.mxu0
        %v4898 = vadd.f32 %v4776, %v4897
        %v4899 = vpop.f32.mrf.mxu0
        %v4900 = vpop.f32.mrf.mxu0
        %v4901 = vadd.f32 %v4776, %v4900
        %v4902 = vpop.f32.mrf.mxu0
        %4903 = vmatprep.mubr.bf16.mxu0 0
        %4904 = vmatmul.mubr.bf16.gmra.mxu0 %v4813
        %v4905 = vpop.f32.mrf.mxu0
        %v4906 = vadd.f32 %v4776, %v4905
        %v4907 = vpop.f32.mrf.mxu0
        %v4908 = vpop.f32.mrf.mxu0
        %v4909 = vadd.f32 %v4776, %v4908
        %v4910 = vpop.f32.mrf.mxu0
        %4911 = vdwg.mxu0
        %v4912 = vld [vmem:[%s6] sm:$0xf]
        %v4913 = vld [vmem:[%s6 + $0x4] sm:$0x7]
        %v4914 = vld [vmem:[%s7] sm:$0x1]
        %v4916 = vlaneseq
        %v4917 = vshrl.u32 %v4916, 7
        %v4918 = vsub.s32 0, %v4917
        %v4919 = vrot.slane %v4914, %v4918
        %v4923 = vunpack.c.l.b16 %v4912
        %v4924 = vunpack.c.l.b16 %v4913
        %v4925 = vpack.c.b16 %v4924, %v4923
        %vm4926 = vcmask 105472
        %v4928 = vsel %vm4926, %v863, 0
        %v4931 = vsel %vm4926, %v864, 0
        %v4934 = vsel %vm4926, %v865, 0
        %v4937 = vsel %vm4926, %v866, 0
        %v4940 = vsel %vm4926, %v867, 0
        %v4943 = vsel %vm4926, %v868, 0
        %v4946 = vsel %vm4926, %v869, 0
        %v4949 = vsel %vm4926, %v870, 0
        %vm4951 = vcmask 1045504
        %vm4952 = vcmask 1046528
        %v4953 = vsel %vm4951, 4294967295, 65535
        %v4954 = vsel %vm4952, %v4953, 0
        %v4956 = vand.u32 %v4925, %v4954
        %4958 = vmatprep.subr.bf16.mxu0 0
        %4959 = vmatpush1.bf16.msra.mxu0 0
        %4960 = vmatprep.subr.bf16.mxu0 0
        %4961 = vmatpush1.bf16.msra.mxu0 0
        %4962 = vmatprep.subr.bf16.mxu0 0
        %4963 = vmatpush1.bf16.msra.mxu0 0
        %4964 = vmatprep.subr.bf16.mxu0 0
        %4965 = vmatpush1.bf16.msra.mxu0 0
        %4966 = vmatprep.subr.bf16.mxu0 0
        %4967 = vmatpush1.bf16.msra.mxu0 0
        %4968 = vmatprep.subr.bf16.mxu0 0
        %4969 = vmatpush1.bf16.msra.mxu0 0
        %4970 = vmatprep.subr.bf16.mxu0 0
        %4971 = vmatpush1.bf16.msra.mxu0 0
        %4972 = vmatprep.subr.bf16.mxu0 0
        %4973 = vmatpush1.bf16.msra.mxu0 %v4956
        %4974 = vmatprep.subr.bf16.mxu0 0
        %4975 = vmatpush2.bf16.msra.mxu0 0
        %4976 = vmatprep.subr.bf16.mxu0 0
        %4977 = vmatpush2.bf16.msra.mxu0 0
        %4978 = vmatprep.subr.bf16.mxu0 0
        %4979 = vmatpush2.bf16.msra.mxu0 0
        %4980 = vmatprep.subr.bf16.mxu0 0
        %4981 = vmatpush2.bf16.msra.mxu0 0
        %4982 = vmatprep.subr.bf16.mxu0 0
        %4983 = vmatpush2.bf16.msra.mxu0 0
        %4984 = vmatprep.subr.bf16.mxu0 0
        %4985 = vmatpush2.bf16.msra.mxu0 0
        %4986 = vmatprep.subr.bf16.mxu0 0
        %4987 = vmatpush2.bf16.msra.mxu0 0
        %4988 = vmatprep.subr.bf16.mxu0 0
        %4989 = vmatpush2.bf16.msra.mxu0 0
        %4990 = vmatprep.mubr.bf16.mxu0 0
        %4991 = vmatmul.mubr.bf16.gmra.mxu0 %v4928
        %v4992 = vpop.f32.mrf.mxu0
        %v4993 = vadd.f32 %v4919, %v4992
        %v4994 = vpop.f32.mrf.mxu0
        %v4995 = vpop.f32.mrf.mxu0
        %v4996 = vadd.f32 %v4919, %v4995
        %v4997 = vpop.f32.mrf.mxu0
        %4998 = vmatprep.mubr.bf16.mxu0 0
        %4999 = vmatmul.mubr.bf16.gmra.mxu0 %v4931
        %v5000 = vpop.f32.mrf.mxu0
        %v5001 = vadd.f32 %v4919, %v5000
        %v5002 = vpop.f32.mrf.mxu0
        %v5003 = vpop.f32.mrf.mxu0
        %v5004 = vadd.f32 %v4919, %v5003
        %v5005 = vpop.f32.mrf.mxu0
        %5006 = vmatprep.mubr.bf16.mxu0 0
        %5007 = vmatmul.mubr.bf16.gmra.mxu0 %v4934
        %v5008 = vpop.f32.mrf.mxu0
        %v5009 = vadd.f32 %v4919, %v5008
        %v5010 = vpop.f32.mrf.mxu0
        %v5011 = vpop.f32.mrf.mxu0
        %v5012 = vadd.f32 %v4919, %v5011
        %v5013 = vpop.f32.mrf.mxu0
        %5014 = vmatprep.mubr.bf16.mxu0 0
        %5015 = vmatmul.mubr.bf16.gmra.mxu0 %v4937
        %v5016 = vpop.f32.mrf.mxu0
        %v5017 = vadd.f32 %v4919, %v5016
        %v5018 = vpop.f32.mrf.mxu0
        %v5019 = vpop.f32.mrf.mxu0
        %v5020 = vadd.f32 %v4919, %v5019
        %v5021 = vpop.f32.mrf.mxu0
        %5022 = vmatprep.mubr.bf16.mxu0 0
        %5023 = vmatmul.mubr.bf16.gmra.mxu0 %v4940
        %v5024 = vpop.f32.mrf.mxu0
        %v5025 = vadd.f32 %v4919, %v5024
        %v5026 = vpop.f32.mrf.mxu0
        %v5027 = vpop.f32.mrf.mxu0
        %v5028 = vadd.f32 %v4919, %v5027
        %v5029 = vpop.f32.mrf.mxu0
        %5030 = vmatprep.mubr.bf16.mxu0 0
        %5031 = vmatmul.mubr.bf16.gmra.mxu0 %v4943
        %v5032 = vpop.f32.mrf.mxu0
        %v5033 = vadd.f32 %v4919, %v5032
        %v5034 = vpop.f32.mrf.mxu0
        %v5035 = vpop.f32.mrf.mxu0
        %v5036 = vadd.f32 %v4919, %v5035
        %v5037 = vpop.f32.mrf.mxu0
        %5038 = vmatprep.mubr.bf16.mxu0 0
        %5039 = vmatmul.mubr.bf16.gmra.mxu0 %v4946
        %v5040 = vpop.f32.mrf.mxu0
        %v5041 = vadd.f32 %v4919, %v5040
        %v5042 = vpop.f32.mrf.mxu0
        %v5043 = vpop.f32.mrf.mxu0
        %v5044 = vadd.f32 %v4919, %v5043
        %v5045 = vpop.f32.mrf.mxu0
        %5046 = vmatprep.mubr.bf16.mxu0 0
        %5047 = vmatmul.mubr.bf16.gmra.mxu0 %v4949
        %v5048 = vpop.f32.mrf.mxu0
        %v5049 = vadd.f32 %v4919, %v5048
        %v5050 = vpop.f32.mrf.mxu0
        %v5051 = vpop.f32.mrf.mxu0
        %v5052 = vadd.f32 %v4919, %v5051
        %v5053 = vpop.f32.mrf.mxu0
        %5054 = vdwg.mxu0
        %v5055 = vadd.f32 %v4850, %v4993
        %v5056 = vadd.f32 %v4853, %v4996
        %v5057 = vadd.f32 %v4858, %v5001
        %v5058 = vadd.f32 %v4861, %v5004
        %v5059 = vadd.f32 %v4866, %v5009
        %v5060 = vadd.f32 %v4869, %v5012
        %v5061 = vadd.f32 %v4874, %v5017
        %v5062 = vadd.f32 %v4877, %v5020
        %v5063 = vadd.f32 %v4882, %v5025
        %v5064 = vadd.f32 %v4885, %v5028
        %v5065 = vadd.f32 %v4890, %v5033
        %v5066 = vadd.f32 %v4893, %v5036
        %v5067 = vadd.f32 %v4898, %v5041
        %v5068 = vadd.f32 %v4901, %v5044
        %v5069 = vadd.f32 %v4906, %v5049
        %v5070 = vadd.f32 %v4909, %v5052
        %v5071 = vxor.u32 %v5055, 2147483648
        %v5072 = vxor.u32 %v5056, 2147483648
        %v5073 = vxor.u32 %v5057, 2147483648
        %v5074 = vxor.u32 %v5058, 2147483648
        %v5075 = vxor.u32 %v5059, 2147483648
        %v5076 = vxor.u32 %v5060, 2147483648
        %v5077 = vxor.u32 %v5061, 2147483648
        %v5078 = vxor.u32 %v5062, 2147483648
        %v5079 = vxor.u32 %v5063, 2147483648
        %v5080 = vxor.u32 %v5064, 2147483648
        %v5081 = vxor.u32 %v5065, 2147483648
        %v5082 = vxor.u32 %v5066, 2147483648
        %v5083 = vxor.u32 %v5067, 2147483648
        %v5084 = vxor.u32 %v5068, 2147483648
        %v5085 = vxor.u32 %v5069, 2147483648
        %v5086 = vxor.u32 %v5070, 2147483648
        %v5087 = vmul.f32 %v5071, 1.442695
        %v5088 = vpow.pop %v5087
        %v5089 = vmul.f32 %v5072, 1.442695
        %v5090 = vpow.pop %v5089
        %v5091 = vmul.f32 %v5073, 1.442695
        %v5092 = vpow.pop %v5091
        %v5093 = vmul.f32 %v5074, 1.442695
        %v5094 = vpow.pop %v5093
        %v5095 = vmul.f32 %v5075, 1.442695
        %v5096 = vpow.pop %v5095
        %v5097 = vmul.f32 %v5076, 1.442695
        %v5098 = vpow.pop %v5097
        %v5099 = vmul.f32 %v5077, 1.442695
        %v5100 = vpow.pop %v5099
        %v5101 = vmul.f32 %v5078, 1.442695
        %v5102 = vpow.pop %v5101
        %v5103 = vmul.f32 %v5079, 1.442695
        %v5104 = vpow.pop %v5103
        %v5105 = vmul.f32 %v5080, 1.442695
        %v5106 = vpow.pop %v5105
        %v5107 = vmul.f32 %v5081, 1.442695
        %v5108 = vpow.pop %v5107
        %v5109 = vmul.f32 %v5082, 1.442695
        %v5110 = vpow.pop %v5109
        %v5111 = vmul.f32 %v5083, 1.442695
        %v5112 = vpow.pop %v5111
        %v5113 = vmul.f32 %v5084, 1.442695
        %v5114 = vpow.pop %v5113
        %v5115 = vmul.f32 %v5085, 1.442695
        %v5116 = vpow.pop %v5115
        %v5117 = vmul.f32 %v5086, 1.442695
        %v5118 = vpow.pop %v5117
        %v5119 = vadd.f32 %v5088, 1.0
        %v5120 = vadd.f32 %v5090, 1.0
        %v5121 = vadd.f32 %v5092, 1.0
        %v5122 = vadd.f32 %v5094, 1.0
        %v5123 = vadd.f32 %v5096, 1.0
        %v5124 = vadd.f32 %v5098, 1.0
        %v5125 = vadd.f32 %v5100, 1.0
        %v5126 = vadd.f32 %v5102, 1.0
        %v5127 = vadd.f32 %v5104, 1.0
        %v5128 = vadd.f32 %v5106, 1.0
        %v5129 = vadd.f32 %v5108, 1.0
        %v5130 = vadd.f32 %v5110, 1.0
        %v5131 = vadd.f32 %v5112, 1.0
        %v5132 = vadd.f32 %v5114, 1.0
        %v5133 = vadd.f32 %v5116, 1.0
        %v5134 = vadd.f32 %v5118, 1.0
        %v5135 = vrcp.pop %v5119
        %v5136 = vmul.f32 1.0, %v5135
        %v5137 = vrcp.pop %v5120
        %v5138 = vmul.f32 1.0, %v5137
        %v5139 = vrcp.pop %v5121
        %v5140 = vmul.f32 1.0, %v5139
        %v5141 = vrcp.pop %v5122
        %v5142 = vmul.f32 1.0, %v5141
        %v5143 = vrcp.pop %v5123
        %v5144 = vmul.f32 1.0, %v5143
        %v5145 = vrcp.pop %v5124
        %v5146 = vmul.f32 1.0, %v5145
        %v5147 = vrcp.pop %v5125
        %v5148 = vmul.f32 1.0, %v5147
        %v5149 = vrcp.pop %v5126
        %v5150 = vmul.f32 1.0, %v5149
        %v5151 = vrcp.pop %v5127
        %v5152 = vmul.f32 1.0, %v5151
        %v5153 = vrcp.pop %v5128
        %v5154 = vmul.f32 1.0, %v5153
        %v5155 = vrcp.pop %v5129
        %v5156 = vmul.f32 1.0, %v5155
        %v5157 = vrcp.pop %v5130
        %v5158 = vmul.f32 1.0, %v5157
        %v5159 = vrcp.pop %v5131
        %v5160 = vmul.f32 1.0, %v5159
        %v5161 = vrcp.pop %v5132
        %v5162 = vmul.f32 1.0, %v5161
        %v5163 = vrcp.pop %v5133
        %v5164 = vmul.f32 1.0, %v5163
        %v5165 = vrcp.pop %v5134
        %v5166 = vmul.f32 1.0, %v5165
        %v5167 = vmul.f32 %v5055, %v5136
        %v5168 = vmul.f32 %v5056, %v5138
        %v5169 = vmul.f32 %v5057, %v5140
        %v5170 = vmul.f32 %v5058, %v5142
        %v5171 = vmul.f32 %v5059, %v5144
        %v5172 = vmul.f32 %v5060, %v5146
        %v5173 = vmul.f32 %v5061, %v5148
        %v5174 = vmul.f32 %v5062, %v5150
        %v5175 = vmul.f32 %v5063, %v5152
        %v5176 = vmul.f32 %v5064, %v5154
        %v5177 = vmul.f32 %v5065, %v5156
        %v5178 = vmul.f32 %v5066, %v5158
        %v5179 = vmul.f32 %v5067, %v5160
        %v5180 = vmul.f32 %v5068, %v5162
        %v5181 = vmul.f32 %v5069, %v5164
        %v5182 = vmul.f32 %v5070, %v5166
        %v5183 = vpack.c.bf16 %v5168, %v5167
        %v5184 = vpack.c.bf16 %v5170, %v5169
        %v5185 = vpack.c.bf16 %v5172, %v5171
        %v5186 = vpack.c.bf16 %v5174, %v5173
        %v5187 = vpack.c.bf16 %v5176, %v5175
        %v5188 = vpack.c.bf16 %v5178, %v5177
        %v5189 = vpack.c.bf16 %v5180, %v5179
        %v5190 = vpack.c.bf16 %v5182, %v5181
        %v5191 = vld [vmem:[%s8] sm:$0xf]
        %v5192 = vld [vmem:[%s8 + $0x4] sm:$0x7]
        %v5193 = vld [vmem:[%s9] sm:$0x1]
        %v5195 = vlaneseq
        %v5196 = vshrl.u32 %v5195, 7
        %v5197 = vsub.s32 0, %v5196
        %v5198 = vrot.slane %v5193, %v5197
        %v5202 = vunpack.c.l.b16 %v5191
        %v5203 = vunpack.c.l.b16 %v5192
        %v5204 = vpack.c.b16 %v5203, %v5202
        %v5206 = vand.u32 %v5204, %v4954
        %5208 = vmatprep.subr.bf16.mxu0 0
        %5209 = vmatpush1.bf16.msra.mxu0 0
        %5210 = vmatprep.subr.bf16.mxu0 0
        %5211 = vmatpush1.bf16.msra.mxu0 0
        %5212 = vmatprep.subr.bf16.mxu0 0
        %5213 = vmatpush1.bf16.msra.mxu0 0
        %5214 = vmatprep.subr.bf16.mxu0 0
        %5215 = vmatpush1.bf16.msra.mxu0 0
        %5216 = vmatprep.subr.bf16.mxu0 0
        %5217 = vmatpush1.bf16.msra.mxu0 0
        %5218 = vmatprep.subr.bf16.mxu0 0
        %5219 = vmatpush1.bf16.msra.mxu0 0
        %5220 = vmatprep.subr.bf16.mxu0 0
        %5221 = vmatpush1.bf16.msra.mxu0 0
        %5222 = vmatprep.subr.bf16.mxu0 0
        %5223 = vmatpush1.bf16.msra.mxu0 %v5206
        %5224 = vmatprep.subr.bf16.mxu0 0
        %5225 = vmatpush2.bf16.msra.mxu0 0
        %5226 = vmatprep.subr.bf16.mxu0 0
        %5227 = vmatpush2.bf16.msra.mxu0 0
        %5228 = vmatprep.subr.bf16.mxu0 0
        %5229 = vmatpush2.bf16.msra.mxu0 0
        %5230 = vmatprep.subr.bf16.mxu0 0
        %5231 = vmatpush2.bf16.msra.mxu0 0
        %5232 = vmatprep.subr.bf16.mxu0 0
        %5233 = vmatpush2.bf16.msra.mxu0 0
        %5234 = vmatprep.subr.bf16.mxu0 0
        %5235 = vmatpush2.bf16.msra.mxu0 0
        %5236 = vmatprep.subr.bf16.mxu0 0
        %5237 = vmatpush2.bf16.msra.mxu0 0
        %5238 = vmatprep.subr.bf16.mxu0 0
        %5239 = vmatpush2.bf16.msra.mxu0 0
        %5240 = vmatprep.mubr.bf16.mxu0 0
        %5241 = vmatmul.mubr.bf16.gmra.mxu0 %v4928
        %v5242 = vpop.f32.mrf.mxu0
        %v5243 = vadd.f32 %v5198, %v5242
        %v5244 = vpop.f32.mrf.mxu0
        %v5245 = vpop.f32.mrf.mxu0
        %v5246 = vadd.f32 %v5198, %v5245
        %v5247 = vpop.f32.mrf.mxu0
        %5248 = vmatprep.mubr.bf16.mxu0 0
        %5249 = vmatmul.mubr.bf16.gmra.mxu0 %v4931
        %v5250 = vpop.f32.mrf.mxu0
        %v5251 = vadd.f32 %v5198, %v5250
        %v5252 = vpop.f32.mrf.mxu0
        %v5253 = vpop.f32.mrf.mxu0
        %v5254 = vadd.f32 %v5198, %v5253
        %v5255 = vpop.f32.mrf.mxu0
        %5256 = vmatprep.mubr.bf16.mxu0 0
        %5257 = vmatmul.mubr.bf16.gmra.mxu0 %v4934
        %v5258 = vpop.f32.mrf.mxu0
        %v5259 = vadd.f32 %v5198, %v5258
        %v5260 = vpop.f32.mrf.mxu0
        %v5261 = vpop.f32.mrf.mxu0
        %v5262 = vadd.f32 %v5198, %v5261
        %v5263 = vpop.f32.mrf.mxu0
        %5264 = vmatprep.mubr.bf16.mxu0 0
        %5265 = vmatmul.mubr.bf16.gmra.mxu0 %v4937
        %v5266 = vpop.f32.mrf.mxu0
        %v5267 = vadd.f32 %v5198, %v5266
        %v5268 = vpop.f32.mrf.mxu0
        %v5269 = vpop.f32.mrf.mxu0
        %v5270 = vadd.f32 %v5198, %v5269
        %v5271 = vpop.f32.mrf.mxu0
        %5272 = vmatprep.mubr.bf16.mxu0 0
        %5273 = vmatmul.mubr.bf16.gmra.mxu0 %v4940
        %v5274 = vpop.f32.mrf.mxu0
        %v5275 = vadd.f32 %v5198, %v5274
        %v5276 = vpop.f32.mrf.mxu0
        %v5277 = vpop.f32.mrf.mxu0
        %v5278 = vadd.f32 %v5198, %v5277
        %v5279 = vpop.f32.mrf.mxu0
        %5280 = vmatprep.mubr.bf16.mxu0 0
        %5281 = vmatmul.mubr.bf16.gmra.mxu0 %v4943
        %v5282 = vpop.f32.mrf.mxu0
        %v5283 = vadd.f32 %v5198, %v5282
        %v5284 = vpop.f32.mrf.mxu0
        %v5285 = vpop.f32.mrf.mxu0
        %v5286 = vadd.f32 %v5198, %v5285
        %v5287 = vpop.f32.mrf.mxu0
        %5288 = vmatprep.mubr.bf16.mxu0 0
        %5289 = vmatmul.mubr.bf16.gmra.mxu0 %v4946
        %v5290 = vpop.f32.mrf.mxu0
        %v5291 = vadd.f32 %v5198, %v5290
        %v5292 = vpop.f32.mrf.mxu0
        %v5293 = vpop.f32.mrf.mxu0
        %v5294 = vadd.f32 %v5198, %v5293
        %v5295 = vpop.f32.mrf.mxu0
        %5296 = vmatprep.mubr.bf16.mxu0 0
        %5297 = vmatmul.mubr.bf16.gmra.mxu0 %v4949
        %v5298 = vpop.f32.mrf.mxu0
        %v5299 = vadd.f32 %v5198, %v5298
        %v5300 = vpop.f32.mrf.mxu0
        %v5301 = vpop.f32.mrf.mxu0
        %v5302 = vadd.f32 %v5198, %v5301
        %v5303 = vpop.f32.mrf.mxu0
        %5304 = vdwg.mxu0
        %v5305 = vld [vmem:[%s10] sm:$0xf]
        %v5306 = vld [vmem:[%s10 + $0x4] sm:$0xf]
        %v5307 = vld [vmem:[%s10 + $0x8] sm:$0xf]
        %v5308 = vld [vmem:[%s10 + $0xc] sm:$0xf]
        %v5309 = vld [vmem:[%s13] sm:$0x1]
        %v5311 = vlaneseq
        %v5312 = vshrl.u32 %v5311, 7
        %v5313 = vsub.s32 0, %v5312
        %v5314 = vrot.slane %v5309, %v5313
        %v5320 = vunpack.c.l.b16 %v5305
        %v5321 = vunpack.c.l.b16 %v5306
        %v5322 = vunpack.c.l.b16 %v5307
        %v5323 = vunpack.c.l.b16 %v5308
        %v5324 = vpack.c.b16 %v5321, %v5320
        %v5325 = vpack.c.b16 %v5323, %v5322
        %v5329 = vsel %vm4790, %v5183, 0
        %v5332 = vsel %vm4790, %v5184, 0
        %v5335 = vsel %vm4790, %v5185, 0
        %v5338 = vsel %vm4790, %v5186, 0
        %v5341 = vsel %vm4790, %v5187, 0
        %v5344 = vsel %vm4790, %v5188, 0
        %v5347 = vsel %vm4790, %v5189, 0
        %v5350 = vsel %vm4790, %v5190, 0
        %5352 = vmatprep.subr.bf16.mxu0 0
        %5353 = vmatpush1.bf16.msra.mxu0 0
        %5354 = vmatprep.subr.bf16.mxu0 0
        %5355 = vmatpush1.bf16.msra.mxu0 0
        %5356 = vmatprep.subr.bf16.mxu0 0
        %5357 = vmatpush1.bf16.msra.mxu0 0
        %5358 = vmatprep.subr.bf16.mxu0 0
        %5359 = vmatpush1.bf16.msra.mxu0 0
        %5360 = vmatprep.subr.bf16.mxu0 0
        %5361 = vmatpush1.bf16.msra.mxu0 0
        %5362 = vmatprep.subr.bf16.mxu0 0
        %5363 = vmatpush1.bf16.msra.mxu0 0
        %5364 = vmatprep.subr.bf16.mxu0 0
        %5365 = vmatpush1.bf16.msra.mxu0 %v5325
        %5366 = vmatprep.subr.bf16.mxu0 0
        %5367 = vmatpush1.bf16.msra.mxu0 %v5324
        %5368 = vmatprep.subr.bf16.mxu0 0
        %5369 = vmatpush2.bf16.msra.mxu0 0
        %5370 = vmatprep.subr.bf16.mxu0 0
        %5371 = vmatpush2.bf16.msra.mxu0 0
        %5372 = vmatprep.subr.bf16.mxu0 0
        %5373 = vmatpush2.bf16.msra.mxu0 0
        %5374 = vmatprep.subr.bf16.mxu0 0
        %5375 = vmatpush2.bf16.msra.mxu0 0
        %5376 = vmatprep.subr.bf16.mxu0 0
        %5377 = vmatpush2.bf16.msra.mxu0 0
        %5378 = vmatprep.subr.bf16.mxu0 0
        %5379 = vmatpush2.bf16.msra.mxu0 0
        %5380 = vmatprep.subr.bf16.mxu0 0
        %5381 = vmatpush2.bf16.msra.mxu0 0
        %5382 = vmatprep.subr.bf16.mxu0 0
        %5383 = vmatpush2.bf16.msra.mxu0 0
        %5384 = vmatprep.mubr.bf16.mxu0 0
        %5385 = vmatmul.mubr.bf16.gmra.mxu0 %v5329
        %v5386 = vpop.f32.mrf.mxu0
        %v5387 = vadd.f32 %v5314, %v5386
        %v5388 = vpop.f32.mrf.mxu0
        %v5389 = vpop.f32.mrf.mxu0
        %v5390 = vadd.f32 %v5314, %v5389
        %v5391 = vpop.f32.mrf.mxu0
        %5392 = vmatprep.mubr.bf16.mxu0 0
        %5393 = vmatmul.mubr.bf16.gmra.mxu0 %v5332
        %v5394 = vpop.f32.mrf.mxu0
        %v5395 = vadd.f32 %v5314, %v5394
        %v5396 = vpop.f32.mrf.mxu0
        %v5397 = vpop.f32.mrf.mxu0
        %v5398 = vadd.f32 %v5314, %v5397
        %v5399 = vpop.f32.mrf.mxu0
        %5400 = vmatprep.mubr.bf16.mxu0 0
        %5401 = vmatmul.mubr.bf16.gmra.mxu0 %v5335
        %v5402 = vpop.f32.mrf.mxu0
        %v5403 = vadd.f32 %v5314, %v5402
        %v5404 = vpop.f32.mrf.mxu0
        %v5405 = vpop.f32.mrf.mxu0
        %v5406 = vadd.f32 %v5314, %v5405
        %v5407 = vpop.f32.mrf.mxu0
        %5408 = vmatprep.mubr.bf16.mxu0 0
        %5409 = vmatmul.mubr.bf16.gmra.mxu0 %v5338
        %v5410 = vpop.f32.mrf.mxu0
        %v5411 = vadd.f32 %v5314, %v5410
        %v5412 = vpop.f32.mrf.mxu0
        %v5413 = vpop.f32.mrf.mxu0
        %v5414 = vadd.f32 %v5314, %v5413
        %v5415 = vpop.f32.mrf.mxu0
        %5416 = vmatprep.mubr.bf16.mxu0 0
        %5417 = vmatmul.mubr.bf16.gmra.mxu0 %v5341
        %v5418 = vpop.f32.mrf.mxu0
        %v5419 = vadd.f32 %v5314, %v5418
        %v5420 = vpop.f32.mrf.mxu0
        %v5421 = vpop.f32.mrf.mxu0
        %v5422 = vadd.f32 %v5314, %v5421
        %v5423 = vpop.f32.mrf.mxu0
        %5424 = vmatprep.mubr.bf16.mxu0 0
        %5425 = vmatmul.mubr.bf16.gmra.mxu0 %v5344
        %v5426 = vpop.f32.mrf.mxu0
        %v5427 = vadd.f32 %v5314, %v5426
        %v5428 = vpop.f32.mrf.mxu0
        %v5429 = vpop.f32.mrf.mxu0
        %v5430 = vadd.f32 %v5314, %v5429
        %v5431 = vpop.f32.mrf.mxu0
        %5432 = vmatprep.mubr.bf16.mxu0 0
        %5433 = vmatmul.mubr.bf16.gmra.mxu0 %v5347
        %v5434 = vpop.f32.mrf.mxu0
        %v5435 = vadd.f32 %v5314, %v5434
        %v5436 = vpop.f32.mrf.mxu0
        %v5437 = vpop.f32.mrf.mxu0
        %v5438 = vadd.f32 %v5314, %v5437
        %v5439 = vpop.f32.mrf.mxu0
        %5440 = vmatprep.mubr.bf16.mxu0 0
        %5441 = vmatmul.mubr.bf16.gmra.mxu0 %v5350
        %v5442 = vpop.f32.mrf.mxu0
        %v5443 = vadd.f32 %v5314, %v5442
        %v5444 = vpop.f32.mrf.mxu0
        %v5445 = vpop.f32.mrf.mxu0
        %v5446 = vadd.f32 %v5314, %v5445
        %v5447 = vpop.f32.mrf.mxu0
        %5448 = vdwg.mxu0
        %v5449 = vld [vmem:[%s11] sm:$0xf]
        %v5450 = vld [vmem:[%s11 + $0x4] sm:$0xf]
        %v5451 = vld [vmem:[%s11 + $0x8] sm:$0xf]
        %v5452 = vld [vmem:[%s11 + $0xc] sm:$0xf]
        %v5453 = vld [vmem:[%s14] sm:$0x1]
        %v5455 = vlaneseq
        %v5456 = vshrl.u32 %v5455, 7
        %v5457 = vsub.s32 0, %v5456
        %v5458 = vrot.slane %v5453, %v5457
        %v5464 = vunpack.c.l.b16 %v5449
        %v5465 = vunpack.c.l.b16 %v5450
        %v5466 = vunpack.c.l.b16 %v5451
        %v5467 = vunpack.c.l.b16 %v5452
        %v5468 = vpack.c.b16 %v5465, %v5464
        %v5469 = vpack.c.b16 %v5467, %v5466
        %5472 = vmatprep.subr.bf16.mxu0 0
        %5473 = vmatpush1.bf16.msra.mxu0 0
        %5474 = vmatprep.subr.bf16.mxu0 0
        %5475 = vmatpush1.bf16.msra.mxu0 0
        %5476 = vmatprep.subr.bf16.mxu0 0
        %5477 = vmatpush1.bf16.msra.mxu0 0
        %5478 = vmatprep.subr.bf16.mxu0 0
        %5479 = vmatpush1.bf16.msra.mxu0 0
        %5480 = vmatprep.subr.bf16.mxu0 0
        %5481 = vmatpush1.bf16.msra.mxu0 0
        %5482 = vmatprep.subr.bf16.mxu0 0
        %5483 = vmatpush1.bf16.msra.mxu0 0
        %5484 = vmatprep.subr.bf16.mxu0 0
        %5485 = vmatpush1.bf16.msra.mxu0 %v5469
        %5486 = vmatprep.subr.bf16.mxu0 0
        %5487 = vmatpush1.bf16.msra.mxu0 %v5468
        %5488 = vmatprep.subr.bf16.mxu0 0
        %5489 = vmatpush2.bf16.msra.mxu0 0
        %5490 = vmatprep.subr.bf16.mxu0 0
        %5491 = vmatpush2.bf16.msra.mxu0 0
        %5492 = vmatprep.subr.bf16.mxu0 0
        %5493 = vmatpush2.bf16.msra.mxu0 0
        %5494 = vmatprep.subr.bf16.mxu0 0
        %5495 = vmatpush2.bf16.msra.mxu0 0
        %5496 = vmatprep.subr.bf16.mxu0 0
        %5497 = vmatpush2.bf16.msra.mxu0 0
        %5498 = vmatprep.subr.bf16.mxu0 0
        %5499 = vmatpush2.bf16.msra.mxu0 0
        %5500 = vmatprep.subr.bf16.mxu0 0
        %5501 = vmatpush2.bf16.msra.mxu0 0
        %5502 = vmatprep.subr.bf16.mxu0 0
        %5503 = vmatpush2.bf16.msra.mxu0 0
        %5504 = vmatprep.mubr.bf16.mxu0 0
        %5505 = vmatmul.mubr.bf16.gmra.mxu0 %v5329
        %v5506 = vpop.f32.mrf.mxu0
        %v5507 = vadd.f32 %v5458, %v5506
        %v5508 = vpop.f32.mrf.mxu0
        %v5509 = vpop.f32.mrf.mxu0
        %v5510 = vadd.f32 %v5458, %v5509
        %v5511 = vpop.f32.mrf.mxu0
        %5512 = vmatprep.mubr.bf16.mxu0 0
        %5513 = vmatmul.mubr.bf16.gmra.mxu0 %v5332
        %v5514 = vpop.f32.mrf.mxu0
        %v5515 = vadd.f32 %v5458, %v5514
        %v5516 = vpop.f32.mrf.mxu0
        %v5517 = vpop.f32.mrf.mxu0
        %v5518 = vadd.f32 %v5458, %v5517
        %v5519 = vpop.f32.mrf.mxu0
        %5520 = vmatprep.mubr.bf16.mxu0 0
        %5521 = vmatmul.mubr.bf16.gmra.mxu0 %v5335
        %v5522 = vpop.f32.mrf.mxu0
        %v5523 = vadd.f32 %v5458, %v5522
        %v5524 = vpop.f32.mrf.mxu0
        %v5525 = vpop.f32.mrf.mxu0
        %v5526 = vadd.f32 %v5458, %v5525
        %v5527 = vpop.f32.mrf.mxu0
        %5528 = vmatprep.mubr.bf16.mxu0 0
        %5529 = vmatmul.mubr.bf16.gmra.mxu0 %v5338
        %v5530 = vpop.f32.mrf.mxu0
        %v5531 = vadd.f32 %v5458, %v5530
        %v5532 = vpop.f32.mrf.mxu0
        %v5533 = vpop.f32.mrf.mxu0
        %v5534 = vadd.f32 %v5458, %v5533
        %v5535 = vpop.f32.mrf.mxu0
        %5536 = vmatprep.mubr.bf16.mxu0 0
        %5537 = vmatmul.mubr.bf16.gmra.mxu0 %v5341
        %v5538 = vpop.f32.mrf.mxu0
        %v5539 = vadd.f32 %v5458, %v5538
        %v5540 = vpop.f32.mrf.mxu0
        %v5541 = vpop.f32.mrf.mxu0
        %v5542 = vadd.f32 %v5458, %v5541
        %v5543 = vpop.f32.mrf.mxu0
        %5544 = vmatprep.mubr.bf16.mxu0 0
        %5545 = vmatmul.mubr.bf16.gmra.mxu0 %v5344
        %v5546 = vpop.f32.mrf.mxu0
        %v5547 = vadd.f32 %v5458, %v5546
        %v5548 = vpop.f32.mrf.mxu0
        %v5549 = vpop.f32.mrf.mxu0
        %v5550 = vadd.f32 %v5458, %v5549
        %v5551 = vpop.f32.mrf.mxu0
        %5552 = vmatprep.mubr.bf16.mxu0 0
        %5553 = vmatmul.mubr.bf16.gmra.mxu0 %v5347
        %v5554 = vpop.f32.mrf.mxu0
        %v5555 = vadd.f32 %v5458, %v5554
        %v5556 = vpop.f32.mrf.mxu0
        %v5557 = vpop.f32.mrf.mxu0
        %v5558 = vadd.f32 %v5458, %v5557
        %v5559 = vpop.f32.mrf.mxu0
        %5560 = vmatprep.mubr.bf16.mxu0 0
        %5561 = vmatmul.mubr.bf16.gmra.mxu0 %v5350
        %v5562 = vpop.f32.mrf.mxu0
        %v5563 = vadd.f32 %v5458, %v5562
        %v5564 = vpop.f32.mrf.mxu0
        %v5565 = vpop.f32.mrf.mxu0
        %v5566 = vadd.f32 %v5458, %v5565
        %v5567 = vpop.f32.mrf.mxu0
        %5568 = vdwg.mxu0
        %v5569 = vld [vmem:[%s12] sm:$0xf]
        %v5570 = vld [vmem:[%s12 + $0x4] sm:$0xf]
        %v5571 = vld [vmem:[%s12 + $0x8] sm:$0xf]
        %v5572 = vld [vmem:[%s12 + $0xc] sm:$0xf]
        %v5573 = vld [vmem:[%s15] sm:$0x1]
        %v5575 = vlaneseq
        %v5576 = vshrl.u32 %v5575, 7
        %v5577 = vsub.s32 0, %v5576
        %v5578 = vrot.slane %v5573, %v5577
        %v5584 = vunpack.c.l.b16 %v5569
        %v5585 = vunpack.c.l.b16 %v5570
        %v5586 = vunpack.c.l.b16 %v5571
        %v5587 = vunpack.c.l.b16 %v5572
        %v5588 = vpack.c.b16 %v5585, %v5584
        %v5589 = vpack.c.b16 %v5587, %v5586
        %5592 = vmatprep.subr.bf16.mxu0 0
        %5593 = vmatpush1.bf16.msra.mxu0 0
        %5594 = vmatprep.subr.bf16.mxu0 0
        %5595 = vmatpush1.bf16.msra.mxu0 0
        %5596 = vmatprep.subr.bf16.mxu0 0
        %5597 = vmatpush1.bf16.msra.mxu0 0
        %5598 = vmatprep.subr.bf16.mxu0 0
        %5599 = vmatpush1.bf16.msra.mxu0 0
        %5600 = vmatprep.subr.bf16.mxu0 0
        %5601 = vmatpush1.bf16.msra.mxu0 0
        %5602 = vmatprep.subr.bf16.mxu0 0
        %5603 = vmatpush1.bf16.msra.mxu0 0
        %5604 = vmatprep.subr.bf16.mxu0 0
        %5605 = vmatpush1.bf16.msra.mxu0 %v5589
        %5606 = vmatprep.subr.bf16.mxu0 0
        %5607 = vmatpush1.bf16.msra.mxu0 %v5588
        %5608 = vmatprep.subr.bf16.mxu0 0
        %5609 = vmatpush2.bf16.msra.mxu0 0
        %5610 = vmatprep.subr.bf16.mxu0 0
        %5611 = vmatpush2.bf16.msra.mxu0 0
        %5612 = vmatprep.subr.bf16.mxu0 0
        %5613 = vmatpush2.bf16.msra.mxu0 0
        %5614 = vmatprep.subr.bf16.mxu0 0
        %5615 = vmatpush2.bf16.msra.mxu0 0
        %5616 = vmatprep.subr.bf16.mxu0 0
        %5617 = vmatpush2.bf16.msra.mxu0 0
        %5618 = vmatprep.subr.bf16.mxu0 0
        %5619 = vmatpush2.bf16.msra.mxu0 0
        %5620 = vmatprep.subr.bf16.mxu0 0
        %5621 = vmatpush2.bf16.msra.mxu0 0
        %5622 = vmatprep.subr.bf16.mxu0 0
        %5623 = vmatpush2.bf16.msra.mxu0 0
        %5624 = vmatprep.mubr.bf16.mxu0 0
        %5625 = vmatmul.mubr.bf16.gmra.mxu0 %v5329
        %v5626 = vpop.f32.mrf.mxu0
        %v5627 = vadd.f32 %v5578, %v5626
        %v5628 = vpop.f32.mrf.mxu0
        %v5629 = vpop.f32.mrf.mxu0
        %v5630 = vadd.f32 %v5578, %v5629
        %v5631 = vpop.f32.mrf.mxu0
        %5632 = vmatprep.mubr.bf16.mxu0 0
        %5633 = vmatmul.mubr.bf16.gmra.mxu0 %v5332
        %v5634 = vpop.f32.mrf.mxu0
        %v5635 = vadd.f32 %v5578, %v5634
        %v5636 = vpop.f32.mrf.mxu0
        %v5637 = vpop.f32.mrf.mxu0
        %v5638 = vadd.f32 %v5578, %v5637
        %v5639 = vpop.f32.mrf.mxu0
        %5640 = vmatprep.mubr.bf16.mxu0 0
        %5641 = vmatmul.mubr.bf16.gmra.mxu0 %v5335
        %v5642 = vpop.f32.mrf.mxu0
        %v5643 = vadd.f32 %v5578, %v5642
        %v5644 = vpop.f32.mrf.mxu0
        %v5645 = vpop.f32.mrf.mxu0
        %v5646 = vadd.f32 %v5578, %v5645
        %v5647 = vpop.f32.mrf.mxu0
        %5648 = vmatprep.mubr.bf16.mxu0 0
        %5649 = vmatmul.mubr.bf16.gmra.mxu0 %v5338
        %v5650 = vpop.f32.mrf.mxu0
        %v5651 = vadd.f32 %v5578, %v5650
        %v5652 = vpop.f32.mrf.mxu0
        %v5653 = vpop.f32.mrf.mxu0
        %v5654 = vadd.f32 %v5578, %v5653
        %v5655 = vpop.f32.mrf.mxu0
        %5656 = vmatprep.mubr.bf16.mxu0 0
        %5657 = vmatmul.mubr.bf16.gmra.mxu0 %v5341
        %v5658 = vpop.f32.mrf.mxu0
        %v5659 = vadd.f32 %v5578, %v5658
        %v5660 = vpop.f32.mrf.mxu0
        %v5661 = vpop.f32.mrf.mxu0
        %v5662 = vadd.f32 %v5578, %v5661
        %v5663 = vpop.f32.mrf.mxu0
        %5664 = vmatprep.mubr.bf16.mxu0 0
        %5665 = vmatmul.mubr.bf16.gmra.mxu0 %v5344
        %v5666 = vpop.f32.mrf.mxu0
        %v5667 = vadd.f32 %v5578, %v5666
        %v5668 = vpop.f32.mrf.mxu0
        %v5669 = vpop.f32.mrf.mxu0
        %v5670 = vadd.f32 %v5578, %v5669
        %v5671 = vpop.f32.mrf.mxu0
        %5672 = vmatprep.mubr.bf16.mxu0 0
        %5673 = vmatmul.mubr.bf16.gmra.mxu0 %v5347
        %v5674 = vpop.f32.mrf.mxu0
        %v5675 = vadd.f32 %v5578, %v5674
        %v5676 = vpop.f32.mrf.mxu0
        %v5677 = vpop.f32.mrf.mxu0
        %v5678 = vadd.f32 %v5578, %v5677
        %v5679 = vpop.f32.mrf.mxu0
        %5680 = vmatprep.mubr.bf16.mxu0 0
        %5681 = vmatmul.mubr.bf16.gmra.mxu0 %v5350
        %v5682 = vpop.f32.mrf.mxu0
        %v5683 = vadd.f32 %v5578, %v5682
        %v5684 = vpop.f32.mrf.mxu0
        %v5685 = vpop.f32.mrf.mxu0
        %v5686 = vadd.f32 %v5578, %v5685
        %v5687 = vpop.f32.mrf.mxu0
        %5688 = vdwg.mxu0
        %v5689 = vsel %vm4790, %v5243, 0.0
        %5690 = vadd.xlane.f32.xlu0 %v5689
        %v5691 = vpop.xlane.xlu0 %5690
        %v5692 = vsel %vm4790, %v5246, 0.0
        %5693 = vadd.xlane.f32.xlu0 %v5692
        %v5694 = vpop.xlane.xlu0 %5693
        %v5695 = vsel %vm4790, %v5251, 0.0
        %5696 = vadd.xlane.f32.xlu0 %v5695
        %v5697 = vpop.xlane.xlu0 %5696
        %v5698 = vsel %vm4790, %v5254, 0.0
        %5699 = vadd.xlane.f32.xlu0 %v5698
        %v5700 = vpop.xlane.xlu0 %5699
        %v5701 = vsel %vm4790, %v5259, 0.0
        %5702 = vadd.xlane.f32.xlu0 %v5701
        %v5703 = vpop.xlane.xlu0 %5702
        %v5704 = vsel %vm4790, %v5262, 0.0
        %5705 = vadd.xlane.f32.xlu0 %v5704
        %v5706 = vpop.xlane.xlu0 %5705
        %v5707 = vsel %vm4790, %v5267, 0.0
        %5708 = vadd.xlane.f32.xlu0 %v5707
        %v5709 = vpop.xlane.xlu0 %5708
        %v5710 = vsel %vm4790, %v5270, 0.0
        %5711 = vadd.xlane.f32.xlu0 %v5710
        %v5712 = vpop.xlane.xlu0 %5711
        %v5713 = vsel %vm4790, %v5275, 0.0
        %5714 = vadd.xlane.f32.xlu0 %v5713
        %v5715 = vpop.xlane.xlu0 %5714
        %v5716 = vsel %vm4790, %v5278, 0.0
        %5717 = vadd.xlane.f32.xlu0 %v5716
        %v5718 = vpop.xlane.xlu0 %5717
        %v5719 = vsel %vm4790, %v5283, 0.0
        %5720 = vadd.xlane.f32.xlu0 %v5719
        %v5721 = vpop.xlane.xlu0 %5720
        %v5722 = vsel %vm4790, %v5286, 0.0
        %5723 = vadd.xlane.f32.xlu0 %v5722
        %v5724 = vpop.xlane.xlu0 %5723
        %v5725 = vsel %vm4790, %v5291, 0.0
        %5726 = vadd.xlane.f32.xlu0 %v5725
        %v5727 = vpop.xlane.xlu0 %5726
        %v5728 = vsel %vm4790, %v5294, 0.0
        %5729 = vadd.xlane.f32.xlu0 %v5728
        %v5730 = vpop.xlane.xlu0 %5729
        %v5731 = vsel %vm4790, %v5299, 0.0
        %5732 = vadd.xlane.f32.xlu0 %v5731
        %v5733 = vpop.xlane.xlu0 %5732
        %v5734 = vsel %vm4790, %v5302, 0.0
        %5735 = vadd.xlane.f32.xlu0 %v5734
        %v5736 = vpop.xlane.xlu0 %5735
        %v5737 = vrcp.pop 32.0
        %v5738 = vmul.f32 %v5691, %v5737
        %v5739 = vmul.f32 %v5694, %v5737
        %v5740 = vmul.f32 %v5697, %v5737
        %v5741 = vmul.f32 %v5700, %v5737
        %v5742 = vmul.f32 %v5703, %v5737
        %v5743 = vmul.f32 %v5706, %v5737
        %v5744 = vmul.f32 %v5709, %v5737
        %v5745 = vmul.f32 %v5712, %v5737
        %v5746 = vmul.f32 %v5715, %v5737
        %v5747 = vmul.f32 %v5718, %v5737
        %v5748 = vmul.f32 %v5721, %v5737
        %v5749 = vmul.f32 %v5724, %v5737
        %v5750 = vmul.f32 %v5727, %v5737
        %v5751 = vmul.f32 %v5730, %v5737
        %v5752 = vmul.f32 %v5733, %v5737
        %v5753 = vmul.f32 %v5736, %v5737
        %v5754 = vmul.f32 %v5243, %v5243
        %v5755 = vmul.f32 %v5246, %v5246
        %v5756 = vmul.f32 %v5251, %v5251
        %v5757 = vmul.f32 %v5254, %v5254
        %v5758 = vmul.f32 %v5259, %v5259
        %v5759 = vmul.f32 %v5262, %v5262
        %v5760 = vmul.f32 %v5267, %v5267
        %v5761 = vmul.f32 %v5270, %v5270
        %v5762 = vmul.f32 %v5275, %v5275
        %v5763 = vmul.f32 %v5278, %v5278
        %v5764 = vmul.f32 %v5283, %v5283
        %v5765 = vmul.f32 %v5286, %v5286
        %v5766 = vmul.f32 %v5291, %v5291
        %v5767 = vmul.f32 %v5294, %v5294
        %v5768 = vmul.f32 %v5299, %v5299
        %v5769 = vmul.f32 %v5302, %v5302
        %v5770 = vsel %vm4790, %v5754, 0.0
        %5771 = vadd.xlane.f32.xlu0 %v5770
        %v5772 = vpop.xlane.xlu0 %5771
        %v5773 = vsel %vm4790, %v5755, 0.0
        %5774 = vadd.xlane.f32.xlu0 %v5773
        %v5775 = vpop.xlane.xlu0 %5774
        %v5776 = vsel %vm4790, %v5756, 0.0
        %5777 = vadd.xlane.f32.xlu0 %v5776
        %v5778 = vpop.xlane.xlu0 %5777
        %v5779 = vsel %vm4790, %v5757, 0.0
        %5780 = vadd.xlane.f32.xlu0 %v5779
        %v5781 = vpop.xlane.xlu0 %5780
        %v5782 = vsel %vm4790, %v5758, 0.0
        %5783 = vadd.xlane.f32.xlu0 %v5782
        %v5784 = vpop.xlane.xlu0 %5783
        %v5785 = vsel %vm4790, %v5759, 0.0
        %5786 = vadd.xlane.f32.xlu0 %v5785
        %v5787 = vpop.xlane.xlu0 %5786
        %v5788 = vsel %vm4790, %v5760, 0.0
        %5789 = vadd.xlane.f32.xlu0 %v5788
        %v5790 = vpop.xlane.xlu0 %5789
        %v5791 = vsel %vm4790, %v5761, 0.0
        %5792 = vadd.xlane.f32.xlu0 %v5791
        %v5793 = vpop.xlane.xlu0 %5792
        %v5794 = vsel %vm4790, %v5762, 0.0
        %5795 = vadd.xlane.f32.xlu0 %v5794
        %v5796 = vpop.xlane.xlu0 %5795
        %v5797 = vsel %vm4790, %v5763, 0.0
        %5798 = vadd.xlane.f32.xlu0 %v5797
        %v5799 = vpop.xlane.xlu0 %5798
        %v5800 = vsel %vm4790, %v5764, 0.0
        %5801 = vadd.xlane.f32.xlu0 %v5800
        %v5802 = vpop.xlane.xlu0 %5801
        %v5803 = vsel %vm4790, %v5765, 0.0
        %5804 = vadd.xlane.f32.xlu0 %v5803
        %v5805 = vpop.xlane.xlu0 %5804
        %v5806 = vsel %vm4790, %v5766, 0.0
        %5807 = vadd.xlane.f32.xlu0 %v5806
        %v5808 = vpop.xlane.xlu0 %5807
        %v5809 = vsel %vm4790, %v5767, 0.0
        %5810 = vadd.xlane.f32.xlu0 %v5809
        %v5811 = vpop.xlane.xlu0 %5810
        %v5812 = vsel %vm4790, %v5768, 0.0
        %5813 = vadd.xlane.f32.xlu0 %v5812
        %v5814 = vpop.xlane.xlu0 %5813
        %v5815 = vsel %vm4790, %v5769, 0.0
        %5816 = vadd.xlane.f32.xlu0 %v5815
        %v5817 = vpop.xlane.xlu0 %5816
        %v5818 = vmul.f32 %v5772, %v5737
        %v5819 = vmul.f32 %v5775, %v5737
        %v5820 = vmul.f32 %v5778, %v5737
        %v5821 = vmul.f32 %v5781, %v5737
        %v5822 = vmul.f32 %v5784, %v5737
        %v5823 = vmul.f32 %v5787, %v5737
        %v5824 = vmul.f32 %v5790, %v5737
        %v5825 = vmul.f32 %v5793, %v5737
        %v5826 = vmul.f32 %v5796, %v5737
        %v5827 = vmul.f32 %v5799, %v5737
        %v5828 = vmul.f32 %v5802, %v5737
        %v5829 = vmul.f32 %v5805, %v5737
        %v5830 = vmul.f32 %v5808, %v5737
        %v5831 = vmul.f32 %v5811, %v5737
        %v5832 = vmul.f32 %v5814, %v5737
        %v5833 = vmul.f32 %v5817, %v5737
        %v5834 = vmul.f32 %v5738, %v5738
        %v5835 = vmul.f32 %v5739, %v5739
        %v5836 = vmul.f32 %v5740, %v5740
        %v5837 = vmul.f32 %v5741, %v5741
        %v5838 = vmul.f32 %v5742, %v5742
        %v5839 = vmul.f32 %v5743, %v5743
        %v5840 = vmul.f32 %v5744, %v5744
        %v5841 = vmul.f32 %v5745, %v5745
        %v5842 = vmul.f32 %v5746, %v5746
        %v5843 = vmul.f32 %v5747, %v5747
        %v5844 = vmul.f32 %v5748, %v5748
        %v5845 = vmul.f32 %v5749, %v5749
        %v5846 = vmul.f32 %v5750, %v5750
        %v5847 = vmul.f32 %v5751, %v5751
        %v5848 = vmul.f32 %v5752, %v5752
        %v5849 = vmul.f32 %v5753, %v5753
        %v5850 = vsub.f32 %v5818, %v5834
        %v5851 = vsub.f32 %v5819, %v5835
        %v5852 = vsub.f32 %v5820, %v5836
        %v5853 = vsub.f32 %v5821, %v5837
        %v5854 = vsub.f32 %v5822, %v5838
        %v5855 = vsub.f32 %v5823, %v5839
        %v5856 = vsub.f32 %v5824, %v5840
        %v5857 = vsub.f32 %v5825, %v5841
        %v5858 = vsub.f32 %v5826, %v5842
        %v5859 = vsub.f32 %v5827, %v5843
        %v5860 = vsub.f32 %v5828, %v5844
        %v5861 = vsub.f32 %v5829, %v5845
        %v5862 = vsub.f32 %v5830, %v5846
        %v5863 = vsub.f32 %v5831, %v5847
        %v5864 = vsub.f32 %v5832, %v5848
        %v5865 = vsub.f32 %v5833, %v5849
        %v5866 = vsub.f32 %v5243, %v5738
        %v5867 = vsub.f32 %v5246, %v5739
        %v5868 = vsub.f32 %v5251, %v5740
        %v5869 = vsub.f32 %v5254, %v5741
        %v5870 = vsub.f32 %v5259, %v5742
        %v5871 = vsub.f32 %v5262, %v5743
        %v5872 = vsub.f32 %v5267, %v5744
        %v5873 = vsub.f32 %v5270, %v5745
        %v5874 = vsub.f32 %v5275, %v5746
        %v5875 = vsub.f32 %v5278, %v5747
        %v5876 = vsub.f32 %v5283, %v5748
        %v5877 = vsub.f32 %v5286, %v5749
        %v5878 = vsub.f32 %v5291, %v5750
        %v5879 = vsub.f32 %v5294, %v5751
        %v5880 = vsub.f32 %v5299, %v5752
        %v5881 = vsub.f32 %v5302, %v5753
        %v5882 = vadd.f32 %v5850, 1e-06
        %v5883 = vadd.f32 %v5851, 1e-06
        %v5884 = vadd.f32 %v5852, 1e-06
        %v5885 = vadd.f32 %v5853, 1e-06
        %v5886 = vadd.f32 %v5854, 1e-06
        %v5887 = vadd.f32 %v5855, 1e-06
        %v5888 = vadd.f32 %v5856, 1e-06
        %v5889 = vadd.f32 %v5857, 1e-06
        %v5890 = vadd.f32 %v5858, 1e-06
        %v5891 = vadd.f32 %v5859, 1e-06
        %v5892 = vadd.f32 %v5860, 1e-06
        %v5893 = vadd.f32 %v5861, 1e-06
        %v5894 = vadd.f32 %v5862, 1e-06
        %v5895 = vadd.f32 %v5863, 1e-06
        %v5896 = vadd.f32 %v5864, 1e-06
        %v5897 = vadd.f32 %v5865, 1e-06
        %v5898 = vrsqrt.pop %v5882
        %v5899 = vrsqrt.pop %v5883
        %v5900 = vrsqrt.pop %v5884
        %v5901 = vrsqrt.pop %v5885
        %v5902 = vrsqrt.pop %v5886
        %v5903 = vrsqrt.pop %v5887
        %v5904 = vrsqrt.pop %v5888
        %v5905 = vrsqrt.pop %v5889
        %v5906 = vrsqrt.pop %v5890
        %v5907 = vrsqrt.pop %v5891
        %v5908 = vrsqrt.pop %v5892
        %v5909 = vrsqrt.pop %v5893
        %v5910 = vrsqrt.pop %v5894
        %v5911 = vrsqrt.pop %v5895
        %v5912 = vrsqrt.pop %v5896
        %v5913 = vrsqrt.pop %v5897
        %v5914 = vmul.f32 %v5866, %v5898
        %v5915 = vmul.f32 %v5867, %v5899
        %v5916 = vmul.f32 %v5868, %v5900
        %v5917 = vmul.f32 %v5869, %v5901
        %v5918 = vmul.f32 %v5870, %v5902
        %v5919 = vmul.f32 %v5871, %v5903
        %v5920 = vmul.f32 %v5872, %v5904
        %v5921 = vmul.f32 %v5873, %v5905
        %v5922 = vmul.f32 %v5874, %v5906
        %v5923 = vmul.f32 %v5875, %v5907
        %v5924 = vmul.f32 %v5876, %v5908
        %v5925 = vmul.f32 %v5877, %v5909
        %v5926 = vmul.f32 %v5878, %v5910
        %v5927 = vmul.f32 %v5879, %v5911
        %v5928 = vmul.f32 %v5880, %v5912
        %v5929 = vmul.f32 %v5881, %v5913
        %v5930 = vld [vmem:[%s16] sm:$0x1]
        %v5932 = vlaneseq
        %v5933 = vshrl.u32 %v5932, 7
        %v5934 = vsub.s32 0, %v5933
        %v5935 = vrot.slane %v5930, %v5934
        %v5937 = vmul.f32 %v5914, %v5935
        %v5938 = vmul.f32 %v5915, %v5935
        %v5939 = vmul.f32 %v5916, %v5935
        %v5940 = vmul.f32 %v5917, %v5935
        %v5941 = vmul.f32 %v5918, %v5935
        %v5942 = vmul.f32 %v5919, %v5935
        %v5943 = vmul.f32 %v5920, %v5935
        %v5944 = vmul.f32 %v5921, %v5935
        %v5945 = vmul.f32 %v5922, %v5935
        %v5946 = vmul.f32 %v5923, %v5935
        %v5947 = vmul.f32 %v5924, %v5935
        %v5948 = vmul.f32 %v5925, %v5935
        %v5949 = vmul.f32 %v5926, %v5935
        %v5950 = vmul.f32 %v5927, %v5935
        %v5951 = vmul.f32 %v5928, %v5935
        %v5952 = vmul.f32 %v5929, %v5935
        %v5953 = vld [vmem:[%s17] sm:$0x1]
        %v5955 = vlaneseq
        %v5956 = vshrl.u32 %v5955, 7
        %v5957 = vsub.s32 0, %v5956
        %v5958 = vrot.slane %v5953, %v5957
        %v5960 = vadd.f32 %v5937, %v5958
        %v5961 = vadd.f32 %v5938, %v5958
        %v5962 = vadd.f32 %v5939, %v5958
        %v5963 = vadd.f32 %v5940, %v5958
        %v5964 = vadd.f32 %v5941, %v5958
        %v5965 = vadd.f32 %v5942, %v5958
        %v5966 = vadd.f32 %v5943, %v5958
        %v5967 = vadd.f32 %v5944, %v5958
        %v5968 = vadd.f32 %v5945, %v5958
        %v5969 = vadd.f32 %v5946, %v5958
        %v5970 = vadd.f32 %v5947, %v5958
        %v5971 = vadd.f32 %v5948, %v5958
        %v5972 = vadd.f32 %v5949, %v5958
        %v5973 = vadd.f32 %v5950, %v5958
        %v5974 = vadd.f32 %v5951, %v5958
        %v5975 = vadd.f32 %v5952, %v5958
        %v5976 = vadd.f32 %v5507, 1.0
        %v5977 = vadd.f32 %v5510, 1.0
        %v5978 = vadd.f32 %v5515, 1.0
        %v5979 = vadd.f32 %v5518, 1.0
        %v5980 = vadd.f32 %v5523, 1.0
        %v5981 = vadd.f32 %v5526, 1.0
        %v5982 = vadd.f32 %v5531, 1.0
        %v5983 = vadd.f32 %v5534, 1.0
        %v5984 = vadd.f32 %v5539, 1.0
        %v5985 = vadd.f32 %v5542, 1.0
        %v5986 = vadd.f32 %v5547, 1.0
        %v5987 = vadd.f32 %v5550, 1.0
        %v5988 = vadd.f32 %v5555, 1.0
        %v5989 = vadd.f32 %v5558, 1.0
        %v5990 = vadd.f32 %v5563, 1.0
        %v5991 = vadd.f32 %v5566, 1.0
        %v5992 = vmul.f32 %v5960, %v5976
        %v5993 = vmul.f32 %v5961, %v5977
        %v5994 = vmul.f32 %v5962, %v5978
        %v5995 = vmul.f32 %v5963, %v5979
        %v5996 = vmul.f32 %v5964, %v5980
        %v5997 = vmul.f32 %v5965, %v5981
        %v5998 = vmul.f32 %v5966, %v5982
        %v5999 = vmul.f32 %v5967, %v5983
        %v6000 = vmul.f32 %v5968, %v5984
        %v6001 = vmul.f32 %v5969, %v5985
        %v6002 = vmul.f32 %v5970, %v5986
        %v6003 = vmul.f32 %v5971, %v5987
        %v6004 = vmul.f32 %v5972, %v5988
        %v6005 = vmul.f32 %v5973, %v5989
        %v6006 = vmul.f32 %v5974, %v5990
        %v6007 = vmul.f32 %v5975, %v5991
        %v6008 = vadd.f32 %v5992, %v5387
        %v6009 = vadd.f32 %v5993, %v5390
        %v6010 = vadd.f32 %v5994, %v5395
        %v6011 = vadd.f32 %v5995, %v5398
        %v6012 = vadd.f32 %v5996, %v5403
        %v6013 = vadd.f32 %v5997, %v5406
        %v6014 = vadd.f32 %v5998, %v5411
        %v6015 = vadd.f32 %v5999, %v5414
        %v6016 = vadd.f32 %v6000, %v5419
        %v6017 = vadd.f32 %v6001, %v5422
        %v6018 = vadd.f32 %v6002, %v5427
        %v6019 = vadd.f32 %v6003, %v5430
        %v6020 = vadd.f32 %v6004, %v5435
        %v6021 = vadd.f32 %v6005, %v5438
        %v6022 = vadd.f32 %v6006, %v5443
        %v6023 = vadd.f32 %v6007, %v5446
        %v6024 = vpack.c.bf16 %v6009, %v6008
        %v6025 = vpack.c.bf16 %v6011, %v6010
        %v6026 = vpack.c.bf16 %v6013, %v6012
        %v6027 = vpack.c.bf16 %v6015, %v6014
        %v6028 = vpack.c.bf16 %v6017, %v6016
        %v6029 = vpack.c.bf16 %v6019, %v6018
        %v6030 = vpack.c.bf16 %v6021, %v6020
        %v6031 = vpack.c.bf16 %v6023, %v6022
        %v6032 = vld [vmem:[%s18] sm:$0xf]
        %v6033 = vld [vmem:[%s18 + $0x4] sm:$0xf]
        %v6034 = vld [vmem:[%s18 + $0x8] sm:$0xf]
        %v6035 = vld [vmem:[%s18 + $0xc] sm:$0xf]
        %v6036 = vld [vmem:[%s19] sm:$0x1]
        %v6038 = vlaneseq
        %v6039 = vshrl.u32 %v6038, 7
        %v6040 = vsub.s32 0, %v6039
        %v6041 = vrot.slane %v6036, %v6040
        %v6047 = vunpack.c.l.b16 %v6032
        %v6048 = vunpack.c.l.b16 %v6033
        %v6049 = vunpack.c.l.b16 %v6034
        %v6050 = vunpack.c.l.b16 %v6035
        %v6051 = vpack.c.b16 %v6048, %v6047
        %v6052 = vpack.c.b16 %v6050, %v6049
        %v6056 = vsel %vm4790, %v6024, 0
        %v6059 = vsel %vm4790, %v6025, 0
        %v6062 = vsel %vm4790, %v6026, 0
        %v6065 = vsel %vm4790, %v6027, 0
        %v6068 = vsel %vm4790, %v6028, 0
        %v6071 = vsel %vm4790, %v6029, 0
        %v6074 = vsel %vm4790, %v6030, 0
        %v6077 = vsel %vm4790, %v6031, 0
        %6079 = vmatprep.subr.bf16.mxu0 0
        %6080 = vmatpush1.bf16.msra.mxu0 0
        %6081 = vmatprep.subr.bf16.mxu0 0
        %6082 = vmatpush1.bf16.msra.mxu0 0
        %6083 = vmatprep.subr.bf16.mxu0 0
        %6084 = vmatpush1.bf16.msra.mxu0 0
        %6085 = vmatprep.subr.bf16.mxu0 0
        %6086 = vmatpush1.bf16.msra.mxu0 0
        %6087 = vmatprep.subr.bf16.mxu0 0
        %6088 = vmatpush1.bf16.msra.mxu0 0
        %6089 = vmatprep.subr.bf16.mxu0 0
        %6090 = vmatpush1.bf16.msra.mxu0 0
        %6091 = vmatprep.subr.bf16.mxu0 0
        %6092 = vmatpush1.bf16.msra.mxu0 %v6052
        %6093 = vmatprep.subr.bf16.mxu0 0
        %6094 = vmatpush1.bf16.msra.mxu0 %v6051
        %6095 = vmatprep.subr.bf16.mxu0 0
        %6096 = vmatpush2.bf16.msra.mxu0 0
        %6097 = vmatprep.subr.bf16.mxu0 0
        %6098 = vmatpush2.bf16.msra.mxu0 0
        %6099 = vmatprep.subr.bf16.mxu0 0
        %6100 = vmatpush2.bf16.msra.mxu0 0
        %6101 = vmatprep.subr.bf16.mxu0 0
        %6102 = vmatpush2.bf16.msra.mxu0 0
        %6103 = vmatprep.subr.bf16.mxu0 0
        %6104 = vmatpush2.bf16.msra.mxu0 0
        %6105 = vmatprep.subr.bf16.mxu0 0
        %6106 = vmatpush2.bf16.msra.mxu0 0
        %6107 = vmatprep.subr.bf16.mxu0 0
        %6108 = vmatpush2.bf16.msra.mxu0 0
        %6109 = vmatprep.subr.bf16.mxu0 0
        %6110 = vmatpush2.bf16.msra.mxu0 0
        %6111 = vmatprep.mubr.bf16.mxu0 0
        %6112 = vmatmul.mubr.bf16.gmra.mxu0 %v6056
        %v6113 = vpop.f32.mrf.mxu0
        %v6114 = vadd.f32 %v6041, %v6113
        %v6115 = vpop.f32.mrf.mxu0
        %v6116 = vpop.f32.mrf.mxu0
        %v6117 = vadd.f32 %v6041, %v6116
        %v6118 = vpop.f32.mrf.mxu0
        %6119 = vmatprep.mubr.bf16.mxu0 0
        %6120 = vmatmul.mubr.bf16.gmra.mxu0 %v6059
        %v6121 = vpop.f32.mrf.mxu0
        %v6122 = vadd.f32 %v6041, %v6121
        %v6123 = vpop.f32.mrf.mxu0
        %v6124 = vpop.f32.mrf.mxu0
        %v6125 = vadd.f32 %v6041, %v6124
        %v6126 = vpop.f32.mrf.mxu0
        %6127 = vmatprep.mubr.bf16.mxu0 0
        %6128 = vmatmul.mubr.bf16.gmra.mxu0 %v6062
        %v6129 = vpop.f32.mrf.mxu0
        %v6130 = vadd.f32 %v6041, %v6129
        %v6131 = vpop.f32.mrf.mxu0
        %v6132 = vpop.f32.mrf.mxu0
        %v6133 = vadd.f32 %v6041, %v6132
        %v6134 = vpop.f32.mrf.mxu0
        %6135 = vmatprep.mubr.bf16.mxu0 0
        %6136 = vmatmul.mubr.bf16.gmra.mxu0 %v6065
        %v6137 = vpop.f32.mrf.mxu0
        %v6138 = vadd.f32 %v6041, %v6137
        %v6139 = vpop.f32.mrf.mxu0
        %v6140 = vpop.f32.mrf.mxu0
        %v6141 = vadd.f32 %v6041, %v6140
        %v6142 = vpop.f32.mrf.mxu0
        %6143 = vmatprep.mubr.bf16.mxu0 0
        %6144 = vmatmul.mubr.bf16.gmra.mxu0 %v6068
        %v6145 = vpop.f32.mrf.mxu0
        %v6146 = vadd.f32 %v6041, %v6145
        %v6147 = vpop.f32.mrf.mxu0
        %v6148 = vpop.f32.mrf.mxu0
        %v6149 = vadd.f32 %v6041, %v6148
        %v6150 = vpop.f32.mrf.mxu0
        %6151 = vmatprep.mubr.bf16.mxu0 0
        %6152 = vmatmul.mubr.bf16.gmra.mxu0 %v6071
        %v6153 = vpop.f32.mrf.mxu0
        %v6154 = vadd.f32 %v6041, %v6153
        %v6155 = vpop.f32.mrf.mxu0
        %v6156 = vpop.f32.mrf.mxu0
        %v6157 = vadd.f32 %v6041, %v6156
        %v6158 = vpop.f32.mrf.mxu0
        %6159 = vmatprep.mubr.bf16.mxu0 0
        %6160 = vmatmul.mubr.bf16.gmra.mxu0 %v6074
        %v6161 = vpop.f32.mrf.mxu0
        %v6162 = vadd.f32 %v6041, %v6161
        %v6163 = vpop.f32.mrf.mxu0
        %v6164 = vpop.f32.mrf.mxu0
        %v6165 = vadd.f32 %v6041, %v6164
        %v6166 = vpop.f32.mrf.mxu0
        %6167 = vmatprep.mubr.bf16.mxu0 0
        %6168 = vmatmul.mubr.bf16.gmra.mxu0 %v6077
        %v6169 = vpop.f32.mrf.mxu0
        %v6170 = vadd.f32 %v6041, %v6169
        %v6171 = vpop.f32.mrf.mxu0
        %v6172 = vpop.f32.mrf.mxu0
        %v6173 = vadd.f32 %v6041, %v6172
        %v6174 = vpop.f32.mrf.mxu0
        %6175 = vdwg.mxu0
        %v6176 = vxor.u32 %v6114, 2147483648
        %v6177 = vxor.u32 %v6117, 2147483648
        %v6178 = vxor.u32 %v6122, 2147483648
        %v6179 = vxor.u32 %v6125, 2147483648
        %v6180 = vxor.u32 %v6130, 2147483648
        %v6181 = vxor.u32 %v6133, 2147483648
        %v6182 = vxor.u32 %v6138, 2147483648
        %v6183 = vxor.u32 %v6141, 2147483648
        %v6184 = vxor.u32 %v6146, 2147483648
        %v6185 = vxor.u32 %v6149, 2147483648
        %v6186 = vxor.u32 %v6154, 2147483648
        %v6187 = vxor.u32 %v6157, 2147483648
        %v6188 = vxor.u32 %v6162, 2147483648
        %v6189 = vxor.u32 %v6165, 2147483648
        %v6190 = vxor.u32 %v6170, 2147483648
        %v6191 = vxor.u32 %v6173, 2147483648
        %v6192 = vmul.f32 %v6176, 1.442695
        %v6193 = vpow.pop %v6192
        %v6194 = vmul.f32 %v6177, 1.442695
        %v6195 = vpow.pop %v6194
        %v6196 = vmul.f32 %v6178, 1.442695
        %v6197 = vpow.pop %v6196
        %v6198 = vmul.f32 %v6179, 1.442695
        %v6199 = vpow.pop %v6198
        %v6200 = vmul.f32 %v6180, 1.442695
        %v6201 = vpow.pop %v6200
        %v6202 = vmul.f32 %v6181, 1.442695
        %v6203 = vpow.pop %v6202
        %v6204 = vmul.f32 %v6182, 1.442695
        %v6205 = vpow.pop %v6204
        %v6206 = vmul.f32 %v6183, 1.442695
        %v6207 = vpow.pop %v6206
        %v6208 = vmul.f32 %v6184, 1.442695
        %v6209 = vpow.pop %v6208
        %v6210 = vmul.f32 %v6185, 1.442695
        %v6211 = vpow.pop %v6210
        %v6212 = vmul.f32 %v6186, 1.442695
        %v6213 = vpow.pop %v6212
        %v6214 = vmul.f32 %v6187, 1.442695
        %v6215 = vpow.pop %v6214
        %v6216 = vmul.f32 %v6188, 1.442695
        %v6217 = vpow.pop %v6216
        %v6218 = vmul.f32 %v6189, 1.442695
        %v6219 = vpow.pop %v6218
        %v6220 = vmul.f32 %v6190, 1.442695
        %v6221 = vpow.pop %v6220
        %v6222 = vmul.f32 %v6191, 1.442695
        %v6223 = vpow.pop %v6222
        %v6224 = vadd.f32 %v6193, 1.0
        %v6225 = vadd.f32 %v6195, 1.0
        %v6226 = vadd.f32 %v6197, 1.0
        %v6227 = vadd.f32 %v6199, 1.0
        %v6228 = vadd.f32 %v6201, 1.0
        %v6229 = vadd.f32 %v6203, 1.0
        %v6230 = vadd.f32 %v6205, 1.0
        %v6231 = vadd.f32 %v6207, 1.0
        %v6232 = vadd.f32 %v6209, 1.0
        %v6233 = vadd.f32 %v6211, 1.0
        %v6234 = vadd.f32 %v6213, 1.0
        %v6235 = vadd.f32 %v6215, 1.0
        %v6236 = vadd.f32 %v6217, 1.0
        %v6237 = vadd.f32 %v6219, 1.0
        %v6238 = vadd.f32 %v6221, 1.0
        %v6239 = vadd.f32 %v6223, 1.0
        %v6240 = vrcp.pop %v6224
        %v6241 = vmul.f32 1.0, %v6240
        %v6242 = vrcp.pop %v6225
        %v6243 = vmul.f32 1.0, %v6242
        %v6244 = vrcp.pop %v6226
        %v6245 = vmul.f32 1.0, %v6244
        %v6246 = vrcp.pop %v6227
        %v6247 = vmul.f32 1.0, %v6246
        %v6248 = vrcp.pop %v6228
        %v6249 = vmul.f32 1.0, %v6248
        %v6250 = vrcp.pop %v6229
        %v6251 = vmul.f32 1.0, %v6250
        %v6252 = vrcp.pop %v6230
        %v6253 = vmul.f32 1.0, %v6252
        %v6254 = vrcp.pop %v6231
        %v6255 = vmul.f32 1.0, %v6254
        %v6256 = vrcp.pop %v6232
        %v6257 = vmul.f32 1.0, %v6256
        %v6258 = vrcp.pop %v6233
        %v6259 = vmul.f32 1.0, %v6258
        %v6260 = vrcp.pop %v6234
        %v6261 = vmul.f32 1.0, %v6260
        %v6262 = vrcp.pop %v6235
        %v6263 = vmul.f32 1.0, %v6262
        %v6264 = vrcp.pop %v6236
        %v6265 = vmul.f32 1.0, %v6264
        %v6266 = vrcp.pop %v6237
        %v6267 = vmul.f32 1.0, %v6266
        %v6268 = vrcp.pop %v6238
        %v6269 = vmul.f32 1.0, %v6268
        %v6270 = vrcp.pop %v6239
        %v6271 = vmul.f32 1.0, %v6270
        %v6272 = vmul.f32 %v6114, %v6241
        %v6273 = vmul.f32 %v6117, %v6243
        %v6274 = vmul.f32 %v6122, %v6245
        %v6275 = vmul.f32 %v6125, %v6247
        %v6276 = vmul.f32 %v6130, %v6249
        %v6277 = vmul.f32 %v6133, %v6251
        %v6278 = vmul.f32 %v6138, %v6253
        %v6279 = vmul.f32 %v6141, %v6255
        %v6280 = vmul.f32 %v6146, %v6257
        %v6281 = vmul.f32 %v6149, %v6259
        %v6282 = vmul.f32 %v6154, %v6261
        %v6283 = vmul.f32 %v6157, %v6263
        %v6284 = vmul.f32 %v6162, %v6265
        %v6285 = vmul.f32 %v6165, %v6267
        %v6286 = vmul.f32 %v6170, %v6269
        %v6287 = vmul.f32 %v6173, %v6271
        %v6288 = vpack.c.bf16 %v6273, %v6272
        %v6289 = vpack.c.bf16 %v6275, %v6274
        %v6290 = vpack.c.bf16 %v6277, %v6276
        %v6291 = vpack.c.bf16 %v6279, %v6278
        %v6292 = vpack.c.bf16 %v6281, %v6280
        %v6293 = vpack.c.bf16 %v6283, %v6282
        %v6294 = vpack.c.bf16 %v6285, %v6284
        %v6295 = vpack.c.bf16 %v6287, %v6286
        %v6296 = vld [vmem:[%s20] sm:$0xf]
        %v6297 = vld [vmem:[%s20 + $0x4] sm:$0xf]
        %v6298 = vld [vmem:[%s20 + $0x8] sm:$0xf]
        %v6299 = vld [vmem:[%s20 + $0xc] sm:$0xf]
        %v6300 = vld [vmem:[%s21] sm:$0x1]
        %v6302 = vlaneseq
        %v6303 = vshrl.u32 %v6302, 7
        %v6304 = vsub.s32 0, %v6303
        %v6305 = vrot.slane %v6300, %v6304
        %v6311 = vunpack.c.l.b16 %v6296
        %v6312 = vunpack.c.l.b16 %v6297
        %v6313 = vunpack.c.l.b16 %v6298
        %v6314 = vunpack.c.l.b16 %v6299
        %v6315 = vpack.c.b16 %v6312, %v6311
        %v6316 = vpack.c.b16 %v6314, %v6313
        %v6320 = vsel %vm4790, %v6288, 0
        %v6323 = vsel %vm4790, %v6289, 0
        %v6326 = vsel %vm4790, %v6290, 0
        %v6329 = vsel %vm4790, %v6291, 0
        %v6332 = vsel %vm4790, %v6292, 0
        %v6335 = vsel %vm4790, %v6293, 0
        %v6338 = vsel %vm4790, %v6294, 0
        %v6341 = vsel %vm4790, %v6295, 0
        %6343 = vmatprep.subr.bf16.mxu0 0
        %6344 = vmatpush1.bf16.msra.mxu0 0
        %6345 = vmatprep.subr.bf16.mxu0 0
        %6346 = vmatpush1.bf16.msra.mxu0 0
        %6347 = vmatprep.subr.bf16.mxu0 0
        %6348 = vmatpush1.bf16.msra.mxu0 0
        %6349 = vmatprep.subr.bf16.mxu0 0
        %6350 = vmatpush1.bf16.msra.mxu0 0
        %6351 = vmatprep.subr.bf16.mxu0 0
        %6352 = vmatpush1.bf16.msra.mxu0 0
        %6353 = vmatprep.subr.bf16.mxu0 0
        %6354 = vmatpush1.bf16.msra.mxu0 0
        %6355 = vmatprep.subr.bf16.mxu0 0
        %6356 = vmatpush1.bf16.msra.mxu0 %v6316
        %6357 = vmatprep.subr.bf16.mxu0 0
        %6358 = vmatpush1.bf16.msra.mxu0 %v6315
        %6359 = vmatprep.subr.bf16.mxu0 0
        %6360 = vmatpush2.bf16.msra.mxu0 0
        %6361 = vmatprep.subr.bf16.mxu0 0
        %6362 = vmatpush2.bf16.msra.mxu0 0
        %6363 = vmatprep.subr.bf16.mxu0 0
        %6364 = vmatpush2.bf16.msra.mxu0 0
        %6365 = vmatprep.subr.bf16.mxu0 0
        %6366 = vmatpush2.bf16.msra.mxu0 0
        %6367 = vmatprep.subr.bf16.mxu0 0
        %6368 = vmatpush2.bf16.msra.mxu0 0
        %6369 = vmatprep.subr.bf16.mxu0 0
        %6370 = vmatpush2.bf16.msra.mxu0 0
        %6371 = vmatprep.subr.bf16.mxu0 0
        %6372 = vmatpush2.bf16.msra.mxu0 0
        %6373 = vmatprep.subr.bf16.mxu0 0
        %6374 = vmatpush2.bf16.msra.mxu0 0
        %6375 = vmatprep.mubr.bf16.mxu0 0
        %6376 = vmatmul.mubr.bf16.gmra.mxu0 %v6320
        %v6377 = vpop.f32.mrf.mxu0
        %v6378 = vadd.f32 %v6305, %v6377
        %v6379 = vpop.f32.mrf.mxu0
        %v6380 = vpop.f32.mrf.mxu0
        %v6381 = vadd.f32 %v6305, %v6380
        %v6382 = vpop.f32.mrf.mxu0
        %6383 = vmatprep.mubr.bf16.mxu0 0
        %6384 = vmatmul.mubr.bf16.gmra.mxu0 %v6323
        %v6385 = vpop.f32.mrf.mxu0
        %v6386 = vadd.f32 %v6305, %v6385
        %v6387 = vpop.f32.mrf.mxu0
        %v6388 = vpop.f32.mrf.mxu0
        %v6389 = vadd.f32 %v6305, %v6388
        %v6390 = vpop.f32.mrf.mxu0
        %6391 = vmatprep.mubr.bf16.mxu0 0
        %6392 = vmatmul.mubr.bf16.gmra.mxu0 %v6326
        %v6393 = vpop.f32.mrf.mxu0
        %v6394 = vadd.f32 %v6305, %v6393
        %v6395 = vpop.f32.mrf.mxu0
        %v6396 = vpop.f32.mrf.mxu0
        %v6397 = vadd.f32 %v6305, %v6396
        %v6398 = vpop.f32.mrf.mxu0
        %6399 = vmatprep.mubr.bf16.mxu0 0
        %6400 = vmatmul.mubr.bf16.gmra.mxu0 %v6329
        %v6401 = vpop.f32.mrf.mxu0
        %v6402 = vadd.f32 %v6305, %v6401
        %v6403 = vpop.f32.mrf.mxu0
        %v6404 = vpop.f32.mrf.mxu0
        %v6405 = vadd.f32 %v6305, %v6404
        %v6406 = vpop.f32.mrf.mxu0
        %6407 = vmatprep.mubr.bf16.mxu0 0
        %6408 = vmatmul.mubr.bf16.gmra.mxu0 %v6332
        %v6409 = vpop.f32.mrf.mxu0
        %v6410 = vadd.f32 %v6305, %v6409
        %v6411 = vpop.f32.mrf.mxu0
        %v6412 = vpop.f32.mrf.mxu0
        %v6413 = vadd.f32 %v6305, %v6412
        %v6414 = vpop.f32.mrf.mxu0
        %6415 = vmatprep.mubr.bf16.mxu0 0
        %6416 = vmatmul.mubr.bf16.gmra.mxu0 %v6335
        %v6417 = vpop.f32.mrf.mxu0
        %v6418 = vadd.f32 %v6305, %v6417
        %v6419 = vpop.f32.mrf.mxu0
        %v6420 = vpop.f32.mrf.mxu0
        %v6421 = vadd.f32 %v6305, %v6420
        %v6422 = vpop.f32.mrf.mxu0
        %6423 = vmatprep.mubr.bf16.mxu0 0
        %6424 = vmatmul.mubr.bf16.gmra.mxu0 %v6338
        %v6425 = vpop.f32.mrf.mxu0
        %v6426 = vadd.f32 %v6305, %v6425
        %v6427 = vpop.f32.mrf.mxu0
        %v6428 = vpop.f32.mrf.mxu0
        %v6429 = vadd.f32 %v6305, %v6428
        %v6430 = vpop.f32.mrf.mxu0
        %6431 = vmatprep.mubr.bf16.mxu0 0
        %6432 = vmatmul.mubr.bf16.gmra.mxu0 %v6341
        %v6433 = vpop.f32.mrf.mxu0
        %v6434 = vadd.f32 %v6305, %v6433
        %v6435 = vpop.f32.mrf.mxu0
        %v6436 = vpop.f32.mrf.mxu0
        %v6437 = vadd.f32 %v6305, %v6436
        %v6438 = vpop.f32.mrf.mxu0
        %6439 = vdwg.mxu0
        %v6440 = vmul.f32 %v5627, %v6378
        %v6441 = vmul.f32 %v5630, %v6381
        %v6442 = vmul.f32 %v5635, %v6386
        %v6443 = vmul.f32 %v5638, %v6389
        %v6444 = vmul.f32 %v5643, %v6394
        %v6445 = vmul.f32 %v5646, %v6397
        %v6446 = vmul.f32 %v5651, %v6402
        %v6447 = vmul.f32 %v5654, %v6405
        %v6448 = vmul.f32 %v5659, %v6410
        %v6449 = vmul.f32 %v5662, %v6413
        %v6450 = vmul.f32 %v5667, %v6418
        %v6451 = vmul.f32 %v5670, %v6421
        %v6452 = vmul.f32 %v5675, %v6426
        %v6453 = vmul.f32 %v5678, %v6429
        %v6454 = vmul.f32 %v5683, %v6434
        %v6455 = vmul.f32 %v5686, %v6437
        %v6456 = vadd.f32 %v5243, %v6440
        %v6457 = vadd.f32 %v5246, %v6441
        %v6458 = vadd.f32 %v5251, %v6442
        %v6459 = vadd.f32 %v5254, %v6443
        %v6460 = vadd.f32 %v5259, %v6444
        %v6461 = vadd.f32 %v5262, %v6445
        %v6462 = vadd.f32 %v5267, %v6446
        %v6463 = vadd.f32 %v5270, %v6447
        %v6464 = vadd.f32 %v5275, %v6448
        %v6465 = vadd.f32 %v5278, %v6449
        %v6466 = vadd.f32 %v5283, %v6450
        %v6467 = vadd.f32 %v5286, %v6451
        %v6468 = vadd.f32 %v5291, %v6452
        %v6469 = vadd.f32 %v5294, %v6453
        %v6470 = vadd.f32 %v5299, %v6454
        %v6471 = vadd.f32 %v5302, %v6455
        %s6472 = scalar_lea.vmem %s10, 16
        %v6473 = vld [vmem:[%s6472] sm:$0xf]
        %v6474 = vld [vmem:[%s6472 + $0x4] sm:$0xf]
        %v6475 = vld [vmem:[%s6472 + $0x8] sm:$0xf]
        %v6476 = vld [vmem:[%s6472 + $0xc] sm:$0xf]
        %s6477 = scalar_lea.vmem %s13, 1
        %v6478 = vld [vmem:[%s6477] sm:$0x1]
        %v6480 = vlaneseq
        %v6481 = vshrl.u32 %v6480, 7
        %v6482 = vsub.s32 0, %v6481
        %v6483 = vrot.slane %v6478, %v6482
        %v6489 = vunpack.c.l.b16 %v6473
        %v6490 = vunpack.c.l.b16 %v6474
        %v6491 = vunpack.c.l.b16 %v6475
        %v6492 = vunpack.c.l.b16 %v6476
        %v6493 = vpack.c.b16 %v6490, %v6489
        %v6494 = vpack.c.b16 %v6492, %v6491
        %6497 = vmatprep.subr.bf16.mxu0 0
        %6498 = vmatpush1.bf16.msra.mxu0 0
        %6499 = vmatprep.subr.bf16.mxu0 0
        %6500 = vmatpush1.bf16.msra.mxu0 0
        %6501 = vmatprep.subr.bf16.mxu0 0
        %6502 = vmatpush1.bf16.msra.mxu0 0
        %6503 = vmatprep.subr.bf16.mxu0 0
        %6504 = vmatpush1.bf16.msra.mxu0 0
        %6505 = vmatprep.subr.bf16.mxu0 0
        %6506 = vmatpush1.bf16.msra.mxu0 0
        %6507 = vmatprep.subr.bf16.mxu0 0
        %6508 = vmatpush1.bf16.msra.mxu0 0
        %6509 = vmatprep.subr.bf16.mxu0 0
        %6510 = vmatpush1.bf16.msra.mxu0 %v6494
        %6511 = vmatprep.subr.bf16.mxu0 0
        %6512 = vmatpush1.bf16.msra.mxu0 %v6493
        %6513 = vmatprep.subr.bf16.mxu0 0
        %6514 = vmatpush2.bf16.msra.mxu0 0
        %6515 = vmatprep.subr.bf16.mxu0 0
        %6516 = vmatpush2.bf16.msra.mxu0 0
        %6517 = vmatprep.subr.bf16.mxu0 0
        %6518 = vmatpush2.bf16.msra.mxu0 0
        %6519 = vmatprep.subr.bf16.mxu0 0
        %6520 = vmatpush2.bf16.msra.mxu0 0
        %6521 = vmatprep.subr.bf16.mxu0 0
        %6522 = vmatpush2.bf16.msra.mxu0 0
        %6523 = vmatprep.subr.bf16.mxu0 0
        %6524 = vmatpush2.bf16.msra.mxu0 0
        %6525 = vmatprep.subr.bf16.mxu0 0
        %6526 = vmatpush2.bf16.msra.mxu0 0
        %6527 = vmatprep.subr.bf16.mxu0 0
        %6528 = vmatpush2.bf16.msra.mxu0 0
        %6529 = vmatprep.mubr.bf16.mxu0 0
        %6530 = vmatmul.mubr.bf16.gmra.mxu0 %v5329
        %v6531 = vpop.f32.mrf.mxu0
        %v6532 = vadd.f32 %v6483, %v6531
        %v6533 = vpop.f32.mrf.mxu0
        %v6534 = vpop.f32.mrf.mxu0
        %v6535 = vadd.f32 %v6483, %v6534
        %v6536 = vpop.f32.mrf.mxu0
        %6537 = vmatprep.mubr.bf16.mxu0 0
        %6538 = vmatmul.mubr.bf16.gmra.mxu0 %v5332
        %v6539 = vpop.f32.mrf.mxu0
        %v6540 = vadd.f32 %v6483, %v6539
        %v6541 = vpop.f32.mrf.mxu0
        %v6542 = vpop.f32.mrf.mxu0
        %v6543 = vadd.f32 %v6483, %v6542
        %v6544 = vpop.f32.mrf.mxu0
        %6545 = vmatprep.mubr.bf16.mxu0 0
        %6546 = vmatmul.mubr.bf16.gmra.mxu0 %v5335
        %v6547 = vpop.f32.mrf.mxu0
        %v6548 = vadd.f32 %v6483, %v6547
        %v6549 = vpop.f32.mrf.mxu0
        %v6550 = vpop.f32.mrf.mxu0
        %v6551 = vadd.f32 %v6483, %v6550
        %v6552 = vpop.f32.mrf.mxu0
        %6553 = vmatprep.mubr.bf16.mxu0 0
        %6554 = vmatmul.mubr.bf16.gmra.mxu0 %v5338
        %v6555 = vpop.f32.mrf.mxu0
        %v6556 = vadd.f32 %v6483, %v6555
        %v6557 = vpop.f32.mrf.mxu0
        %v6558 = vpop.f32.mrf.mxu0
        %v6559 = vadd.f32 %v6483, %v6558
        %v6560 = vpop.f32.mrf.mxu0
        %6561 = vmatprep.mubr.bf16.mxu0 0
        %6562 = vmatmul.mubr.bf16.gmra.mxu0 %v5341
        %v6563 = vpop.f32.mrf.mxu0
        %v6564 = vadd.f32 %v6483, %v6563
        %v6565 = vpop.f32.mrf.mxu0
        %v6566 = vpop.f32.mrf.mxu0
        %v6567 = vadd.f32 %v6483, %v6566
        %v6568 = vpop.f32.mrf.mxu0
        %6569 = vmatprep.mubr.bf16.mxu0 0
        %6570 = vmatmul.mubr.bf16.gmra.mxu0 %v5344
        %v6571 = vpop.f32.mrf.mxu0
        %v6572 = vadd.f32 %v6483, %v6571
        %v6573 = vpop.f32.mrf.mxu0
        %v6574 = vpop.f32.mrf.mxu0
        %v6575 = vadd.f32 %v6483, %v6574
        %v6576 = vpop.f32.mrf.mxu0
        %6577 = vmatprep.mubr.bf16.mxu0 0
        %6578 = vmatmul.mubr.bf16.gmra.mxu0 %v5347
        %v6579 = vpop.f32.mrf.mxu0
        %v6580 = vadd.f32 %v6483, %v6579
        %v6581 = vpop.f32.mrf.mxu0
        %v6582 = vpop.f32.mrf.mxu0
        %v6583 = vadd.f32 %v6483, %v6582
        %v6584 = vpop.f32.mrf.mxu0
        %6585 = vmatprep.mubr.bf16.mxu0 0
        %6586 = vmatmul.mubr.bf16.gmra.mxu0 %v5350
        %v6587 = vpop.f32.mrf.mxu0
        %v6588 = vadd.f32 %v6483, %v6587
        %v6589 = vpop.f32.mrf.mxu0
        %v6590 = vpop.f32.mrf.mxu0
        %v6591 = vadd.f32 %v6483, %v6590
        %v6592 = vpop.f32.mrf.mxu0
        %6593 = vdwg.mxu0
        %s6594 = scalar_lea.vmem %s11, 16
        %v6595 = vld [vmem:[%s6594] sm:$0xf]
        %v6596 = vld [vmem:[%s6594 + $0x4] sm:$0xf]
        %v6597 = vld [vmem:[%s6594 + $0x8] sm:$0xf]
        %v6598 = vld [vmem:[%s6594 + $0xc] sm:$0xf]
        %s6599 = scalar_lea.vmem %s14, 1
        %v6600 = vld [vmem:[%s6599] sm:$0x1]
        %v6602 = vlaneseq
        %v6603 = vshrl.u32 %v6602, 7
        %v6604 = vsub.s32 0, %v6603
        %v6605 = vrot.slane %v6600, %v6604
        %v6611 = vunpack.c.l.b16 %v6595
        %v6612 = vunpack.c.l.b16 %v6596
        %v6613 = vunpack.c.l.b16 %v6597
        %v6614 = vunpack.c.l.b16 %v6598
        %v6615 = vpack.c.b16 %v6612, %v6611
        %v6616 = vpack.c.b16 %v6614, %v6613
        %6619 = vmatprep.subr.bf16.mxu0 0
        %6620 = vmatpush1.bf16.msra.mxu0 0
        %6621 = vmatprep.subr.bf16.mxu0 0
        %6622 = vmatpush1.bf16.msra.mxu0 0
        %6623 = vmatprep.subr.bf16.mxu0 0
        %6624 = vmatpush1.bf16.msra.mxu0 0
        %6625 = vmatprep.subr.bf16.mxu0 0
        %6626 = vmatpush1.bf16.msra.mxu0 0
        %6627 = vmatprep.subr.bf16.mxu0 0
        %6628 = vmatpush1.bf16.msra.mxu0 0
        %6629 = vmatprep.subr.bf16.mxu0 0
        %6630 = vmatpush1.bf16.msra.mxu0 0
        %6631 = vmatprep.subr.bf16.mxu0 0
        %6632 = vmatpush1.bf16.msra.mxu0 %v6616
        %6633 = vmatprep.subr.bf16.mxu0 0
        %6634 = vmatpush1.bf16.msra.mxu0 %v6615
        %6635 = vmatprep.subr.bf16.mxu0 0
        %6636 = vmatpush2.bf16.msra.mxu0 0
        %6637 = vmatprep.subr.bf16.mxu0 0
        %6638 = vmatpush2.bf16.msra.mxu0 0
        %6639 = vmatprep.subr.bf16.mxu0 0
        %6640 = vmatpush2.bf16.msra.mxu0 0
        %6641 = vmatprep.subr.bf16.mxu0 0
        %6642 = vmatpush2.bf16.msra.mxu0 0
        %6643 = vmatprep.subr.bf16.mxu0 0
        %6644 = vmatpush2.bf16.msra.mxu0 0
        %6645 = vmatprep.subr.bf16.mxu0 0
        %6646 = vmatpush2.bf16.msra.mxu0 0
        %6647 = vmatprep.subr.bf16.mxu0 0
        %6648 = vmatpush2.bf16.msra.mxu0 0
        %6649 = vmatprep.subr.bf16.mxu0 0
        %6650 = vmatpush2.bf16.msra.mxu0 0
        %6651 = vmatprep.mubr.bf16.mxu0 0
        %6652 = vmatmul.mubr.bf16.gmra.mxu0 %v5329
        %v6653 = vpop.f32.mrf.mxu0
        %v6654 = vadd.f32 %v6605, %v6653
        %v6655 = vpop.f32.mrf.mxu0
        %v6656 = vpop.f32.mrf.mxu0
        %v6657 = vadd.f32 %v6605, %v6656
        %v6658 = vpop.f32.mrf.mxu0
        %6659 = vmatprep.mubr.bf16.mxu0 0
        %6660 = vmatmul.mubr.bf16.gmra.mxu0 %v5332
        %v6661 = vpop.f32.mrf.mxu0
        %v6662 = vadd.f32 %v6605, %v6661
        %v6663 = vpop.f32.mrf.mxu0
        %v6664 = vpop.f32.mrf.mxu0
        %v6665 = vadd.f32 %v6605, %v6664
        %v6666 = vpop.f32.mrf.mxu0
        %6667 = vmatprep.mubr.bf16.mxu0 0
        %6668 = vmatmul.mubr.bf16.gmra.mxu0 %v5335
        %v6669 = vpop.f32.mrf.mxu0
        %v6670 = vadd.f32 %v6605, %v6669
        %v6671 = vpop.f32.mrf.mxu0
        %v6672 = vpop.f32.mrf.mxu0
        %v6673 = vadd.f32 %v6605, %v6672
        %v6674 = vpop.f32.mrf.mxu0
        %6675 = vmatprep.mubr.bf16.mxu0 0
        %6676 = vmatmul.mubr.bf16.gmra.mxu0 %v5338
        %v6677 = vpop.f32.mrf.mxu0
        %v6678 = vadd.f32 %v6605, %v6677
        %v6679 = vpop.f32.mrf.mxu0
        %v6680 = vpop.f32.mrf.mxu0
        %v6681 = vadd.f32 %v6605, %v6680
        %v6682 = vpop.f32.mrf.mxu0
        %6683 = vmatprep.mubr.bf16.mxu0 0
        %6684 = vmatmul.mubr.bf16.gmra.mxu0 %v5341
        %v6685 = vpop.f32.mrf.mxu0
        %v6686 = vadd.f32 %v6605, %v6685
        %v6687 = vpop.f32.mrf.mxu0
        %v6688 = vpop.f32.mrf.mxu0
        %v6689 = vadd.f32 %v6605, %v6688
        %v6690 = vpop.f32.mrf.mxu0
        %6691 = vmatprep.mubr.bf16.mxu0 0
        %6692 = vmatmul.mubr.bf16.gmra.mxu0 %v5344
        %v6693 = vpop.f32.mrf.mxu0
        %v6694 = vadd.f32 %v6605, %v6693
        %v6695 = vpop.f32.mrf.mxu0
        %v6696 = vpop.f32.mrf.mxu0
        %v6697 = vadd.f32 %v6605, %v6696
        %v6698 = vpop.f32.mrf.mxu0
        %6699 = vmatprep.mubr.bf16.mxu0 0
        %6700 = vmatmul.mubr.bf16.gmra.mxu0 %v5347
        %v6701 = vpop.f32.mrf.mxu0
        %v6702 = vadd.f32 %v6605, %v6701
        %v6703 = vpop.f32.mrf.mxu0
        %v6704 = vpop.f32.mrf.mxu0
        %v6705 = vadd.f32 %v6605, %v6704
        %v6706 = vpop.f32.mrf.mxu0
        %6707 = vmatprep.mubr.bf16.mxu0 0
        %6708 = vmatmul.mubr.bf16.gmra.mxu0 %v5350
        %v6709 = vpop.f32.mrf.mxu0
        %v6710 = vadd.f32 %v6605, %v6709
        %v6711 = vpop.f32.mrf.mxu0
        %v6712 = vpop.f32.mrf.mxu0
        %v6713 = vadd.f32 %v6605, %v6712
        %v6714 = vpop.f32.mrf.mxu0
        %6715 = vdwg.mxu0
        %s6716 = scalar_lea.vmem %s12, 16
        %v6717 = vld [vmem:[%s6716] sm:$0xf]
        %v6718 = vld [vmem:[%s6716 + $0x4] sm:$0xf]
        %v6719 = vld [vmem:[%s6716 + $0x8] sm:$0xf]
        %v6720 = vld [vmem:[%s6716 + $0xc] sm:$0xf]
        %s6721 = scalar_lea.vmem %s15, 1
        %v6722 = vld [vmem:[%s6721] sm:$0x1]
        %v6724 = vlaneseq
        %v6725 = vshrl.u32 %v6724, 7
        %v6726 = vsub.s32 0, %v6725
        %v6727 = vrot.slane %v6722, %v6726
        %v6733 = vunpack.c.l.b16 %v6717
        %v6734 = vunpack.c.l.b16 %v6718
        %v6735 = vunpack.c.l.b16 %v6719
        %v6736 = vunpack.c.l.b16 %v6720
        %v6737 = vpack.c.b16 %v6734, %v6733
        %v6738 = vpack.c.b16 %v6736, %v6735
        %6741 = vmatprep.subr.bf16.mxu0 0
        %6742 = vmatpush1.bf16.msra.mxu0 0
        %6743 = vmatprep.subr.bf16.mxu0 0
        %6744 = vmatpush1.bf16.msra.mxu0 0
        %6745 = vmatprep.subr.bf16.mxu0 0
        %6746 = vmatpush1.bf16.msra.mxu0 0
        %6747 = vmatprep.subr.bf16.mxu0 0
        %6748 = vmatpush1.bf16.msra.mxu0 0
        %6749 = vmatprep.subr.bf16.mxu0 0
        %6750 = vmatpush1.bf16.msra.mxu0 0
        %6751 = vmatprep.subr.bf16.mxu0 0
        %6752 = vmatpush1.bf16.msra.mxu0 0
        %6753 = vmatprep.subr.bf16.mxu0 0
        %6754 = vmatpush1.bf16.msra.mxu0 %v6738
        %6755 = vmatprep.subr.bf16.mxu0 0
        %6756 = vmatpush1.bf16.msra.mxu0 %v6737
        %6757 = vmatprep.subr.bf16.mxu0 0
        %6758 = vmatpush2.bf16.msra.mxu0 0
        %6759 = vmatprep.subr.bf16.mxu0 0
        %6760 = vmatpush2.bf16.msra.mxu0 0
        %6761 = vmatprep.subr.bf16.mxu0 0
        %6762 = vmatpush2.bf16.msra.mxu0 0
        %6763 = vmatprep.subr.bf16.mxu0 0
        %6764 = vmatpush2.bf16.msra.mxu0 0
        %6765 = vmatprep.subr.bf16.mxu0 0
        %6766 = vmatpush2.bf16.msra.mxu0 0
        %6767 = vmatprep.subr.bf16.mxu0 0
        %6768 = vmatpush2.bf16.msra.mxu0 0
        %6769 = vmatprep.subr.bf16.mxu0 0
        %6770 = vmatpush2.bf16.msra.mxu0 0
        %6771 = vmatprep.subr.bf16.mxu0 0
        %6772 = vmatpush2.bf16.msra.mxu0 0
        %6773 = vmatprep.mubr.bf16.mxu0 0
        %6774 = vmatmul.mubr.bf16.gmra.mxu0 %v5329
        %v6775 = vpop.f32.mrf.mxu0
        %v6776 = vadd.f32 %v6727, %v6775
        %v6777 = vpop.f32.mrf.mxu0
        %v6778 = vpop.f32.mrf.mxu0
        %v6779 = vadd.f32 %v6727, %v6778
        %v6780 = vpop.f32.mrf.mxu0
        %6781 = vmatprep.mubr.bf16.mxu0 0
        %6782 = vmatmul.mubr.bf16.gmra.mxu0 %v5332
        %v6783 = vpop.f32.mrf.mxu0
        %v6784 = vadd.f32 %v6727, %v6783
        %v6785 = vpop.f32.mrf.mxu0
        %v6786 = vpop.f32.mrf.mxu0
        %v6787 = vadd.f32 %v6727, %v6786
        %v6788 = vpop.f32.mrf.mxu0
        %6789 = vmatprep.mubr.bf16.mxu0 0
        %6790 = vmatmul.mubr.bf16.gmra.mxu0 %v5335
        %v6791 = vpop.f32.mrf.mxu0
        %v6792 = vadd.f32 %v6727, %v6791
        %v6793 = vpop.f32.mrf.mxu0
        %v6794 = vpop.f32.mrf.mxu0
        %v6795 = vadd.f32 %v6727, %v6794
        %v6796 = vpop.f32.mrf.mxu0
        %6797 = vmatprep.mubr.bf16.mxu0 0
        %6798 = vmatmul.mubr.bf16.gmra.mxu0 %v5338
        %v6799 = vpop.f32.mrf.mxu0
        %v6800 = vadd.f32 %v6727, %v6799
        %v6801 = vpop.f32.mrf.mxu0
        %v6802 = vpop.f32.mrf.mxu0
        %v6803 = vadd.f32 %v6727, %v6802
        %v6804 = vpop.f32.mrf.mxu0
        %6805 = vmatprep.mubr.bf16.mxu0 0
        %6806 = vmatmul.mubr.bf16.gmra.mxu0 %v5341
        %v6807 = vpop.f32.mrf.mxu0
        %v6808 = vadd.f32 %v6727, %v6807
        %v6809 = vpop.f32.mrf.mxu0
        %v6810 = vpop.f32.mrf.mxu0
        %v6811 = vadd.f32 %v6727, %v6810
        %v6812 = vpop.f32.mrf.mxu0
        %6813 = vmatprep.mubr.bf16.mxu0 0
        %6814 = vmatmul.mubr.bf16.gmra.mxu0 %v5344
        %v6815 = vpop.f32.mrf.mxu0
        %v6816 = vadd.f32 %v6727, %v6815
        %v6817 = vpop.f32.mrf.mxu0
        %v6818 = vpop.f32.mrf.mxu0
        %v6819 = vadd.f32 %v6727, %v6818
        %v6820 = vpop.f32.mrf.mxu0
        %6821 = vmatprep.mubr.bf16.mxu0 0
        %6822 = vmatmul.mubr.bf16.gmra.mxu0 %v5347
        %v6823 = vpop.f32.mrf.mxu0
        %v6824 = vadd.f32 %v6727, %v6823
        %v6825 = vpop.f32.mrf.mxu0
        %v6826 = vpop.f32.mrf.mxu0
        %v6827 = vadd.f32 %v6727, %v6826
        %v6828 = vpop.f32.mrf.mxu0
        %6829 = vmatprep.mubr.bf16.mxu0 0
        %6830 = vmatmul.mubr.bf16.gmra.mxu0 %v5350
        %v6831 = vpop.f32.mrf.mxu0
        %v6832 = vadd.f32 %v6727, %v6831
        %v6833 = vpop.f32.mrf.mxu0
        %v6834 = vpop.f32.mrf.mxu0
        %v6835 = vadd.f32 %v6727, %v6834
        %v6836 = vpop.f32.mrf.mxu0
        %6837 = vdwg.mxu0
        %v6838 = vsel %vm4790, %v6456, 0.0
        %6839 = vadd.xlane.f32.xlu0 %v6838
        %v6840 = vpop.xlane.xlu0 %6839
        %v6841 = vsel %vm4790, %v6457, 0.0
        %6842 = vadd.xlane.f32.xlu0 %v6841
        %v6843 = vpop.xlane.xlu0 %6842
        %v6844 = vsel %vm4790, %v6458, 0.0
        %6845 = vadd.xlane.f32.xlu0 %v6844
        %v6846 = vpop.xlane.xlu0 %6845
        %v6847 = vsel %vm4790, %v6459, 0.0
        %6848 = vadd.xlane.f32.xlu0 %v6847
        %v6849 = vpop.xlane.xlu0 %6848
        %v6850 = vsel %vm4790, %v6460, 0.0
        %6851 = vadd.xlane.f32.xlu0 %v6850
        %v6852 = vpop.xlane.xlu0 %6851
        %v6853 = vsel %vm4790, %v6461, 0.0
        %6854 = vadd.xlane.f32.xlu0 %v6853
        %v6855 = vpop.xlane.xlu0 %6854
        %v6856 = vsel %vm4790, %v6462, 0.0
        %6857 = vadd.xlane.f32.xlu0 %v6856
        %v6858 = vpop.xlane.xlu0 %6857
        %v6859 = vsel %vm4790, %v6463, 0.0
        %6860 = vadd.xlane.f32.xlu0 %v6859
        %v6861 = vpop.xlane.xlu0 %6860
        %v6862 = vsel %vm4790, %v6464, 0.0
        %6863 = vadd.xlane.f32.xlu0 %v6862
        %v6864 = vpop.xlane.xlu0 %6863
        %v6865 = vsel %vm4790, %v6465, 0.0
        %6866 = vadd.xlane.f32.xlu0 %v6865
        %v6867 = vpop.xlane.xlu0 %6866
        %v6868 = vsel %vm4790, %v6466, 0.0
        %6869 = vadd.xlane.f32.xlu0 %v6868
        %v6870 = vpop.xlane.xlu0 %6869
        %v6871 = vsel %vm4790, %v6467, 0.0
        %6872 = vadd.xlane.f32.xlu0 %v6871
        %v6873 = vpop.xlane.xlu0 %6872
        %v6874 = vsel %vm4790, %v6468, 0.0
        %6875 = vadd.xlane.f32.xlu0 %v6874
        %v6876 = vpop.xlane.xlu0 %6875
        %v6877 = vsel %vm4790, %v6469, 0.0
        %6878 = vadd.xlane.f32.xlu0 %v6877
        %v6879 = vpop.xlane.xlu0 %6878
        %v6880 = vsel %vm4790, %v6470, 0.0
        %6881 = vadd.xlane.f32.xlu0 %v6880
        %v6882 = vpop.xlane.xlu0 %6881
        %v6883 = vsel %vm4790, %v6471, 0.0
        %6884 = vadd.xlane.f32.xlu0 %v6883
        %v6885 = vpop.xlane.xlu0 %6884
        %v6886 = vmul.f32 %v6840, %v5737
        %v6887 = vmul.f32 %v6843, %v5737
        %v6888 = vmul.f32 %v6846, %v5737
        %v6889 = vmul.f32 %v6849, %v5737
        %v6890 = vmul.f32 %v6852, %v5737
        %v6891 = vmul.f32 %v6855, %v5737
        %v6892 = vmul.f32 %v6858, %v5737
        %v6893 = vmul.f32 %v6861, %v5737
        %v6894 = vmul.f32 %v6864, %v5737
        %v6895 = vmul.f32 %v6867, %v5737
        %v6896 = vmul.f32 %v6870, %v5737
        %v6897 = vmul.f32 %v6873, %v5737
        %v6898 = vmul.f32 %v6876, %v5737
        %v6899 = vmul.f32 %v6879, %v5737
        %v6900 = vmul.f32 %v6882, %v5737
        %v6901 = vmul.f32 %v6885, %v5737
        %v6902 = vmul.f32 %v6456, %v6456
        %v6903 = vmul.f32 %v6457, %v6457
        %v6904 = vmul.f32 %v6458, %v6458
        %v6905 = vmul.f32 %v6459, %v6459
        %v6906 = vmul.f32 %v6460, %v6460
        %v6907 = vmul.f32 %v6461, %v6461
        %v6908 = vmul.f32 %v6462, %v6462
        %v6909 = vmul.f32 %v6463, %v6463
        %v6910 = vmul.f32 %v6464, %v6464
        %v6911 = vmul.f32 %v6465, %v6465
        %v6912 = vmul.f32 %v6466, %v6466
        %v6913 = vmul.f32 %v6467, %v6467
        %v6914 = vmul.f32 %v6468, %v6468
        %v6915 = vmul.f32 %v6469, %v6469
        %v6916 = vmul.f32 %v6470, %v6470
        %v6917 = vmul.f32 %v6471, %v6471
        %v6918 = vsel %vm4790, %v6902, 0.0
        %6919 = vadd.xlane.f32.xlu0 %v6918
        %v6920 = vpop.xlane.xlu0 %6919
        %v6921 = vsel %vm4790, %v6903, 0.0
        %6922 = vadd.xlane.f32.xlu0 %v6921
        %v6923 = vpop.xlane.xlu0 %6922
        %v6924 = vsel %vm4790, %v6904, 0.0
        %6925 = vadd.xlane.f32.xlu0 %v6924
        %v6926 = vpop.xlane.xlu0 %6925
        %v6927 = vsel %vm4790, %v6905, 0.0
        %6928 = vadd.xlane.f32.xlu0 %v6927
        %v6929 = vpop.xlane.xlu0 %6928
        %v6930 = vsel %vm4790, %v6906, 0.0
        %6931 = vadd.xlane.f32.xlu0 %v6930
        %v6932 = vpop.xlane.xlu0 %6931
        %v6933 = vsel %vm4790, %v6907, 0.0
        %6934 = vadd.xlane.f32.xlu0 %v6933
        %v6935 = vpop.xlane.xlu0 %6934
        %v6936 = vsel %vm4790, %v6908, 0.0
        %6937 = vadd.xlane.f32.xlu0 %v6936
        %v6938 = vpop.xlane.xlu0 %6937
        %v6939 = vsel %vm4790, %v6909, 0.0
        %6940 = vadd.xlane.f32.xlu0 %v6939
        %v6941 = vpop.xlane.xlu0 %6940
        %v6942 = vsel %vm4790, %v6910, 0.0
        %6943 = vadd.xlane.f32.xlu0 %v6942
        %v6944 = vpop.xlane.xlu0 %6943
        %v6945 = vsel %vm4790, %v6911, 0.0
        %6946 = vadd.xlane.f32.xlu0 %v6945
        %v6947 = vpop.xlane.xlu0 %6946
        %v6948 = vsel %vm4790, %v6912, 0.0
        %6949 = vadd.xlane.f32.xlu0 %v6948
        %v6950 = vpop.xlane.xlu0 %6949
        %v6951 = vsel %vm4790, %v6913, 0.0
        %6952 = vadd.xlane.f32.xlu0 %v6951
        %v6953 = vpop.xlane.xlu0 %6952
        %v6954 = vsel %vm4790, %v6914, 0.0
        %6955 = vadd.xlane.f32.xlu0 %v6954
        %v6956 = vpop.xlane.xlu0 %6955
        %v6957 = vsel %vm4790, %v6915, 0.0
        %6958 = vadd.xlane.f32.xlu0 %v6957
        %v6959 = vpop.xlane.xlu0 %6958
        %v6960 = vsel %vm4790, %v6916, 0.0
        %6961 = vadd.xlane.f32.xlu0 %v6960
        %v6962 = vpop.xlane.xlu0 %6961
        %v6963 = vsel %vm4790, %v6917, 0.0
        %6964 = vadd.xlane.f32.xlu0 %v6963
        %v6965 = vpop.xlane.xlu0 %6964
        %v6966 = vmul.f32 %v6920, %v5737
        %v6967 = vmul.f32 %v6923, %v5737
        %v6968 = vmul.f32 %v6926, %v5737
        %v6969 = vmul.f32 %v6929, %v5737
        %v6970 = vmul.f32 %v6932, %v5737
        %v6971 = vmul.f32 %v6935, %v5737
        %v6972 = vmul.f32 %v6938, %v5737
        %v6973 = vmul.f32 %v6941, %v5737
        %v6974 = vmul.f32 %v6944, %v5737
        %v6975 = vmul.f32 %v6947, %v5737
        %v6976 = vmul.f32 %v6950, %v5737
        %v6977 = vmul.f32 %v6953, %v5737
        %v6978 = vmul.f32 %v6956, %v5737
        %v6979 = vmul.f32 %v6959, %v5737
        %v6980 = vmul.f32 %v6962, %v5737
        %v6981 = vmul.f32 %v6965, %v5737
        %v6982 = vmul.f32 %v6886, %v6886
        %v6983 = vmul.f32 %v6887, %v6887
        %v6984 = vmul.f32 %v6888, %v6888
        %v6985 = vmul.f32 %v6889, %v6889
        %v6986 = vmul.f32 %v6890, %v6890
        %v6987 = vmul.f32 %v6891, %v6891
        %v6988 = vmul.f32 %v6892, %v6892
        %v6989 = vmul.f32 %v6893, %v6893
        %v6990 = vmul.f32 %v6894, %v6894
        %v6991 = vmul.f32 %v6895, %v6895
        %v6992 = vmul.f32 %v6896, %v6896
        %v6993 = vmul.f32 %v6897, %v6897
        %v6994 = vmul.f32 %v6898, %v6898
        %v6995 = vmul.f32 %v6899, %v6899
        %v6996 = vmul.f32 %v6900, %v6900
        %v6997 = vmul.f32 %v6901, %v6901
        %v6998 = vsub.f32 %v6966, %v6982
        %v6999 = vsub.f32 %v6967, %v6983
        %v7000 = vsub.f32 %v6968, %v6984
        %v7001 = vsub.f32 %v6969, %v6985
        %v7002 = vsub.f32 %v6970, %v6986
        %v7003 = vsub.f32 %v6971, %v6987
        %v7004 = vsub.f32 %v6972, %v6988
        %v7005 = vsub.f32 %v6973, %v6989
        %v7006 = vsub.f32 %v6974, %v6990
        %v7007 = vsub.f32 %v6975, %v6991
        %v7008 = vsub.f32 %v6976, %v6992
        %v7009 = vsub.f32 %v6977, %v6993
        %v7010 = vsub.f32 %v6978, %v6994
        %v7011 = vsub.f32 %v6979, %v6995
        %v7012 = vsub.f32 %v6980, %v6996
        %v7013 = vsub.f32 %v6981, %v6997
        %v7014 = vsub.f32 %v6456, %v6886
        %v7015 = vsub.f32 %v6457, %v6887
        %v7016 = vsub.f32 %v6458, %v6888
        %v7017 = vsub.f32 %v6459, %v6889
        %v7018 = vsub.f32 %v6460, %v6890
        %v7019 = vsub.f32 %v6461, %v6891
        %v7020 = vsub.f32 %v6462, %v6892
        %v7021 = vsub.f32 %v6463, %v6893
        %v7022 = vsub.f32 %v6464, %v6894
        %v7023 = vsub.f32 %v6465, %v6895
        %v7024 = vsub.f32 %v6466, %v6896
        %v7025 = vsub.f32 %v6467, %v6897
        %v7026 = vsub.f32 %v6468, %v6898
        %v7027 = vsub.f32 %v6469, %v6899
        %v7028 = vsub.f32 %v6470, %v6900
        %v7029 = vsub.f32 %v6471, %v6901
        %v7030 = vadd.f32 %v6998, 1e-06
        %v7031 = vadd.f32 %v6999, 1e-06
        %v7032 = vadd.f32 %v7000, 1e-06
        %v7033 = vadd.f32 %v7001, 1e-06
        %v7034 = vadd.f32 %v7002, 1e-06
        %v7035 = vadd.f32 %v7003, 1e-06
        %v7036 = vadd.f32 %v7004, 1e-06
        %v7037 = vadd.f32 %v7005, 1e-06
        %v7038 = vadd.f32 %v7006, 1e-06
        %v7039 = vadd.f32 %v7007, 1e-06
        %v7040 = vadd.f32 %v7008, 1e-06
        %v7041 = vadd.f32 %v7009, 1e-06
        %v7042 = vadd.f32 %v7010, 1e-06
        %v7043 = vadd.f32 %v7011, 1e-06
        %v7044 = vadd.f32 %v7012, 1e-06
        %v7045 = vadd.f32 %v7013, 1e-06
        %v7046 = vrsqrt.pop %v7030
        %v7047 = vrsqrt.pop %v7031
        %v7048 = vrsqrt.pop %v7032
        %v7049 = vrsqrt.pop %v7033
        %v7050 = vrsqrt.pop %v7034
        %v7051 = vrsqrt.pop %v7035
        %v7052 = vrsqrt.pop %v7036
        %v7053 = vrsqrt.pop %v7037
        %v7054 = vrsqrt.pop %v7038
        %v7055 = vrsqrt.pop %v7039
        %v7056 = vrsqrt.pop %v7040
        %v7057 = vrsqrt.pop %v7041
        %v7058 = vrsqrt.pop %v7042
        %v7059 = vrsqrt.pop %v7043
        %v7060 = vrsqrt.pop %v7044
        %v7061 = vrsqrt.pop %v7045
        %v7062 = vmul.f32 %v7014, %v7046
        %v7063 = vmul.f32 %v7015, %v7047
        %v7064 = vmul.f32 %v7016, %v7048
        %v7065 = vmul.f32 %v7017, %v7049
        %v7066 = vmul.f32 %v7018, %v7050
        %v7067 = vmul.f32 %v7019, %v7051
        %v7068 = vmul.f32 %v7020, %v7052
        %v7069 = vmul.f32 %v7021, %v7053
        %v7070 = vmul.f32 %v7022, %v7054
        %v7071 = vmul.f32 %v7023, %v7055
        %v7072 = vmul.f32 %v7024, %v7056
        %v7073 = vmul.f32 %v7025, %v7057
        %v7074 = vmul.f32 %v7026, %v7058
        %v7075 = vmul.f32 %v7027, %v7059
        %v7076 = vmul.f32 %v7028, %v7060
        %v7077 = vmul.f32 %v7029, %v7061
        %s7078 = scalar_lea.vmem %s16, 1
        %v7079 = vld [vmem:[%s7078] sm:$0x1]
        %v7081 = vlaneseq
        %v7082 = vshrl.u32 %v7081, 7
        %v7083 = vsub.s32 0, %v7082
        %v7084 = vrot.slane %v7079, %v7083
        %v7086 = vmul.f32 %v7062, %v7084
        %v7087 = vmul.f32 %v7063, %v7084
        %v7088 = vmul.f32 %v7064, %v7084
        %v7089 = vmul.f32 %v7065, %v7084
        %v7090 = vmul.f32 %v7066, %v7084
        %v7091 = vmul.f32 %v7067, %v7084
        %v7092 = vmul.f32 %v7068, %v7084
        %v7093 = vmul.f32 %v7069, %v7084
        %v7094 = vmul.f32 %v7070, %v7084
        %v7095 = vmul.f32 %v7071, %v7084
        %v7096 = vmul.f32 %v7072, %v7084
        %v7097 = vmul.f32 %v7073, %v7084
        %v7098 = vmul.f32 %v7074, %v7084
        %v7099 = vmul.f32 %v7075, %v7084
        %v7100 = vmul.f32 %v7076, %v7084
        %v7101 = vmul.f32 %v7077, %v7084
        %s7102 = scalar_lea.vmem %s17, 1
        %v7103 = vld [vmem:[%s7102] sm:$0x1]
        %v7105 = vlaneseq
        %v7106 = vshrl.u32 %v7105, 7
        %v7107 = vsub.s32 0, %v7106
        %v7108 = vrot.slane %v7103, %v7107
        %v7110 = vadd.f32 %v7086, %v7108
        %v7111 = vadd.f32 %v7087, %v7108
        %v7112 = vadd.f32 %v7088, %v7108
        %v7113 = vadd.f32 %v7089, %v7108
        %v7114 = vadd.f32 %v7090, %v7108
        %v7115 = vadd.f32 %v7091, %v7108
        %v7116 = vadd.f32 %v7092, %v7108
        %v7117 = vadd.f32 %v7093, %v7108
        %v7118 = vadd.f32 %v7094, %v7108
        %v7119 = vadd.f32 %v7095, %v7108
        %v7120 = vadd.f32 %v7096, %v7108
        %v7121 = vadd.f32 %v7097, %v7108
        %v7122 = vadd.f32 %v7098, %v7108
        %v7123 = vadd.f32 %v7099, %v7108
        %v7124 = vadd.f32 %v7100, %v7108
        %v7125 = vadd.f32 %v7101, %v7108
        %v7126 = vadd.f32 %v6654, 1.0
        %v7127 = vadd.f32 %v6657, 1.0
        %v7128 = vadd.f32 %v6662, 1.0
        %v7129 = vadd.f32 %v6665, 1.0
        %v7130 = vadd.f32 %v6670, 1.0
        %v7131 = vadd.f32 %v6673, 1.0
        %v7132 = vadd.f32 %v6678, 1.0
        %v7133 = vadd.f32 %v6681, 1.0
        %v7134 = vadd.f32 %v6686, 1.0
        %v7135 = vadd.f32 %v6689, 1.0
        %v7136 = vadd.f32 %v6694, 1.0
        %v7137 = vadd.f32 %v6697, 1.0
        %v7138 = vadd.f32 %v6702, 1.0
        %v7139 = vadd.f32 %v6705, 1.0
        %v7140 = vadd.f32 %v6710, 1.0
        %v7141 = vadd.f32 %v6713, 1.0
        %v7142 = vmul.f32 %v7110, %v7126
        %v7143 = vmul.f32 %v7111, %v7127
        %v7144 = vmul.f32 %v7112, %v7128
        %v7145 = vmul.f32 %v7113, %v7129
        %v7146 = vmul.f32 %v7114, %v7130
        %v7147 = vmul.f32 %v7115, %v7131
        %v7148 = vmul.f32 %v7116, %v7132
        %v7149 = vmul.f32 %v7117, %v7133
        %v7150 = vmul.f32 %v7118, %v7134
        %v7151 = vmul.f32 %v7119, %v7135
        %v7152 = vmul.f32 %v7120, %v7136
        %v7153 = vmul.f32 %v7121, %v7137
        %v7154 = vmul.f32 %v7122, %v7138
        %v7155 = vmul.f32 %v7123, %v7139
        %v7156 = vmul.f32 %v7124, %v7140
        %v7157 = vmul.f32 %v7125, %v7141
        %v7158 = vadd.f32 %v7142, %v6532
        %v7159 = vadd.f32 %v7143, %v6535
        %v7160 = vadd.f32 %v7144, %v6540
        %v7161 = vadd.f32 %v7145, %v6543
        %v7162 = vadd.f32 %v7146, %v6548
        %v7163 = vadd.f32 %v7147, %v6551
        %v7164 = vadd.f32 %v7148, %v6556
        %v7165 = vadd.f32 %v7149, %v6559
        %v7166 = vadd.f32 %v7150, %v6564
        %v7167 = vadd.f32 %v7151, %v6567
        %v7168 = vadd.f32 %v7152, %v6572
        %v7169 = vadd.f32 %v7153, %v6575
        %v7170 = vadd.f32 %v7154, %v6580
        %v7171 = vadd.f32 %v7155, %v6583
        %v7172 = vadd.f32 %v7156, %v6588
        %v7173 = vadd.f32 %v7157, %v6591
        %v7174 = vpack.c.bf16 %v7159, %v7158
        %v7175 = vpack.c.bf16 %v7161, %v7160
        %v7176 = vpack.c.bf16 %v7163, %v7162
        %v7177 = vpack.c.bf16 %v7165, %v7164
        %v7178 = vpack.c.bf16 %v7167, %v7166
        %v7179 = vpack.c.bf16 %v7169, %v7168
        %v7180 = vpack.c.bf16 %v7171, %v7170
        %v7181 = vpack.c.bf16 %v7173, %v7172
        %s7182 = scalar_lea.vmem %s18, 16
        %v7183 = vld [vmem:[%s7182] sm:$0xf]
        %v7184 = vld [vmem:[%s7182 + $0x4] sm:$0xf]
        %v7185 = vld [vmem:[%s7182 + $0x8] sm:$0xf]
        %v7186 = vld [vmem:[%s7182 + $0xc] sm:$0xf]
        %s7187 = scalar_lea.vmem %s19, 1
        %v7188 = vld [vmem:[%s7187] sm:$0x1]
        %v7190 = vlaneseq
        %v7191 = vshrl.u32 %v7190, 7
        %v7192 = vsub.s32 0, %v7191
        %v7193 = vrot.slane %v7188, %v7192
        %v7199 = vunpack.c.l.b16 %v7183
        %v7200 = vunpack.c.l.b16 %v7184
        %v7201 = vunpack.c.l.b16 %v7185
        %v7202 = vunpack.c.l.b16 %v7186
        %v7203 = vpack.c.b16 %v7200, %v7199
        %v7204 = vpack.c.b16 %v7202, %v7201
        %v7208 = vsel %vm4790, %v7174, 0
        %v7211 = vsel %vm4790, %v7175, 0
        %v7214 = vsel %vm4790, %v7176, 0
        %v7217 = vsel %vm4790, %v7177, 0
        %v7220 = vsel %vm4790, %v7178, 0
        %v7223 = vsel %vm4790, %v7179, 0
        %v7226 = vsel %vm4790, %v7180, 0
        %v7229 = vsel %vm4790, %v7181, 0
        %7231 = vmatprep.subr.bf16.mxu0 0
        %7232 = vmatpush1.bf16.msra.mxu0 0
        %7233 = vmatprep.subr.bf16.mxu0 0
        %7234 = vmatpush1.bf16.msra.mxu0 0
        %7235 = vmatprep.subr.bf16.mxu0 0
        %7236 = vmatpush1.bf16.msra.mxu0 0
        %7237 = vmatprep.subr.bf16.mxu0 0
        %7238 = vmatpush1.bf16.msra.mxu0 0
        %7239 = vmatprep.subr.bf16.mxu0 0
        %7240 = vmatpush1.bf16.msra.mxu0 0
        %7241 = vmatprep.subr.bf16.mxu0 0
        %7242 = vmatpush1.bf16.msra.mxu0 0
        %7243 = vmatprep.subr.bf16.mxu0 0
        %7244 = vmatpush1.bf16.msra.mxu0 %v7204
        %7245 = vmatprep.subr.bf16.mxu0 0
        %7246 = vmatpush1.bf16.msra.mxu0 %v7203
        %7247 = vmatprep.subr.bf16.mxu0 0
        %7248 = vmatpush2.bf16.msra.mxu0 0
        %7249 = vmatprep.subr.bf16.mxu0 0
        %7250 = vmatpush2.bf16.msra.mxu0 0
        %7251 = vmatprep.subr.bf16.mxu0 0
        %7252 = vmatpush2.bf16.msra.mxu0 0
        %7253 = vmatprep.subr.bf16.mxu0 0
        %7254 = vmatpush2.bf16.msra.mxu0 0
        %7255 = vmatprep.subr.bf16.mxu0 0
        %7256 = vmatpush2.bf16.msra.mxu0 0
        %7257 = vmatprep.subr.bf16.mxu0 0
        %7258 = vmatpush2.bf16.msra.mxu0 0
        %7259 = vmatprep.subr.bf16.mxu0 0
        %7260 = vmatpush2.bf16.msra.mxu0 0
        %7261 = vmatprep.subr.bf16.mxu0 0
        %7262 = vmatpush2.bf16.msra.mxu0 0
        %7263 = vmatprep.mubr.bf16.mxu0 0
        %7264 = vmatmul.mubr.bf16.gmra.mxu0 %v7208
        %v7265 = vpop.f32.mrf.mxu0
        %v7266 = vadd.f32 %v7193, %v7265
        %v7267 = vpop.f32.mrf.mxu0
        %v7268 = vpop.f32.mrf.mxu0
        %v7269 = vadd.f32 %v7193, %v7268
        %v7270 = vpop.f32.mrf.mxu0
        %7271 = vmatprep.mubr.bf16.mxu0 0
        %7272 = vmatmul.mubr.bf16.gmra.mxu0 %v7211
        %v7273 = vpop.f32.mrf.mxu0
        %v7274 = vadd.f32 %v7193, %v7273
        %v7275 = vpop.f32.mrf.mxu0
        %v7276 = vpop.f32.mrf.mxu0
        %v7277 = vadd.f32 %v7193, %v7276
        %v7278 = vpop.f32.mrf.mxu0
        %7279 = vmatprep.mubr.bf16.mxu0 0
        %7280 = vmatmul.mubr.bf16.gmra.mxu0 %v7214
        %v7281 = vpop.f32.mrf.mxu0
        %v7282 = vadd.f32 %v7193, %v7281
        %v7283 = vpop.f32.mrf.mxu0
        %v7284 = vpop.f32.mrf.mxu0
        %v7285 = vadd.f32 %v7193, %v7284
        %v7286 = vpop.f32.mrf.mxu0
        %7287 = vmatprep.mubr.bf16.mxu0 0
        %7288 = vmatmul.mubr.bf16.gmra.mxu0 %v7217
        %v7289 = vpop.f32.mrf.mxu0
        %v7290 = vadd.f32 %v7193, %v7289
        %v7291 = vpop.f32.mrf.mxu0
        %v7292 = vpop.f32.mrf.mxu0
        %v7293 = vadd.f32 %v7193, %v7292
        %v7294 = vpop.f32.mrf.mxu0
        %7295 = vmatprep.mubr.bf16.mxu0 0
        %7296 = vmatmul.mubr.bf16.gmra.mxu0 %v7220
        %v7297 = vpop.f32.mrf.mxu0
        %v7298 = vadd.f32 %v7193, %v7297
        %v7299 = vpop.f32.mrf.mxu0
        %v7300 = vpop.f32.mrf.mxu0
        %v7301 = vadd.f32 %v7193, %v7300
        %v7302 = vpop.f32.mrf.mxu0
        %7303 = vmatprep.mubr.bf16.mxu0 0
        %7304 = vmatmul.mubr.bf16.gmra.mxu0 %v7223
        %v7305 = vpop.f32.mrf.mxu0
        %v7306 = vadd.f32 %v7193, %v7305
        %v7307 = vpop.f32.mrf.mxu0
        %v7308 = vpop.f32.mrf.mxu0
        %v7309 = vadd.f32 %v7193, %v7308
        %v7310 = vpop.f32.mrf.mxu0
        %7311 = vmatprep.mubr.bf16.mxu0 0
        %7312 = vmatmul.mubr.bf16.gmra.mxu0 %v7226
        %v7313 = vpop.f32.mrf.mxu0
        %v7314 = vadd.f32 %v7193, %v7313
        %v7315 = vpop.f32.mrf.mxu0
        %v7316 = vpop.f32.mrf.mxu0
        %v7317 = vadd.f32 %v7193, %v7316
        %v7318 = vpop.f32.mrf.mxu0
        %7319 = vmatprep.mubr.bf16.mxu0 0
        %7320 = vmatmul.mubr.bf16.gmra.mxu0 %v7229
        %v7321 = vpop.f32.mrf.mxu0
        %v7322 = vadd.f32 %v7193, %v7321
        %v7323 = vpop.f32.mrf.mxu0
        %v7324 = vpop.f32.mrf.mxu0
        %v7325 = vadd.f32 %v7193, %v7324
        %v7326 = vpop.f32.mrf.mxu0
        %7327 = vdwg.mxu0
        %v7328 = vxor.u32 %v7266, 2147483648
        %v7329 = vxor.u32 %v7269, 2147483648
        %v7330 = vxor.u32 %v7274, 2147483648
        %v7331 = vxor.u32 %v7277, 2147483648
        %v7332 = vxor.u32 %v7282, 2147483648
        %v7333 = vxor.u32 %v7285, 2147483648
        %v7334 = vxor.u32 %v7290, 2147483648
        %v7335 = vxor.u32 %v7293, 2147483648
        %v7336 = vxor.u32 %v7298, 2147483648
        %v7337 = vxor.u32 %v7301, 2147483648
        %v7338 = vxor.u32 %v7306, 2147483648
        %v7339 = vxor.u32 %v7309, 2147483648
        %v7340 = vxor.u32 %v7314, 2147483648
        %v7341 = vxor.u32 %v7317, 2147483648
        %v7342 = vxor.u32 %v7322, 2147483648
        %v7343 = vxor.u32 %v7325, 2147483648
        %v7344 = vmul.f32 %v7328, 1.442695
        %v7345 = vpow.pop %v7344
        %v7346 = vmul.f32 %v7329, 1.442695
        %v7347 = vpow.pop %v7346
        %v7348 = vmul.f32 %v7330, 1.442695
        %v7349 = vpow.pop %v7348
        %v7350 = vmul.f32 %v7331, 1.442695
        %v7351 = vpow.pop %v7350
        %v7352 = vmul.f32 %v7332, 1.442695
        %v7353 = vpow.pop %v7352
        %v7354 = vmul.f32 %v7333, 1.442695
        %v7355 = vpow.pop %v7354
        %v7356 = vmul.f32 %v7334, 1.442695
        %v7357 = vpow.pop %v7356
        %v7358 = vmul.f32 %v7335, 1.442695
        %v7359 = vpow.pop %v7358
        %v7360 = vmul.f32 %v7336, 1.442695
        %v7361 = vpow.pop %v7360
        %v7362 = vmul.f32 %v7337, 1.442695
        %v7363 = vpow.pop %v7362
        %v7364 = vmul.f32 %v7338, 1.442695
        %v7365 = vpow.pop %v7364
        %v7366 = vmul.f32 %v7339, 1.442695
        %v7367 = vpow.pop %v7366
        %v7368 = vmul.f32 %v7340, 1.442695
        %v7369 = vpow.pop %v7368
        %v7370 = vmul.f32 %v7341, 1.442695
        %v7371 = vpow.pop %v7370
        %v7372 = vmul.f32 %v7342, 1.442695
        %v7373 = vpow.pop %v7372
        %v7374 = vmul.f32 %v7343, 1.442695
        %v7375 = vpow.pop %v7374
        %v7376 = vadd.f32 %v7345, 1.0
        %v7377 = vadd.f32 %v7347, 1.0
        %v7378 = vadd.f32 %v7349, 1.0
        %v7379 = vadd.f32 %v7351, 1.0
        %v7380 = vadd.f32 %v7353, 1.0
        %v7381 = vadd.f32 %v7355, 1.0
        %v7382 = vadd.f32 %v7357, 1.0
        %v7383 = vadd.f32 %v7359, 1.0
        %v7384 = vadd.f32 %v7361, 1.0
        %v7385 = vadd.f32 %v7363, 1.0
        %v7386 = vadd.f32 %v7365, 1.0
        %v7387 = vadd.f32 %v7367, 1.0
        %v7388 = vadd.f32 %v7369, 1.0
        %v7389 = vadd.f32 %v7371, 1.0
        %v7390 = vadd.f32 %v7373, 1.0
        %v7391 = vadd.f32 %v7375, 1.0
        %v7392 = vrcp.pop %v7376
        %v7393 = vmul.f32 1.0, %v7392
        %v7394 = vrcp.pop %v7377
        %v7395 = vmul.f32 1.0, %v7394
        %v7396 = vrcp.pop %v7378
        %v7397 = vmul.f32 1.0, %v7396
        %v7398 = vrcp.pop %v7379
        %v7399 = vmul.f32 1.0, %v7398
        %v7400 = vrcp.pop %v7380
        %v7401 = vmul.f32 1.0, %v7400
        %v7402 = vrcp.pop %v7381
        %v7403 = vmul.f32 1.0, %v7402
        %v7404 = vrcp.pop %v7382
        %v7405 = vmul.f32 1.0, %v7404
        %v7406 = vrcp.pop %v7383
        %v7407 = vmul.f32 1.0, %v7406
        %v7408 = vrcp.pop %v7384
        %v7409 = vmul.f32 1.0, %v7408
        %v7410 = vrcp.pop %v7385
        %v7411 = vmul.f32 1.0, %v7410
        %v7412 = vrcp.pop %v7386
        %v7413 = vmul.f32 1.0, %v7412
        %v7414 = vrcp.pop %v7387
        %v7415 = vmul.f32 1.0, %v7414
        %v7416 = vrcp.pop %v7388
        %v7417 = vmul.f32 1.0, %v7416
        %v7418 = vrcp.pop %v7389
        %v7419 = vmul.f32 1.0, %v7418
        %v7420 = vrcp.pop %v7390
        %v7421 = vmul.f32 1.0, %v7420
        %v7422 = vrcp.pop %v7391
        %v7423 = vmul.f32 1.0, %v7422
        %v7424 = vmul.f32 %v7266, %v7393
        %v7425 = vmul.f32 %v7269, %v7395
        %v7426 = vmul.f32 %v7274, %v7397
        %v7427 = vmul.f32 %v7277, %v7399
        %v7428 = vmul.f32 %v7282, %v7401
        %v7429 = vmul.f32 %v7285, %v7403
        %v7430 = vmul.f32 %v7290, %v7405
        %v7431 = vmul.f32 %v7293, %v7407
        %v7432 = vmul.f32 %v7298, %v7409
        %v7433 = vmul.f32 %v7301, %v7411
        %v7434 = vmul.f32 %v7306, %v7413
        %v7435 = vmul.f32 %v7309, %v7415
        %v7436 = vmul.f32 %v7314, %v7417
        %v7437 = vmul.f32 %v7317, %v7419
        %v7438 = vmul.f32 %v7322, %v7421
        %v7439 = vmul.f32 %v7325, %v7423
        %v7440 = vpack.c.bf16 %v7425, %v7424
        %v7441 = vpack.c.bf16 %v7427, %v7426
        %v7442 = vpack.c.bf16 %v7429, %v7428
        %v7443 = vpack.c.bf16 %v7431, %v7430
        %v7444 = vpack.c.bf16 %v7433, %v7432
        %v7445 = vpack.c.bf16 %v7435, %v7434
        %v7446 = vpack.c.bf16 %v7437, %v7436
        %v7447 = vpack.c.bf16 %v7439, %v7438
        %s7448 = scalar_lea.vmem %s20, 16
        %v7449 = vld [vmem:[%s7448] sm:$0xf]
        %v7450 = vld [vmem:[%s7448 + $0x4] sm:$0xf]
        %v7451 = vld [vmem:[%s7448 + $0x8] sm:$0xf]
        %v7452 = vld [vmem:[%s7448 + $0xc] sm:$0xf]
        %s7453 = scalar_lea.vmem %s21, 1
        %v7454 = vld [vmem:[%s7453] sm:$0x1]
        %v7456 = vlaneseq
        %v7457 = vshrl.u32 %v7456, 7
        %v7458 = vsub.s32 0, %v7457
        %v7459 = vrot.slane %v7454, %v7458
        %v7465 = vunpack.c.l.b16 %v7449
        %v7466 = vunpack.c.l.b16 %v7450
        %v7467 = vunpack.c.l.b16 %v7451
        %v7468 = vunpack.c.l.b16 %v7452
        %v7469 = vpack.c.b16 %v7466, %v7465
        %v7470 = vpack.c.b16 %v7468, %v7467
        %v7474 = vsel %vm4790, %v7440, 0
        %v7477 = vsel %vm4790, %v7441, 0
        %v7480 = vsel %vm4790, %v7442, 0
        %v7483 = vsel %vm4790, %v7443, 0
        %v7486 = vsel %vm4790, %v7444, 0
        %v7489 = vsel %vm4790, %v7445, 0
        %v7492 = vsel %vm4790, %v7446, 0
        %v7495 = vsel %vm4790, %v7447, 0
        %7497 = vmatprep.subr.bf16.mxu0 0
        %7498 = vmatpush1.bf16.msra.mxu0 0
        %7499 = vmatprep.subr.bf16.mxu0 0
        %7500 = vmatpush1.bf16.msra.mxu0 0
        %7501 = vmatprep.subr.bf16.mxu0 0
        %7502 = vmatpush1.bf16.msra.mxu0 0
        %7503 = vmatprep.subr.bf16.mxu0 0
        %7504 = vmatpush1.bf16.msra.mxu0 0
        %7505 = vmatprep.subr.bf16.mxu0 0
        %7506 = vmatpush1.bf16.msra.mxu0 0
        %7507 = vmatprep.subr.bf16.mxu0 0
        %7508 = vmatpush1.bf16.msra.mxu0 0
        %7509 = vmatprep.subr.bf16.mxu0 0
        %7510 = vmatpush1.bf16.msra.mxu0 %v7470
        %7511 = vmatprep.subr.bf16.mxu0 0
        %7512 = vmatpush1.bf16.msra.mxu0 %v7469
        %7513 = vmatprep.subr.bf16.mxu0 0
        %7514 = vmatpush2.bf16.msra.mxu0 0
        %7515 = vmatprep.subr.bf16.mxu0 0
        %7516 = vmatpush2.bf16.msra.mxu0 0
        %7517 = vmatprep.subr.bf16.mxu0 0
        %7518 = vmatpush2.bf16.msra.mxu0 0
        %7519 = vmatprep.subr.bf16.mxu0 0
        %7520 = vmatpush2.bf16.msra.mxu0 0
        %7521 = vmatprep.subr.bf16.mxu0 0
        %7522 = vmatpush2.bf16.msra.mxu0 0
        %7523 = vmatprep.subr.bf16.mxu0 0
        %7524 = vmatpush2.bf16.msra.mxu0 0
        %7525 = vmatprep.subr.bf16.mxu0 0
        %7526 = vmatpush2.bf16.msra.mxu0 0
        %7527 = vmatprep.subr.bf16.mxu0 0
        %7528 = vmatpush2.bf16.msra.mxu0 0
        %7529 = vmatprep.mubr.bf16.mxu0 0
        %7530 = vmatmul.mubr.bf16.gmra.mxu0 %v7474
        %v7531 = vpop.f32.mrf.mxu0
        %v7532 = vadd.f32 %v7459, %v7531
        %v7533 = vpop.f32.mrf.mxu0
        %v7534 = vpop.f32.mrf.mxu0
        %v7535 = vadd.f32 %v7459, %v7534
        %v7536 = vpop.f32.mrf.mxu0
        %7537 = vmatprep.mubr.bf16.mxu0 0
        %7538 = vmatmul.mubr.bf16.gmra.mxu0 %v7477
        %v7539 = vpop.f32.mrf.mxu0
        %v7540 = vadd.f32 %v7459, %v7539
        %v7541 = vpop.f32.mrf.mxu0
        %v7542 = vpop.f32.mrf.mxu0
        %v7543 = vadd.f32 %v7459, %v7542
        %v7544 = vpop.f32.mrf.mxu0
        %7545 = vmatprep.mubr.bf16.mxu0 0
        %7546 = vmatmul.mubr.bf16.gmra.mxu0 %v7480
        %v7547 = vpop.f32.mrf.mxu0
        %v7548 = vadd.f32 %v7459, %v7547
        %v7549 = vpop.f32.mrf.mxu0
        %v7550 = vpop.f32.mrf.mxu0
        %v7551 = vadd.f32 %v7459, %v7550
        %v7552 = vpop.f32.mrf.mxu0
        %7553 = vmatprep.mubr.bf16.mxu0 0
        %7554 = vmatmul.mubr.bf16.gmra.mxu0 %v7483
        %v7555 = vpop.f32.mrf.mxu0
        %v7556 = vadd.f32 %v7459, %v7555
        %v7557 = vpop.f32.mrf.mxu0
        %v7558 = vpop.f32.mrf.mxu0
        %v7559 = vadd.f32 %v7459, %v7558
        %v7560 = vpop.f32.mrf.mxu0
        %7561 = vmatprep.mubr.bf16.mxu0 0
        %7562 = vmatmul.mubr.bf16.gmra.mxu0 %v7486
        %v7563 = vpop.f32.mrf.mxu0
        %v7564 = vadd.f32 %v7459, %v7563
        %v7565 = vpop.f32.mrf.mxu0
        %v7566 = vpop.f32.mrf.mxu0
        %v7567 = vadd.f32 %v7459, %v7566
        %v7568 = vpop.f32.mrf.mxu0
        %7569 = vmatprep.mubr.bf16.mxu0 0
        %7570 = vmatmul.mubr.bf16.gmra.mxu0 %v7489
        %v7571 = vpop.f32.mrf.mxu0
        %v7572 = vadd.f32 %v7459, %v7571
        %v7573 = vpop.f32.mrf.mxu0
        %v7574 = vpop.f32.mrf.mxu0
        %v7575 = vadd.f32 %v7459, %v7574
        %v7576 = vpop.f32.mrf.mxu0
        %7577 = vmatprep.mubr.bf16.mxu0 0
        %7578 = vmatmul.mubr.bf16.gmra.mxu0 %v7492
        %v7579 = vpop.f32.mrf.mxu0
        %v7580 = vadd.f32 %v7459, %v7579
        %v7581 = vpop.f32.mrf.mxu0
        %v7582 = vpop.f32.mrf.mxu0
        %v7583 = vadd.f32 %v7459, %v7582
        %v7584 = vpop.f32.mrf.mxu0
        %7585 = vmatprep.mubr.bf16.mxu0 0
        %7586 = vmatmul.mubr.bf16.gmra.mxu0 %v7495
        %v7587 = vpop.f32.mrf.mxu0
        %v7588 = vadd.f32 %v7459, %v7587
        %v7589 = vpop.f32.mrf.mxu0
        %v7590 = vpop.f32.mrf.mxu0
        %v7591 = vadd.f32 %v7459, %v7590
        %v7592 = vpop.f32.mrf.mxu0
        %7593 = vdwg.mxu0
        %v7594 = vmul.f32 %v6776, %v7532
        %v7595 = vmul.f32 %v6779, %v7535
        %v7596 = vmul.f32 %v6784, %v7540
        %v7597 = vmul.f32 %v6787, %v7543
        %v7598 = vmul.f32 %v6792, %v7548
        %v7599 = vmul.f32 %v6795, %v7551
        %v7600 = vmul.f32 %v6800, %v7556
        %v7601 = vmul.f32 %v6803, %v7559
        %v7602 = vmul.f32 %v6808, %v7564
        %v7603 = vmul.f32 %v6811, %v7567
        %v7604 = vmul.f32 %v6816, %v7572
        %v7605 = vmul.f32 %v6819, %v7575
        %v7606 = vmul.f32 %v6824, %v7580
        %v7607 = vmul.f32 %v6827, %v7583
        %v7608 = vmul.f32 %v6832, %v7588
        %v7609 = vmul.f32 %v6835, %v7591
        %v7610 = vadd.f32 %v6456, %v7594
        %v7611 = vadd.f32 %v6457, %v7595
        %v7612 = vadd.f32 %v6458, %v7596
        %v7613 = vadd.f32 %v6459, %v7597
        %v7614 = vadd.f32 %v6460, %v7598
        %v7615 = vadd.f32 %v6461, %v7599
        %v7616 = vadd.f32 %v6462, %v7600
        %v7617 = vadd.f32 %v6463, %v7601
        %v7618 = vadd.f32 %v6464, %v7602
        %v7619 = vadd.f32 %v6465, %v7603
        %v7620 = vadd.f32 %v6466, %v7604
        %v7621 = vadd.f32 %v6467, %v7605
        %v7622 = vadd.f32 %v6468, %v7606
        %v7623 = vadd.f32 %v6469, %v7607
        %v7624 = vadd.f32 %v6470, %v7608
        %v7625 = vadd.f32 %v6471, %v7609
        %v7626 = vld [vmem:[%s22] sm:$0xf]
        %v7627 = vld [vmem:[%s22 + $0x4] sm:$0xf]
        %v7628 = vld [vmem:[%s22 + $0x8] sm:$0xf]
        %v7629 = vld [vmem:[%s22 + $0xc] sm:$0xf]
        %v7630 = vld [vmem:[%s24] sm:$0x1]
        %v7632 = vlaneseq
        %v7633 = vshrl.u32 %v7632, 7
        %v7634 = vsub.s32 0, %v7633
        %v7635 = vrot.slane %v7630, %v7634
        %v7641 = vunpack.c.l.b16 %v7626
        %v7642 = vunpack.c.l.b16 %v7627
        %v7643 = vunpack.c.l.b16 %v7628
        %v7644 = vunpack.c.l.b16 %v7629
        %v7645 = vpack.c.b16 %v7642, %v7641
        %v7646 = vpack.c.b16 %v7644, %v7643
        %7649 = vmatprep.subr.bf16.mxu0 0
        %7650 = vmatpush1.bf16.msra.mxu0 0
        %7651 = vmatprep.subr.bf16.mxu0 0
        %7652 = vmatpush1.bf16.msra.mxu0 0
        %7653 = vmatprep.subr.bf16.mxu0 0
        %7654 = vmatpush1.bf16.msra.mxu0 0
        %7655 = vmatprep.subr.bf16.mxu0 0
        %7656 = vmatpush1.bf16.msra.mxu0 0
        %7657 = vmatprep.subr.bf16.mxu0 0
        %7658 = vmatpush1.bf16.msra.mxu0 0
        %7659 = vmatprep.subr.bf16.mxu0 0
        %7660 = vmatpush1.bf16.msra.mxu0 0
        %7661 = vmatprep.subr.bf16.mxu0 0
        %7662 = vmatpush1.bf16.msra.mxu0 %v7646
        %7663 = vmatprep.subr.bf16.mxu0 0
        %7664 = vmatpush1.bf16.msra.mxu0 %v7645
        %7665 = vmatprep.subr.bf16.mxu0 0
        %7666 = vmatpush2.bf16.msra.mxu0 0
        %7667 = vmatprep.subr.bf16.mxu0 0
        %7668 = vmatpush2.bf16.msra.mxu0 0
        %7669 = vmatprep.subr.bf16.mxu0 0
        %7670 = vmatpush2.bf16.msra.mxu0 0
        %7671 = vmatprep.subr.bf16.mxu0 0
        %7672 = vmatpush2.bf16.msra.mxu0 0
        %7673 = vmatprep.subr.bf16.mxu0 0
        %7674 = vmatpush2.bf16.msra.mxu0 0
        %7675 = vmatprep.subr.bf16.mxu0 0
        %7676 = vmatpush2.bf16.msra.mxu0 0
        %7677 = vmatprep.subr.bf16.mxu0 0
        %7678 = vmatpush2.bf16.msra.mxu0 0
        %7679 = vmatprep.subr.bf16.mxu0 0
        %7680 = vmatpush2.bf16.msra.mxu0 0
        %7681 = vmatprep.mubr.bf16.mxu0 0
        %7682 = vmatmul.mubr.bf16.gmra.mxu0 %v5329
        %v7683 = vpop.f32.mrf.mxu0
        %v7684 = vadd.f32 %v7635, %v7683
        %v7685 = vpop.f32.mrf.mxu0
        %v7686 = vpop.f32.mrf.mxu0
        %v7687 = vadd.f32 %v7635, %v7686
        %v7688 = vpop.f32.mrf.mxu0
        %7689 = vmatprep.mubr.bf16.mxu0 0
        %7690 = vmatmul.mubr.bf16.gmra.mxu0 %v5332
        %v7691 = vpop.f32.mrf.mxu0
        %v7692 = vadd.f32 %v7635, %v7691
        %v7693 = vpop.f32.mrf.mxu0
        %v7694 = vpop.f32.mrf.mxu0
        %v7695 = vadd.f32 %v7635, %v7694
        %v7696 = vpop.f32.mrf.mxu0
        %7697 = vmatprep.mubr.bf16.mxu0 0
        %7698 = vmatmul.mubr.bf16.gmra.mxu0 %v5335
        %v7699 = vpop.f32.mrf.mxu0
        %v7700 = vadd.f32 %v7635, %v7699
        %v7701 = vpop.f32.mrf.mxu0
        %v7702 = vpop.f32.mrf.mxu0
        %v7703 = vadd.f32 %v7635, %v7702
        %v7704 = vpop.f32.mrf.mxu0
        %7705 = vmatprep.mubr.bf16.mxu0 0
        %7706 = vmatmul.mubr.bf16.gmra.mxu0 %v5338
        %v7707 = vpop.f32.mrf.mxu0
        %v7708 = vadd.f32 %v7635, %v7707
        %v7709 = vpop.f32.mrf.mxu0
        %v7710 = vpop.f32.mrf.mxu0
        %v7711 = vadd.f32 %v7635, %v7710
        %v7712 = vpop.f32.mrf.mxu0
        %7713 = vmatprep.mubr.bf16.mxu0 0
        %7714 = vmatmul.mubr.bf16.gmra.mxu0 %v5341
        %v7715 = vpop.f32.mrf.mxu0
        %v7716 = vadd.f32 %v7635, %v7715
        %v7717 = vpop.f32.mrf.mxu0
        %v7718 = vpop.f32.mrf.mxu0
        %v7719 = vadd.f32 %v7635, %v7718
        %v7720 = vpop.f32.mrf.mxu0
        %7721 = vmatprep.mubr.bf16.mxu0 0
        %7722 = vmatmul.mubr.bf16.gmra.mxu0 %v5344
        %v7723 = vpop.f32.mrf.mxu0
        %v7724 = vadd.f32 %v7635, %v7723
        %v7725 = vpop.f32.mrf.mxu0
        %v7726 = vpop.f32.mrf.mxu0
        %v7727 = vadd.f32 %v7635, %v7726
        %v7728 = vpop.f32.mrf.mxu0
        %7729 = vmatprep.mubr.bf16.mxu0 0
        %7730 = vmatmul.mubr.bf16.gmra.mxu0 %v5347
        %v7731 = vpop.f32.mrf.mxu0
        %v7732 = vadd.f32 %v7635, %v7731
        %v7733 = vpop.f32.mrf.mxu0
        %v7734 = vpop.f32.mrf.mxu0
        %v7735 = vadd.f32 %v7635, %v7734
        %v7736 = vpop.f32.mrf.mxu0
        %7737 = vmatprep.mubr.bf16.mxu0 0
        %7738 = vmatmul.mubr.bf16.gmra.mxu0 %v5350
        %v7739 = vpop.f32.mrf.mxu0
        %v7740 = vadd.f32 %v7635, %v7739
        %v7741 = vpop.f32.mrf.mxu0
        %v7742 = vpop.f32.mrf.mxu0
        %v7743 = vadd.f32 %v7635, %v7742
        %v7744 = vpop.f32.mrf.mxu0
        %7745 = vdwg.mxu0
        %v7746 = vld [vmem:[%s23] sm:$0xf]
        %v7747 = vld [vmem:[%s23 + $0x4] sm:$0xf]
        %v7748 = vld [vmem:[%s23 + $0x8] sm:$0xf]
        %v7749 = vld [vmem:[%s23 + $0xc] sm:$0xf]
        %v7750 = vld [vmem:[%s25] sm:$0x1]
        %v7752 = vlaneseq
        %v7753 = vshrl.u32 %v7752, 7
        %v7754 = vsub.s32 0, %v7753
        %v7755 = vrot.slane %v7750, %v7754
        %v7761 = vunpack.c.l.b16 %v7746
        %v7762 = vunpack.c.l.b16 %v7747
        %v7763 = vunpack.c.l.b16 %v7748
        %v7764 = vunpack.c.l.b16 %v7749
        %v7765 = vpack.c.b16 %v7762, %v7761
        %v7766 = vpack.c.b16 %v7764, %v7763
        %7769 = vmatprep.subr.bf16.mxu0 0
        %7770 = vmatpush1.bf16.msra.mxu0 0
        %7771 = vmatprep.subr.bf16.mxu0 0
        %7772 = vmatpush1.bf16.msra.mxu0 0
        %7773 = vmatprep.subr.bf16.mxu0 0
        %7774 = vmatpush1.bf16.msra.mxu0 0
        %7775 = vmatprep.subr.bf16.mxu0 0
        %7776 = vmatpush1.bf16.msra.mxu0 0
        %7777 = vmatprep.subr.bf16.mxu0 0
        %7778 = vmatpush1.bf16.msra.mxu0 0
        %7779 = vmatprep.subr.bf16.mxu0 0
        %7780 = vmatpush1.bf16.msra.mxu0 0
        %7781 = vmatprep.subr.bf16.mxu0 0
        %7782 = vmatpush1.bf16.msra.mxu0 %v7766
        %7783 = vmatprep.subr.bf16.mxu0 0
        %7784 = vmatpush1.bf16.msra.mxu0 %v7765
        %7785 = vmatprep.subr.bf16.mxu0 0
        %7786 = vmatpush2.bf16.msra.mxu0 0
        %7787 = vmatprep.subr.bf16.mxu0 0
        %7788 = vmatpush2.bf16.msra.mxu0 0
        %7789 = vmatprep.subr.bf16.mxu0 0
        %7790 = vmatpush2.bf16.msra.mxu0 0
        %7791 = vmatprep.subr.bf16.mxu0 0
        %7792 = vmatpush2.bf16.msra.mxu0 0
        %7793 = vmatprep.subr.bf16.mxu0 0
        %7794 = vmatpush2.bf16.msra.mxu0 0
        %7795 = vmatprep.subr.bf16.mxu0 0
        %7796 = vmatpush2.bf16.msra.mxu0 0
        %7797 = vmatprep.subr.bf16.mxu0 0
        %7798 = vmatpush2.bf16.msra.mxu0 0
        %7799 = vmatprep.subr.bf16.mxu0 0
        %7800 = vmatpush2.bf16.msra.mxu0 0
        %7801 = vmatprep.mubr.bf16.mxu0 0
        %7802 = vmatmul.mubr.bf16.gmra.mxu0 %v5329
        %v7803 = vpop.f32.mrf.mxu0
        %v7804 = vadd.f32 %v7755, %v7803
        %v7805 = vpop.f32.mrf.mxu0
        %v7806 = vpop.f32.mrf.mxu0
        %v7807 = vadd.f32 %v7755, %v7806
        %v7808 = vpop.f32.mrf.mxu0
        %7809 = vmatprep.mubr.bf16.mxu0 0
        %7810 = vmatmul.mubr.bf16.gmra.mxu0 %v5332
        %v7811 = vpop.f32.mrf.mxu0
        %v7812 = vadd.f32 %v7755, %v7811
        %v7813 = vpop.f32.mrf.mxu0
        %v7814 = vpop.f32.mrf.mxu0
        %v7815 = vadd.f32 %v7755, %v7814
        %v7816 = vpop.f32.mrf.mxu0
        %7817 = vmatprep.mubr.bf16.mxu0 0
        %7818 = vmatmul.mubr.bf16.gmra.mxu0 %v5335
        %v7819 = vpop.f32.mrf.mxu0
        %v7820 = vadd.f32 %v7755, %v7819
        %v7821 = vpop.f32.mrf.mxu0
        %v7822 = vpop.f32.mrf.mxu0
        %v7823 = vadd.f32 %v7755, %v7822
        %v7824 = vpop.f32.mrf.mxu0
        %7825 = vmatprep.mubr.bf16.mxu0 0
        %7826 = vmatmul.mubr.bf16.gmra.mxu0 %v5338
        %v7827 = vpop.f32.mrf.mxu0
        %v7828 = vadd.f32 %v7755, %v7827
        %v7829 = vpop.f32.mrf.mxu0
        %v7830 = vpop.f32.mrf.mxu0
        %v7831 = vadd.f32 %v7755, %v7830
        %v7832 = vpop.f32.mrf.mxu0
        %7833 = vmatprep.mubr.bf16.mxu0 0
        %7834 = vmatmul.mubr.bf16.gmra.mxu0 %v5341
        %v7835 = vpop.f32.mrf.mxu0
        %v7836 = vadd.f32 %v7755, %v7835
        %v7837 = vpop.f32.mrf.mxu0
        %v7838 = vpop.f32.mrf.mxu0
        %v7839 = vadd.f32 %v7755, %v7838
        %v7840 = vpop.f32.mrf.mxu0
        %7841 = vmatprep.mubr.bf16.mxu0 0
        %7842 = vmatmul.mubr.bf16.gmra.mxu0 %v5344
        %v7843 = vpop.f32.mrf.mxu0
        %v7844 = vadd.f32 %v7755, %v7843
        %v7845 = vpop.f32.mrf.mxu0
        %v7846 = vpop.f32.mrf.mxu0
        %v7847 = vadd.f32 %v7755, %v7846
        %v7848 = vpop.f32.mrf.mxu0
        %7849 = vmatprep.mubr.bf16.mxu0 0
        %7850 = vmatmul.mubr.bf16.gmra.mxu0 %v5347
        %v7851 = vpop.f32.mrf.mxu0
        %v7852 = vadd.f32 %v7755, %v7851
        %v7853 = vpop.f32.mrf.mxu0
        %v7854 = vpop.f32.mrf.mxu0
        %v7855 = vadd.f32 %v7755, %v7854
        %v7856 = vpop.f32.mrf.mxu0
        %7857 = vmatprep.mubr.bf16.mxu0 0
        %7858 = vmatmul.mubr.bf16.gmra.mxu0 %v5350
        %v7859 = vpop.f32.mrf.mxu0
        %v7860 = vadd.f32 %v7755, %v7859
        %v7861 = vpop.f32.mrf.mxu0
        %v7862 = vpop.f32.mrf.mxu0
        %v7863 = vadd.f32 %v7755, %v7862
        %v7864 = vpop.f32.mrf.mxu0
        %7865 = vdwg.mxu0
        %v7866 = vsel %vm4790, %v7610, 0.0
        %7867 = vadd.xlane.f32.xlu0 %v7866
        %v7868 = vpop.xlane.xlu0 %7867
        %v7869 = vsel %vm4790, %v7611, 0.0
        %7870 = vadd.xlane.f32.xlu0 %v7869
        %v7871 = vpop.xlane.xlu0 %7870
        %v7872 = vsel %vm4790, %v7612, 0.0
        %7873 = vadd.xlane.f32.xlu0 %v7872
        %v7874 = vpop.xlane.xlu0 %7873
        %v7875 = vsel %vm4790, %v7613, 0.0
        %7876 = vadd.xlane.f32.xlu0 %v7875
        %v7877 = vpop.xlane.xlu0 %7876
        %v7878 = vsel %vm4790, %v7614, 0.0
        %7879 = vadd.xlane.f32.xlu0 %v7878
        %v7880 = vpop.xlane.xlu0 %7879
        %v7881 = vsel %vm4790, %v7615, 0.0
        %7882 = vadd.xlane.f32.xlu0 %v7881
        %v7883 = vpop.xlane.xlu0 %7882
        %v7884 = vsel %vm4790, %v7616, 0.0
        %7885 = vadd.xlane.f32.xlu0 %v7884
        %v7886 = vpop.xlane.xlu0 %7885
        %v7887 = vsel %vm4790, %v7617, 0.0
        %7888 = vadd.xlane.f32.xlu0 %v7887
        %v7889 = vpop.xlane.xlu0 %7888
        %v7890 = vsel %vm4790, %v7618, 0.0
        %7891 = vadd.xlane.f32.xlu0 %v7890
        %v7892 = vpop.xlane.xlu0 %7891
        %v7893 = vsel %vm4790, %v7619, 0.0
        %7894 = vadd.xlane.f32.xlu0 %v7893
        %v7895 = vpop.xlane.xlu0 %7894
        %v7896 = vsel %vm4790, %v7620, 0.0
        %7897 = vadd.xlane.f32.xlu0 %v7896
        %v7898 = vpop.xlane.xlu0 %7897
        %v7899 = vsel %vm4790, %v7621, 0.0
        %7900 = vadd.xlane.f32.xlu0 %v7899
        %v7901 = vpop.xlane.xlu0 %7900
        %v7902 = vsel %vm4790, %v7622, 0.0
        %7903 = vadd.xlane.f32.xlu0 %v7902
        %v7904 = vpop.xlane.xlu0 %7903
        %v7905 = vsel %vm4790, %v7623, 0.0
        %7906 = vadd.xlane.f32.xlu0 %v7905
        %v7907 = vpop.xlane.xlu0 %7906
        %v7908 = vsel %vm4790, %v7624, 0.0
        %7909 = vadd.xlane.f32.xlu0 %v7908
        %v7910 = vpop.xlane.xlu0 %7909
        %v7911 = vsel %vm4790, %v7625, 0.0
        %7912 = vadd.xlane.f32.xlu0 %v7911
        %v7913 = vpop.xlane.xlu0 %7912
        %v7914 = vmul.f32 %v7868, %v5737
        %v7915 = vmul.f32 %v7871, %v5737
        %v7916 = vmul.f32 %v7874, %v5737
        %v7917 = vmul.f32 %v7877, %v5737
        %v7918 = vmul.f32 %v7880, %v5737
        %v7919 = vmul.f32 %v7883, %v5737
        %v7920 = vmul.f32 %v7886, %v5737
        %v7921 = vmul.f32 %v7889, %v5737
        %v7922 = vmul.f32 %v7892, %v5737
        %v7923 = vmul.f32 %v7895, %v5737
        %v7924 = vmul.f32 %v7898, %v5737
        %v7925 = vmul.f32 %v7901, %v5737
        %v7926 = vmul.f32 %v7904, %v5737
        %v7927 = vmul.f32 %v7907, %v5737
        %v7928 = vmul.f32 %v7910, %v5737
        %v7929 = vmul.f32 %v7913, %v5737
        %v7930 = vmul.f32 %v7610, %v7610
        %v7931 = vmul.f32 %v7611, %v7611
        %v7932 = vmul.f32 %v7612, %v7612
        %v7933 = vmul.f32 %v7613, %v7613
        %v7934 = vmul.f32 %v7614, %v7614
        %v7935 = vmul.f32 %v7615, %v7615
        %v7936 = vmul.f32 %v7616, %v7616
        %v7937 = vmul.f32 %v7617, %v7617
        %v7938 = vmul.f32 %v7618, %v7618
        %v7939 = vmul.f32 %v7619, %v7619
        %v7940 = vmul.f32 %v7620, %v7620
        %v7941 = vmul.f32 %v7621, %v7621
        %v7942 = vmul.f32 %v7622, %v7622
        %v7943 = vmul.f32 %v7623, %v7623
        %v7944 = vmul.f32 %v7624, %v7624
        %v7945 = vmul.f32 %v7625, %v7625
        %v7946 = vsel %vm4790, %v7930, 0.0
        %7947 = vadd.xlane.f32.xlu0 %v7946
        %v7948 = vpop.xlane.xlu0 %7947
        %v7949 = vsel %vm4790, %v7931, 0.0
        %7950 = vadd.xlane.f32.xlu0 %v7949
        %v7951 = vpop.xlane.xlu0 %7950
        %v7952 = vsel %vm4790, %v7932, 0.0
        %7953 = vadd.xlane.f32.xlu0 %v7952
        %v7954 = vpop.xlane.xlu0 %7953
        %v7955 = vsel %vm4790, %v7933, 0.0
        %7956 = vadd.xlane.f32.xlu0 %v7955
        %v7957 = vpop.xlane.xlu0 %7956
        %v7958 = vsel %vm4790, %v7934, 0.0
        %7959 = vadd.xlane.f32.xlu0 %v7958
        %v7960 = vpop.xlane.xlu0 %7959
        %v7961 = vsel %vm4790, %v7935, 0.0
        %7962 = vadd.xlane.f32.xlu0 %v7961
        %v7963 = vpop.xlane.xlu0 %7962
        %v7964 = vsel %vm4790, %v7936, 0.0
        %7965 = vadd.xlane.f32.xlu0 %v7964
        %v7966 = vpop.xlane.xlu0 %7965
        %v7967 = vsel %vm4790, %v7937, 0.0
        %7968 = vadd.xlane.f32.xlu0 %v7967
        %v7969 = vpop.xlane.xlu0 %7968
        %v7970 = vsel %vm4790, %v7938, 0.0
        %7971 = vadd.xlane.f32.xlu0 %v7970
        %v7972 = vpop.xlane.xlu0 %7971
        %v7973 = vsel %vm4790, %v7939, 0.0
        %7974 = vadd.xlane.f32.xlu0 %v7973
        %v7975 = vpop.xlane.xlu0 %7974
        %v7976 = vsel %vm4790, %v7940, 0.0
        %7977 = vadd.xlane.f32.xlu0 %v7976
        %v7978 = vpop.xlane.xlu0 %7977
        %v7979 = vsel %vm4790, %v7941, 0.0
        %7980 = vadd.xlane.f32.xlu0 %v7979
        %v7981 = vpop.xlane.xlu0 %7980
        %v7982 = vsel %vm4790, %v7942, 0.0
        %7983 = vadd.xlane.f32.xlu0 %v7982
        %v7984 = vpop.xlane.xlu0 %7983
        %v7985 = vsel %vm4790, %v7943, 0.0
        %7986 = vadd.xlane.f32.xlu0 %v7985
        %v7987 = vpop.xlane.xlu0 %7986
        %v7988 = vsel %vm4790, %v7944, 0.0
        %7989 = vadd.xlane.f32.xlu0 %v7988
        %v7990 = vpop.xlane.xlu0 %7989
        %v7991 = vsel %vm4790, %v7945, 0.0
        %7992 = vadd.xlane.f32.xlu0 %v7991
        %v7993 = vpop.xlane.xlu0 %7992
        %v7994 = vmul.f32 %v7948, %v5737
        %v7995 = vmul.f32 %v7951, %v5737
        %v7996 = vmul.f32 %v7954, %v5737
        %v7997 = vmul.f32 %v7957, %v5737
        %v7998 = vmul.f32 %v7960, %v5737
        %v7999 = vmul.f32 %v7963, %v5737
        %v8000 = vmul.f32 %v7966, %v5737
        %v8001 = vmul.f32 %v7969, %v5737
        %v8002 = vmul.f32 %v7972, %v5737
        %v8003 = vmul.f32 %v7975, %v5737
        %v8004 = vmul.f32 %v7978, %v5737
        %v8005 = vmul.f32 %v7981, %v5737
        %v8006 = vmul.f32 %v7984, %v5737
        %v8007 = vmul.f32 %v7987, %v5737
        %v8008 = vmul.f32 %v7990, %v5737
        %v8009 = vmul.f32 %v7993, %v5737
        %v8010 = vmul.f32 %v7914, %v7914
        %v8011 = vmul.f32 %v7915, %v7915
        %v8012 = vmul.f32 %v7916, %v7916
        %v8013 = vmul.f32 %v7917, %v7917
        %v8014 = vmul.f32 %v7918, %v7918
        %v8015 = vmul.f32 %v7919, %v7919
        %v8016 = vmul.f32 %v7920, %v7920
        %v8017 = vmul.f32 %v7921, %v7921
        %v8018 = vmul.f32 %v7922, %v7922
        %v8019 = vmul.f32 %v7923, %v7923
        %v8020 = vmul.f32 %v7924, %v7924
        %v8021 = vmul.f32 %v7925, %v7925
        %v8022 = vmul.f32 %v7926, %v7926
        %v8023 = vmul.f32 %v7927, %v7927
        %v8024 = vmul.f32 %v7928, %v7928
        %v8025 = vmul.f32 %v7929, %v7929
        %v8026 = vsub.f32 %v7994, %v8010
        %v8027 = vsub.f32 %v7995, %v8011
        %v8028 = vsub.f32 %v7996, %v8012
        %v8029 = vsub.f32 %v7997, %v8013
        %v8030 = vsub.f32 %v7998, %v8014
        %v8031 = vsub.f32 %v7999, %v8015
        %v8032 = vsub.f32 %v8000, %v8016
        %v8033 = vsub.f32 %v8001, %v8017
        %v8034 = vsub.f32 %v8002, %v8018
        %v8035 = vsub.f32 %v8003, %v8019
        %v8036 = vsub.f32 %v8004, %v8020
        %v8037 = vsub.f32 %v8005, %v8021
        %v8038 = vsub.f32 %v8006, %v8022
        %v8039 = vsub.f32 %v8007, %v8023
        %v8040 = vsub.f32 %v8008, %v8024
        %v8041 = vsub.f32 %v8009, %v8025
        %v8042 = vsub.f32 %v7610, %v7914
        %v8043 = vsub.f32 %v7611, %v7915
        %v8044 = vsub.f32 %v7612, %v7916
        %v8045 = vsub.f32 %v7613, %v7917
        %v8046 = vsub.f32 %v7614, %v7918
        %v8047 = vsub.f32 %v7615, %v7919
        %v8048 = vsub.f32 %v7616, %v7920
        %v8049 = vsub.f32 %v7617, %v7921
        %v8050 = vsub.f32 %v7618, %v7922
        %v8051 = vsub.f32 %v7619, %v7923
        %v8052 = vsub.f32 %v7620, %v7924
        %v8053 = vsub.f32 %v7621, %v7925
        %v8054 = vsub.f32 %v7622, %v7926
        %v8055 = vsub.f32 %v7623, %v7927
        %v8056 = vsub.f32 %v7624, %v7928
        %v8057 = vsub.f32 %v7625, %v7929
        %v8058 = vadd.f32 %v8026, 1e-06
        %v8059 = vadd.f32 %v8027, 1e-06
        %v8060 = vadd.f32 %v8028, 1e-06
        %v8061 = vadd.f32 %v8029, 1e-06
        %v8062 = vadd.f32 %v8030, 1e-06
        %v8063 = vadd.f32 %v8031, 1e-06
        %v8064 = vadd.f32 %v8032, 1e-06
        %v8065 = vadd.f32 %v8033, 1e-06
        %v8066 = vadd.f32 %v8034, 1e-06
        %v8067 = vadd.f32 %v8035, 1e-06
        %v8068 = vadd.f32 %v8036, 1e-06
        %v8069 = vadd.f32 %v8037, 1e-06
        %v8070 = vadd.f32 %v8038, 1e-06
        %v8071 = vadd.f32 %v8039, 1e-06
        %v8072 = vadd.f32 %v8040, 1e-06
        %v8073 = vadd.f32 %v8041, 1e-06
        %v8074 = vrsqrt.pop %v8058
        %v8075 = vrsqrt.pop %v8059
        %v8076 = vrsqrt.pop %v8060
        %v8077 = vrsqrt.pop %v8061
        %v8078 = vrsqrt.pop %v8062
        %v8079 = vrsqrt.pop %v8063
        %v8080 = vrsqrt.pop %v8064
        %v8081 = vrsqrt.pop %v8065
        %v8082 = vrsqrt.pop %v8066
        %v8083 = vrsqrt.pop %v8067
        %v8084 = vrsqrt.pop %v8068
        %v8085 = vrsqrt.pop %v8069
        %v8086 = vrsqrt.pop %v8070
        %v8087 = vrsqrt.pop %v8071
        %v8088 = vrsqrt.pop %v8072
        %v8089 = vrsqrt.pop %v8073
        %v8090 = vmul.f32 %v8042, %v8074
        %v8091 = vmul.f32 %v8043, %v8075
        %v8092 = vmul.f32 %v8044, %v8076
        %v8093 = vmul.f32 %v8045, %v8077
        %v8094 = vmul.f32 %v8046, %v8078
        %v8095 = vmul.f32 %v8047, %v8079
        %v8096 = vmul.f32 %v8048, %v8080
        %v8097 = vmul.f32 %v8049, %v8081
        %v8098 = vmul.f32 %v8050, %v8082
        %v8099 = vmul.f32 %v8051, %v8083
        %v8100 = vmul.f32 %v8052, %v8084
        %v8101 = vmul.f32 %v8053, %v8085
        %v8102 = vmul.f32 %v8054, %v8086
        %v8103 = vmul.f32 %v8055, %v8087
        %v8104 = vmul.f32 %v8056, %v8088
        %v8105 = vmul.f32 %v8057, %v8089
        %v8106 = vadd.f32 %v7804, 1.0
        %v8107 = vadd.f32 %v7807, 1.0
        %v8108 = vadd.f32 %v7812, 1.0
        %v8109 = vadd.f32 %v7815, 1.0
        %v8110 = vadd.f32 %v7820, 1.0
        %v8111 = vadd.f32 %v7823, 1.0
        %v8112 = vadd.f32 %v7828, 1.0
        %v8113 = vadd.f32 %v7831, 1.0
        %v8114 = vadd.f32 %v7836, 1.0
        %v8115 = vadd.f32 %v7839, 1.0
        %v8116 = vadd.f32 %v7844, 1.0
        %v8117 = vadd.f32 %v7847, 1.0
        %v8118 = vadd.f32 %v7852, 1.0
        %v8119 = vadd.f32 %v7855, 1.0
        %v8120 = vadd.f32 %v7860, 1.0
        %v8121 = vadd.f32 %v7863, 1.0
        %v8122 = vmul.f32 %v8090, %v8106
        %v8123 = vmul.f32 %v8091, %v8107
        %v8124 = vmul.f32 %v8092, %v8108
        %v8125 = vmul.f32 %v8093, %v8109
        %v8126 = vmul.f32 %v8094, %v8110
        %v8127 = vmul.f32 %v8095, %v8111
        %v8128 = vmul.f32 %v8096, %v8112
        %v8129 = vmul.f32 %v8097, %v8113
        %v8130 = vmul.f32 %v8098, %v8114
        %v8131 = vmul.f32 %v8099, %v8115
        %v8132 = vmul.f32 %v8100, %v8116
        %v8133 = vmul.f32 %v8101, %v8117
        %v8134 = vmul.f32 %v8102, %v8118
        %v8135 = vmul.f32 %v8103, %v8119
        %v8136 = vmul.f32 %v8104, %v8120
        %v8137 = vmul.f32 %v8105, %v8121
        %v8138 = vadd.f32 %v8122, %v7684
        %v8139 = vadd.f32 %v8123, %v7687
        %v8140 = vadd.f32 %v8124, %v7692
        %v8141 = vadd.f32 %v8125, %v7695
        %v8142 = vadd.f32 %v8126, %v7700
        %v8143 = vadd.f32 %v8127, %v7703
        %v8144 = vadd.f32 %v8128, %v7708
        %v8145 = vadd.f32 %v8129, %v7711
        %v8146 = vadd.f32 %v8130, %v7716
        %v8147 = vadd.f32 %v8131, %v7719
        %v8148 = vadd.f32 %v8132, %v7724
        %v8149 = vadd.f32 %v8133, %v7727
        %v8150 = vadd.f32 %v8134, %v7732
        %v8151 = vadd.f32 %v8135, %v7735
        %v8152 = vadd.f32 %v8136, %v7740
        %v8153 = vadd.f32 %v8137, %v7743
        %v8154 = vld [vmem:[%s26] sm:$0xf]
        %v8155 = vpack.c.bf16 %v8139, %v8138
        %v8156 = vpack.c.bf16 %v8141, %v8140
        %v8157 = vpack.c.bf16 %v8143, %v8142
        %v8158 = vpack.c.bf16 %v8145, %v8144
        %v8159 = vpack.c.bf16 %v8147, %v8146
        %v8160 = vpack.c.bf16 %v8149, %v8148
        %v8161 = vpack.c.bf16 %v8151, %v8150
        %v8162 = vpack.c.bf16 %v8153, %v8152
        %v8163 = vld [vmem:[%s27] sm:$0xff]
        %8165 = vset.pattern.permute.xlu0 0
        %8166 = vperm.xlu0 %8165, %v8163
        %v8167 = vpop.permute.xlu0 %8166
        %v8170 = vsel %vm4790, %v8154, 0
        %v8173 = vsel %vm4790, %v8155, 0
        %v8176 = vsel %vm4790, %v8156, 0
        %v8179 = vsel %vm4790, %v8157, 0
        %v8182 = vsel %vm4790, %v8158, 0
        %v8185 = vsel %vm4790, %v8159, 0
        %v8188 = vsel %vm4790, %v8160, 0
        %v8191 = vsel %vm4790, %v8161, 0
        %v8194 = vsel %vm4790, %v8162, 0
        %8196 = vmatprep.subr.bf16.mxu0 0
        %8197 = vmatpush1.bf16.xpose.msra.mxu0 %v8194
        %8198 = vmatprep.subr.bf16.mxu0 0
        %8199 = vmatpush1.bf16.xpose.msra.mxu0 %v8191
        %8200 = vmatprep.subr.bf16.mxu0 0
        %8201 = vmatpush1.bf16.xpose.msra.mxu0 %v8188
        %8202 = vmatprep.subr.bf16.mxu0 0
        %8203 = vmatpush1.bf16.xpose.msra.mxu0 %v8185
        %8204 = vmatprep.subr.bf16.mxu0 0
        %8205 = vmatpush1.bf16.xpose.msra.mxu0 %v8182
        %8206 = vmatprep.subr.bf16.mxu0 0
        %8207 = vmatpush1.bf16.xpose.msra.mxu0 %v8179
        %8208 = vmatprep.subr.bf16.mxu0 0
        %8209 = vmatpush1.bf16.xpose.msra.mxu0 %v8176
        %8210 = vmatprep.subr.bf16.mxu0 0
        %8211 = vmatpush1.bf16.xpose.msra.mxu0 %v8173
        %8212 = vmatprep.subr.bf16.mxu0 0
        %8213 = vmatpush2.bf16.xpose.msra.mxu0 0
        %8214 = vmatprep.subr.bf16.mxu0 0
        %8215 = vmatpush2.bf16.xpose.msra.mxu0 0
        %8216 = vmatprep.subr.bf16.mxu0 0
        %8217 = vmatpush2.bf16.xpose.msra.mxu0 0
        %8218 = vmatprep.subr.bf16.mxu0 0
        %8219 = vmatpush2.bf16.xpose.msra.mxu0 0
        %8220 = vmatprep.subr.bf16.mxu0 0
        %8221 = vmatpush2.bf16.xpose.msra.mxu0 0
        %8222 = vmatprep.subr.bf16.mxu0 0
        %8223 = vmatpush2.bf16.xpose.msra.mxu0 0
        %8224 = vmatprep.subr.bf16.mxu0 0
        %8225 = vmatpush2.bf16.xpose.msra.mxu0 0
        %8226 = vmatprep.subr.bf16.mxu0 0
        %8227 = vmatpush2.bf16.xpose.msra.mxu0 0
        %8228 = vmatprep.mubr.bf16.mxu0 0
        %8229 = vmatmul.mubr.bf16.gmra.mxu0 %v8170
        %v8230 = vpop.f32.mrf.mxu0
        %v8231 = vadd.f32 %v8167, %v8230
        %v8232 = vpop.f32.mrf.mxu0
        %v8233 = vpop.f32.mrf.mxu0
        %v8234 = vpop.f32.mrf.mxu0
        %8235 = vdwg.mxu0
        %8236 = vst [vmem:[%s839] sm:$0xff] %v8231
        %s8237 = sand.u32 %s643, 1
        %s8238 = scalar_lea.sflag [#allocation3], %s8237
        %s8239 = sand.u32 %s643, 1
        %s8240 = smul.addr %s8239, 8
        %s8241 = scalar_lea.vmem [#allocation2], %s8240
        // Predicated region
        $region133: #{tpu_custom_call.1} parent=131 // pred_check
          %p8242 = pneg %p653
        $region134: #{tpu_custom_call.1} parent=131 // pred_check_branch
          %8244 = sbr.rel (%p8242) target = $region136
        $region135: #{tpu_custom_call.1} parent=131 // pred_region
          %s8246 = ssub.s32 128, 128
          %8247 = vsyncadd %s8238, %s8246
          %s8248 = smul.addr %s42, 128
          %s8249 = scalar_lea.hbm %s28, %s8248
          %s8251 = sshll.u32 %s8241, 4
          %s8252 = int_to_ptr.vmem [resolvable:$true] %s8251
          %8254 = dma.vmem_to_hbm [thread:$0]  %s8252, 128, %s8249, %s8238
        $region136: #{tpu_custom_call.1} parent=131 // pred_fallthru
          _
      $region132: #{tpu_custom_call.1} parent=5 // pred_fallthru
        _
      %p8255 = scmp.le.s32.totalorder 2, %s37
      // Predicated region
      $region137: #{tpu_custom_call.1} parent=5 // pred_check
        %p8256 = pneg %p8255
      $region138: #{tpu_custom_call.1} parent=5 // pred_check_branch
        %8258 = sbr.rel (%p8256) target = $region140
      $region139: #{tpu_custom_call.1} parent=5 // pred_region
        %s8259 = ssub.s32 %s37, 2
        // Predicated region
        $region141: #{tpu_custom_call.1} parent=139 // pred_check
          %p8260 = pneg %p659
        $region142: #{tpu_custom_call.1} parent=139 // pred_check_branch
          %8262 = sbr.rel (%p8260) target = $region144
        $region143: #{tpu_custom_call.1} parent=139 // pred_region
          %s8263 = sand.u32 %s644, 1
          %s8264 = scalar_lea.sflag [#allocation3], %s8263
          %s8265 = sand.u32 %s644, 1
          %s8266 = smul.addr %s8265, 8
          %s8267 = scalar_lea.vmem [#allocation2], %s8266
          %8268 = dma.done %s8264, 128
        $region144: #{tpu_custom_call.1} parent=139 // pred_fallthru
          _
      $region140: #{tpu_custom_call.1} parent=5 // pred_fallthru
        _
    $region6: #{tpu_custom_call.1} parent=1 // loop_footer
      %s41 = sadd.s32 1, %s37
    $region7: #{tpu_custom_call.1} parent=1 // loop_footer_branch
      %36 = sbr.rel target = $region3
    $region8: #{tpu_custom_call.1} parent=1 // loop_exit
      _
    %8269 = vsyncpa [#allocation3], 1
    %s8270 = scalar_lea.sflag [#allocation3], 1
    %8271 = vsyncpa %s8270, 1

</llo_original>
